<compile_context>
chip_gen: v7x
topology: tpu7x:2x2x1
jax: 0.10.0
libtpu: 0.0.40
codegen_flags: <defaults>
</compile_context>

<pallas_src>
import math

import jax
import jax.numpy as jnp
from jax import lax
from jax.experimental import pallas as pl
from jax.experimental.pallas import tpu as pltpu


# ----------------------------- config (small, synthetic) -----------------------------
VOCAB_SIZE   = 4
N_EMBD       = 32
N_LAYER      = 2
SEQ          = 8            # actual_step_size
BATCH        = 2
MAX_TIMESTEP = 100
BLOCK_SIZE   = 64           # >= 3 * SEQ
LN_EPS       = 1e-5
HEAD_PAD     = 128          # lm_head output padded to a full lane width


# ----------------------------- in-kernel helpers -----------------------------
def _ln(x, w, b):
    # LayerNorm over last axis (n_embd), biased variance, eps=1e-5 (PyTorch default).
    mu = jnp.mean(x, axis=-1, keepdims=True)
    var = jnp.mean(jnp.square(x - mu), axis=-1, keepdims=True)
    return (x - mu) * lax.rsqrt(var + LN_EPS) * w + b


# ----------------------------- fused Pallas kernel -----------------------------
def fused_rwkv_kernel(
    x_ref,                                           # (T*B, C)
    ln1_w_ref, ln1_b_ref, ln2_w_ref, ln2_b_ref,      # (L, 1, C)
    wneg_ref, u_ref,                                 # (L, 1, C)   -exp(time_decay), time_first
    wkvr_a_ref, wkvr_b_ref,                          # (L, C, 3C)  pre-mixed k/v/r (x / shift(x) halves)
    wo_ref,                                          # (L, C, C)
    wcm_a_ref, wcm_b_ref,                            # (L, C, 5C)  pre-mixed channel-mix key/receptance
    wcv_ref,                                         # (L, 4C, C)
    norm_w_ref, norm_b_ref,                          # (1, C)
    whead_ref,                                       # (C, HEAD_PAD)
    out_ref,                                         # (SEQ*B, HEAD_PAD)
    k_scr, v_scr, y_scr,                             # VMEM scratch, each (T*B, C)
):
    x = x_ref[...]                                   # fp32 (T*B, C)
    TB, C = x.shape
    B = BATCH
    T = TB // B
    S = T // 3

    # hoisted once: rows with t == 0 (reused by all 4 time_shift calls)
    row = lax.broadcasted_iota(jnp.int32, (TB, C), 0)
    first_rows = row < B

    def time_shift(v):
        # v[t*B+b] -> v[(t-1)*B+b]; rows of t==0 zeroed (== nn.ZeroPad2d((0,0,1,-1)))
        return jnp.where(first_rows, 0.0, pltpu.roll(v, shift=B, axis=0))

    for l in range(N_LAYER):                         # static layer loop (fused)
        # ---------------- TimeMix ----------------
        xn = _ln(x, ln1_w_ref[l], ln1_b_ref[l])
        xx = time_shift(xn)
        # fused k/v/r projection: two accumulating MXU matmuls (no lane-axis concat)
        kvr = (jnp.dot(xn, wkvr_a_ref[l], preferred_element_type=jnp.float32)
               + jnp.dot(xx, wkvr_b_ref[l], preferred_element_type=jnp.float32))  # (TB, 3C)
        k_scr[...] = kvr[:, :C]                       # stage k/v in VMEM scratch
        v_scr[...] = kvr[:, C:2 * C]
        sr = jax.nn.sigmoid(kvr[:, 2 * C:3 * C])

        # hoisted per-layer constants for the recurrence
        w2 = jnp.broadcast_to(wneg_ref[l], (B, C))    # w = -exp(time_decay)
        u2 = jnp.broadcast_to(u_ref[l], (B, C))       # u = time_first

        # Numerically-stable WKV recurrence (same algorithm as wkv_cuda.forward).
        # State carried in vregs; y written to VMEM scratch; ONE packed exp per step.
        def wkv_step(t, carry):
            p, q, o = carry                                        # (B, C) each
            base = pl.multiple_of(t * B, B)
            kt = k_scr[pl.ds(base, B), :]
            vt = v_scr[pl.ds(base, B), :]
            ukt = u2 + kt
            wo = w2 + o
            no = jnp.maximum(o, ukt)                               # for y
            no2 = jnp.maximum(wo, kt)                              # for next state
            # pack all four exponent args into one vreg -> single EUP push
            args = jnp.concatenate(
                [o - no, ukt - no, wo - no2, kt - no2], axis=0)    # (4B, C)
            e = jnp.exp(args)
            e1 = e[0 * B:1 * B]
            e2 = e[1 * B:2 * B]
            e3 = e[2 * B:3 * B]
            e4 = e[3 * B:4 * B]
            num = e1 * p + e2 * vt
            den = e1 * q + e2
            r = pl.reciprocal(den, approx=True)
            r = r * (2.0 - den * r)                    # one Newton step -> ~exact divide
            y_scr[pl.ds(base, B), :] = num * r
            p = e3 * p + e4 * vt
            q = e3 * q + e4
            return (p, q, no2)

        init = (jnp.zeros((B, C), jnp.float32),
                jnp.zeros((B, C), jnp.float32),
                jnp.full((B, C), -1e38, jnp.float32))
        _ = lax.fori_loop(0, T, wkv_step, init, unroll=True)
        y = y_scr[...]                                             # (TB, C)

        x = x + jnp.dot(sr * y, wo_ref[l], preferred_element_type=jnp.float32)

        # ---------------- ChannelMix ----------------
        xn2 = _ln(x, ln2_w_ref[l], ln2_b_ref[l])
        xx2 = time_shift(xn2)
        kr = (jnp.dot(xn2, wcm_a_ref[l], preferred_element_type=jnp.float32)
              + jnp.dot(xx2, wcm_b_ref[l], preferred_element_type=jnp.float32))   # (TB, 5C)
        kc = jnp.square(jnp.maximum(kr[:, :4 * C], 0.0))                          # square(relu(k))
        rc = jax.nn.sigmoid(kr[:, 4 * C:5 * C])
        kv = jnp.dot(kc, wcv_ref[l], preferred_element_type=jnp.float32)          # (TB, C)
        x = x + rc * kv

    # ---------------- head: only the rows kept by logits[:, 1::3, :] ----------------
    # gather state rows (t % 3 == 1) with static slices, then LayerNorm + padded lm_head
    x_state = jnp.concatenate(
        [x[(3 * s + 1) * B:(3 * s + 2) * B, :] for s in range(S)], axis=0)        # (S*B, C)
    xf = _ln(x_state, norm_w_ref[...], norm_b_ref[...])
    out_ref[...] = jnp.dot(xf, whead_ref[...], preferred_element_type=jnp.float32)


# ----------------------------- pallas_call wrapper -----------------------------
_VMEM = pl.BlockSpec(memory_space=pltpu.MemorySpace.VMEM)


def run_fused(x_flat, fw):
    TB, C = x_flat.shape
    args = (
        x_flat,
        fw["ln1_w"], fw["ln1_b"], fw["ln2_w"], fw["ln2_b"],
        fw["wneg"], fw["u"],
        fw["wkvr_a"], fw["wkvr_b"], fw["wo"],
        fw["wcm_a"], fw["wcm_b"], fw["wcv"],
        fw["norm_w"], fw["norm_b"], fw["whead"],
    )
    n_state = SEQ * BATCH
    return pl.pallas_call(
        fused_rwkv_kernel,
        out_shape=jax.ShapeDtypeStruct((n_state, HEAD_PAD), jnp.float32),
        in_specs=[_VMEM] * len(args),
        out_specs=_VMEM,
        scratch_shapes=[
            pltpu.VMEM((TB, C), jnp.float32),   # k (time-staged)
            pltpu.VMEM((TB, C), jnp.float32),   # v
            pltpu.VMEM((TB, C), jnp.float32),   # y
        ],
        # TODO(synk): at production sizes (large C/L), add a layer grid axis so weights
        # stream HBM->VMEM (v7x has only 64 MiB VMEM), and a parallel batch axis for v7x's
        # second TensorCore; unnecessary at this toy size.
    )(*args)


# ----------------------------- weight fusion / stacking -----------------------------
def fuse_params(params):
    blocks = params["blocks"]

    def premix(m, w):                       # m: (1, Cin), w: (Cin, Cout)
        return m.T * w, (1.0 - m).T * w     # row-scaled weights (x / shift(x) halves)

    wkvr_a, wkvr_b, wcm_a, wcm_b = [], [], [], []
    for b in blocks:
        ka, kb = premix(b["mk"], b["wk"])
        va, vb = premix(b["mv"], b["wv"])
        ra, rb = premix(b["mr"], b["wr"])
        wkvr_a.append(jnp.concatenate([ka, va, ra], axis=1))     # (C, 3C)
        wkvr_b.append(jnp.concatenate([kb, vb, rb], axis=1))     # (C, 3C)
        cka, ckb = premix(b["cmk"], b["wck"])
        cra, crb = premix(b["cmr"], b["wcr"])
        wcm_a.append(jnp.concatenate([cka, cra], axis=1))        # (C, 5C)
        wcm_b.append(jnp.concatenate([ckb, crb], axis=1))        # (C, 5C)

    return {
        "ln1_w": jnp.stack([b["ln1_w"] for b in blocks]),
        "ln1_b": jnp.stack([b["ln1_b"] for b in blocks]),
        "ln2_w": jnp.stack([b["ln2_w"] for b in blocks]),
        "ln2_b": jnp.stack([b["ln2_b"] for b in blocks]),
        "wneg": jnp.stack([-jnp.exp(b["td"]) for b in blocks]),  # w = -exp(time_decay)
        "u":    jnp.stack([b["tf"] for b in blocks]),
        "wkvr_a": jnp.stack(wkvr_a),
        "wkvr_b": jnp.stack(wkvr_b),
        "wo":   jnp.stack([b["wo"] for b in blocks]),
        "wcm_a": jnp.stack(wcm_a),
        "wcm_b": jnp.stack(wcm_b),
        "wcv":  jnp.stack([b["wcv"] for b in blocks]),
        "norm_w": params["norm_w"],
        "norm_b": params["norm_b"],
        "whead": jnp.pad(params["lm_head"], ((0, 0), (0, HEAD_PAD - VOCAB_SIZE))),
    }


# ----------------------------- parameter init (deterministic, synthetic) -----------------------------
def init_params(key):
    C, V, L = N_EMBD, VOCAB_SIZE, N_LAYER
    keys = iter(jax.random.split(key, 64))

    def lin(shape):  # nn.Linear weights: N(0, 0.01); stored as (in, out)
        return jax.random.normal(next(keys), shape, jnp.float32) * 0.01

    def emb(shape):  # nn.Embedding weights: N(0, 1e-5)
        return jax.random.normal(next(keys), shape, jnp.float32) * 1e-5

    params = {
        "global_emb": emb((MAX_TIMESTEP, C)),
        "ctx_emb": emb((BLOCK_SIZE, C)),
        "norm_w": jnp.ones((1, C), jnp.float32),
        "norm_b": jnp.zeros((1, C), jnp.float32),
        "lm_head": lin((C, V)),
        "blocks": [],
    }

    h = jnp.arange(C, dtype=jnp.float32)
    xratio = h / C
    for i in range(L):
        # NOTE: original code builds block_loop with layer_id=vocab_size, which makes
        # the RWKV time-mix init formulas degenerate (inf); we use the loop index as
        # layer_id instead — forward semantics are identical, only init values differ.
        r01 = i / max(L - 1, 1)
        r1a0 = 1.0 - i / L
        decay = -5.0 + 8.0 * (h / (C - 1)) ** (0.7 + 1.3 * r01)
        zigzag = (jnp.mod(h + 1, 3) - 1) * 0.5
        tfirst = jnp.full((C,), math.log(0.3), jnp.float32) + zigzag
        blk = {
            "ln1_w": jnp.ones((1, C), jnp.float32),
            "ln1_b": jnp.zeros((1, C), jnp.float32),
            "ln2_w": jnp.ones((1, C), jnp.float32),
            "ln2_b": jnp.zeros((1, C), jnp.float32),
            "mk": (xratio ** r1a0).reshape(1, C),
            "mv": (xratio ** r1a0 + 0.3 * r01).reshape(1, C),
            "mr": (xratio ** (0.5 * r1a0)).reshape(1, C),
            "td": decay.reshape(1, C),
            "tf": tfirst.reshape(1, C),
            "wk": lin((C, C)),
            "wv": lin((C, C)),
            "wr": lin((C, C)),
            "wo": lin((C, C)),
            "cmk": (xratio ** r1a0).reshape(1, C),
            "cmr": (xratio ** r1a0).reshape(1, C),
            "wck": lin((C, 4 * C)),
            "wcv": lin((4 * C, C)),
            "wcr": lin((C, C)),
        }
        params["blocks"].append(blk)
    return params


# ----------------------------- forward (glue in plain JAX) -----------------------------
@jax.jit
def decision_rwkv_forward(params, rtgs_emb, states_emb, actions_emb, timesteps):
    B, S, C = states_emb.shape
    T = 3 * S

    token = jnp.zeros((B, T, C), jnp.float32)
    token = token.at[:, 0::3, :].set(rtgs_emb)
    token = token.at[:, 1::3, :].set(states_emb)
    if actions_emb is not None:
        token = token.at[:, 2::3, :].set(actions_emb)

    ts0 = timesteps[:, 0]                                  # (B,)
    pos_global = params["global_emb"][ts0][:, None, :]     # (B, 1, C)
    pos_rel = params["ctx_emb"][jnp.arange(T)][None, :, :] # (1, T, C)
    x = token + pos_global + pos_rel
    # TODO(synk): nn.Dropout omitted (identity in eval mode).

    # time-major, lane-dense 2-D slab: row index = t*B + b
    x_flat = jnp.transpose(x, (1, 0, 2)).reshape(T * B, C)

    fw = fuse_params(params)
    logits_state = run_fused(x_flat, fw)                   # (S*B, HEAD_PAD), state rows only
    logits = logits_state.reshape(S, B, HEAD_PAD).transpose(1, 0, 2)
    return logits[:, :, :VOCAB_SIZE]                       # == original logits[:, 1::3, :]


# ----------------------------- main -----------------------------
if __name__ == "__main__":
    key = jax.random.PRNGKey(0)
    kp, k1, k2, k3, k4 = jax.random.split(key, 5)

    params = init_params(kp)

    rtgs_emb = jax.random.normal(k1, (BATCH, SEQ, N_EMBD), jnp.float32)
    states_emb = jax.random.normal(k2, (BATCH, SEQ, N_EMBD), jnp.float32)
    actions_emb = jax.random.normal(k3, (BATCH, SEQ, N_EMBD), jnp.float32)
    timesteps = jax.random.randint(k4, (BATCH, SEQ), 0, MAX_TIMESTEP, jnp.int32)

    logits = decision_rwkv_forward(params, rtgs_emb, states_emb, actions_emb, timesteps)
    logits = jax.block_until_ready(logits)

    assert logits.shape == (BATCH, SEQ, VOCAB_SIZE), logits.shape
    assert bool(jnp.all(jnp.isfinite(logits)))
    print("KERNEL_OK")
</pallas_src>

<mosaic_0001>
module attributes {stable_mosaic.version = 11 : i64} {
  func.func @fused_rwkv_kernel(%arg0: memref<48x32xf32, #tpu.memory_space<vmem>>, %arg1: memref<2x1x32xf32, #tpu.memory_space<vmem>>, %arg2: memref<2x1x32xf32, #tpu.memory_space<vmem>>, %arg3: memref<2x1x32xf32, #tpu.memory_space<vmem>>, %arg4: memref<2x1x32xf32, #tpu.memory_space<vmem>>, %arg5: memref<2x1x32xf32, #tpu.memory_space<vmem>>, %arg6: memref<2x1x32xf32, #tpu.memory_space<vmem>>, %arg7: memref<2x32x96xf32, #tpu.memory_space<vmem>>, %arg8: memref<2x32x96xf32, #tpu.memory_space<vmem>>, %arg9: memref<2x32x32xf32, #tpu.memory_space<vmem>>, %arg10: memref<2x32x160xf32, #tpu.memory_space<vmem>>, %arg11: memref<2x32x160xf32, #tpu.memory_space<vmem>>, %arg12: memref<2x128x32xf32, #tpu.memory_space<vmem>>, %arg13: memref<1x32xf32, #tpu.memory_space<vmem>>, %arg14: memref<1x32xf32, #tpu.memory_space<vmem>>, %arg15: memref<32x128xf32, #tpu.memory_space<vmem>>, %arg16: memref<16x128xf32, #tpu.memory_space<vmem>>, %arg17: memref<48x32xf32, #tpu.memory_space<vmem>>, %arg18: memref<48x32xf32, #tpu.memory_space<vmem>>, %arg19: memref<48x32xf32, #tpu.memory_space<vmem>>) attributes {dimension_semantics = [], scalar_prefetch = 0 : i64, scratch_operands = 3 : i64, tpu.core_type = #tpu.core_type<tc>} {
    %c0 = arith.constant 0 : index
    %c0_0 = arith.constant 0 : index
    %0 = vector.load %arg0[%c0, %c0_0] : memref<48x32xf32, #tpu.memory_space<vmem>>, vector<48x32xf32>
    %1 = tpu.iota {dimensions = array<i32: 0>} : vector<48x32xi32>
    %c2_i32 = arith.constant 2 : i32
    %2 = vector.broadcast %c2_i32 : i32 to vector<48x32xi32>
    %3 = arith.cmpi slt, %1, %2 : vector<48x32xi32>
    %c0_1 = arith.constant 0 : index
    %c0_2 = arith.constant 0 : index
    %c0_3 = arith.constant 0 : index
    %4 = vector.load %arg1[%c0_1, %c0_2, %c0_3] : memref<2x1x32xf32, #tpu.memory_space<vmem>>, vector<1x1x32xf32>
    %5 = vector.shape_cast %4 : vector<1x1x32xf32> to vector<1x32xf32>
    %c0_4 = arith.constant 0 : index
    %c0_5 = arith.constant 0 : index
    %c0_6 = arith.constant 0 : index
    %6 = vector.load %arg2[%c0_4, %c0_5, %c0_6] : memref<2x1x32xf32, #tpu.memory_space<vmem>>, vector<1x1x32xf32>
    %7 = vector.shape_cast %6 : vector<1x1x32xf32> to vector<1x32xf32>
    %cst = arith.constant dense<0.000000e+00> : vector<48xf32>
    %8 = vector.multi_reduction <add>, %0, %cst [1] : vector<48x32xf32> to vector<48xf32>
    %9 = vector.shape_cast %8 : vector<48xf32> to vector<48x1xf32>
    %cst_7 = arith.constant 3.200000e+01 : f32
    %10 = vector.broadcast %cst_7 : f32 to vector<48x1xf32>
    %11 = arith.divf %9, %10 : vector<48x1xf32>
    %12 = vector.broadcast %11 : vector<48x1xf32> to vector<48x32xf32>
    %13 = arith.subf %0, %12 : vector<48x32xf32>
    %14 = arith.mulf %13, %13 : vector<48x32xf32>
    %cst_8 = arith.constant dense<0.000000e+00> : vector<48xf32>
    %15 = vector.multi_reduction <add>, %14, %cst_8 [1] : vector<48x32xf32> to vector<48xf32>
    %16 = vector.shape_cast %15 : vector<48xf32> to vector<48x1xf32>
    %cst_9 = arith.constant 3.200000e+01 : f32
    %17 = vector.broadcast %cst_9 : f32 to vector<48x1xf32>
    %18 = arith.divf %16, %17 : vector<48x1xf32>
    %19 = vector.broadcast %11 : vector<48x1xf32> to vector<48x32xf32>
    %20 = arith.subf %0, %19 : vector<48x32xf32>
    %cst_10 = arith.constant 9.99999974E-6 : f32
    %21 = vector.broadcast %cst_10 : f32 to vector<48x1xf32>
    %22 = arith.addf %18, %21 : vector<48x1xf32>
    %23 = math.rsqrt %22 : vector<48x1xf32>
    %24 = vector.broadcast %23 : vector<48x1xf32> to vector<48x32xf32>
    %25 = arith.mulf %20, %24 : vector<48x32xf32>
    %26 = vector.broadcast %5 : vector<1x32xf32> to vector<48x32xf32>
    %27 = arith.mulf %25, %26 : vector<48x32xf32>
    %28 = vector.broadcast %7 : vector<1x32xf32> to vector<48x32xf32>
    %29 = arith.addf %27, %28 : vector<48x32xf32>
    %c2_i32_11 = arith.constant 2 : i32
    %30 = tpu.dynamic_rotate %29 by %c2_i32_11 dim 0 : vector<48x32xf32>, i32 -> vector<48x32xf32>
    %cst_12 = arith.constant 0.000000e+00 : f32
    %31 = vector.broadcast %cst_12 : f32 to vector<48x32xf32>
    %32 = arith.select %3, %31, %30 : vector<48x32xi1>, vector<48x32xf32>
    %c0_13 = arith.constant 0 : index
    %c0_14 = arith.constant 0 : index
    %c0_15 = arith.constant 0 : index
    %33 = vector.load %arg7[%c0_13, %c0_14, %c0_15] : memref<2x32x96xf32, #tpu.memory_space<vmem>>, vector<1x32x96xf32>
    %34 = vector.shape_cast %33 : vector<1x32x96xf32> to vector<32x96xf32>
    %cst_16 = arith.constant dense<0.000000e+00> : vector<48x96xf32>
    %35 = tpu.matmul %29, %34, %cst_16 {dimension_numbers = #tpu.dot_dimension_numbers<[1], [0], [0], [1], [0, 0, 1, 1], [], []>} : vector<48x32xf32>, vector<32x96xf32>, vector<48x96xf32> -> vector<48x96xf32>
    %c0_17 = arith.constant 0 : index
    %c0_18 = arith.constant 0 : index
    %c0_19 = arith.constant 0 : index
    %36 = vector.load %arg8[%c0_17, %c0_18, %c0_19] : memref<2x32x96xf32, #tpu.memory_space<vmem>>, vector<1x32x96xf32>
    %37 = vector.shape_cast %36 : vector<1x32x96xf32> to vector<32x96xf32>
    %cst_20 = arith.constant dense<0.000000e+00> : vector<48x96xf32>
    %38 = tpu.matmul %32, %37, %cst_20 {dimension_numbers = #tpu.dot_dimension_numbers<[1], [0], [0], [1], [0, 0, 1, 1], [], []>} : vector<48x32xf32>, vector<32x96xf32>, vector<48x96xf32> -> vector<48x96xf32>
    %39 = arith.addf %35, %38 : vector<48x96xf32>
    %40 = vector.extract_strided_slice %39 {offsets = [0, 0], sizes = [48, 32], strides = [1, 1]} : vector<48x96xf32> to vector<48x32xf32>
    %c0_21 = arith.constant 0 : index
    %c0_22 = arith.constant 0 : index
    %41 = vector.load %arg17[%c0_21, %c0_22] : memref<48x32xf32, #tpu.memory_space<vmem>>, vector<48x32xf32>
    tpu.vector_store %arg17[%c0_21, %c0_22], %40 {strides = array<i32>} : memref<48x32xf32, #tpu.memory_space<vmem>>, vector<48x32xf32>,
    %42 = vector.extract_strided_slice %39 {offsets = [0, 32], sizes = [48, 32], strides = [1, 1]} : vector<48x96xf32> to vector<48x32xf32>
    %c0_23 = arith.constant 0 : index
    %c0_24 = arith.constant 0 : index
    %43 = vector.load %arg18[%c0_23, %c0_24] : memref<48x32xf32, #tpu.memory_space<vmem>>, vector<48x32xf32>
    tpu.vector_store %arg18[%c0_23, %c0_24], %42 {strides = array<i32>} : memref<48x32xf32, #tpu.memory_space<vmem>>, vector<48x32xf32>,
    %44 = vector.extract_strided_slice %39 {offsets = [0, 64], sizes = [48, 32], strides = [1, 1]} : vector<48x96xf32> to vector<48x32xf32>
    %45 = arith.negf %44 : vector<48x32xf32>
    %46 = math.exp %45 : vector<48x32xf32>
    %cst_25 = arith.constant 1.000000e+00 : f32
    %47 = vector.broadcast %cst_25 : f32 to vector<48x32xf32>
    %48 = arith.addf %47, %46 : vector<48x32xf32>
    %49 = arith.divf %47, %48 : vector<48x32xf32>
    %c0_26 = arith.constant 0 : index
    %c0_27 = arith.constant 0 : index
    %c0_28 = arith.constant 0 : index
    %50 = vector.load %arg5[%c0_26, %c0_27, %c0_28] : memref<2x1x32xf32, #tpu.memory_space<vmem>>, vector<1x1x32xf32>
    %51 = vector.shape_cast %50 : vector<1x1x32xf32> to vector<1x32xf32>
    %52 = vector.shape_cast %51 : vector<1x32xf32> to vector<1x32xf32>
    %53 = vector.broadcast %52 : vector<1x32xf32> to vector<2x32xf32>
    %c0_29 = arith.constant 0 : index
    %c0_30 = arith.constant 0 : index
    %c0_31 = arith.constant 0 : index
    %54 = vector.load %arg6[%c0_29, %c0_30, %c0_31] : memref<2x1x32xf32, #tpu.memory_space<vmem>>, vector<1x1x32xf32>
    %55 = vector.shape_cast %54 : vector<1x1x32xf32> to vector<1x32xf32>
    %56 = vector.shape_cast %55 : vector<1x32xf32> to vector<1x32xf32>
    %57 = vector.broadcast %56 : vector<1x32xf32> to vector<2x32xf32>
    %cst_32 = arith.constant 0.000000e+00 : f32
    %58 = vector.broadcast %cst_32 : f32 to vector<2x32xf32>
    %cst_33 = arith.constant 0.000000e+00 : f32
    %59 = vector.broadcast %cst_33 : f32 to vector<2x32xf32>
    %cst_34 = arith.constant -9.99999968E+37 : f32
    %60 = vector.broadcast %cst_34 : f32 to vector<2x32xf32>
    %c0_i32 = arith.constant 0 : i32
    %c2_i32_35 = arith.constant 2 : i32
    %61 = arith.muli %c0_i32, %c2_i32_35 : i32
    %62 = tpu.assume_multiple %61, 2 : i32
    %63 = arith.index_cast %62 : i32 to index
    %c0_36 = arith.constant 0 : index
    %64 = vector.load %arg17[%63, %c0_36] : memref<48x32xf32, #tpu.memory_space<vmem>>, vector<2x32xf32>
    %65 = arith.index_cast %62 : i32 to index
    %c0_37 = arith.constant 0 : index
    %66 = vector.load %arg18[%65, %c0_37] : memref<48x32xf32, #tpu.memory_space<vmem>>, vector<2x32xf32>
    %67 = arith.addf %57, %64 : vector<2x32xf32>
    %68 = arith.addf %53, %60 : vector<2x32xf32>
    %69 = arith.maximumf %60, %67 : vector<2x32xf32>
    %70 = arith.maximumf %68, %64 : vector<2x32xf32>
    %71 = arith.subf %60, %69 : vector<2x32xf32>
    %72 = arith.subf %67, %69 : vector<2x32xf32>
    %73 = arith.subf %68, %70 : vector<2x32xf32>
    %74 = arith.subf %64, %70 : vector<2x32xf32>
    %75 = tpu.concatenate %71, %72, %73, %74 in 0 : vector<2x32xf32>, vector<2x32xf32>, vector<2x32xf32>, vector<2x32xf32> -> vector<8x32xf32>
    %76 = math.exp %75 : vector<8x32xf32>
    %77 = vector.extract_strided_slice %76 {offsets = [0, 0], sizes = [2, 32], strides = [1, 1]} : vector<8x32xf32> to vector<2x32xf32>
    %78 = vector.extract_strided_slice %76 {offsets = [2, 0], sizes = [2, 32], strides = [1, 1]} : vector<8x32xf32> to vector<2x32xf32>
    %79 = vector.extract_strided_slice %76 {offsets = [4, 0], sizes = [2, 32], strides = [1, 1]} : vector<8x32xf32> to vector<2x32xf32>
    %80 = vector.extract_strided_slice %76 {offsets = [6, 0], sizes = [2, 32], strides = [1, 1]} : vector<8x32xf32> to vector<2x32xf32>
    %81 = arith.mulf %77, %58 : vector<2x32xf32>
    %82 = arith.mulf %78, %66 : vector<2x32xf32>
    %83 = arith.addf %81, %82 : vector<2x32xf32>
    %84 = arith.mulf %77, %59 : vector<2x32xf32>
    %85 = arith.addf %84, %78 : vector<2x32xf32>
    %86 = tpu.reciprocal %85 {approx = true} : vector<2x32xf32> -> vector<2x32xf32>
    %87 = arith.mulf %85, %86 : vector<2x32xf32>
    %cst_38 = arith.constant 2.000000e+00 : f32
    %88 = vector.broadcast %cst_38 : f32 to vector<2x32xf32>
    %89 = arith.subf %88, %87 : vector<2x32xf32>
    %90 = arith.mulf %86, %89 : vector<2x32xf32>
    %91 = arith.mulf %83, %90 : vector<2x32xf32>
    %92 = arith.index_cast %62 : i32 to index
    %c0_39 = arith.constant 0 : index
    %93 = vector.load %arg19[%92, %c0_39] : memref<48x32xf32, #tpu.memory_space<vmem>>, vector<2x32xf32>
    tpu.vector_store %arg19[%92, %c0_39], %91 {strides = array<i32>} : memref<48x32xf32, #tpu.memory_space<vmem>>, vector<2x32xf32>,
    %94 = arith.mulf %79, %58 : vector<2x32xf32>
    %95 = arith.mulf %80, %66 : vector<2x32xf32>
    %96 = arith.addf %94, %95 : vector<2x32xf32>
    %97 = arith.mulf %79, %59 : vector<2x32xf32>
    %98 = arith.addf %97, %80 : vector<2x32xf32>
    %c1_i32 = arith.constant 1 : i32
    %c2_i32_40 = arith.constant 2 : i32
    %99 = arith.muli %c1_i32, %c2_i32_40 : i32
    %100 = tpu.assume_multiple %99, 2 : i32
    %101 = arith.index_cast %100 : i32 to index
    %c0_41 = arith.constant 0 : index
    %102 = vector.load %arg17[%101, %c0_41] : memref<48x32xf32, #tpu.memory_space<vmem>>, vector<2x32xf32>
    %103 = arith.index_cast %100 : i32 to index
    %c0_42 = arith.constant 0 : index
    %104 = vector.load %arg18[%103, %c0_42] : memref<48x32xf32, #tpu.memory_space<vmem>>, vector<2x32xf32>
    %105 = arith.addf %57, %102 : vector<2x32xf32>
    %106 = arith.addf %53, %70 : vector<2x32xf32>
    %107 = arith.maximumf %70, %105 : vector<2x32xf32>
    %108 = arith.maximumf %106, %102 : vector<2x32xf32>
    %109 = arith.subf %70, %107 : vector<2x32xf32>
    %110 = arith.subf %105, %107 : vector<2x32xf32>
    %111 = arith.subf %106, %108 : vector<2x32xf32>
    %112 = arith.subf %102, %108 : vector<2x32xf32>
    %113 = tpu.concatenate %109, %110, %111, %112 in 0 : vector<2x32xf32>, vector<2x32xf32>, vector<2x32xf32>, vector<2x32xf32> -> vector<8x32xf32>
    %114 = math.exp %113 : vector<8x32xf32>
    %115 = vector.extract_strided_slice %114 {offsets = [0, 0], sizes = [2, 32], strides = [1, 1]} : vector<8x32xf32> to vector<2x32xf32>
    %116 = vector.extract_strided_slice %114 {offsets = [2, 0], sizes = [2, 32], strides = [1, 1]} : vector<8x32xf32> to vector<2x32xf32>
    %117 = vector.extract_strided_slice %114 {offsets = [4, 0], sizes = [2, 32], strides = [1, 1]} : vector<8x32xf32> to vector<2x32xf32>
    %118 = vector.extract_strided_slice %114 {offsets = [6, 0], sizes = [2, 32], strides = [1, 1]} : vector<8x32xf32> to vector<2x32xf32>
    %119 = arith.mulf %115, %96 : vector<2x32xf32>
    %120 = arith.mulf %116, %104 : vector<2x32xf32>
    %121 = arith.addf %119, %120 : vector<2x32xf32>
    %122 = arith.mulf %115, %98 : vector<2x32xf32>
    %123 = arith.addf %122, %116 : vector<2x32xf32>
    %124 = tpu.reciprocal %123 {approx = true} : vector<2x32xf32> -> vector<2x32xf32>
    %125 = arith.mulf %123, %124 : vector<2x32xf32>
    %cst_43 = arith.constant 2.000000e+00 : f32
    %126 = vector.broadcast %cst_43 : f32 to vector<2x32xf32>
    %127 = arith.subf %126, %125 : vector<2x32xf32>
    %128 = arith.mulf %124, %127 : vector<2x32xf32>
    %129 = arith.mulf %121, %128 : vector<2x32xf32>
    %130 = arith.index_cast %100 : i32 to index
    %c0_44 = arith.constant 0 : index
    %131 = vector.load %arg19[%130, %c0_44] : memref<48x32xf32, #tpu.memory_space<vmem>>, vector<2x32xf32>
    tpu.vector_store %arg19[%130, %c0_44], %129 {strides = array<i32>} : memref<48x32xf32, #tpu.memory_space<vmem>>, vector<2x32xf32>,
    %132 = arith.mulf %117, %96 : vector<2x32xf32>
    %133 = arith.mulf %118, %104 : vector<2x32xf32>
    %134 = arith.addf %132, %133 : vector<2x32xf32>
    %135 = arith.mulf %117, %98 : vector<2x32xf32>
    %136 = arith.addf %135, %118 : vector<2x32xf32>
    %c2_i32_45 = arith.constant 2 : i32
    %c2_i32_46 = arith.constant 2 : i32
    %137 = arith.muli %c2_i32_45, %c2_i32_46 : i32
    %138 = tpu.assume_multiple %137, 2 : i32
    %139 = arith.index_cast %138 : i32 to index
    %c0_47 = arith.constant 0 : index
    %140 = vector.load %arg17[%139, %c0_47] : memref<48x32xf32, #tpu.memory_space<vmem>>, vector<2x32xf32>
    %141 = arith.index_cast %138 : i32 to index
    %c0_48 = arith.constant 0 : index
    %142 = vector.load %arg18[%141, %c0_48] : memref<48x32xf32, #tpu.memory_space<vmem>>, vector<2x32xf32>
    %143 = arith.addf %57, %140 : vector<2x32xf32>
    %144 = arith.addf %53, %108 : vector<2x32xf32>
    %145 = arith.maximumf %108, %143 : vector<2x32xf32>
    %146 = arith.maximumf %144, %140 : vector<2x32xf32>
    %147 = arith.subf %108, %145 : vector<2x32xf32>
    %148 = arith.subf %143, %145 : vector<2x32xf32>
    %149 = arith.subf %144, %146 : vector<2x32xf32>
    %150 = arith.subf %140, %146 : vector<2x32xf32>
    %151 = tpu.concatenate %147, %148, %149, %150 in 0 : vector<2x32xf32>, vector<2x32xf32>, vector<2x32xf32>, vector<2x32xf32> -> vector<8x32xf32>
    %152 = math.exp %151 : vector<8x32xf32>
    %153 = vector.extract_strided_slice %152 {offsets = [0, 0], sizes = [2, 32], strides = [1, 1]} : vector<8x32xf32> to vector<2x32xf32>
    %154 = vector.extract_strided_slice %152 {offsets = [2, 0], sizes = [2, 32], strides = [1, 1]} : vector<8x32xf32> to vector<2x32xf32>
    %155 = vector.extract_strided_slice %152 {offsets = [4, 0], sizes = [2, 32], strides = [1, 1]} : vector<8x32xf32> to vector<2x32xf32>
    %156 = vector.extract_strided_slice %152 {offsets = [6, 0], sizes = [2, 32], strides = [1, 1]} : vector<8x32xf32> to vector<2x32xf32>
    %157 = arith.mulf %153, %134 : vector<2x32xf32>
    %158 = arith.mulf %154, %142 : vector<2x32xf32>
    %159 = arith.addf %157, %158 : vector<2x32xf32>
    %160 = arith.mulf %153, %136 : vector<2x32xf32>
    %161 = arith.addf %160, %154 : vector<2x32xf32>
    %162 = tpu.reciprocal %161 {approx = true} : vector<2x32xf32> -> vector<2x32xf32>
    %163 = arith.mulf %161, %162 : vector<2x32xf32>
    %cst_49 = arith.constant 2.000000e+00 : f32
    %164 = vector.broadcast %cst_49 : f32 to vector<2x32xf32>
    %165 = arith.subf %164, %163 : vector<2x32xf32>
    %166 = arith.mulf %162, %165 : vector<2x32xf32>
    %167 = arith.mulf %159, %166 : vector<2x32xf32>
    %168 = arith.index_cast %138 : i32 to index
    %c0_50 = arith.constant 0 : index
    %169 = vector.load %arg19[%168, %c0_50] : memref<48x32xf32, #tpu.memory_space<vmem>>, vector<2x32xf32>
    tpu.vector_store %arg19[%168, %c0_50], %167 {strides = array<i32>} : memref<48x32xf32, #tpu.memory_space<vmem>>, vector<2x32xf32>,
    %170 = arith.mulf %155, %134 : vector<2x32xf32>
    %171 = arith.mulf %156, %142 : vector<2x32xf32>
    %172 = arith.addf %170, %171 : vector<2x32xf32>
    %173 = arith.mulf %155, %136 : vector<2x32xf32>
    %174 = arith.addf %173, %156 : vector<2x32xf32>
    %c3_i32 = arith.constant 3 : i32
    %c2_i32_51 = arith.constant 2 : i32
    %175 = arith.muli %c3_i32, %c2_i32_51 : i32
    %176 = tpu.assume_multiple %175, 2 : i32
    %177 = arith.index_cast %176 : i32 to index
    %c0_52 = arith.constant 0 : index
    %178 = vector.load %arg17[%177, %c0_52] : memref<48x32xf32, #tpu.memory_space<vmem>>, vector<2x32xf32>
    %179 = arith.index_cast %176 : i32 to index
    %c0_53 = arith.constant 0 : index
    %180 = vector.load %arg18[%179, %c0_53] : memref<48x32xf32, #tpu.memory_space<vmem>>, vector<2x32xf32>
    %181 = arith.addf %57, %178 : vector<2x32xf32>
    %182 = arith.addf %53, %146 : vector<2x32xf32>
    %183 = arith.maximumf %146, %181 : vector<2x32xf32>
    %184 = arith.maximumf %182, %178 : vector<2x32xf32>
    %185 = arith.subf %146, %183 : vector<2x32xf32>
    %186 = arith.subf %181, %183 : vector<2x32xf32>
    %187 = arith.subf %182, %184 : vector<2x32xf32>
    %188 = arith.subf %178, %184 : vector<2x32xf32>
    %189 = tpu.concatenate %185, %186, %187, %188 in 0 : vector<2x32xf32>, vector<2x32xf32>, vector<2x32xf32>, vector<2x32xf32> -> vector<8x32xf32>
    %190 = math.exp %189 : vector<8x32xf32>
    %191 = vector.extract_strided_slice %190 {offsets = [0, 0], sizes = [2, 32], strides = [1, 1]} : vector<8x32xf32> to vector<2x32xf32>
    %192 = vector.extract_strided_slice %190 {offsets = [2, 0], sizes = [2, 32], strides = [1, 1]} : vector<8x32xf32> to vector<2x32xf32>
    %193 = vector.extract_strided_slice %190 {offsets = [4, 0], sizes = [2, 32], strides = [1, 1]} : vector<8x32xf32> to vector<2x32xf32>
    %194 = vector.extract_strided_slice %190 {offsets = [6, 0], sizes = [2, 32], strides = [1, 1]} : vector<8x32xf32> to vector<2x32xf32>
    %195 = arith.mulf %191, %172 : vector<2x32xf32>
    %196 = arith.mulf %192, %180 : vector<2x32xf32>
    %197 = arith.addf %195, %196 : vector<2x32xf32>
    %198 = arith.mulf %191, %174 : vector<2x32xf32>
    %199 = arith.addf %198, %192 : vector<2x32xf32>
    %200 = tpu.reciprocal %199 {approx = true} : vector<2x32xf32> -> vector<2x32xf32>
    %201 = arith.mulf %199, %200 : vector<2x32xf32>
    %cst_54 = arith.constant 2.000000e+00 : f32
    %202 = vector.broadcast %cst_54 : f32 to vector<2x32xf32>
    %203 = arith.subf %202, %201 : vector<2x32xf32>
    %204 = arith.mulf %200, %203 : vector<2x32xf32>
    %205 = arith.mulf %197, %204 : vector<2x32xf32>
    %206 = arith.index_cast %176 : i32 to index
    %c0_55 = arith.constant 0 : index
    %207 = vector.load %arg19[%206, %c0_55] : memref<48x32xf32, #tpu.memory_space<vmem>>, vector<2x32xf32>
    tpu.vector_store %arg19[%206, %c0_55], %205 {strides = array<i32>} : memref<48x32xf32, #tpu.memory_space<vmem>>, vector<2x32xf32>,
    %208 = arith.mulf %193, %172 : vector<2x32xf32>
    %209 = arith.mulf %194, %180 : vector<2x32xf32>
    %210 = arith.addf %208, %209 : vector<2x32xf32>
    %211 = arith.mulf %193, %174 : vector<2x32xf32>
    %212 = arith.addf %211, %194 : vector<2x32xf32>
    %c4_i32 = arith.constant 4 : i32
    %c2_i32_56 = arith.constant 2 : i32
    %213 = arith.muli %c4_i32, %c2_i32_56 : i32
    %214 = tpu.assume_multiple %213, 2 : i32
    %215 = arith.index_cast %214 : i32 to index
    %c0_57 = arith.constant 0 : index
    %216 = vector.load %arg17[%215, %c0_57] : memref<48x32xf32, #tpu.memory_space<vmem>>, vector<2x32xf32>
    %217 = arith.index_cast %214 : i32 to index
    %c0_58 = arith.constant 0 : index
    %218 = vector.load %arg18[%217, %c0_58] : memref<48x32xf32, #tpu.memory_space<vmem>>, vector<2x32xf32>
    %219 = arith.addf %57, %216 : vector<2x32xf32>
    %220 = arith.addf %53, %184 : vector<2x32xf32>
    %221 = arith.maximumf %184, %219 : vector<2x32xf32>
    %222 = arith.maximumf %220, %216 : vector<2x32xf32>
    %223 = arith.subf %184, %221 : vector<2x32xf32>
    %224 = arith.subf %219, %221 : vector<2x32xf32>
    %225 = arith.subf %220, %222 : vector<2x32xf32>
    %226 = arith.subf %216, %222 : vector<2x32xf32>
    %227 = tpu.concatenate %223, %224, %225, %226 in 0 : vector<2x32xf32>, vector<2x32xf32>, vector<2x32xf32>, vector<2x32xf32> -> vector<8x32xf32>
    %228 = math.exp %227 : vector<8x32xf32>
    %229 = vector.extract_strided_slice %228 {offsets = [0, 0], sizes = [2, 32], strides = [1, 1]} : vector<8x32xf32> to vector<2x32xf32>
    %230 = vector.extract_strided_slice %228 {offsets = [2, 0], sizes = [2, 32], strides = [1, 1]} : vector<8x32xf32> to vector<2x32xf32>
    %231 = vector.extract_strided_slice %228 {offsets = [4, 0], sizes = [2, 32], strides = [1, 1]} : vector<8x32xf32> to vector<2x32xf32>
    %232 = vector.extract_strided_slice %228 {offsets = [6, 0], sizes = [2, 32], strides = [1, 1]} : vector<8x32xf32> to vector<2x32xf32>
    %233 = arith.mulf %229, %210 : vector<2x32xf32>
    %234 = arith.mulf %230, %218 : vector<2x32xf32>
    %235 = arith.addf %233, %234 : vector<2x32xf32>
    %236 = arith.mulf %229, %212 : vector<2x32xf32>
    %237 = arith.addf %236, %230 : vector<2x32xf32>
    %238 = tpu.reciprocal %237 {approx = true} : vector<2x32xf32> -> vector<2x32xf32>
    %239 = arith.mulf %237, %238 : vector<2x32xf32>
    %cst_59 = arith.constant 2.000000e+00 : f32
    %240 = vector.broadcast %cst_59 : f32 to vector<2x32xf32>
    %241 = arith.subf %240, %239 : vector<2x32xf32>
    %242 = arith.mulf %238, %241 : vector<2x32xf32>
    %243 = arith.mulf %235, %242 : vector<2x32xf32>
    %244 = arith.index_cast %214 : i32 to index
    %c0_60 = arith.constant 0 : index
    %245 = vector.load %arg19[%244, %c0_60] : memref<48x32xf32, #tpu.memory_space<vmem>>, vector<2x32xf32>
    tpu.vector_store %arg19[%244, %c0_60], %243 {strides = array<i32>} : memref<48x32xf32, #tpu.memory_space<vmem>>, vector<2x32xf32>,
    %246 = arith.mulf %231, %210 : vector<2x32xf32>
    %247 = arith.mulf %232, %218 : vector<2x32xf32>
    %248 = arith.addf %246, %247 : vector<2x32xf32>
    %249 = arith.mulf %231, %212 : vector<2x32xf32>
    %250 = arith.addf %249, %232 : vector<2x32xf32>
    %c5_i32 = arith.constant 5 : i32
    %c2_i32_61 = arith.constant 2 : i32
    %251 = arith.muli %c5_i32, %c2_i32_61 : i32
    %252 = tpu.assume_multiple %251, 2 : i32
    %253 = arith.index_cast %252 : i32 to index
    %c0_62 = arith.constant 0 : index
    %254 = vector.load %arg17[%253, %c0_62] : memref<48x32xf32, #tpu.memory_space<vmem>>, vector<2x32xf32>
    %255 = arith.index_cast %252 : i32 to index
    %c0_63 = arith.constant 0 : index
    %256 = vector.load %arg18[%255, %c0_63] : memref<48x32xf32, #tpu.memory_space<vmem>>, vector<2x32xf32>
    %257 = arith.addf %57, %254 : vector<2x32xf32>
    %258 = arith.addf %53, %222 : vector<2x32xf32>
    %259 = arith.maximumf %222, %257 : vector<2x32xf32>
    %260 = arith.maximumf %258, %254 : vector<2x32xf32>
    %261 = arith.subf %222, %259 : vector<2x32xf32>
    %262 = arith.subf %257, %259 : vector<2x32xf32>
    %263 = arith.subf %258, %260 : vector<2x32xf32>
    %264 = arith.subf %254, %260 : vector<2x32xf32>
    %265 = tpu.concatenate %261, %262, %263, %264 in 0 : vector<2x32xf32>, vector<2x32xf32>, vector<2x32xf32>, vector<2x32xf32> -> vector<8x32xf32>
    %266 = math.exp %265 : vector<8x32xf32>
    %267 = vector.extract_strided_slice %266 {offsets = [0, 0], sizes = [2, 32], strides = [1, 1]} : vector<8x32xf32> to vector<2x32xf32>
    %268 = vector.extract_strided_slice %266 {offsets = [2, 0], sizes = [2, 32], strides = [1, 1]} : vector<8x32xf32> to vector<2x32xf32>
    %269 = vector.extract_strided_slice %266 {offsets = [4, 0], sizes = [2, 32], strides = [1, 1]} : vector<8x32xf32> to vector<2x32xf32>
    %270 = vector.extract_strided_slice %266 {offsets = [6, 0], sizes = [2, 32], strides = [1, 1]} : vector<8x32xf32> to vector<2x32xf32>
    %271 = arith.mulf %267, %248 : vector<2x32xf32>
    %272 = arith.mulf %268, %256 : vector<2x32xf32>
    %273 = arith.addf %271, %272 : vector<2x32xf32>
    %274 = arith.mulf %267, %250 : vector<2x32xf32>
    %275 = arith.addf %274, %268 : vector<2x32xf32>
    %276 = tpu.reciprocal %275 {approx = true} : vector<2x32xf32> -> vector<2x32xf32>
    %277 = arith.mulf %275, %276 : vector<2x32xf32>
    %cst_64 = arith.constant 2.000000e+00 : f32
    %278 = vector.broadcast %cst_64 : f32 to vector<2x32xf32>
    %279 = arith.subf %278, %277 : vector<2x32xf32>
    %280 = arith.mulf %276, %279 : vector<2x32xf32>
    %281 = arith.mulf %273, %280 : vector<2x32xf32>
    %282 = arith.index_cast %252 : i32 to index
    %c0_65 = arith.constant 0 : index
    %283 = vector.load %arg19[%282, %c0_65] : memref<48x32xf32, #tpu.memory_space<vmem>>, vector<2x32xf32>
    tpu.vector_store %arg19[%282, %c0_65], %281 {strides = array<i32>} : memref<48x32xf32, #tpu.memory_space<vmem>>, vector<2x32xf32>,
    %284 = arith.mulf %269, %248 : vector<2x32xf32>
    %285 = arith.mulf %270, %256 : vector<2x32xf32>
    %286 = arith.addf %284, %285 : vector<2x32xf32>
    %287 = arith.mulf %269, %250 : vector<2x32xf32>
    %288 = arith.addf %287, %270 : vector<2x32xf32>
    %c6_i32 = arith.constant 6 : i32
    %c2_i32_66 = arith.constant 2 : i32
    %289 = arith.muli %c6_i32, %c2_i32_66 : i32
    %290 = tpu.assume_multiple %289, 2 : i32
    %291 = arith.index_cast %290 : i32 to index
    %c0_67 = arith.constant 0 : index
    %292 = vector.load %arg17[%291, %c0_67] : memref<48x32xf32, #tpu.memory_space<vmem>>, vector<2x32xf32>
    %293 = arith.index_cast %290 : i32 to index
    %c0_68 = arith.constant 0 : index
    %294 = vector.load %arg18[%293, %c0_68] : memref<48x32xf32, #tpu.memory_space<vmem>>, vector<2x32xf32>
    %295 = arith.addf %57, %292 : vector<2x32xf32>
    %296 = arith.addf %53, %260 : vector<2x32xf32>
    %297 = arith.maximumf %260, %295 : vector<2x32xf32>
    %298 = arith.maximumf %296, %292 : vector<2x32xf32>
    %299 = arith.subf %260, %297 : vector<2x32xf32>
    %300 = arith.subf %295, %297 : vector<2x32xf32>
    %301 = arith.subf %296, %298 : vector<2x32xf32>
    %302 = arith.subf %292, %298 : vector<2x32xf32>
    %303 = tpu.concatenate %299, %300, %301, %302 in 0 : vector<2x32xf32>, vector<2x32xf32>, vector<2x32xf32>, vector<2x32xf32> -> vector<8x32xf32>
    %304 = math.exp %303 : vector<8x32xf32>
    %305 = vector.extract_strided_slice %304 {offsets = [0, 0], sizes = [2, 32], strides = [1, 1]} : vector<8x32xf32> to vector<2x32xf32>
    %306 = vector.extract_strided_slice %304 {offsets = [2, 0], sizes = [2, 32], strides = [1, 1]} : vector<8x32xf32> to vector<2x32xf32>
    %307 = vector.extract_strided_slice %304 {offsets = [4, 0], sizes = [2, 32], strides = [1, 1]} : vector<8x32xf32> to vector<2x32xf32>
    %308 = vector.extract_strided_slice %304 {offsets = [6, 0], sizes = [2, 32], strides = [1, 1]} : vector<8x32xf32> to vector<2x32xf32>
    %309 = arith.mulf %305, %286 : vector<2x32xf32>
    %310 = arith.mulf %306, %294 : vector<2x32xf32>
    %311 = arith.addf %309, %310 : vector<2x32xf32>
    %312 = arith.mulf %305, %288 : vector<2x32xf32>
    %313 = arith.addf %312, %306 : vector<2x32xf32>
    %314 = tpu.reciprocal %313 {approx = true} : vector<2x32xf32> -> vector<2x32xf32>
    %315 = arith.mulf %313, %314 : vector<2x32xf32>
    %cst_69 = arith.constant 2.000000e+00 : f32
    %316 = vector.broadcast %cst_69 : f32 to vector<2x32xf32>
    %317 = arith.subf %316, %315 : vector<2x32xf32>
    %318 = arith.mulf %314, %317 : vector<2x32xf32>
    %319 = arith.mulf %311, %318 : vector<2x32xf32>
    %320 = arith.index_cast %290 : i32 to index
    %c0_70 = arith.constant 0 : index
    %321 = vector.load %arg19[%320, %c0_70] : memref<48x32xf32, #tpu.memory_space<vmem>>, vector<2x32xf32>
    tpu.vector_store %arg19[%320, %c0_70], %319 {strides = array<i32>} : memref<48x32xf32, #tpu.memory_space<vmem>>, vector<2x32xf32>,
    %322 = arith.mulf %307, %286 : vector<2x32xf32>
    %323 = arith.mulf %308, %294 : vector<2x32xf32>
    %324 = arith.addf %322, %323 : vector<2x32xf32>
    %325 = arith.mulf %307, %288 : vector<2x32xf32>
    %326 = arith.addf %325, %308 : vector<2x32xf32>
    %c7_i32 = arith.constant 7 : i32
    %c2_i32_71 = arith.constant 2 : i32
    %327 = arith.muli %c7_i32, %c2_i32_71 : i32
    %328 = tpu.assume_multiple %327, 2 : i32
    %329 = arith.index_cast %328 : i32 to index
    %c0_72 = arith.constant 0 : index
    %330 = vector.load %arg17[%329, %c0_72] : memref<48x32xf32, #tpu.memory_space<vmem>>, vector<2x32xf32>
    %331 = arith.index_cast %328 : i32 to index
    %c0_73 = arith.constant 0 : index
    %332 = vector.load %arg18[%331, %c0_73] : memref<48x32xf32, #tpu.memory_space<vmem>>, vector<2x32xf32>
    %333 = arith.addf %57, %330 : vector<2x32xf32>
    %334 = arith.addf %53, %298 : vector<2x32xf32>
    %335 = arith.maximumf %298, %333 : vector<2x32xf32>
    %336 = arith.maximumf %334, %330 : vector<2x32xf32>
    %337 = arith.subf %298, %335 : vector<2x32xf32>
    %338 = arith.subf %333, %335 : vector<2x32xf32>
    %339 = arith.subf %334, %336 : vector<2x32xf32>
    %340 = arith.subf %330, %336 : vector<2x32xf32>
    %341 = tpu.concatenate %337, %338, %339, %340 in 0 : vector<2x32xf32>, vector<2x32xf32>, vector<2x32xf32>, vector<2x32xf32> -> vector<8x32xf32>
    %342 = math.exp %341 : vector<8x32xf32>
    %343 = vector.extract_strided_slice %342 {offsets = [0, 0], sizes = [2, 32], strides = [1, 1]} : vector<8x32xf32> to vector<2x32xf32>
    %344 = vector.extract_strided_slice %342 {offsets = [2, 0], sizes = [2, 32], strides = [1, 1]} : vector<8x32xf32> to vector<2x32xf32>
    %345 = vector.extract_strided_slice %342 {offsets = [4, 0], sizes = [2, 32], strides = [1, 1]} : vector<8x32xf32> to vector<2x32xf32>
    %346 = vector.extract_strided_slice %342 {offsets = [6, 0], sizes = [2, 32], strides = [1, 1]} : vector<8x32xf32> to vector<2x32xf32>
    %347 = arith.mulf %343, %324 : vector<2x32xf32>
    %348 = arith.mulf %344, %332 : vector<2x32xf32>
    %349 = arith.addf %347, %348 : vector<2x32xf32>
    %350 = arith.mulf %343, %326 : vector<2x32xf32>
    %351 = arith.addf %350, %344 : vector<2x32xf32>
    %352 = tpu.reciprocal %351 {approx = true} : vector<2x32xf32> -> vector<2x32xf32>
    %353 = arith.mulf %351, %352 : vector<2x32xf32>
    %cst_74 = arith.constant 2.000000e+00 : f32
    %354 = vector.broadcast %cst_74 : f32 to vector<2x32xf32>
    %355 = arith.subf %354, %353 : vector<2x32xf32>
    %356 = arith.mulf %352, %355 : vector<2x32xf32>
    %357 = arith.mulf %349, %356 : vector<2x32xf32>
    %358 = arith.index_cast %328 : i32 to index
    %c0_75 = arith.constant 0 : index
    %359 = vector.load %arg19[%358, %c0_75] : memref<48x32xf32, #tpu.memory_space<vmem>>, vector<2x32xf32>
    tpu.vector_store %arg19[%358, %c0_75], %357 {strides = array<i32>} : memref<48x32xf32, #tpu.memory_space<vmem>>, vector<2x32xf32>,
    %360 = arith.mulf %345, %324 : vector<2x32xf32>
    %361 = arith.mulf %346, %332 : vector<2x32xf32>
    %362 = arith.addf %360, %361 : vector<2x32xf32>
    %363 = arith.mulf %345, %326 : vector<2x32xf32>
    %364 = arith.addf %363, %346 : vector<2x32xf32>
    %c8_i32 = arith.constant 8 : i32
    %c2_i32_76 = arith.constant 2 : i32
    %365 = arith.muli %c8_i32, %c2_i32_76 : i32
    %366 = tpu.assume_multiple %365, 2 : i32
    %367 = arith.index_cast %366 : i32 to index
    %c0_77 = arith.constant 0 : index
    %368 = vector.load %arg17[%367, %c0_77] : memref<48x32xf32, #tpu.memory_space<vmem>>, vector<2x32xf32>
    %369 = arith.index_cast %366 : i32 to index
    %c0_78 = arith.constant 0 : index
    %370 = vector.load %arg18[%369, %c0_78] : memref<48x32xf32, #tpu.memory_space<vmem>>, vector<2x32xf32>
    %371 = arith.addf %57, %368 : vector<2x32xf32>
    %372 = arith.addf %53, %336 : vector<2x32xf32>
    %373 = arith.maximumf %336, %371 : vector<2x32xf32>
    %374 = arith.maximumf %372, %368 : vector<2x32xf32>
    %375 = arith.subf %336, %373 : vector<2x32xf32>
    %376 = arith.subf %371, %373 : vector<2x32xf32>
    %377 = arith.subf %372, %374 : vector<2x32xf32>
    %378 = arith.subf %368, %374 : vector<2x32xf32>
    %379 = tpu.concatenate %375, %376, %377, %378 in 0 : vector<2x32xf32>, vector<2x32xf32>, vector<2x32xf32>, vector<2x32xf32> -> vector<8x32xf32>
    %380 = math.exp %379 : vector<8x32xf32>
    %381 = vector.extract_strided_slice %380 {offsets = [0, 0], sizes = [2, 32], strides = [1, 1]} : vector<8x32xf32> to vector<2x32xf32>
    %382 = vector.extract_strided_slice %380 {offsets = [2, 0], sizes = [2, 32], strides = [1, 1]} : vector<8x32xf32> to vector<2x32xf32>
    %383 = vector.extract_strided_slice %380 {offsets = [4, 0], sizes = [2, 32], strides = [1, 1]} : vector<8x32xf32> to vector<2x32xf32>
    %384 = vector.extract_strided_slice %380 {offsets = [6, 0], sizes = [2, 32], strides = [1, 1]} : vector<8x32xf32> to vector<2x32xf32>
    %385 = arith.mulf %381, %362 : vector<2x32xf32>
    %386 = arith.mulf %382, %370 : vector<2x32xf32>
    %387 = arith.addf %385, %386 : vector<2x32xf32>
    %388 = arith.mulf %381, %364 : vector<2x32xf32>
    %389 = arith.addf %388, %382 : vector<2x32xf32>
    %390 = tpu.reciprocal %389 {approx = true} : vector<2x32xf32> -> vector<2x32xf32>
    %391 = arith.mulf %389, %390 : vector<2x32xf32>
    %cst_79 = arith.constant 2.000000e+00 : f32
    %392 = vector.broadcast %cst_79 : f32 to vector<2x32xf32>
    %393 = arith.subf %392, %391 : vector<2x32xf32>
    %394 = arith.mulf %390, %393 : vector<2x32xf32>
    %395 = arith.mulf %387, %394 : vector<2x32xf32>
    %396 = arith.index_cast %366 : i32 to index
    %c0_80 = arith.constant 0 : index
    %397 = vector.load %arg19[%396, %c0_80] : memref<48x32xf32, #tpu.memory_space<vmem>>, vector<2x32xf32>
    tpu.vector_store %arg19[%396, %c0_80], %395 {strides = array<i32>} : memref<48x32xf32, #tpu.memory_space<vmem>>, vector<2x32xf32>,
    %398 = arith.mulf %383, %362 : vector<2x32xf32>
    %399 = arith.mulf %384, %370 : vector<2x32xf32>
    %400 = arith.addf %398, %399 : vector<2x32xf32>
    %401 = arith.mulf %383, %364 : vector<2x32xf32>
    %402 = arith.addf %401, %384 : vector<2x32xf32>
    %c9_i32 = arith.constant 9 : i32
    %c2_i32_81 = arith.constant 2 : i32
    %403 = arith.muli %c9_i32, %c2_i32_81 : i32
    %404 = tpu.assume_multiple %403, 2 : i32
    %405 = arith.index_cast %404 : i32 to index
    %c0_82 = arith.constant 0 : index
    %406 = vector.load %arg17[%405, %c0_82] : memref<48x32xf32, #tpu.memory_space<vmem>>, vector<2x32xf32>
    %407 = arith.index_cast %404 : i32 to index
    %c0_83 = arith.constant 0 : index
    %408 = vector.load %arg18[%407, %c0_83] : memref<48x32xf32, #tpu.memory_space<vmem>>, vector<2x32xf32>
    %409 = arith.addf %57, %406 : vector<2x32xf32>
    %410 = arith.addf %53, %374 : vector<2x32xf32>
    %411 = arith.maximumf %374, %409 : vector<2x32xf32>
    %412 = arith.maximumf %410, %406 : vector<2x32xf32>
    %413 = arith.subf %374, %411 : vector<2x32xf32>
    %414 = arith.subf %409, %411 : vector<2x32xf32>
    %415 = arith.subf %410, %412 : vector<2x32xf32>
    %416 = arith.subf %406, %412 : vector<2x32xf32>
    %417 = tpu.concatenate %413, %414, %415, %416 in 0 : vector<2x32xf32>, vector<2x32xf32>, vector<2x32xf32>, vector<2x32xf32> -> vector<8x32xf32>
    %418 = math.exp %417 : vector<8x32xf32>
    %419 = vector.extract_strided_slice %418 {offsets = [0, 0], sizes = [2, 32], strides = [1, 1]} : vector<8x32xf32> to vector<2x32xf32>
    %420 = vector.extract_strided_slice %418 {offsets = [2, 0], sizes = [2, 32], strides = [1, 1]} : vector<8x32xf32> to vector<2x32xf32>
    %421 = vector.extract_strided_slice %418 {offsets = [4, 0], sizes = [2, 32], strides = [1, 1]} : vector<8x32xf32> to vector<2x32xf32>
    %422 = vector.extract_strided_slice %418 {offsets = [6, 0], sizes = [2, 32], strides = [1, 1]} : vector<8x32xf32> to vector<2x32xf32>
    %423 = arith.mulf %419, %400 : vector<2x32xf32>
    %424 = arith.mulf %420, %408 : vector<2x32xf32>
    %425 = arith.addf %423, %424 : vector<2x32xf32>
    %426 = arith.mulf %419, %402 : vector<2x32xf32>
    %427 = arith.addf %426, %420 : vector<2x32xf32>
    %428 = tpu.reciprocal %427 {approx = true} : vector<2x32xf32> -> vector<2x32xf32>
    %429 = arith.mulf %427, %428 : vector<2x32xf32>
    %cst_84 = arith.constant 2.000000e+00 : f32
    %430 = vector.broadcast %cst_84 : f32 to vector<2x32xf32>
    %431 = arith.subf %430, %429 : vector<2x32xf32>
    %432 = arith.mulf %428, %431 : vector<2x32xf32>
    %433 = arith.mulf %425, %432 : vector<2x32xf32>
    %434 = arith.index_cast %404 : i32 to index
    %c0_85 = arith.constant 0 : index
    %435 = vector.load %arg19[%434, %c0_85] : memref<48x32xf32, #tpu.memory_space<vmem>>, vector<2x32xf32>
    tpu.vector_store %arg19[%434, %c0_85], %433 {strides = array<i32>} : memref<48x32xf32, #tpu.memory_space<vmem>>, vector<2x32xf32>,
    %436 = arith.mulf %421, %400 : vector<2x32xf32>
    %437 = arith.mulf %422, %408 : vector<2x32xf32>
    %438 = arith.addf %436, %437 : vector<2x32xf32>
    %439 = arith.mulf %421, %402 : vector<2x32xf32>
    %440 = arith.addf %439, %422 : vector<2x32xf32>
    %c10_i32 = arith.constant 10 : i32
    %c2_i32_86 = arith.constant 2 : i32
    %441 = arith.muli %c10_i32, %c2_i32_86 : i32
    %442 = tpu.assume_multiple %441, 2 : i32
    %443 = arith.index_cast %442 : i32 to index
    %c0_87 = arith.constant 0 : index
    %444 = vector.load %arg17[%443, %c0_87] : memref<48x32xf32, #tpu.memory_space<vmem>>, vector<2x32xf32>
    %445 = arith.index_cast %442 : i32 to index
    %c0_88 = arith.constant 0 : index
    %446 = vector.load %arg18[%445, %c0_88] : memref<48x32xf32, #tpu.memory_space<vmem>>, vector<2x32xf32>
    %447 = arith.addf %57, %444 : vector<2x32xf32>
    %448 = arith.addf %53, %412 : vector<2x32xf32>
    %449 = arith.maximumf %412, %447 : vector<2x32xf32>
    %450 = arith.maximumf %448, %444 : vector<2x32xf32>
    %451 = arith.subf %412, %449 : vector<2x32xf32>
    %452 = arith.subf %447, %449 : vector<2x32xf32>
    %453 = arith.subf %448, %450 : vector<2x32xf32>
    %454 = arith.subf %444, %450 : vector<2x32xf32>
    %455 = tpu.concatenate %451, %452, %453, %454 in 0 : vector<2x32xf32>, vector<2x32xf32>, vector<2x32xf32>, vector<2x32xf32> -> vector<8x32xf32>
    %456 = math.exp %455 : vector<8x32xf32>
    %457 = vector.extract_strided_slice %456 {offsets = [0, 0], sizes = [2, 32], strides = [1, 1]} : vector<8x32xf32> to vector<2x32xf32>
    %458 = vector.extract_strided_slice %456 {offsets = [2, 0], sizes = [2, 32], strides = [1, 1]} : vector<8x32xf32> to vector<2x32xf32>
    %459 = vector.extract_strided_slice %456 {offsets = [4, 0], sizes = [2, 32], strides = [1, 1]} : vector<8x32xf32> to vector<2x32xf32>
    %460 = vector.extract_strided_slice %456 {offsets = [6, 0], sizes = [2, 32], strides = [1, 1]} : vector<8x32xf32> to vector<2x32xf32>
    %461 = arith.mulf %457, %438 : vector<2x32xf32>
    %462 = arith.mulf %458, %446 : vector<2x32xf32>
    %463 = arith.addf %461, %462 : vector<2x32xf32>
    %464 = arith.mulf %457, %440 : vector<2x32xf32>
    %465 = arith.addf %464, %458 : vector<2x32xf32>
    %466 = tpu.reciprocal %465 {approx = true} : vector<2x32xf32> -> vector<2x32xf32>
    %467 = arith.mulf %465, %466 : vector<2x32xf32>
    %cst_89 = arith.constant 2.000000e+00 : f32
    %468 = vector.broadcast %cst_89 : f32 to vector<2x32xf32>
    %469 = arith.subf %468, %467 : vector<2x32xf32>
    %470 = arith.mulf %466, %469 : vector<2x32xf32>
    %471 = arith.mulf %463, %470 : vector<2x32xf32>
    %472 = arith.index_cast %442 : i32 to index
    %c0_90 = arith.constant 0 : index
    %473 = vector.load %arg19[%472, %c0_90] : memref<48x32xf32, #tpu.memory_space<vmem>>, vector<2x32xf32>
    tpu.vector_store %arg19[%472, %c0_90], %471 {strides = array<i32>} : memref<48x32xf32, #tpu.memory_space<vmem>>, vector<2x32xf32>,
    %474 = arith.mulf %459, %438 : vector<2x32xf32>
    %475 = arith.mulf %460, %446 : vector<2x32xf32>
    %476 = arith.addf %474, %475 : vector<2x32xf32>
    %477 = arith.mulf %459, %440 : vector<2x32xf32>
    %478 = arith.addf %477, %460 : vector<2x32xf32>
    %c11_i32 = arith.constant 11 : i32
    %c2_i32_91 = arith.constant 2 : i32
    %479 = arith.muli %c11_i32, %c2_i32_91 : i32
    %480 = tpu.assume_multiple %479, 2 : i32
    %481 = arith.index_cast %480 : i32 to index
    %c0_92 = arith.constant 0 : index
    %482 = vector.load %arg17[%481, %c0_92] : memref<48x32xf32, #tpu.memory_space<vmem>>, vector<2x32xf32>
    %483 = arith.index_cast %480 : i32 to index
    %c0_93 = arith.constant 0 : index
    %484 = vector.load %arg18[%483, %c0_93] : memref<48x32xf32, #tpu.memory_space<vmem>>, vector<2x32xf32>
    %485 = arith.addf %57, %482 : vector<2x32xf32>
    %486 = arith.addf %53, %450 : vector<2x32xf32>
    %487 = arith.maximumf %450, %485 : vector<2x32xf32>
    %488 = arith.maximumf %486, %482 : vector<2x32xf32>
    %489 = arith.subf %450, %487 : vector<2x32xf32>
    %490 = arith.subf %485, %487 : vector<2x32xf32>
    %491 = arith.subf %486, %488 : vector<2x32xf32>
    %492 = arith.subf %482, %488 : vector<2x32xf32>
    %493 = tpu.concatenate %489, %490, %491, %492 in 0 : vector<2x32xf32>, vector<2x32xf32>, vector<2x32xf32>, vector<2x32xf32> -> vector<8x32xf32>
    %494 = math.exp %493 : vector<8x32xf32>
    %495 = vector.extract_strided_slice %494 {offsets = [0, 0], sizes = [2, 32], strides = [1, 1]} : vector<8x32xf32> to vector<2x32xf32>
    %496 = vector.extract_strided_slice %494 {offsets = [2, 0], sizes = [2, 32], strides = [1, 1]} : vector<8x32xf32> to vector<2x32xf32>
    %497 = vector.extract_strided_slice %494 {offsets = [4, 0], sizes = [2, 32], strides = [1, 1]} : vector<8x32xf32> to vector<2x32xf32>
    %498 = vector.extract_strided_slice %494 {offsets = [6, 0], sizes = [2, 32], strides = [1, 1]} : vector<8x32xf32> to vector<2x32xf32>
    %499 = arith.mulf %495, %476 : vector<2x32xf32>
    %500 = arith.mulf %496, %484 : vector<2x32xf32>
    %501 = arith.addf %499, %500 : vector<2x32xf32>
    %502 = arith.mulf %495, %478 : vector<2x32xf32>
    %503 = arith.addf %502, %496 : vector<2x32xf32>
    %504 = tpu.reciprocal %503 {approx = true} : vector<2x32xf32> -> vector<2x32xf32>
    %505 = arith.mulf %503, %504 : vector<2x32xf32>
    %cst_94 = arith.constant 2.000000e+00 : f32
    %506 = vector.broadcast %cst_94 : f32 to vector<2x32xf32>
    %507 = arith.subf %506, %505 : vector<2x32xf32>
    %508 = arith.mulf %504, %507 : vector<2x32xf32>
    %509 = arith.mulf %501, %508 : vector<2x32xf32>
    %510 = arith.index_cast %480 : i32 to index
    %c0_95 = arith.constant 0 : index
    %511 = vector.load %arg19[%510, %c0_95] : memref<48x32xf32, #tpu.memory_space<vmem>>, vector<2x32xf32>
    tpu.vector_store %arg19[%510, %c0_95], %509 {strides = array<i32>} : memref<48x32xf32, #tpu.memory_space<vmem>>, vector<2x32xf32>,
    %512 = arith.mulf %497, %476 : vector<2x32xf32>
    %513 = arith.mulf %498, %484 : vector<2x32xf32>
    %514 = arith.addf %512, %513 : vector<2x32xf32>
    %515 = arith.mulf %497, %478 : vector<2x32xf32>
    %516 = arith.addf %515, %498 : vector<2x32xf32>
    %c12_i32 = arith.constant 12 : i32
    %c2_i32_96 = arith.constant 2 : i32
    %517 = arith.muli %c12_i32, %c2_i32_96 : i32
    %518 = tpu.assume_multiple %517, 2 : i32
    %519 = arith.index_cast %518 : i32 to index
    %c0_97 = arith.constant 0 : index
    %520 = vector.load %arg17[%519, %c0_97] : memref<48x32xf32, #tpu.memory_space<vmem>>, vector<2x32xf32>
    %521 = arith.index_cast %518 : i32 to index
    %c0_98 = arith.constant 0 : index
    %522 = vector.load %arg18[%521, %c0_98] : memref<48x32xf32, #tpu.memory_space<vmem>>, vector<2x32xf32>
    %523 = arith.addf %57, %520 : vector<2x32xf32>
    %524 = arith.addf %53, %488 : vector<2x32xf32>
    %525 = arith.maximumf %488, %523 : vector<2x32xf32>
    %526 = arith.maximumf %524, %520 : vector<2x32xf32>
    %527 = arith.subf %488, %525 : vector<2x32xf32>
    %528 = arith.subf %523, %525 : vector<2x32xf32>
    %529 = arith.subf %524, %526 : vector<2x32xf32>
    %530 = arith.subf %520, %526 : vector<2x32xf32>
    %531 = tpu.concatenate %527, %528, %529, %530 in 0 : vector<2x32xf32>, vector<2x32xf32>, vector<2x32xf32>, vector<2x32xf32> -> vector<8x32xf32>
    %532 = math.exp %531 : vector<8x32xf32>
    %533 = vector.extract_strided_slice %532 {offsets = [0, 0], sizes = [2, 32], strides = [1, 1]} : vector<8x32xf32> to vector<2x32xf32>
    %534 = vector.extract_strided_slice %532 {offsets = [2, 0], sizes = [2, 32], strides = [1, 1]} : vector<8x32xf32> to vector<2x32xf32>
    %535 = vector.extract_strided_slice %532 {offsets = [4, 0], sizes = [2, 32], strides = [1, 1]} : vector<8x32xf32> to vector<2x32xf32>
    %536 = vector.extract_strided_slice %532 {offsets = [6, 0], sizes = [2, 32], strides = [1, 1]} : vector<8x32xf32> to vector<2x32xf32>
    %537 = arith.mulf %533, %514 : vector<2x32xf32>
    %538 = arith.mulf %534, %522 : vector<2x32xf32>
    %539 = arith.addf %537, %538 : vector<2x32xf32>
    %540 = arith.mulf %533, %516 : vector<2x32xf32>
    %541 = arith.addf %540, %534 : vector<2x32xf32>
    %542 = tpu.reciprocal %541 {approx = true} : vector<2x32xf32> -> vector<2x32xf32>
    %543 = arith.mulf %541, %542 : vector<2x32xf32>
    %cst_99 = arith.constant 2.000000e+00 : f32
    %544 = vector.broadcast %cst_99 : f32 to vector<2x32xf32>
    %545 = arith.subf %544, %543 : vector<2x32xf32>
    %546 = arith.mulf %542, %545 : vector<2x32xf32>
    %547 = arith.mulf %539, %546 : vector<2x32xf32>
    %548 = arith.index_cast %518 : i32 to index
    %c0_100 = arith.constant 0 : index
    %549 = vector.load %arg19[%548, %c0_100] : memref<48x32xf32, #tpu.memory_space<vmem>>, vector<2x32xf32>
    tpu.vector_store %arg19[%548, %c0_100], %547 {strides = array<i32>} : memref<48x32xf32, #tpu.memory_space<vmem>>, vector<2x32xf32>,
    %550 = arith.mulf %535, %514 : vector<2x32xf32>
    %551 = arith.mulf %536, %522 : vector<2x32xf32>
    %552 = arith.addf %550, %551 : vector<2x32xf32>
    %553 = arith.mulf %535, %516 : vector<2x32xf32>
    %554 = arith.addf %553, %536 : vector<2x32xf32>
    %c13_i32 = arith.constant 13 : i32
    %c2_i32_101 = arith.constant 2 : i32
    %555 = arith.muli %c13_i32, %c2_i32_101 : i32
    %556 = tpu.assume_multiple %555, 2 : i32
    %557 = arith.index_cast %556 : i32 to index
    %c0_102 = arith.constant 0 : index
    %558 = vector.load %arg17[%557, %c0_102] : memref<48x32xf32, #tpu.memory_space<vmem>>, vector<2x32xf32>
    %559 = arith.index_cast %556 : i32 to index
    %c0_103 = arith.constant 0 : index
    %560 = vector.load %arg18[%559, %c0_103] : memref<48x32xf32, #tpu.memory_space<vmem>>, vector<2x32xf32>
    %561 = arith.addf %57, %558 : vector<2x32xf32>
    %562 = arith.addf %53, %526 : vector<2x32xf32>
    %563 = arith.maximumf %526, %561 : vector<2x32xf32>
    %564 = arith.maximumf %562, %558 : vector<2x32xf32>
    %565 = arith.subf %526, %563 : vector<2x32xf32>
    %566 = arith.subf %561, %563 : vector<2x32xf32>
    %567 = arith.subf %562, %564 : vector<2x32xf32>
    %568 = arith.subf %558, %564 : vector<2x32xf32>
    %569 = tpu.concatenate %565, %566, %567, %568 in 0 : vector<2x32xf32>, vector<2x32xf32>, vector<2x32xf32>, vector<2x32xf32> -> vector<8x32xf32>
    %570 = math.exp %569 : vector<8x32xf32>
    %571 = vector.extract_strided_slice %570 {offsets = [0, 0], sizes = [2, 32], strides = [1, 1]} : vector<8x32xf32> to vector<2x32xf32>
    %572 = vector.extract_strided_slice %570 {offsets = [2, 0], sizes = [2, 32], strides = [1, 1]} : vector<8x32xf32> to vector<2x32xf32>
    %573 = vector.extract_strided_slice %570 {offsets = [4, 0], sizes = [2, 32], strides = [1, 1]} : vector<8x32xf32> to vector<2x32xf32>
    %574 = vector.extract_strided_slice %570 {offsets = [6, 0], sizes = [2, 32], strides = [1, 1]} : vector<8x32xf32> to vector<2x32xf32>
    %575 = arith.mulf %571, %552 : vector<2x32xf32>
    %576 = arith.mulf %572, %560 : vector<2x32xf32>
    %577 = arith.addf %575, %576 : vector<2x32xf32>
    %578 = arith.mulf %571, %554 : vector<2x32xf32>
    %579 = arith.addf %578, %572 : vector<2x32xf32>
    %580 = tpu.reciprocal %579 {approx = true} : vector<2x32xf32> -> vector<2x32xf32>
    %581 = arith.mulf %579, %580 : vector<2x32xf32>
    %cst_104 = arith.constant 2.000000e+00 : f32
    %582 = vector.broadcast %cst_104 : f32 to vector<2x32xf32>
    %583 = arith.subf %582, %581 : vector<2x32xf32>
    %584 = arith.mulf %580, %583 : vector<2x32xf32>
    %585 = arith.mulf %577, %584 : vector<2x32xf32>
    %586 = arith.index_cast %556 : i32 to index
    %c0_105 = arith.constant 0 : index
    %587 = vector.load %arg19[%586, %c0_105] : memref<48x32xf32, #tpu.memory_space<vmem>>, vector<2x32xf32>
    tpu.vector_store %arg19[%586, %c0_105], %585 {strides = array<i32>} : memref<48x32xf32, #tpu.memory_space<vmem>>, vector<2x32xf32>,
    %588 = arith.mulf %573, %552 : vector<2x32xf32>
    %589 = arith.mulf %574, %560 : vector<2x32xf32>
    %590 = arith.addf %588, %589 : vector<2x32xf32>
    %591 = arith.mulf %573, %554 : vector<2x32xf32>
    %592 = arith.addf %591, %574 : vector<2x32xf32>
    %c14_i32 = arith.constant 14 : i32
    %c2_i32_106 = arith.constant 2 : i32
    %593 = arith.muli %c14_i32, %c2_i32_106 : i32
    %594 = tpu.assume_multiple %593, 2 : i32
    %595 = arith.index_cast %594 : i32 to index
    %c0_107 = arith.constant 0 : index
    %596 = vector.load %arg17[%595, %c0_107] : memref<48x32xf32, #tpu.memory_space<vmem>>, vector<2x32xf32>
    %597 = arith.index_cast %594 : i32 to index
    %c0_108 = arith.constant 0 : index
    %598 = vector.load %arg18[%597, %c0_108] : memref<48x32xf32, #tpu.memory_space<vmem>>, vector<2x32xf32>
    %599 = arith.addf %57, %596 : vector<2x32xf32>
    %600 = arith.addf %53, %564 : vector<2x32xf32>
    %601 = arith.maximumf %564, %599 : vector<2x32xf32>
    %602 = arith.maximumf %600, %596 : vector<2x32xf32>
    %603 = arith.subf %564, %601 : vector<2x32xf32>
    %604 = arith.subf %599, %601 : vector<2x32xf32>
    %605 = arith.subf %600, %602 : vector<2x32xf32>
    %606 = arith.subf %596, %602 : vector<2x32xf32>
    %607 = tpu.concatenate %603, %604, %605, %606 in 0 : vector<2x32xf32>, vector<2x32xf32>, vector<2x32xf32>, vector<2x32xf32> -> vector<8x32xf32>
    %608 = math.exp %607 : vector<8x32xf32>
    %609 = vector.extract_strided_slice %608 {offsets = [0, 0], sizes = [2, 32], strides = [1, 1]} : vector<8x32xf32> to vector<2x32xf32>
    %610 = vector.extract_strided_slice %608 {offsets = [2, 0], sizes = [2, 32], strides = [1, 1]} : vector<8x32xf32> to vector<2x32xf32>
    %611 = vector.extract_strided_slice %608 {offsets = [4, 0], sizes = [2, 32], strides = [1, 1]} : vector<8x32xf32> to vector<2x32xf32>
    %612 = vector.extract_strided_slice %608 {offsets = [6, 0], sizes = [2, 32], strides = [1, 1]} : vector<8x32xf32> to vector<2x32xf32>
    %613 = arith.mulf %609, %590 : vector<2x32xf32>
    %614 = arith.mulf %610, %598 : vector<2x32xf32>
    %615 = arith.addf %613, %614 : vector<2x32xf32>
    %616 = arith.mulf %609, %592 : vector<2x32xf32>
    %617 = arith.addf %616, %610 : vector<2x32xf32>
    %618 = tpu.reciprocal %617 {approx = true} : vector<2x32xf32> -> vector<2x32xf32>
    %619 = arith.mulf %617, %618 : vector<2x32xf32>
    %cst_109 = arith.constant 2.000000e+00 : f32
    %620 = vector.broadcast %cst_109 : f32 to vector<2x32xf32>
    %621 = arith.subf %620, %619 : vector<2x32xf32>
    %622 = arith.mulf %618, %621 : vector<2x32xf32>
    %623 = arith.mulf %615, %622 : vector<2x32xf32>
    %624 = arith.index_cast %594 : i32 to index
    %c0_110 = arith.constant 0 : index
    %625 = vector.load %arg19[%624, %c0_110] : memref<48x32xf32, #tpu.memory_space<vmem>>, vector<2x32xf32>
    tpu.vector_store %arg19[%624, %c0_110], %623 {strides = array<i32>} : memref<48x32xf32, #tpu.memory_space<vmem>>, vector<2x32xf32>,
    %626 = arith.mulf %611, %590 : vector<2x32xf32>
    %627 = arith.mulf %612, %598 : vector<2x32xf32>
    %628 = arith.addf %626, %627 : vector<2x32xf32>
    %629 = arith.mulf %611, %592 : vector<2x32xf32>
    %630 = arith.addf %629, %612 : vector<2x32xf32>
    %c15_i32 = arith.constant 15 : i32
    %c2_i32_111 = arith.constant 2 : i32
    %631 = arith.muli %c15_i32, %c2_i32_111 : i32
    %632 = tpu.assume_multiple %631, 2 : i32
    %633 = arith.index_cast %632 : i32 to index
    %c0_112 = arith.constant 0 : index
    %634 = vector.load %arg17[%633, %c0_112] : memref<48x32xf32, #tpu.memory_space<vmem>>, vector<2x32xf32>
    %635 = arith.index_cast %632 : i32 to index
    %c0_113 = arith.constant 0 : index
    %636 = vector.load %arg18[%635, %c0_113] : memref<48x32xf32, #tpu.memory_space<vmem>>, vector<2x32xf32>
    %637 = arith.addf %57, %634 : vector<2x32xf32>
    %638 = arith.addf %53, %602 : vector<2x32xf32>
    %639 = arith.maximumf %602, %637 : vector<2x32xf32>
    %640 = arith.maximumf %638, %634 : vector<2x32xf32>
    %641 = arith.subf %602, %639 : vector<2x32xf32>
    %642 = arith.subf %637, %639 : vector<2x32xf32>
    %643 = arith.subf %638, %640 : vector<2x32xf32>
    %644 = arith.subf %634, %640 : vector<2x32xf32>
    %645 = tpu.concatenate %641, %642, %643, %644 in 0 : vector<2x32xf32>, vector<2x32xf32>, vector<2x32xf32>, vector<2x32xf32> -> vector<8x32xf32>
    %646 = math.exp %645 : vector<8x32xf32>
    %647 = vector.extract_strided_slice %646 {offsets = [0, 0], sizes = [2, 32], strides = [1, 1]} : vector<8x32xf32> to vector<2x32xf32>
    %648 = vector.extract_strided_slice %646 {offsets = [2, 0], sizes = [2, 32], strides = [1, 1]} : vector<8x32xf32> to vector<2x32xf32>
    %649 = vector.extract_strided_slice %646 {offsets = [4, 0], sizes = [2, 32], strides = [1, 1]} : vector<8x32xf32> to vector<2x32xf32>
    %650 = vector.extract_strided_slice %646 {offsets = [6, 0], sizes = [2, 32], strides = [1, 1]} : vector<8x32xf32> to vector<2x32xf32>
    %651 = arith.mulf %647, %628 : vector<2x32xf32>
    %652 = arith.mulf %648, %636 : vector<2x32xf32>
    %653 = arith.addf %651, %652 : vector<2x32xf32>
    %654 = arith.mulf %647, %630 : vector<2x32xf32>
    %655 = arith.addf %654, %648 : vector<2x32xf32>
    %656 = tpu.reciprocal %655 {approx = true} : vector<2x32xf32> -> vector<2x32xf32>
    %657 = arith.mulf %655, %656 : vector<2x32xf32>
    %cst_114 = arith.constant 2.000000e+00 : f32
    %658 = vector.broadcast %cst_114 : f32 to vector<2x32xf32>
    %659 = arith.subf %658, %657 : vector<2x32xf32>
    %660 = arith.mulf %656, %659 : vector<2x32xf32>
    %661 = arith.mulf %653, %660 : vector<2x32xf32>
    %662 = arith.index_cast %632 : i32 to index
    %c0_115 = arith.constant 0 : index
    %663 = vector.load %arg19[%662, %c0_115] : memref<48x32xf32, #tpu.memory_space<vmem>>, vector<2x32xf32>
    tpu.vector_store %arg19[%662, %c0_115], %661 {strides = array<i32>} : memref<48x32xf32, #tpu.memory_space<vmem>>, vector<2x32xf32>,
    %664 = arith.mulf %649, %628 : vector<2x32xf32>
    %665 = arith.mulf %650, %636 : vector<2x32xf32>
    %666 = arith.addf %664, %665 : vector<2x32xf32>
    %667 = arith.mulf %649, %630 : vector<2x32xf32>
    %668 = arith.addf %667, %650 : vector<2x32xf32>
    %c16_i32 = arith.constant 16 : i32
    %c2_i32_116 = arith.constant 2 : i32
    %669 = arith.muli %c16_i32, %c2_i32_116 : i32
    %670 = tpu.assume_multiple %669, 2 : i32
    %671 = arith.index_cast %670 : i32 to index
    %c0_117 = arith.constant 0 : index
    %672 = vector.load %arg17[%671, %c0_117] : memref<48x32xf32, #tpu.memory_space<vmem>>, vector<2x32xf32>
    %673 = arith.index_cast %670 : i32 to index
    %c0_118 = arith.constant 0 : index
    %674 = vector.load %arg18[%673, %c0_118] : memref<48x32xf32, #tpu.memory_space<vmem>>, vector<2x32xf32>
    %675 = arith.addf %57, %672 : vector<2x32xf32>
    %676 = arith.addf %53, %640 : vector<2x32xf32>
    %677 = arith.maximumf %640, %675 : vector<2x32xf32>
    %678 = arith.maximumf %676, %672 : vector<2x32xf32>
    %679 = arith.subf %640, %677 : vector<2x32xf32>
    %680 = arith.subf %675, %677 : vector<2x32xf32>
    %681 = arith.subf %676, %678 : vector<2x32xf32>
    %682 = arith.subf %672, %678 : vector<2x32xf32>
    %683 = tpu.concatenate %679, %680, %681, %682 in 0 : vector<2x32xf32>, vector<2x32xf32>, vector<2x32xf32>, vector<2x32xf32> -> vector<8x32xf32>
    %684 = math.exp %683 : vector<8x32xf32>
    %685 = vector.extract_strided_slice %684 {offsets = [0, 0], sizes = [2, 32], strides = [1, 1]} : vector<8x32xf32> to vector<2x32xf32>
    %686 = vector.extract_strided_slice %684 {offsets = [2, 0], sizes = [2, 32], strides = [1, 1]} : vector<8x32xf32> to vector<2x32xf32>
    %687 = vector.extract_strided_slice %684 {offsets = [4, 0], sizes = [2, 32], strides = [1, 1]} : vector<8x32xf32> to vector<2x32xf32>
    %688 = vector.extract_strided_slice %684 {offsets = [6, 0], sizes = [2, 32], strides = [1, 1]} : vector<8x32xf32> to vector<2x32xf32>
    %689 = arith.mulf %685, %666 : vector<2x32xf32>
    %690 = arith.mulf %686, %674 : vector<2x32xf32>
    %691 = arith.addf %689, %690 : vector<2x32xf32>
    %692 = arith.mulf %685, %668 : vector<2x32xf32>
    %693 = arith.addf %692, %686 : vector<2x32xf32>
    %694 = tpu.reciprocal %693 {approx = true} : vector<2x32xf32> -> vector<2x32xf32>
    %695 = arith.mulf %693, %694 : vector<2x32xf32>
    %cst_119 = arith.constant 2.000000e+00 : f32
    %696 = vector.broadcast %cst_119 : f32 to vector<2x32xf32>
    %697 = arith.subf %696, %695 : vector<2x32xf32>
    %698 = arith.mulf %694, %697 : vector<2x32xf32>
    %699 = arith.mulf %691, %698 : vector<2x32xf32>
    %700 = arith.index_cast %670 : i32 to index
    %c0_120 = arith.constant 0 : index
    %701 = vector.load %arg19[%700, %c0_120] : memref<48x32xf32, #tpu.memory_space<vmem>>, vector<2x32xf32>
    tpu.vector_store %arg19[%700, %c0_120], %699 {strides = array<i32>} : memref<48x32xf32, #tpu.memory_space<vmem>>, vector<2x32xf32>,
    %702 = arith.mulf %687, %666 : vector<2x32xf32>
    %703 = arith.mulf %688, %674 : vector<2x32xf32>
    %704 = arith.addf %702, %703 : vector<2x32xf32>
    %705 = arith.mulf %687, %668 : vector<2x32xf32>
    %706 = arith.addf %705, %688 : vector<2x32xf32>
    %c17_i32 = arith.constant 17 : i32
    %c2_i32_121 = arith.constant 2 : i32
    %707 = arith.muli %c17_i32, %c2_i32_121 : i32
    %708 = tpu.assume_multiple %707, 2 : i32
    %709 = arith.index_cast %708 : i32 to index
    %c0_122 = arith.constant 0 : index
    %710 = vector.load %arg17[%709, %c0_122] : memref<48x32xf32, #tpu.memory_space<vmem>>, vector<2x32xf32>
    %711 = arith.index_cast %708 : i32 to index
    %c0_123 = arith.constant 0 : index
    %712 = vector.load %arg18[%711, %c0_123] : memref<48x32xf32, #tpu.memory_space<vmem>>, vector<2x32xf32>
    %713 = arith.addf %57, %710 : vector<2x32xf32>
    %714 = arith.addf %53, %678 : vector<2x32xf32>
    %715 = arith.maximumf %678, %713 : vector<2x32xf32>
    %716 = arith.maximumf %714, %710 : vector<2x32xf32>
    %717 = arith.subf %678, %715 : vector<2x32xf32>
    %718 = arith.subf %713, %715 : vector<2x32xf32>
    %719 = arith.subf %714, %716 : vector<2x32xf32>
    %720 = arith.subf %710, %716 : vector<2x32xf32>
    %721 = tpu.concatenate %717, %718, %719, %720 in 0 : vector<2x32xf32>, vector<2x32xf32>, vector<2x32xf32>, vector<2x32xf32> -> vector<8x32xf32>
    %722 = math.exp %721 : vector<8x32xf32>
    %723 = vector.extract_strided_slice %722 {offsets = [0, 0], sizes = [2, 32], strides = [1, 1]} : vector<8x32xf32> to vector<2x32xf32>
    %724 = vector.extract_strided_slice %722 {offsets = [2, 0], sizes = [2, 32], strides = [1, 1]} : vector<8x32xf32> to vector<2x32xf32>
    %725 = vector.extract_strided_slice %722 {offsets = [4, 0], sizes = [2, 32], strides = [1, 1]} : vector<8x32xf32> to vector<2x32xf32>
    %726 = vector.extract_strided_slice %722 {offsets = [6, 0], sizes = [2, 32], strides = [1, 1]} : vector<8x32xf32> to vector<2x32xf32>
    %727 = arith.mulf %723, %704 : vector<2x32xf32>
    %728 = arith.mulf %724, %712 : vector<2x32xf32>
    %729 = arith.addf %727, %728 : vector<2x32xf32>
    %730 = arith.mulf %723, %706 : vector<2x32xf32>
    %731 = arith.addf %730, %724 : vector<2x32xf32>
    %732 = tpu.reciprocal %731 {approx = true} : vector<2x32xf32> -> vector<2x32xf32>
    %733 = arith.mulf %731, %732 : vector<2x32xf32>
    %cst_124 = arith.constant 2.000000e+00 : f32
    %734 = vector.broadcast %cst_124 : f32 to vector<2x32xf32>
    %735 = arith.subf %734, %733 : vector<2x32xf32>
    %736 = arith.mulf %732, %735 : vector<2x32xf32>
    %737 = arith.mulf %729, %736 : vector<2x32xf32>
    %738 = arith.index_cast %708 : i32 to index
    %c0_125 = arith.constant 0 : index
    %739 = vector.load %arg19[%738, %c0_125] : memref<48x32xf32, #tpu.memory_space<vmem>>, vector<2x32xf32>
    tpu.vector_store %arg19[%738, %c0_125], %737 {strides = array<i32>} : memref<48x32xf32, #tpu.memory_space<vmem>>, vector<2x32xf32>,
    %740 = arith.mulf %725, %704 : vector<2x32xf32>
    %741 = arith.mulf %726, %712 : vector<2x32xf32>
    %742 = arith.addf %740, %741 : vector<2x32xf32>
    %743 = arith.mulf %725, %706 : vector<2x32xf32>
    %744 = arith.addf %743, %726 : vector<2x32xf32>
    %c18_i32 = arith.constant 18 : i32
    %c2_i32_126 = arith.constant 2 : i32
    %745 = arith.muli %c18_i32, %c2_i32_126 : i32
    %746 = tpu.assume_multiple %745, 2 : i32
    %747 = arith.index_cast %746 : i32 to index
    %c0_127 = arith.constant 0 : index
    %748 = vector.load %arg17[%747, %c0_127] : memref<48x32xf32, #tpu.memory_space<vmem>>, vector<2x32xf32>
    %749 = arith.index_cast %746 : i32 to index
    %c0_128 = arith.constant 0 : index
    %750 = vector.load %arg18[%749, %c0_128] : memref<48x32xf32, #tpu.memory_space<vmem>>, vector<2x32xf32>
    %751 = arith.addf %57, %748 : vector<2x32xf32>
    %752 = arith.addf %53, %716 : vector<2x32xf32>
    %753 = arith.maximumf %716, %751 : vector<2x32xf32>
    %754 = arith.maximumf %752, %748 : vector<2x32xf32>
    %755 = arith.subf %716, %753 : vector<2x32xf32>
    %756 = arith.subf %751, %753 : vector<2x32xf32>
    %757 = arith.subf %752, %754 : vector<2x32xf32>
    %758 = arith.subf %748, %754 : vector<2x32xf32>
    %759 = tpu.concatenate %755, %756, %757, %758 in 0 : vector<2x32xf32>, vector<2x32xf32>, vector<2x32xf32>, vector<2x32xf32> -> vector<8x32xf32>
    %760 = math.exp %759 : vector<8x32xf32>
    %761 = vector.extract_strided_slice %760 {offsets = [0, 0], sizes = [2, 32], strides = [1, 1]} : vector<8x32xf32> to vector<2x32xf32>
    %762 = vector.extract_strided_slice %760 {offsets = [2, 0], sizes = [2, 32], strides = [1, 1]} : vector<8x32xf32> to vector<2x32xf32>
    %763 = vector.extract_strided_slice %760 {offsets = [4, 0], sizes = [2, 32], strides = [1, 1]} : vector<8x32xf32> to vector<2x32xf32>
    %764 = vector.extract_strided_slice %760 {offsets = [6, 0], sizes = [2, 32], strides = [1, 1]} : vector<8x32xf32> to vector<2x32xf32>
    %765 = arith.mulf %761, %742 : vector<2x32xf32>
    %766 = arith.mulf %762, %750 : vector<2x32xf32>
    %767 = arith.addf %765, %766 : vector<2x32xf32>
    %768 = arith.mulf %761, %744 : vector<2x32xf32>
    %769 = arith.addf %768, %762 : vector<2x32xf32>
    %770 = tpu.reciprocal %769 {approx = true} : vector<2x32xf32> -> vector<2x32xf32>
    %771 = arith.mulf %769, %770 : vector<2x32xf32>
    %cst_129 = arith.constant 2.000000e+00 : f32
    %772 = vector.broadcast %cst_129 : f32 to vector<2x32xf32>
    %773 = arith.subf %772, %771 : vector<2x32xf32>
    %774 = arith.mulf %770, %773 : vector<2x32xf32>
    %775 = arith.mulf %767, %774 : vector<2x32xf32>
    %776 = arith.index_cast %746 : i32 to index
    %c0_130 = arith.constant 0 : index
    %777 = vector.load %arg19[%776, %c0_130] : memref<48x32xf32, #tpu.memory_space<vmem>>, vector<2x32xf32>
    tpu.vector_store %arg19[%776, %c0_130], %775 {strides = array<i32>} : memref<48x32xf32, #tpu.memory_space<vmem>>, vector<2x32xf32>,
    %778 = arith.mulf %763, %742 : vector<2x32xf32>
    %779 = arith.mulf %764, %750 : vector<2x32xf32>
    %780 = arith.addf %778, %779 : vector<2x32xf32>
    %781 = arith.mulf %763, %744 : vector<2x32xf32>
    %782 = arith.addf %781, %764 : vector<2x32xf32>
    %c19_i32 = arith.constant 19 : i32
    %c2_i32_131 = arith.constant 2 : i32
    %783 = arith.muli %c19_i32, %c2_i32_131 : i32
    %784 = tpu.assume_multiple %783, 2 : i32
    %785 = arith.index_cast %784 : i32 to index
    %c0_132 = arith.constant 0 : index
    %786 = vector.load %arg17[%785, %c0_132] : memref<48x32xf32, #tpu.memory_space<vmem>>, vector<2x32xf32>
    %787 = arith.index_cast %784 : i32 to index
    %c0_133 = arith.constant 0 : index
    %788 = vector.load %arg18[%787, %c0_133] : memref<48x32xf32, #tpu.memory_space<vmem>>, vector<2x32xf32>
    %789 = arith.addf %57, %786 : vector<2x32xf32>
    %790 = arith.addf %53, %754 : vector<2x32xf32>
    %791 = arith.maximumf %754, %789 : vector<2x32xf32>
    %792 = arith.maximumf %790, %786 : vector<2x32xf32>
    %793 = arith.subf %754, %791 : vector<2x32xf32>
    %794 = arith.subf %789, %791 : vector<2x32xf32>
    %795 = arith.subf %790, %792 : vector<2x32xf32>
    %796 = arith.subf %786, %792 : vector<2x32xf32>
    %797 = tpu.concatenate %793, %794, %795, %796 in 0 : vector<2x32xf32>, vector<2x32xf32>, vector<2x32xf32>, vector<2x32xf32> -> vector<8x32xf32>
    %798 = math.exp %797 : vector<8x32xf32>
    %799 = vector.extract_strided_slice %798 {offsets = [0, 0], sizes = [2, 32], strides = [1, 1]} : vector<8x32xf32> to vector<2x32xf32>
    %800 = vector.extract_strided_slice %798 {offsets = [2, 0], sizes = [2, 32], strides = [1, 1]} : vector<8x32xf32> to vector<2x32xf32>
    %801 = vector.extract_strided_slice %798 {offsets = [4, 0], sizes = [2, 32], strides = [1, 1]} : vector<8x32xf32> to vector<2x32xf32>
    %802 = vector.extract_strided_slice %798 {offsets = [6, 0], sizes = [2, 32], strides = [1, 1]} : vector<8x32xf32> to vector<2x32xf32>
    %803 = arith.mulf %799, %780 : vector<2x32xf32>
    %804 = arith.mulf %800, %788 : vector<2x32xf32>
    %805 = arith.addf %803, %804 : vector<2x32xf32>
    %806 = arith.mulf %799, %782 : vector<2x32xf32>
    %807 = arith.addf %806, %800 : vector<2x32xf32>
    %808 = tpu.reciprocal %807 {approx = true} : vector<2x32xf32> -> vector<2x32xf32>
    %809 = arith.mulf %807, %808 : vector<2x32xf32>
    %cst_134 = arith.constant 2.000000e+00 : f32
    %810 = vector.broadcast %cst_134 : f32 to vector<2x32xf32>
    %811 = arith.subf %810, %809 : vector<2x32xf32>
    %812 = arith.mulf %808, %811 : vector<2x32xf32>
    %813 = arith.mulf %805, %812 : vector<2x32xf32>
    %814 = arith.index_cast %784 : i32 to index
    %c0_135 = arith.constant 0 : index
    %815 = vector.load %arg19[%814, %c0_135] : memref<48x32xf32, #tpu.memory_space<vmem>>, vector<2x32xf32>
    tpu.vector_store %arg19[%814, %c0_135], %813 {strides = array<i32>} : memref<48x32xf32, #tpu.memory_space<vmem>>, vector<2x32xf32>,
    %816 = arith.mulf %801, %780 : vector<2x32xf32>
    %817 = arith.mulf %802, %788 : vector<2x32xf32>
    %818 = arith.addf %816, %817 : vector<2x32xf32>
    %819 = arith.mulf %801, %782 : vector<2x32xf32>
    %820 = arith.addf %819, %802 : vector<2x32xf32>
    %c20_i32 = arith.constant 20 : i32
    %c2_i32_136 = arith.constant 2 : i32
    %821 = arith.muli %c20_i32, %c2_i32_136 : i32
    %822 = tpu.assume_multiple %821, 2 : i32
    %823 = arith.index_cast %822 : i32 to index
    %c0_137 = arith.constant 0 : index
    %824 = vector.load %arg17[%823, %c0_137] : memref<48x32xf32, #tpu.memory_space<vmem>>, vector<2x32xf32>
    %825 = arith.index_cast %822 : i32 to index
    %c0_138 = arith.constant 0 : index
    %826 = vector.load %arg18[%825, %c0_138] : memref<48x32xf32, #tpu.memory_space<vmem>>, vector<2x32xf32>
    %827 = arith.addf %57, %824 : vector<2x32xf32>
    %828 = arith.addf %53, %792 : vector<2x32xf32>
    %829 = arith.maximumf %792, %827 : vector<2x32xf32>
    %830 = arith.maximumf %828, %824 : vector<2x32xf32>
    %831 = arith.subf %792, %829 : vector<2x32xf32>
    %832 = arith.subf %827, %829 : vector<2x32xf32>
    %833 = arith.subf %828, %830 : vector<2x32xf32>
    %834 = arith.subf %824, %830 : vector<2x32xf32>
    %835 = tpu.concatenate %831, %832, %833, %834 in 0 : vector<2x32xf32>, vector<2x32xf32>, vector<2x32xf32>, vector<2x32xf32> -> vector<8x32xf32>
    %836 = math.exp %835 : vector<8x32xf32>
    %837 = vector.extract_strided_slice %836 {offsets = [0, 0], sizes = [2, 32], strides = [1, 1]} : vector<8x32xf32> to vector<2x32xf32>
    %838 = vector.extract_strided_slice %836 {offsets = [2, 0], sizes = [2, 32], strides = [1, 1]} : vector<8x32xf32> to vector<2x32xf32>
    %839 = vector.extract_strided_slice %836 {offsets = [4, 0], sizes = [2, 32], strides = [1, 1]} : vector<8x32xf32> to vector<2x32xf32>
    %840 = vector.extract_strided_slice %836 {offsets = [6, 0], sizes = [2, 32], strides = [1, 1]} : vector<8x32xf32> to vector<2x32xf32>
    %841 = arith.mulf %837, %818 : vector<2x32xf32>
    %842 = arith.mulf %838, %826 : vector<2x32xf32>
    %843 = arith.addf %841, %842 : vector<2x32xf32>
    %844 = arith.mulf %837, %820 : vector<2x32xf32>
    %845 = arith.addf %844, %838 : vector<2x32xf32>
    %846 = tpu.reciprocal %845 {approx = true} : vector<2x32xf32> -> vector<2x32xf32>
    %847 = arith.mulf %845, %846 : vector<2x32xf32>
    %cst_139 = arith.constant 2.000000e+00 : f32
    %848 = vector.broadcast %cst_139 : f32 to vector<2x32xf32>
    %849 = arith.subf %848, %847 : vector<2x32xf32>
    %850 = arith.mulf %846, %849 : vector<2x32xf32>
    %851 = arith.mulf %843, %850 : vector<2x32xf32>
    %852 = arith.index_cast %822 : i32 to index
    %c0_140 = arith.constant 0 : index
    %853 = vector.load %arg19[%852, %c0_140] : memref<48x32xf32, #tpu.memory_space<vmem>>, vector<2x32xf32>
    tpu.vector_store %arg19[%852, %c0_140], %851 {strides = array<i32>} : memref<48x32xf32, #tpu.memory_space<vmem>>, vector<2x32xf32>,
    %854 = arith.mulf %839, %818 : vector<2x32xf32>
    %855 = arith.mulf %840, %826 : vector<2x32xf32>
    %856 = arith.addf %854, %855 : vector<2x32xf32>
    %857 = arith.mulf %839, %820 : vector<2x32xf32>
    %858 = arith.addf %857, %840 : vector<2x32xf32>
    %c21_i32 = arith.constant 21 : i32
    %c2_i32_141 = arith.constant 2 : i32
    %859 = arith.muli %c21_i32, %c2_i32_141 : i32
    %860 = tpu.assume_multiple %859, 2 : i32
    %861 = arith.index_cast %860 : i32 to index
    %c0_142 = arith.constant 0 : index
    %862 = vector.load %arg17[%861, %c0_142] : memref<48x32xf32, #tpu.memory_space<vmem>>, vector<2x32xf32>
    %863 = arith.index_cast %860 : i32 to index
    %c0_143 = arith.constant 0 : index
    %864 = vector.load %arg18[%863, %c0_143] : memref<48x32xf32, #tpu.memory_space<vmem>>, vector<2x32xf32>
    %865 = arith.addf %57, %862 : vector<2x32xf32>
    %866 = arith.addf %53, %830 : vector<2x32xf32>
    %867 = arith.maximumf %830, %865 : vector<2x32xf32>
    %868 = arith.maximumf %866, %862 : vector<2x32xf32>
    %869 = arith.subf %830, %867 : vector<2x32xf32>
    %870 = arith.subf %865, %867 : vector<2x32xf32>
    %871 = arith.subf %866, %868 : vector<2x32xf32>
    %872 = arith.subf %862, %868 : vector<2x32xf32>
    %873 = tpu.concatenate %869, %870, %871, %872 in 0 : vector<2x32xf32>, vector<2x32xf32>, vector<2x32xf32>, vector<2x32xf32> -> vector<8x32xf32>
    %874 = math.exp %873 : vector<8x32xf32>
    %875 = vector.extract_strided_slice %874 {offsets = [0, 0], sizes = [2, 32], strides = [1, 1]} : vector<8x32xf32> to vector<2x32xf32>
    %876 = vector.extract_strided_slice %874 {offsets = [2, 0], sizes = [2, 32], strides = [1, 1]} : vector<8x32xf32> to vector<2x32xf32>
    %877 = vector.extract_strided_slice %874 {offsets = [4, 0], sizes = [2, 32], strides = [1, 1]} : vector<8x32xf32> to vector<2x32xf32>
    %878 = vector.extract_strided_slice %874 {offsets = [6, 0], sizes = [2, 32], strides = [1, 1]} : vector<8x32xf32> to vector<2x32xf32>
    %879 = arith.mulf %875, %856 : vector<2x32xf32>
    %880 = arith.mulf %876, %864 : vector<2x32xf32>
    %881 = arith.addf %879, %880 : vector<2x32xf32>
    %882 = arith.mulf %875, %858 : vector<2x32xf32>
    %883 = arith.addf %882, %876 : vector<2x32xf32>
    %884 = tpu.reciprocal %883 {approx = true} : vector<2x32xf32> -> vector<2x32xf32>
    %885 = arith.mulf %883, %884 : vector<2x32xf32>
    %cst_144 = arith.constant 2.000000e+00 : f32
    %886 = vector.broadcast %cst_144 : f32 to vector<2x32xf32>
    %887 = arith.subf %886, %885 : vector<2x32xf32>
    %888 = arith.mulf %884, %887 : vector<2x32xf32>
    %889 = arith.mulf %881, %888 : vector<2x32xf32>
    %890 = arith.index_cast %860 : i32 to index
    %c0_145 = arith.constant 0 : index
    %891 = vector.load %arg19[%890, %c0_145] : memref<48x32xf32, #tpu.memory_space<vmem>>, vector<2x32xf32>
    tpu.vector_store %arg19[%890, %c0_145], %889 {strides = array<i32>} : memref<48x32xf32, #tpu.memory_space<vmem>>, vector<2x32xf32>,
    %892 = arith.mulf %877, %856 : vector<2x32xf32>
    %893 = arith.mulf %878, %864 : vector<2x32xf32>
    %894 = arith.addf %892, %893 : vector<2x32xf32>
    %895 = arith.mulf %877, %858 : vector<2x32xf32>
    %896 = arith.addf %895, %878 : vector<2x32xf32>
    %c22_i32 = arith.constant 22 : i32
    %c2_i32_146 = arith.constant 2 : i32
    %897 = arith.muli %c22_i32, %c2_i32_146 : i32
    %898 = tpu.assume_multiple %897, 2 : i32
    %899 = arith.index_cast %898 : i32 to index
    %c0_147 = arith.constant 0 : index
    %900 = vector.load %arg17[%899, %c0_147] : memref<48x32xf32, #tpu.memory_space<vmem>>, vector<2x32xf32>
    %901 = arith.index_cast %898 : i32 to index
    %c0_148 = arith.constant 0 : index
    %902 = vector.load %arg18[%901, %c0_148] : memref<48x32xf32, #tpu.memory_space<vmem>>, vector<2x32xf32>
    %903 = arith.addf %57, %900 : vector<2x32xf32>
    %904 = arith.addf %53, %868 : vector<2x32xf32>
    %905 = arith.maximumf %868, %903 : vector<2x32xf32>
    %906 = arith.maximumf %904, %900 : vector<2x32xf32>
    %907 = arith.subf %868, %905 : vector<2x32xf32>
    %908 = arith.subf %903, %905 : vector<2x32xf32>
    %909 = arith.subf %904, %906 : vector<2x32xf32>
    %910 = arith.subf %900, %906 : vector<2x32xf32>
    %911 = tpu.concatenate %907, %908, %909, %910 in 0 : vector<2x32xf32>, vector<2x32xf32>, vector<2x32xf32>, vector<2x32xf32> -> vector<8x32xf32>
    %912 = math.exp %911 : vector<8x32xf32>
    %913 = vector.extract_strided_slice %912 {offsets = [0, 0], sizes = [2, 32], strides = [1, 1]} : vector<8x32xf32> to vector<2x32xf32>
    %914 = vector.extract_strided_slice %912 {offsets = [2, 0], sizes = [2, 32], strides = [1, 1]} : vector<8x32xf32> to vector<2x32xf32>
    %915 = vector.extract_strided_slice %912 {offsets = [4, 0], sizes = [2, 32], strides = [1, 1]} : vector<8x32xf32> to vector<2x32xf32>
    %916 = vector.extract_strided_slice %912 {offsets = [6, 0], sizes = [2, 32], strides = [1, 1]} : vector<8x32xf32> to vector<2x32xf32>
    %917 = arith.mulf %913, %894 : vector<2x32xf32>
    %918 = arith.mulf %914, %902 : vector<2x32xf32>
    %919 = arith.addf %917, %918 : vector<2x32xf32>
    %920 = arith.mulf %913, %896 : vector<2x32xf32>
    %921 = arith.addf %920, %914 : vector<2x32xf32>
    %922 = tpu.reciprocal %921 {approx = true} : vector<2x32xf32> -> vector<2x32xf32>
    %923 = arith.mulf %921, %922 : vector<2x32xf32>
    %cst_149 = arith.constant 2.000000e+00 : f32
    %924 = vector.broadcast %cst_149 : f32 to vector<2x32xf32>
    %925 = arith.subf %924, %923 : vector<2x32xf32>
    %926 = arith.mulf %922, %925 : vector<2x32xf32>
    %927 = arith.mulf %919, %926 : vector<2x32xf32>
    %928 = arith.index_cast %898 : i32 to index
    %c0_150 = arith.constant 0 : index
    %929 = vector.load %arg19[%928, %c0_150] : memref<48x32xf32, #tpu.memory_space<vmem>>, vector<2x32xf32>
    tpu.vector_store %arg19[%928, %c0_150], %927 {strides = array<i32>} : memref<48x32xf32, #tpu.memory_space<vmem>>, vector<2x32xf32>,
    %930 = arith.mulf %915, %894 : vector<2x32xf32>
    %931 = arith.mulf %916, %902 : vector<2x32xf32>
    %932 = arith.addf %930, %931 : vector<2x32xf32>
    %933 = arith.mulf %915, %896 : vector<2x32xf32>
    %934 = arith.addf %933, %916 : vector<2x32xf32>
    %c23_i32 = arith.constant 23 : i32
    %c2_i32_151 = arith.constant 2 : i32
    %935 = arith.muli %c23_i32, %c2_i32_151 : i32
    %936 = tpu.assume_multiple %935, 2 : i32
    %937 = arith.index_cast %936 : i32 to index
    %c0_152 = arith.constant 0 : index
    %938 = vector.load %arg17[%937, %c0_152] : memref<48x32xf32, #tpu.memory_space<vmem>>, vector<2x32xf32>
    %939 = arith.index_cast %936 : i32 to index
    %c0_153 = arith.constant 0 : index
    %940 = vector.load %arg18[%939, %c0_153] : memref<48x32xf32, #tpu.memory_space<vmem>>, vector<2x32xf32>
    %941 = arith.addf %57, %938 : vector<2x32xf32>
    %942 = arith.addf %53, %906 : vector<2x32xf32>
    %943 = arith.maximumf %906, %941 : vector<2x32xf32>
    %944 = arith.maximumf %942, %938 : vector<2x32xf32>
    %945 = arith.subf %906, %943 : vector<2x32xf32>
    %946 = arith.subf %941, %943 : vector<2x32xf32>
    %947 = arith.subf %942, %944 : vector<2x32xf32>
    %948 = arith.subf %938, %944 : vector<2x32xf32>
    %949 = tpu.concatenate %945, %946, %947, %948 in 0 : vector<2x32xf32>, vector<2x32xf32>, vector<2x32xf32>, vector<2x32xf32> -> vector<8x32xf32>
    %950 = math.exp %949 : vector<8x32xf32>
    %951 = vector.extract_strided_slice %950 {offsets = [0, 0], sizes = [2, 32], strides = [1, 1]} : vector<8x32xf32> to vector<2x32xf32>
    %952 = vector.extract_strided_slice %950 {offsets = [2, 0], sizes = [2, 32], strides = [1, 1]} : vector<8x32xf32> to vector<2x32xf32>
    %953 = vector.extract_strided_slice %950 {offsets = [4, 0], sizes = [2, 32], strides = [1, 1]} : vector<8x32xf32> to vector<2x32xf32>
    %954 = vector.extract_strided_slice %950 {offsets = [6, 0], sizes = [2, 32], strides = [1, 1]} : vector<8x32xf32> to vector<2x32xf32>
    %955 = arith.mulf %951, %932 : vector<2x32xf32>
    %956 = arith.mulf %952, %940 : vector<2x32xf32>
    %957 = arith.addf %955, %956 : vector<2x32xf32>
    %958 = arith.mulf %951, %934 : vector<2x32xf32>
    %959 = arith.addf %958, %952 : vector<2x32xf32>
    %960 = tpu.reciprocal %959 {approx = true} : vector<2x32xf32> -> vector<2x32xf32>
    %961 = arith.mulf %959, %960 : vector<2x32xf32>
    %cst_154 = arith.constant 2.000000e+00 : f32
    %962 = vector.broadcast %cst_154 : f32 to vector<2x32xf32>
    %963 = arith.subf %962, %961 : vector<2x32xf32>
    %964 = arith.mulf %960, %963 : vector<2x32xf32>
    %965 = arith.mulf %957, %964 : vector<2x32xf32>
    %966 = arith.index_cast %936 : i32 to index
    %c0_155 = arith.constant 0 : index
    %967 = vector.load %arg19[%966, %c0_155] : memref<48x32xf32, #tpu.memory_space<vmem>>, vector<2x32xf32>
    tpu.vector_store %arg19[%966, %c0_155], %965 {strides = array<i32>} : memref<48x32xf32, #tpu.memory_space<vmem>>, vector<2x32xf32>,
    %968 = arith.mulf %953, %932 : vector<2x32xf32>
    %969 = arith.mulf %954, %940 : vector<2x32xf32>
    %970 = arith.addf %968, %969 : vector<2x32xf32>
    %971 = arith.mulf %953, %934 : vector<2x32xf32>
    %972 = arith.addf %971, %954 : vector<2x32xf32>
    %c24_i32 = arith.constant 24 : i32
    %c0_156 = arith.constant 0 : index
    %c0_157 = arith.constant 0 : index
    %973 = vector.load %arg19[%c0_156, %c0_157] : memref<48x32xf32, #tpu.memory_space<vmem>>, vector<48x32xf32>
    %974 = arith.mulf %49, %973 : vector<48x32xf32>
    %c0_158 = arith.constant 0 : index
    %c0_159 = arith.constant 0 : index
    %c0_160 = arith.constant 0 : index
    %975 = vector.load %arg9[%c0_158, %c0_159, %c0_160] : memref<2x32x32xf32, #tpu.memory_space<vmem>>, vector<1x32x32xf32>
    %976 = vector.shape_cast %975 : vector<1x32x32xf32> to vector<32x32xf32>
    %cst_161 = arith.constant dense<0.000000e+00> : vector<48x32xf32>
    %977 = tpu.matmul %974, %976, %cst_161 {dimension_numbers = #tpu.dot_dimension_numbers<[1], [0], [0], [1], [0, 0, 1, 1], [], []>} : vector<48x32xf32>, vector<32x32xf32>, vector<48x32xf32> -> vector<48x32xf32>
    %978 = arith.addf %0, %977 : vector<48x32xf32>
    %c0_162 = arith.constant 0 : index
    %c0_163 = arith.constant 0 : index
    %c0_164 = arith.constant 0 : index
    %979 = vector.load %arg3[%c0_162, %c0_163, %c0_164] : memref<2x1x32xf32, #tpu.memory_space<vmem>>, vector<1x1x32xf32>
    %980 = vector.shape_cast %979 : vector<1x1x32xf32> to vector<1x32xf32>
    %c0_165 = arith.constant 0 : index
    %c0_166 = arith.constant 0 : index
    %c0_167 = arith.constant 0 : index
    %981 = vector.load %arg4[%c0_165, %c0_166, %c0_167] : memref<2x1x32xf32, #tpu.memory_space<vmem>>, vector<1x1x32xf32>
    %982 = vector.shape_cast %981 : vector<1x1x32xf32> to vector<1x32xf32>
    %cst_168 = arith.constant dense<0.000000e+00> : vector<48xf32>
    %983 = vector.multi_reduction <add>, %978, %cst_168 [1] : vector<48x32xf32> to vector<48xf32>
    %984 = vector.shape_cast %983 : vector<48xf32> to vector<48x1xf32>
    %cst_169 = arith.constant 3.200000e+01 : f32
    %985 = vector.broadcast %cst_169 : f32 to vector<48x1xf32>
    %986 = arith.divf %984, %985 : vector<48x1xf32>
    %987 = vector.broadcast %986 : vector<48x1xf32> to vector<48x32xf32>
    %988 = arith.subf %978, %987 : vector<48x32xf32>
    %989 = arith.mulf %988, %988 : vector<48x32xf32>
    %cst_170 = arith.constant dense<0.000000e+00> : vector<48xf32>
    %990 = vector.multi_reduction <add>, %989, %cst_170 [1] : vector<48x32xf32> to vector<48xf32>
    %991 = vector.shape_cast %990 : vector<48xf32> to vector<48x1xf32>
    %cst_171 = arith.constant 3.200000e+01 : f32
    %992 = vector.broadcast %cst_171 : f32 to vector<48x1xf32>
    %993 = arith.divf %991, %992 : vector<48x1xf32>
    %994 = vector.broadcast %986 : vector<48x1xf32> to vector<48x32xf32>
    %995 = arith.subf %978, %994 : vector<48x32xf32>
    %cst_172 = arith.constant 9.99999974E-6 : f32
    %996 = vector.broadcast %cst_172 : f32 to vector<48x1xf32>
    %997 = arith.addf %993, %996 : vector<48x1xf32>
    %998 = math.rsqrt %997 : vector<48x1xf32>
    %999 = vector.broadcast %998 : vector<48x1xf32> to vector<48x32xf32>
    %1000 = arith.mulf %995, %999 : vector<48x32xf32>
    %1001 = vector.broadcast %980 : vector<1x32xf32> to vector<48x32xf32>
    %1002 = arith.mulf %1000, %1001 : vector<48x32xf32>
    %1003 = vector.broadcast %982 : vector<1x32xf32> to vector<48x32xf32>
    %1004 = arith.addf %1002, %1003 : vector<48x32xf32>
    %c2_i32_173 = arith.constant 2 : i32
    %1005 = tpu.dynamic_rotate %1004 by %c2_i32_173 dim 0 : vector<48x32xf32>, i32 -> vector<48x32xf32>
    %cst_174 = arith.constant 0.000000e+00 : f32
    %1006 = vector.broadcast %cst_174 : f32 to vector<48x32xf32>
    %1007 = arith.select %3, %1006, %1005 : vector<48x32xi1>, vector<48x32xf32>
    %c0_175 = arith.constant 0 : index
    %c0_176 = arith.constant 0 : index
    %c0_177 = arith.constant 0 : index
    %1008 = vector.load %arg10[%c0_175, %c0_176, %c0_177] : memref<2x32x160xf32, #tpu.memory_space<vmem>>, vector<1x32x160xf32>
    %1009 = vector.shape_cast %1008 : vector<1x32x160xf32> to vector<32x160xf32>
    %cst_178 = arith.constant dense<0.000000e+00> : vector<48x160xf32>
    %1010 = tpu.matmul %1004, %1009, %cst_178 {dimension_numbers = #tpu.dot_dimension_numbers<[1], [0], [0], [1], [0, 0, 1, 1], [], []>} : vector<48x32xf32>, vector<32x160xf32>, vector<48x160xf32> -> vector<48x160xf32>
    %c0_179 = arith.constant 0 : index
    %c0_180 = arith.constant 0 : index
    %c0_181 = arith.constant 0 : index
    %1011 = vector.load %arg11[%c0_179, %c0_180, %c0_181] : memref<2x32x160xf32, #tpu.memory_space<vmem>>, vector<1x32x160xf32>
    %1012 = vector.shape_cast %1011 : vector<1x32x160xf32> to vector<32x160xf32>
    %cst_182 = arith.constant dense<0.000000e+00> : vector<48x160xf32>
    %1013 = tpu.matmul %1007, %1012, %cst_182 {dimension_numbers = #tpu.dot_dimension_numbers<[1], [0], [0], [1], [0, 0, 1, 1], [], []>} : vector<48x32xf32>, vector<32x160xf32>, vector<48x160xf32> -> vector<48x160xf32>
    %1014 = arith.addf %1010, %1013 : vector<48x160xf32>
    %1015 = vector.extract_strided_slice %1014 {offsets = [0, 0], sizes = [48, 128], strides = [1, 1]} : vector<48x160xf32> to vector<48x128xf32>
    %cst_183 = arith.constant 0.000000e+00 : f32
    %1016 = vector.broadcast %cst_183 : f32 to vector<48x128xf32>
    %1017 = arith.maximumf %1015, %1016 : vector<48x128xf32>
    %1018 = arith.mulf %1017, %1017 : vector<48x128xf32>
    %1019 = vector.extract_strided_slice %1014 {offsets = [0, 128], sizes = [48, 32], strides = [1, 1]} : vector<48x160xf32> to vector<48x32xf32>
    %1020 = arith.negf %1019 : vector<48x32xf32>
    %1021 = math.exp %1020 : vector<48x32xf32>
    %cst_184 = arith.constant 1.000000e+00 : f32
    %1022 = vector.broadcast %cst_184 : f32 to vector<48x32xf32>
    %1023 = arith.addf %1022, %1021 : vector<48x32xf32>
    %1024 = arith.divf %1022, %1023 : vector<48x32xf32>
    %c0_185 = arith.constant 0 : index
    %c0_186 = arith.constant 0 : index
    %c0_187 = arith.constant 0 : index
    %1025 = vector.load %arg12[%c0_185, %c0_186, %c0_187] : memref<2x128x32xf32, #tpu.memory_space<vmem>>, vector<1x128x32xf32>
    %1026 = vector.shape_cast %1025 : vector<1x128x32xf32> to vector<128x32xf32>
    %cst_188 = arith.constant dense<0.000000e+00> : vector<48x32xf32>
    %1027 = tpu.matmul %1018, %1026, %cst_188 {dimension_numbers = #tpu.dot_dimension_numbers<[1], [0], [0], [1], [0, 0, 1, 1], [], []>} : vector<48x128xf32>, vector<128x32xf32>, vector<48x32xf32> -> vector<48x32xf32>
    %1028 = arith.mulf %1024, %1027 : vector<48x32xf32>
    %1029 = arith.addf %978, %1028 : vector<48x32xf32>
    %c1 = arith.constant 1 : index
    %c0_189 = arith.constant 0 : index
    %c0_190 = arith.constant 0 : index
    %1030 = vector.load %arg1[%c1, %c0_189, %c0_190] : memref<2x1x32xf32, #tpu.memory_space<vmem>>, vector<1x1x32xf32>
    %1031 = vector.shape_cast %1030 : vector<1x1x32xf32> to vector<1x32xf32>
    %c1_191 = arith.constant 1 : index
    %c0_192 = arith.constant 0 : index
    %c0_193 = arith.constant 0 : index
    %1032 = vector.load %arg2[%c1_191, %c0_192, %c0_193] : memref<2x1x32xf32, #tpu.memory_space<vmem>>, vector<1x1x32xf32>
    %1033 = vector.shape_cast %1032 : vector<1x1x32xf32> to vector<1x32xf32>
    %cst_194 = arith.constant dense<0.000000e+00> : vector<48xf32>
    %1034 = vector.multi_reduction <add>, %1029, %cst_194 [1] : vector<48x32xf32> to vector<48xf32>
    %1035 = vector.shape_cast %1034 : vector<48xf32> to vector<48x1xf32>
    %cst_195 = arith.constant 3.200000e+01 : f32
    %1036 = vector.broadcast %cst_195 : f32 to vector<48x1xf32>
    %1037 = arith.divf %1035, %1036 : vector<48x1xf32>
    %1038 = vector.broadcast %1037 : vector<48x1xf32> to vector<48x32xf32>
    %1039 = arith.subf %1029, %1038 : vector<48x32xf32>
    %1040 = arith.mulf %1039, %1039 : vector<48x32xf32>
    %cst_196 = arith.constant dense<0.000000e+00> : vector<48xf32>
    %1041 = vector.multi_reduction <add>, %1040, %cst_196 [1] : vector<48x32xf32> to vector<48xf32>
    %1042 = vector.shape_cast %1041 : vector<48xf32> to vector<48x1xf32>
    %cst_197 = arith.constant 3.200000e+01 : f32
    %1043 = vector.broadcast %cst_197 : f32 to vector<48x1xf32>
    %1044 = arith.divf %1042, %1043 : vector<48x1xf32>
    %1045 = vector.broadcast %1037 : vector<48x1xf32> to vector<48x32xf32>
    %1046 = arith.subf %1029, %1045 : vector<48x32xf32>
    %cst_198 = arith.constant 9.99999974E-6 : f32
    %1047 = vector.broadcast %cst_198 : f32 to vector<48x1xf32>
    %1048 = arith.addf %1044, %1047 : vector<48x1xf32>
    %1049 = math.rsqrt %1048 : vector<48x1xf32>
    %1050 = vector.broadcast %1049 : vector<48x1xf32> to vector<48x32xf32>
    %1051 = arith.mulf %1046, %1050 : vector<48x32xf32>
    %1052 = vector.broadcast %1031 : vector<1x32xf32> to vector<48x32xf32>
    %1053 = arith.mulf %1051, %1052 : vector<48x32xf32>
    %1054 = vector.broadcast %1033 : vector<1x32xf32> to vector<48x32xf32>
    %1055 = arith.addf %1053, %1054 : vector<48x32xf32>
    %c2_i32_199 = arith.constant 2 : i32
    %1056 = tpu.dynamic_rotate %1055 by %c2_i32_199 dim 0 : vector<48x32xf32>, i32 -> vector<48x32xf32>
    %cst_200 = arith.constant 0.000000e+00 : f32
    %1057 = vector.broadcast %cst_200 : f32 to vector<48x32xf32>
    %1058 = arith.select %3, %1057, %1056 : vector<48x32xi1>, vector<48x32xf32>
    %c1_201 = arith.constant 1 : index
    %c0_202 = arith.constant 0 : index
    %c0_203 = arith.constant 0 : index
    %1059 = vector.load %arg7[%c1_201, %c0_202, %c0_203] : memref<2x32x96xf32, #tpu.memory_space<vmem>>, vector<1x32x96xf32>
    %1060 = vector.shape_cast %1059 : vector<1x32x96xf32> to vector<32x96xf32>
    %cst_204 = arith.constant dense<0.000000e+00> : vector<48x96xf32>
    %1061 = tpu.matmul %1055, %1060, %cst_204 {dimension_numbers = #tpu.dot_dimension_numbers<[1], [0], [0], [1], [0, 0, 1, 1], [], []>} : vector<48x32xf32>, vector<32x96xf32>, vector<48x96xf32> -> vector<48x96xf32>
    %c1_205 = arith.constant 1 : index
    %c0_206 = arith.constant 0 : index
    %c0_207 = arith.constant 0 : index
    %1062 = vector.load %arg8[%c1_205, %c0_206, %c0_207] : memref<2x32x96xf32, #tpu.memory_space<vmem>>, vector<1x32x96xf32>
    %1063 = vector.shape_cast %1062 : vector<1x32x96xf32> to vector<32x96xf32>
    %cst_208 = arith.constant dense<0.000000e+00> : vector<48x96xf32>
    %1064 = tpu.matmul %1058, %1063, %cst_208 {dimension_numbers = #tpu.dot_dimension_numbers<[1], [0], [0], [1], [0, 0, 1, 1], [], []>} : vector<48x32xf32>, vector<32x96xf32>, vector<48x96xf32> -> vector<48x96xf32>
    %1065 = arith.addf %1061, %1064 : vector<48x96xf32>
    %1066 = vector.extract_strided_slice %1065 {offsets = [0, 0], sizes = [48, 32], strides = [1, 1]} : vector<48x96xf32> to vector<48x32xf32>
    %c0_209 = arith.constant 0 : index
    %c0_210 = arith.constant 0 : index
    %1067 = vector.load %arg17[%c0_209, %c0_210] : memref<48x32xf32, #tpu.memory_space<vmem>>, vector<48x32xf32>
    tpu.vector_store %arg17[%c0_209, %c0_210], %1066 {strides = array<i32>} : memref<48x32xf32, #tpu.memory_space<vmem>>, vector<48x32xf32>,
    %1068 = vector.extract_strided_slice %1065 {offsets = [0, 32], sizes = [48, 32], strides = [1, 1]} : vector<48x96xf32> to vector<48x32xf32>
    %c0_211 = arith.constant 0 : index
    %c0_212 = arith.constant 0 : index
    %1069 = vector.load %arg18[%c0_211, %c0_212] : memref<48x32xf32, #tpu.memory_space<vmem>>, vector<48x32xf32>
    tpu.vector_store %arg18[%c0_211, %c0_212], %1068 {strides = array<i32>} : memref<48x32xf32, #tpu.memory_space<vmem>>, vector<48x32xf32>,
    %1070 = vector.extract_strided_slice %1065 {offsets = [0, 64], sizes = [48, 32], strides = [1, 1]} : vector<48x96xf32> to vector<48x32xf32>
    %1071 = arith.negf %1070 : vector<48x32xf32>
    %1072 = math.exp %1071 : vector<48x32xf32>
    %cst_213 = arith.constant 1.000000e+00 : f32
    %1073 = vector.broadcast %cst_213 : f32 to vector<48x32xf32>
    %1074 = arith.addf %1073, %1072 : vector<48x32xf32>
    %1075 = arith.divf %1073, %1074 : vector<48x32xf32>
    %c1_214 = arith.constant 1 : index
    %c0_215 = arith.constant 0 : index
    %c0_216 = arith.constant 0 : index
    %1076 = vector.load %arg5[%c1_214, %c0_215, %c0_216] : memref<2x1x32xf32, #tpu.memory_space<vmem>>, vector<1x1x32xf32>
    %1077 = vector.shape_cast %1076 : vector<1x1x32xf32> to vector<1x32xf32>
    %1078 = vector.shape_cast %1077 : vector<1x32xf32> to vector<1x32xf32>
    %1079 = vector.broadcast %1078 : vector<1x32xf32> to vector<2x32xf32>
    %c1_217 = arith.constant 1 : index
    %c0_218 = arith.constant 0 : index
    %c0_219 = arith.constant 0 : index
    %1080 = vector.load %arg6[%c1_217, %c0_218, %c0_219] : memref<2x1x32xf32, #tpu.memory_space<vmem>>, vector<1x1x32xf32>
    %1081 = vector.shape_cast %1080 : vector<1x1x32xf32> to vector<1x32xf32>
    %1082 = vector.shape_cast %1081 : vector<1x32xf32> to vector<1x32xf32>
    %1083 = vector.broadcast %1082 : vector<1x32xf32> to vector<2x32xf32>
    %cst_220 = arith.constant 0.000000e+00 : f32
    %1084 = vector.broadcast %cst_220 : f32 to vector<2x32xf32>
    %cst_221 = arith.constant 0.000000e+00 : f32
    %1085 = vector.broadcast %cst_221 : f32 to vector<2x32xf32>
    %cst_222 = arith.constant -9.99999968E+37 : f32
    %1086 = vector.broadcast %cst_222 : f32 to vector<2x32xf32>
    %c0_i32_223 = arith.constant 0 : i32
    %c2_i32_224 = arith.constant 2 : i32
    %1087 = arith.muli %c0_i32_223, %c2_i32_224 : i32
    %1088 = tpu.assume_multiple %1087, 2 : i32
    %1089 = arith.index_cast %1088 : i32 to index
    %c0_225 = arith.constant 0 : index
    %1090 = vector.load %arg17[%1089, %c0_225] : memref<48x32xf32, #tpu.memory_space<vmem>>, vector<2x32xf32>
    %1091 = arith.index_cast %1088 : i32 to index
    %c0_226 = arith.constant 0 : index
    %1092 = vector.load %arg18[%1091, %c0_226] : memref<48x32xf32, #tpu.memory_space<vmem>>, vector<2x32xf32>
    %1093 = arith.addf %1083, %1090 : vector<2x32xf32>
    %1094 = arith.addf %1079, %1086 : vector<2x32xf32>
    %1095 = arith.maximumf %1086, %1093 : vector<2x32xf32>
    %1096 = arith.maximumf %1094, %1090 : vector<2x32xf32>
    %1097 = arith.subf %1086, %1095 : vector<2x32xf32>
    %1098 = arith.subf %1093, %1095 : vector<2x32xf32>
    %1099 = arith.subf %1094, %1096 : vector<2x32xf32>
    %1100 = arith.subf %1090, %1096 : vector<2x32xf32>
    %1101 = tpu.concatenate %1097, %1098, %1099, %1100 in 0 : vector<2x32xf32>, vector<2x32xf32>, vector<2x32xf32>, vector<2x32xf32> -> vector<8x32xf32>
    %1102 = math.exp %1101 : vector<8x32xf32>
    %1103 = vector.extract_strided_slice %1102 {offsets = [0, 0], sizes = [2, 32], strides = [1, 1]} : vector<8x32xf32> to vector<2x32xf32>
    %1104 = vector.extract_strided_slice %1102 {offsets = [2, 0], sizes = [2, 32], strides = [1, 1]} : vector<8x32xf32> to vector<2x32xf32>
    %1105 = vector.extract_strided_slice %1102 {offsets = [4, 0], sizes = [2, 32], strides = [1, 1]} : vector<8x32xf32> to vector<2x32xf32>
    %1106 = vector.extract_strided_slice %1102 {offsets = [6, 0], sizes = [2, 32], strides = [1, 1]} : vector<8x32xf32> to vector<2x32xf32>
    %1107 = arith.mulf %1103, %1084 : vector<2x32xf32>
    %1108 = arith.mulf %1104, %1092 : vector<2x32xf32>
    %1109 = arith.addf %1107, %1108 : vector<2x32xf32>
    %1110 = arith.mulf %1103, %1085 : vector<2x32xf32>
    %1111 = arith.addf %1110, %1104 : vector<2x32xf32>
    %1112 = tpu.reciprocal %1111 {approx = true} : vector<2x32xf32> -> vector<2x32xf32>
    %1113 = arith.mulf %1111, %1112 : vector<2x32xf32>
    %cst_227 = arith.constant 2.000000e+00 : f32
    %1114 = vector.broadcast %cst_227 : f32 to vector<2x32xf32>
    %1115 = arith.subf %1114, %1113 : vector<2x32xf32>
    %1116 = arith.mulf %1112, %1115 : vector<2x32xf32>
    %1117 = arith.mulf %1109, %1116 : vector<2x32xf32>
    %1118 = arith.index_cast %1088 : i32 to index
    %c0_228 = arith.constant 0 : index
    %1119 = vector.load %arg19[%1118, %c0_228] : memref<48x32xf32, #tpu.memory_space<vmem>>, vector<2x32xf32>
    tpu.vector_store %arg19[%1118, %c0_228], %1117 {strides = array<i32>} : memref<48x32xf32, #tpu.memory_space<vmem>>, vector<2x32xf32>,
    %1120 = arith.mulf %1105, %1084 : vector<2x32xf32>
    %1121 = arith.mulf %1106, %1092 : vector<2x32xf32>
    %1122 = arith.addf %1120, %1121 : vector<2x32xf32>
    %1123 = arith.mulf %1105, %1085 : vector<2x32xf32>
    %1124 = arith.addf %1123, %1106 : vector<2x32xf32>
    %c1_i32_229 = arith.constant 1 : i32
    %c2_i32_230 = arith.constant 2 : i32
    %1125 = arith.muli %c1_i32_229, %c2_i32_230 : i32
    %1126 = tpu.assume_multiple %1125, 2 : i32
    %1127 = arith.index_cast %1126 : i32 to index
    %c0_231 = arith.constant 0 : index
    %1128 = vector.load %arg17[%1127, %c0_231] : memref<48x32xf32, #tpu.memory_space<vmem>>, vector<2x32xf32>
    %1129 = arith.index_cast %1126 : i32 to index
    %c0_232 = arith.constant 0 : index
    %1130 = vector.load %arg18[%1129, %c0_232] : memref<48x32xf32, #tpu.memory_space<vmem>>, vector<2x32xf32>
    %1131 = arith.addf %1083, %1128 : vector<2x32xf32>
    %1132 = arith.addf %1079, %1096 : vector<2x32xf32>
    %1133 = arith.maximumf %1096, %1131 : vector<2x32xf32>
    %1134 = arith.maximumf %1132, %1128 : vector<2x32xf32>
    %1135 = arith.subf %1096, %1133 : vector<2x32xf32>
    %1136 = arith.subf %1131, %1133 : vector<2x32xf32>
    %1137 = arith.subf %1132, %1134 : vector<2x32xf32>
    %1138 = arith.subf %1128, %1134 : vector<2x32xf32>
    %1139 = tpu.concatenate %1135, %1136, %1137, %1138 in 0 : vector<2x32xf32>, vector<2x32xf32>, vector<2x32xf32>, vector<2x32xf32> -> vector<8x32xf32>
    %1140 = math.exp %1139 : vector<8x32xf32>
    %1141 = vector.extract_strided_slice %1140 {offsets = [0, 0], sizes = [2, 32], strides = [1, 1]} : vector<8x32xf32> to vector<2x32xf32>
    %1142 = vector.extract_strided_slice %1140 {offsets = [2, 0], sizes = [2, 32], strides = [1, 1]} : vector<8x32xf32> to vector<2x32xf32>
    %1143 = vector.extract_strided_slice %1140 {offsets = [4, 0], sizes = [2, 32], strides = [1, 1]} : vector<8x32xf32> to vector<2x32xf32>
    %1144 = vector.extract_strided_slice %1140 {offsets = [6, 0], sizes = [2, 32], strides = [1, 1]} : vector<8x32xf32> to vector<2x32xf32>
    %1145 = arith.mulf %1141, %1122 : vector<2x32xf32>
    %1146 = arith.mulf %1142, %1130 : vector<2x32xf32>
    %1147 = arith.addf %1145, %1146 : vector<2x32xf32>
    %1148 = arith.mulf %1141, %1124 : vector<2x32xf32>
    %1149 = arith.addf %1148, %1142 : vector<2x32xf32>
    %1150 = tpu.reciprocal %1149 {approx = true} : vector<2x32xf32> -> vector<2x32xf32>
    %1151 = arith.mulf %1149, %1150 : vector<2x32xf32>
    %cst_233 = arith.constant 2.000000e+00 : f32
    %1152 = vector.broadcast %cst_233 : f32 to vector<2x32xf32>
    %1153 = arith.subf %1152, %1151 : vector<2x32xf32>
    %1154 = arith.mulf %1150, %1153 : vector<2x32xf32>
    %1155 = arith.mulf %1147, %1154 : vector<2x32xf32>
    %1156 = arith.index_cast %1126 : i32 to index
    %c0_234 = arith.constant 0 : index
    %1157 = vector.load %arg19[%1156, %c0_234] : memref<48x32xf32, #tpu.memory_space<vmem>>, vector<2x32xf32>
    tpu.vector_store %arg19[%1156, %c0_234], %1155 {strides = array<i32>} : memref<48x32xf32, #tpu.memory_space<vmem>>, vector<2x32xf32>,
    %1158 = arith.mulf %1143, %1122 : vector<2x32xf32>
    %1159 = arith.mulf %1144, %1130 : vector<2x32xf32>
    %1160 = arith.addf %1158, %1159 : vector<2x32xf32>
    %1161 = arith.mulf %1143, %1124 : vector<2x32xf32>
    %1162 = arith.addf %1161, %1144 : vector<2x32xf32>
    %c2_i32_235 = arith.constant 2 : i32
    %c2_i32_236 = arith.constant 2 : i32
    %1163 = arith.muli %c2_i32_235, %c2_i32_236 : i32
    %1164 = tpu.assume_multiple %1163, 2 : i32
    %1165 = arith.index_cast %1164 : i32 to index
    %c0_237 = arith.constant 0 : index
    %1166 = vector.load %arg17[%1165, %c0_237] : memref<48x32xf32, #tpu.memory_space<vmem>>, vector<2x32xf32>
    %1167 = arith.index_cast %1164 : i32 to index
    %c0_238 = arith.constant 0 : index
    %1168 = vector.load %arg18[%1167, %c0_238] : memref<48x32xf32, #tpu.memory_space<vmem>>, vector<2x32xf32>
    %1169 = arith.addf %1083, %1166 : vector<2x32xf32>
    %1170 = arith.addf %1079, %1134 : vector<2x32xf32>
    %1171 = arith.maximumf %1134, %1169 : vector<2x32xf32>
    %1172 = arith.maximumf %1170, %1166 : vector<2x32xf32>
    %1173 = arith.subf %1134, %1171 : vector<2x32xf32>
    %1174 = arith.subf %1169, %1171 : vector<2x32xf32>
    %1175 = arith.subf %1170, %1172 : vector<2x32xf32>
    %1176 = arith.subf %1166, %1172 : vector<2x32xf32>
    %1177 = tpu.concatenate %1173, %1174, %1175, %1176 in 0 : vector<2x32xf32>, vector<2x32xf32>, vector<2x32xf32>, vector<2x32xf32> -> vector<8x32xf32>
    %1178 = math.exp %1177 : vector<8x32xf32>
    %1179 = vector.extract_strided_slice %1178 {offsets = [0, 0], sizes = [2, 32], strides = [1, 1]} : vector<8x32xf32> to vector<2x32xf32>
    %1180 = vector.extract_strided_slice %1178 {offsets = [2, 0], sizes = [2, 32], strides = [1, 1]} : vector<8x32xf32> to vector<2x32xf32>
    %1181 = vector.extract_strided_slice %1178 {offsets = [4, 0], sizes = [2, 32], strides = [1, 1]} : vector<8x32xf32> to vector<2x32xf32>
    %1182 = vector.extract_strided_slice %1178 {offsets = [6, 0], sizes = [2, 32], strides = [1, 1]} : vector<8x32xf32> to vector<2x32xf32>
    %1183 = arith.mulf %1179, %1160 : vector<2x32xf32>
    %1184 = arith.mulf %1180, %1168 : vector<2x32xf32>
    %1185 = arith.addf %1183, %1184 : vector<2x32xf32>
    %1186 = arith.mulf %1179, %1162 : vector<2x32xf32>
    %1187 = arith.addf %1186, %1180 : vector<2x32xf32>
    %1188 = tpu.reciprocal %1187 {approx = true} : vector<2x32xf32> -> vector<2x32xf32>
    %1189 = arith.mulf %1187, %1188 : vector<2x32xf32>
    %cst_239 = arith.constant 2.000000e+00 : f32
    %1190 = vector.broadcast %cst_239 : f32 to vector<2x32xf32>
    %1191 = arith.subf %1190, %1189 : vector<2x32xf32>
    %1192 = arith.mulf %1188, %1191 : vector<2x32xf32>
    %1193 = arith.mulf %1185, %1192 : vector<2x32xf32>
    %1194 = arith.index_cast %1164 : i32 to index
    %c0_240 = arith.constant 0 : index
    %1195 = vector.load %arg19[%1194, %c0_240] : memref<48x32xf32, #tpu.memory_space<vmem>>, vector<2x32xf32>
    tpu.vector_store %arg19[%1194, %c0_240], %1193 {strides = array<i32>} : memref<48x32xf32, #tpu.memory_space<vmem>>, vector<2x32xf32>,
    %1196 = arith.mulf %1181, %1160 : vector<2x32xf32>
    %1197 = arith.mulf %1182, %1168 : vector<2x32xf32>
    %1198 = arith.addf %1196, %1197 : vector<2x32xf32>
    %1199 = arith.mulf %1181, %1162 : vector<2x32xf32>
    %1200 = arith.addf %1199, %1182 : vector<2x32xf32>
    %c3_i32_241 = arith.constant 3 : i32
    %c2_i32_242 = arith.constant 2 : i32
    %1201 = arith.muli %c3_i32_241, %c2_i32_242 : i32
    %1202 = tpu.assume_multiple %1201, 2 : i32
    %1203 = arith.index_cast %1202 : i32 to index
    %c0_243 = arith.constant 0 : index
    %1204 = vector.load %arg17[%1203, %c0_243] : memref<48x32xf32, #tpu.memory_space<vmem>>, vector<2x32xf32>
    %1205 = arith.index_cast %1202 : i32 to index
    %c0_244 = arith.constant 0 : index
    %1206 = vector.load %arg18[%1205, %c0_244] : memref<48x32xf32, #tpu.memory_space<vmem>>, vector<2x32xf32>
    %1207 = arith.addf %1083, %1204 : vector<2x32xf32>
    %1208 = arith.addf %1079, %1172 : vector<2x32xf32>
    %1209 = arith.maximumf %1172, %1207 : vector<2x32xf32>
    %1210 = arith.maximumf %1208, %1204 : vector<2x32xf32>
    %1211 = arith.subf %1172, %1209 : vector<2x32xf32>
    %1212 = arith.subf %1207, %1209 : vector<2x32xf32>
    %1213 = arith.subf %1208, %1210 : vector<2x32xf32>
    %1214 = arith.subf %1204, %1210 : vector<2x32xf32>
    %1215 = tpu.concatenate %1211, %1212, %1213, %1214 in 0 : vector<2x32xf32>, vector<2x32xf32>, vector<2x32xf32>, vector<2x32xf32> -> vector<8x32xf32>
    %1216 = math.exp %1215 : vector<8x32xf32>
    %1217 = vector.extract_strided_slice %1216 {offsets = [0, 0], sizes = [2, 32], strides = [1, 1]} : vector<8x32xf32> to vector<2x32xf32>
    %1218 = vector.extract_strided_slice %1216 {offsets = [2, 0], sizes = [2, 32], strides = [1, 1]} : vector<8x32xf32> to vector<2x32xf32>
    %1219 = vector.extract_strided_slice %1216 {offsets = [4, 0], sizes = [2, 32], strides = [1, 1]} : vector<8x32xf32> to vector<2x32xf32>
    %1220 = vector.extract_strided_slice %1216 {offsets = [6, 0], sizes = [2, 32], strides = [1, 1]} : vector<8x32xf32> to vector<2x32xf32>
    %1221 = arith.mulf %1217, %1198 : vector<2x32xf32>
    %1222 = arith.mulf %1218, %1206 : vector<2x32xf32>
    %1223 = arith.addf %1221, %1222 : vector<2x32xf32>
    %1224 = arith.mulf %1217, %1200 : vector<2x32xf32>
    %1225 = arith.addf %1224, %1218 : vector<2x32xf32>
    %1226 = tpu.reciprocal %1225 {approx = true} : vector<2x32xf32> -> vector<2x32xf32>
    %1227 = arith.mulf %1225, %1226 : vector<2x32xf32>
    %cst_245 = arith.constant 2.000000e+00 : f32
    %1228 = vector.broadcast %cst_245 : f32 to vector<2x32xf32>
    %1229 = arith.subf %1228, %1227 : vector<2x32xf32>
    %1230 = arith.mulf %1226, %1229 : vector<2x32xf32>
    %1231 = arith.mulf %1223, %1230 : vector<2x32xf32>
    %1232 = arith.index_cast %1202 : i32 to index
    %c0_246 = arith.constant 0 : index
    %1233 = vector.load %arg19[%1232, %c0_246] : memref<48x32xf32, #tpu.memory_space<vmem>>, vector<2x32xf32>
    tpu.vector_store %arg19[%1232, %c0_246], %1231 {strides = array<i32>} : memref<48x32xf32, #tpu.memory_space<vmem>>, vector<2x32xf32>,
    %1234 = arith.mulf %1219, %1198 : vector<2x32xf32>
    %1235 = arith.mulf %1220, %1206 : vector<2x32xf32>
    %1236 = arith.addf %1234, %1235 : vector<2x32xf32>
    %1237 = arith.mulf %1219, %1200 : vector<2x32xf32>
    %1238 = arith.addf %1237, %1220 : vector<2x32xf32>
    %c4_i32_247 = arith.constant 4 : i32
    %c2_i32_248 = arith.constant 2 : i32
    %1239 = arith.muli %c4_i32_247, %c2_i32_248 : i32
    %1240 = tpu.assume_multiple %1239, 2 : i32
    %1241 = arith.index_cast %1240 : i32 to index
    %c0_249 = arith.constant 0 : index
    %1242 = vector.load %arg17[%1241, %c0_249] : memref<48x32xf32, #tpu.memory_space<vmem>>, vector<2x32xf32>
    %1243 = arith.index_cast %1240 : i32 to index
    %c0_250 = arith.constant 0 : index
    %1244 = vector.load %arg18[%1243, %c0_250] : memref<48x32xf32, #tpu.memory_space<vmem>>, vector<2x32xf32>
    %1245 = arith.addf %1083, %1242 : vector<2x32xf32>
    %1246 = arith.addf %1079, %1210 : vector<2x32xf32>
    %1247 = arith.maximumf %1210, %1245 : vector<2x32xf32>
    %1248 = arith.maximumf %1246, %1242 : vector<2x32xf32>
    %1249 = arith.subf %1210, %1247 : vector<2x32xf32>
    %1250 = arith.subf %1245, %1247 : vector<2x32xf32>
    %1251 = arith.subf %1246, %1248 : vector<2x32xf32>
    %1252 = arith.subf %1242, %1248 : vector<2x32xf32>
    %1253 = tpu.concatenate %1249, %1250, %1251, %1252 in 0 : vector<2x32xf32>, vector<2x32xf32>, vector<2x32xf32>, vector<2x32xf32> -> vector<8x32xf32>
    %1254 = math.exp %1253 : vector<8x32xf32>
    %1255 = vector.extract_strided_slice %1254 {offsets = [0, 0], sizes = [2, 32], strides = [1, 1]} : vector<8x32xf32> to vector<2x32xf32>
    %1256 = vector.extract_strided_slice %1254 {offsets = [2, 0], sizes = [2, 32], strides = [1, 1]} : vector<8x32xf32> to vector<2x32xf32>
    %1257 = vector.extract_strided_slice %1254 {offsets = [4, 0], sizes = [2, 32], strides = [1, 1]} : vector<8x32xf32> to vector<2x32xf32>
    %1258 = vector.extract_strided_slice %1254 {offsets = [6, 0], sizes = [2, 32], strides = [1, 1]} : vector<8x32xf32> to vector<2x32xf32>
    %1259 = arith.mulf %1255, %1236 : vector<2x32xf32>
    %1260 = arith.mulf %1256, %1244 : vector<2x32xf32>
    %1261 = arith.addf %1259, %1260 : vector<2x32xf32>
    %1262 = arith.mulf %1255, %1238 : vector<2x32xf32>
    %1263 = arith.addf %1262, %1256 : vector<2x32xf32>
    %1264 = tpu.reciprocal %1263 {approx = true} : vector<2x32xf32> -> vector<2x32xf32>
    %1265 = arith.mulf %1263, %1264 : vector<2x32xf32>
    %cst_251 = arith.constant 2.000000e+00 : f32
    %1266 = vector.broadcast %cst_251 : f32 to vector<2x32xf32>
    %1267 = arith.subf %1266, %1265 : vector<2x32xf32>
    %1268 = arith.mulf %1264, %1267 : vector<2x32xf32>
    %1269 = arith.mulf %1261, %1268 : vector<2x32xf32>
    %1270 = arith.index_cast %1240 : i32 to index
    %c0_252 = arith.constant 0 : index
    %1271 = vector.load %arg19[%1270, %c0_252] : memref<48x32xf32, #tpu.memory_space<vmem>>, vector<2x32xf32>
    tpu.vector_store %arg19[%1270, %c0_252], %1269 {strides = array<i32>} : memref<48x32xf32, #tpu.memory_space<vmem>>, vector<2x32xf32>,
    %1272 = arith.mulf %1257, %1236 : vector<2x32xf32>
    %1273 = arith.mulf %1258, %1244 : vector<2x32xf32>
    %1274 = arith.addf %1272, %1273 : vector<2x32xf32>
    %1275 = arith.mulf %1257, %1238 : vector<2x32xf32>
    %1276 = arith.addf %1275, %1258 : vector<2x32xf32>
    %c5_i32_253 = arith.constant 5 : i32
    %c2_i32_254 = arith.constant 2 : i32
    %1277 = arith.muli %c5_i32_253, %c2_i32_254 : i32
    %1278 = tpu.assume_multiple %1277, 2 : i32
    %1279 = arith.index_cast %1278 : i32 to index
    %c0_255 = arith.constant 0 : index
    %1280 = vector.load %arg17[%1279, %c0_255] : memref<48x32xf32, #tpu.memory_space<vmem>>, vector<2x32xf32>
    %1281 = arith.index_cast %1278 : i32 to index
    %c0_256 = arith.constant 0 : index
    %1282 = vector.load %arg18[%1281, %c0_256] : memref<48x32xf32, #tpu.memory_space<vmem>>, vector<2x32xf32>
    %1283 = arith.addf %1083, %1280 : vector<2x32xf32>
    %1284 = arith.addf %1079, %1248 : vector<2x32xf32>
    %1285 = arith.maximumf %1248, %1283 : vector<2x32xf32>
    %1286 = arith.maximumf %1284, %1280 : vector<2x32xf32>
    %1287 = arith.subf %1248, %1285 : vector<2x32xf32>
    %1288 = arith.subf %1283, %1285 : vector<2x32xf32>
    %1289 = arith.subf %1284, %1286 : vector<2x32xf32>
    %1290 = arith.subf %1280, %1286 : vector<2x32xf32>
    %1291 = tpu.concatenate %1287, %1288, %1289, %1290 in 0 : vector<2x32xf32>, vector<2x32xf32>, vector<2x32xf32>, vector<2x32xf32> -> vector<8x32xf32>
    %1292 = math.exp %1291 : vector<8x32xf32>
    %1293 = vector.extract_strided_slice %1292 {offsets = [0, 0], sizes = [2, 32], strides = [1, 1]} : vector<8x32xf32> to vector<2x32xf32>
    %1294 = vector.extract_strided_slice %1292 {offsets = [2, 0], sizes = [2, 32], strides = [1, 1]} : vector<8x32xf32> to vector<2x32xf32>
    %1295 = vector.extract_strided_slice %1292 {offsets = [4, 0], sizes = [2, 32], strides = [1, 1]} : vector<8x32xf32> to vector<2x32xf32>
    %1296 = vector.extract_strided_slice %1292 {offsets = [6, 0], sizes = [2, 32], strides = [1, 1]} : vector<8x32xf32> to vector<2x32xf32>
    %1297 = arith.mulf %1293, %1274 : vector<2x32xf32>
    %1298 = arith.mulf %1294, %1282 : vector<2x32xf32>
    %1299 = arith.addf %1297, %1298 : vector<2x32xf32>
    %1300 = arith.mulf %1293, %1276 : vector<2x32xf32>
    %1301 = arith.addf %1300, %1294 : vector<2x32xf32>
    %1302 = tpu.reciprocal %1301 {approx = true} : vector<2x32xf32> -> vector<2x32xf32>
    %1303 = arith.mulf %1301, %1302 : vector<2x32xf32>
    %cst_257 = arith.constant 2.000000e+00 : f32
    %1304 = vector.broadcast %cst_257 : f32 to vector<2x32xf32>
    %1305 = arith.subf %1304, %1303 : vector<2x32xf32>
    %1306 = arith.mulf %1302, %1305 : vector<2x32xf32>
    %1307 = arith.mulf %1299, %1306 : vector<2x32xf32>
    %1308 = arith.index_cast %1278 : i32 to index
    %c0_258 = arith.constant 0 : index
    %1309 = vector.load %arg19[%1308, %c0_258] : memref<48x32xf32, #tpu.memory_space<vmem>>, vector<2x32xf32>
    tpu.vector_store %arg19[%1308, %c0_258], %1307 {strides = array<i32>} : memref<48x32xf32, #tpu.memory_space<vmem>>, vector<2x32xf32>,
    %1310 = arith.mulf %1295, %1274 : vector<2x32xf32>
    %1311 = arith.mulf %1296, %1282 : vector<2x32xf32>
    %1312 = arith.addf %1310, %1311 : vector<2x32xf32>
    %1313 = arith.mulf %1295, %1276 : vector<2x32xf32>
    %1314 = arith.addf %1313, %1296 : vector<2x32xf32>
    %c6_i32_259 = arith.constant 6 : i32
    %c2_i32_260 = arith.constant 2 : i32
    %1315 = arith.muli %c6_i32_259, %c2_i32_260 : i32
    %1316 = tpu.assume_multiple %1315, 2 : i32
    %1317 = arith.index_cast %1316 : i32 to index
    %c0_261 = arith.constant 0 : index
    %1318 = vector.load %arg17[%1317, %c0_261] : memref<48x32xf32, #tpu.memory_space<vmem>>, vector<2x32xf32>
    %1319 = arith.index_cast %1316 : i32 to index
    %c0_262 = arith.constant 0 : index
    %1320 = vector.load %arg18[%1319, %c0_262] : memref<48x32xf32, #tpu.memory_space<vmem>>, vector<2x32xf32>
    %1321 = arith.addf %1083, %1318 : vector<2x32xf32>
    %1322 = arith.addf %1079, %1286 : vector<2x32xf32>
    %1323 = arith.maximumf %1286, %1321 : vector<2x32xf32>
    %1324 = arith.maximumf %1322, %1318 : vector<2x32xf32>
    %1325 = arith.subf %1286, %1323 : vector<2x32xf32>
    %1326 = arith.subf %1321, %1323 : vector<2x32xf32>
    %1327 = arith.subf %1322, %1324 : vector<2x32xf32>
    %1328 = arith.subf %1318, %1324 : vector<2x32xf32>
    %1329 = tpu.concatenate %1325, %1326, %1327, %1328 in 0 : vector<2x32xf32>, vector<2x32xf32>, vector<2x32xf32>, vector<2x32xf32> -> vector<8x32xf32>
    %1330 = math.exp %1329 : vector<8x32xf32>
    %1331 = vector.extract_strided_slice %1330 {offsets = [0, 0], sizes = [2, 32], strides = [1, 1]} : vector<8x32xf32> to vector<2x32xf32>
    %1332 = vector.extract_strided_slice %1330 {offsets = [2, 0], sizes = [2, 32], strides = [1, 1]} : vector<8x32xf32> to vector<2x32xf32>
    %1333 = vector.extract_strided_slice %1330 {offsets = [4, 0], sizes = [2, 32], strides = [1, 1]} : vector<8x32xf32> to vector<2x32xf32>
    %1334 = vector.extract_strided_slice %1330 {offsets = [6, 0], sizes = [2, 32], strides = [1, 1]} : vector<8x32xf32> to vector<2x32xf32>
    %1335 = arith.mulf %1331, %1312 : vector<2x32xf32>
    %1336 = arith.mulf %1332, %1320 : vector<2x32xf32>
    %1337 = arith.addf %1335, %1336 : vector<2x32xf32>
    %1338 = arith.mulf %1331, %1314 : vector<2x32xf32>
    %1339 = arith.addf %1338, %1332 : vector<2x32xf32>
    %1340 = tpu.reciprocal %1339 {approx = true} : vector<2x32xf32> -> vector<2x32xf32>
    %1341 = arith.mulf %1339, %1340 : vector<2x32xf32>
    %cst_263 = arith.constant 2.000000e+00 : f32
    %1342 = vector.broadcast %cst_263 : f32 to vector<2x32xf32>
    %1343 = arith.subf %1342, %1341 : vector<2x32xf32>
    %1344 = arith.mulf %1340, %1343 : vector<2x32xf32>
    %1345 = arith.mulf %1337, %1344 : vector<2x32xf32>
    %1346 = arith.index_cast %1316 : i32 to index
    %c0_264 = arith.constant 0 : index
    %1347 = vector.load %arg19[%1346, %c0_264] : memref<48x32xf32, #tpu.memory_space<vmem>>, vector<2x32xf32>
    tpu.vector_store %arg19[%1346, %c0_264], %1345 {strides = array<i32>} : memref<48x32xf32, #tpu.memory_space<vmem>>, vector<2x32xf32>,
    %1348 = arith.mulf %1333, %1312 : vector<2x32xf32>
    %1349 = arith.mulf %1334, %1320 : vector<2x32xf32>
    %1350 = arith.addf %1348, %1349 : vector<2x32xf32>
    %1351 = arith.mulf %1333, %1314 : vector<2x32xf32>
    %1352 = arith.addf %1351, %1334 : vector<2x32xf32>
    %c7_i32_265 = arith.constant 7 : i32
    %c2_i32_266 = arith.constant 2 : i32
    %1353 = arith.muli %c7_i32_265, %c2_i32_266 : i32
    %1354 = tpu.assume_multiple %1353, 2 : i32
    %1355 = arith.index_cast %1354 : i32 to index
    %c0_267 = arith.constant 0 : index
    %1356 = vector.load %arg17[%1355, %c0_267] : memref<48x32xf32, #tpu.memory_space<vmem>>, vector<2x32xf32>
    %1357 = arith.index_cast %1354 : i32 to index
    %c0_268 = arith.constant 0 : index
    %1358 = vector.load %arg18[%1357, %c0_268] : memref<48x32xf32, #tpu.memory_space<vmem>>, vector<2x32xf32>
    %1359 = arith.addf %1083, %1356 : vector<2x32xf32>
    %1360 = arith.addf %1079, %1324 : vector<2x32xf32>
    %1361 = arith.maximumf %1324, %1359 : vector<2x32xf32>
    %1362 = arith.maximumf %1360, %1356 : vector<2x32xf32>
    %1363 = arith.subf %1324, %1361 : vector<2x32xf32>
    %1364 = arith.subf %1359, %1361 : vector<2x32xf32>
    %1365 = arith.subf %1360, %1362 : vector<2x32xf32>
    %1366 = arith.subf %1356, %1362 : vector<2x32xf32>
    %1367 = tpu.concatenate %1363, %1364, %1365, %1366 in 0 : vector<2x32xf32>, vector<2x32xf32>, vector<2x32xf32>, vector<2x32xf32> -> vector<8x32xf32>
    %1368 = math.exp %1367 : vector<8x32xf32>
    %1369 = vector.extract_strided_slice %1368 {offsets = [0, 0], sizes = [2, 32], strides = [1, 1]} : vector<8x32xf32> to vector<2x32xf32>
    %1370 = vector.extract_strided_slice %1368 {offsets = [2, 0], sizes = [2, 32], strides = [1, 1]} : vector<8x32xf32> to vector<2x32xf32>
    %1371 = vector.extract_strided_slice %1368 {offsets = [4, 0], sizes = [2, 32], strides = [1, 1]} : vector<8x32xf32> to vector<2x32xf32>
    %1372 = vector.extract_strided_slice %1368 {offsets = [6, 0], sizes = [2, 32], strides = [1, 1]} : vector<8x32xf32> to vector<2x32xf32>
    %1373 = arith.mulf %1369, %1350 : vector<2x32xf32>
    %1374 = arith.mulf %1370, %1358 : vector<2x32xf32>
    %1375 = arith.addf %1373, %1374 : vector<2x32xf32>
    %1376 = arith.mulf %1369, %1352 : vector<2x32xf32>
    %1377 = arith.addf %1376, %1370 : vector<2x32xf32>
    %1378 = tpu.reciprocal %1377 {approx = true} : vector<2x32xf32> -> vector<2x32xf32>
    %1379 = arith.mulf %1377, %1378 : vector<2x32xf32>
    %cst_269 = arith.constant 2.000000e+00 : f32
    %1380 = vector.broadcast %cst_269 : f32 to vector<2x32xf32>
    %1381 = arith.subf %1380, %1379 : vector<2x32xf32>
    %1382 = arith.mulf %1378, %1381 : vector<2x32xf32>
    %1383 = arith.mulf %1375, %1382 : vector<2x32xf32>
    %1384 = arith.index_cast %1354 : i32 to index
    %c0_270 = arith.constant 0 : index
    %1385 = vector.load %arg19[%1384, %c0_270] : memref<48x32xf32, #tpu.memory_space<vmem>>, vector<2x32xf32>
    tpu.vector_store %arg19[%1384, %c0_270], %1383 {strides = array<i32>} : memref<48x32xf32, #tpu.memory_space<vmem>>, vector<2x32xf32>,
    %1386 = arith.mulf %1371, %1350 : vector<2x32xf32>
    %1387 = arith.mulf %1372, %1358 : vector<2x32xf32>
    %1388 = arith.addf %1386, %1387 : vector<2x32xf32>
    %1389 = arith.mulf %1371, %1352 : vector<2x32xf32>
    %1390 = arith.addf %1389, %1372 : vector<2x32xf32>
    %c8_i32_271 = arith.constant 8 : i32
    %c2_i32_272 = arith.constant 2 : i32
    %1391 = arith.muli %c8_i32_271, %c2_i32_272 : i32
    %1392 = tpu.assume_multiple %1391, 2 : i32
    %1393 = arith.index_cast %1392 : i32 to index
    %c0_273 = arith.constant 0 : index
    %1394 = vector.load %arg17[%1393, %c0_273] : memref<48x32xf32, #tpu.memory_space<vmem>>, vector<2x32xf32>
    %1395 = arith.index_cast %1392 : i32 to index
    %c0_274 = arith.constant 0 : index
    %1396 = vector.load %arg18[%1395, %c0_274] : memref<48x32xf32, #tpu.memory_space<vmem>>, vector<2x32xf32>
    %1397 = arith.addf %1083, %1394 : vector<2x32xf32>
    %1398 = arith.addf %1079, %1362 : vector<2x32xf32>
    %1399 = arith.maximumf %1362, %1397 : vector<2x32xf32>
    %1400 = arith.maximumf %1398, %1394 : vector<2x32xf32>
    %1401 = arith.subf %1362, %1399 : vector<2x32xf32>
    %1402 = arith.subf %1397, %1399 : vector<2x32xf32>
    %1403 = arith.subf %1398, %1400 : vector<2x32xf32>
    %1404 = arith.subf %1394, %1400 : vector<2x32xf32>
    %1405 = tpu.concatenate %1401, %1402, %1403, %1404 in 0 : vector<2x32xf32>, vector<2x32xf32>, vector<2x32xf32>, vector<2x32xf32> -> vector<8x32xf32>
    %1406 = math.exp %1405 : vector<8x32xf32>
    %1407 = vector.extract_strided_slice %1406 {offsets = [0, 0], sizes = [2, 32], strides = [1, 1]} : vector<8x32xf32> to vector<2x32xf32>
    %1408 = vector.extract_strided_slice %1406 {offsets = [2, 0], sizes = [2, 32], strides = [1, 1]} : vector<8x32xf32> to vector<2x32xf32>
    %1409 = vector.extract_strided_slice %1406 {offsets = [4, 0], sizes = [2, 32], strides = [1, 1]} : vector<8x32xf32> to vector<2x32xf32>
    %1410 = vector.extract_strided_slice %1406 {offsets = [6, 0], sizes = [2, 32], strides = [1, 1]} : vector<8x32xf32> to vector<2x32xf32>
    %1411 = arith.mulf %1407, %1388 : vector<2x32xf32>
    %1412 = arith.mulf %1408, %1396 : vector<2x32xf32>
    %1413 = arith.addf %1411, %1412 : vector<2x32xf32>
    %1414 = arith.mulf %1407, %1390 : vector<2x32xf32>
    %1415 = arith.addf %1414, %1408 : vector<2x32xf32>
    %1416 = tpu.reciprocal %1415 {approx = true} : vector<2x32xf32> -> vector<2x32xf32>
    %1417 = arith.mulf %1415, %1416 : vector<2x32xf32>
    %cst_275 = arith.constant 2.000000e+00 : f32
    %1418 = vector.broadcast %cst_275 : f32 to vector<2x32xf32>
    %1419 = arith.subf %1418, %1417 : vector<2x32xf32>
    %1420 = arith.mulf %1416, %1419 : vector<2x32xf32>
    %1421 = arith.mulf %1413, %1420 : vector<2x32xf32>
    %1422 = arith.index_cast %1392 : i32 to index
    %c0_276 = arith.constant 0 : index
    %1423 = vector.load %arg19[%1422, %c0_276] : memref<48x32xf32, #tpu.memory_space<vmem>>, vector<2x32xf32>
    tpu.vector_store %arg19[%1422, %c0_276], %1421 {strides = array<i32>} : memref<48x32xf32, #tpu.memory_space<vmem>>, vector<2x32xf32>,
    %1424 = arith.mulf %1409, %1388 : vector<2x32xf32>
    %1425 = arith.mulf %1410, %1396 : vector<2x32xf32>
    %1426 = arith.addf %1424, %1425 : vector<2x32xf32>
    %1427 = arith.mulf %1409, %1390 : vector<2x32xf32>
    %1428 = arith.addf %1427, %1410 : vector<2x32xf32>
    %c9_i32_277 = arith.constant 9 : i32
    %c2_i32_278 = arith.constant 2 : i32
    %1429 = arith.muli %c9_i32_277, %c2_i32_278 : i32
    %1430 = tpu.assume_multiple %1429, 2 : i32
    %1431 = arith.index_cast %1430 : i32 to index
    %c0_279 = arith.constant 0 : index
    %1432 = vector.load %arg17[%1431, %c0_279] : memref<48x32xf32, #tpu.memory_space<vmem>>, vector<2x32xf32>
    %1433 = arith.index_cast %1430 : i32 to index
    %c0_280 = arith.constant 0 : index
    %1434 = vector.load %arg18[%1433, %c0_280] : memref<48x32xf32, #tpu.memory_space<vmem>>, vector<2x32xf32>
    %1435 = arith.addf %1083, %1432 : vector<2x32xf32>
    %1436 = arith.addf %1079, %1400 : vector<2x32xf32>
    %1437 = arith.maximumf %1400, %1435 : vector<2x32xf32>
    %1438 = arith.maximumf %1436, %1432 : vector<2x32xf32>
    %1439 = arith.subf %1400, %1437 : vector<2x32xf32>
    %1440 = arith.subf %1435, %1437 : vector<2x32xf32>
    %1441 = arith.subf %1436, %1438 : vector<2x32xf32>
    %1442 = arith.subf %1432, %1438 : vector<2x32xf32>
    %1443 = tpu.concatenate %1439, %1440, %1441, %1442 in 0 : vector<2x32xf32>, vector<2x32xf32>, vector<2x32xf32>, vector<2x32xf32> -> vector<8x32xf32>
    %1444 = math.exp %1443 : vector<8x32xf32>
    %1445 = vector.extract_strided_slice %1444 {offsets = [0, 0], sizes = [2, 32], strides = [1, 1]} : vector<8x32xf32> to vector<2x32xf32>
    %1446 = vector.extract_strided_slice %1444 {offsets = [2, 0], sizes = [2, 32], strides = [1, 1]} : vector<8x32xf32> to vector<2x32xf32>
    %1447 = vector.extract_strided_slice %1444 {offsets = [4, 0], sizes = [2, 32], strides = [1, 1]} : vector<8x32xf32> to vector<2x32xf32>
    %1448 = vector.extract_strided_slice %1444 {offsets = [6, 0], sizes = [2, 32], strides = [1, 1]} : vector<8x32xf32> to vector<2x32xf32>
    %1449 = arith.mulf %1445, %1426 : vector<2x32xf32>
    %1450 = arith.mulf %1446, %1434 : vector<2x32xf32>
    %1451 = arith.addf %1449, %1450 : vector<2x32xf32>
    %1452 = arith.mulf %1445, %1428 : vector<2x32xf32>
    %1453 = arith.addf %1452, %1446 : vector<2x32xf32>
    %1454 = tpu.reciprocal %1453 {approx = true} : vector<2x32xf32> -> vector<2x32xf32>
    %1455 = arith.mulf %1453, %1454 : vector<2x32xf32>
    %cst_281 = arith.constant 2.000000e+00 : f32
    %1456 = vector.broadcast %cst_281 : f32 to vector<2x32xf32>
    %1457 = arith.subf %1456, %1455 : vector<2x32xf32>
    %1458 = arith.mulf %1454, %1457 : vector<2x32xf32>
    %1459 = arith.mulf %1451, %1458 : vector<2x32xf32>
    %1460 = arith.index_cast %1430 : i32 to index
    %c0_282 = arith.constant 0 : index
    %1461 = vector.load %arg19[%1460, %c0_282] : memref<48x32xf32, #tpu.memory_space<vmem>>, vector<2x32xf32>
    tpu.vector_store %arg19[%1460, %c0_282], %1459 {strides = array<i32>} : memref<48x32xf32, #tpu.memory_space<vmem>>, vector<2x32xf32>,
    %1462 = arith.mulf %1447, %1426 : vector<2x32xf32>
    %1463 = arith.mulf %1448, %1434 : vector<2x32xf32>
    %1464 = arith.addf %1462, %1463 : vector<2x32xf32>
    %1465 = arith.mulf %1447, %1428 : vector<2x32xf32>
    %1466 = arith.addf %1465, %1448 : vector<2x32xf32>
    %c10_i32_283 = arith.constant 10 : i32
    %c2_i32_284 = arith.constant 2 : i32
    %1467 = arith.muli %c10_i32_283, %c2_i32_284 : i32
    %1468 = tpu.assume_multiple %1467, 2 : i32
    %1469 = arith.index_cast %1468 : i32 to index
    %c0_285 = arith.constant 0 : index
    %1470 = vector.load %arg17[%1469, %c0_285] : memref<48x32xf32, #tpu.memory_space<vmem>>, vector<2x32xf32>
    %1471 = arith.index_cast %1468 : i32 to index
    %c0_286 = arith.constant 0 : index
    %1472 = vector.load %arg18[%1471, %c0_286] : memref<48x32xf32, #tpu.memory_space<vmem>>, vector<2x32xf32>
    %1473 = arith.addf %1083, %1470 : vector<2x32xf32>
    %1474 = arith.addf %1079, %1438 : vector<2x32xf32>
    %1475 = arith.maximumf %1438, %1473 : vector<2x32xf32>
    %1476 = arith.maximumf %1474, %1470 : vector<2x32xf32>
    %1477 = arith.subf %1438, %1475 : vector<2x32xf32>
    %1478 = arith.subf %1473, %1475 : vector<2x32xf32>
    %1479 = arith.subf %1474, %1476 : vector<2x32xf32>
    %1480 = arith.subf %1470, %1476 : vector<2x32xf32>
    %1481 = tpu.concatenate %1477, %1478, %1479, %1480 in 0 : vector<2x32xf32>, vector<2x32xf32>, vector<2x32xf32>, vector<2x32xf32> -> vector<8x32xf32>
    %1482 = math.exp %1481 : vector<8x32xf32>
    %1483 = vector.extract_strided_slice %1482 {offsets = [0, 0], sizes = [2, 32], strides = [1, 1]} : vector<8x32xf32> to vector<2x32xf32>
    %1484 = vector.extract_strided_slice %1482 {offsets = [2, 0], sizes = [2, 32], strides = [1, 1]} : vector<8x32xf32> to vector<2x32xf32>
    %1485 = vector.extract_strided_slice %1482 {offsets = [4, 0], sizes = [2, 32], strides = [1, 1]} : vector<8x32xf32> to vector<2x32xf32>
    %1486 = vector.extract_strided_slice %1482 {offsets = [6, 0], sizes = [2, 32], strides = [1, 1]} : vector<8x32xf32> to vector<2x32xf32>
    %1487 = arith.mulf %1483, %1464 : vector<2x32xf32>
    %1488 = arith.mulf %1484, %1472 : vector<2x32xf32>
    %1489 = arith.addf %1487, %1488 : vector<2x32xf32>
    %1490 = arith.mulf %1483, %1466 : vector<2x32xf32>
    %1491 = arith.addf %1490, %1484 : vector<2x32xf32>
    %1492 = tpu.reciprocal %1491 {approx = true} : vector<2x32xf32> -> vector<2x32xf32>
    %1493 = arith.mulf %1491, %1492 : vector<2x32xf32>
    %cst_287 = arith.constant 2.000000e+00 : f32
    %1494 = vector.broadcast %cst_287 : f32 to vector<2x32xf32>
    %1495 = arith.subf %1494, %1493 : vector<2x32xf32>
    %1496 = arith.mulf %1492, %1495 : vector<2x32xf32>
    %1497 = arith.mulf %1489, %1496 : vector<2x32xf32>
    %1498 = arith.index_cast %1468 : i32 to index
    %c0_288 = arith.constant 0 : index
    %1499 = vector.load %arg19[%1498, %c0_288] : memref<48x32xf32, #tpu.memory_space<vmem>>, vector<2x32xf32>
    tpu.vector_store %arg19[%1498, %c0_288], %1497 {strides = array<i32>} : memref<48x32xf32, #tpu.memory_space<vmem>>, vector<2x32xf32>,
    %1500 = arith.mulf %1485, %1464 : vector<2x32xf32>
    %1501 = arith.mulf %1486, %1472 : vector<2x32xf32>
    %1502 = arith.addf %1500, %1501 : vector<2x32xf32>
    %1503 = arith.mulf %1485, %1466 : vector<2x32xf32>
    %1504 = arith.addf %1503, %1486 : vector<2x32xf32>
    %c11_i32_289 = arith.constant 11 : i32
    %c2_i32_290 = arith.constant 2 : i32
    %1505 = arith.muli %c11_i32_289, %c2_i32_290 : i32
    %1506 = tpu.assume_multiple %1505, 2 : i32
    %1507 = arith.index_cast %1506 : i32 to index
    %c0_291 = arith.constant 0 : index
    %1508 = vector.load %arg17[%1507, %c0_291] : memref<48x32xf32, #tpu.memory_space<vmem>>, vector<2x32xf32>
    %1509 = arith.index_cast %1506 : i32 to index
    %c0_292 = arith.constant 0 : index
    %1510 = vector.load %arg18[%1509, %c0_292] : memref<48x32xf32, #tpu.memory_space<vmem>>, vector<2x32xf32>
    %1511 = arith.addf %1083, %1508 : vector<2x32xf32>
    %1512 = arith.addf %1079, %1476 : vector<2x32xf32>
    %1513 = arith.maximumf %1476, %1511 : vector<2x32xf32>
    %1514 = arith.maximumf %1512, %1508 : vector<2x32xf32>
    %1515 = arith.subf %1476, %1513 : vector<2x32xf32>
    %1516 = arith.subf %1511, %1513 : vector<2x32xf32>
    %1517 = arith.subf %1512, %1514 : vector<2x32xf32>
    %1518 = arith.subf %1508, %1514 : vector<2x32xf32>
    %1519 = tpu.concatenate %1515, %1516, %1517, %1518 in 0 : vector<2x32xf32>, vector<2x32xf32>, vector<2x32xf32>, vector<2x32xf32> -> vector<8x32xf32>
    %1520 = math.exp %1519 : vector<8x32xf32>
    %1521 = vector.extract_strided_slice %1520 {offsets = [0, 0], sizes = [2, 32], strides = [1, 1]} : vector<8x32xf32> to vector<2x32xf32>
    %1522 = vector.extract_strided_slice %1520 {offsets = [2, 0], sizes = [2, 32], strides = [1, 1]} : vector<8x32xf32> to vector<2x32xf32>
    %1523 = vector.extract_strided_slice %1520 {offsets = [4, 0], sizes = [2, 32], strides = [1, 1]} : vector<8x32xf32> to vector<2x32xf32>
    %1524 = vector.extract_strided_slice %1520 {offsets = [6, 0], sizes = [2, 32], strides = [1, 1]} : vector<8x32xf32> to vector<2x32xf32>
    %1525 = arith.mulf %1521, %1502 : vector<2x32xf32>
    %1526 = arith.mulf %1522, %1510 : vector<2x32xf32>
    %1527 = arith.addf %1525, %1526 : vector<2x32xf32>
    %1528 = arith.mulf %1521, %1504 : vector<2x32xf32>
    %1529 = arith.addf %1528, %1522 : vector<2x32xf32>
    %1530 = tpu.reciprocal %1529 {approx = true} : vector<2x32xf32> -> vector<2x32xf32>
    %1531 = arith.mulf %1529, %1530 : vector<2x32xf32>
    %cst_293 = arith.constant 2.000000e+00 : f32
    %1532 = vector.broadcast %cst_293 : f32 to vector<2x32xf32>
    %1533 = arith.subf %1532, %1531 : vector<2x32xf32>
    %1534 = arith.mulf %1530, %1533 : vector<2x32xf32>
    %1535 = arith.mulf %1527, %1534 : vector<2x32xf32>
    %1536 = arith.index_cast %1506 : i32 to index
    %c0_294 = arith.constant 0 : index
    %1537 = vector.load %arg19[%1536, %c0_294] : memref<48x32xf32, #tpu.memory_space<vmem>>, vector<2x32xf32>
    tpu.vector_store %arg19[%1536, %c0_294], %1535 {strides = array<i32>} : memref<48x32xf32, #tpu.memory_space<vmem>>, vector<2x32xf32>,
    %1538 = arith.mulf %1523, %1502 : vector<2x32xf32>
    %1539 = arith.mulf %1524, %1510 : vector<2x32xf32>
    %1540 = arith.addf %1538, %1539 : vector<2x32xf32>
    %1541 = arith.mulf %1523, %1504 : vector<2x32xf32>
    %1542 = arith.addf %1541, %1524 : vector<2x32xf32>
    %c12_i32_295 = arith.constant 12 : i32
    %c2_i32_296 = arith.constant 2 : i32
    %1543 = arith.muli %c12_i32_295, %c2_i32_296 : i32
    %1544 = tpu.assume_multiple %1543, 2 : i32
    %1545 = arith.index_cast %1544 : i32 to index
    %c0_297 = arith.constant 0 : index
    %1546 = vector.load %arg17[%1545, %c0_297] : memref<48x32xf32, #tpu.memory_space<vmem>>, vector<2x32xf32>
    %1547 = arith.index_cast %1544 : i32 to index
    %c0_298 = arith.constant 0 : index
    %1548 = vector.load %arg18[%1547, %c0_298] : memref<48x32xf32, #tpu.memory_space<vmem>>, vector<2x32xf32>
    %1549 = arith.addf %1083, %1546 : vector<2x32xf32>
    %1550 = arith.addf %1079, %1514 : vector<2x32xf32>
    %1551 = arith.maximumf %1514, %1549 : vector<2x32xf32>
    %1552 = arith.maximumf %1550, %1546 : vector<2x32xf32>
    %1553 = arith.subf %1514, %1551 : vector<2x32xf32>
    %1554 = arith.subf %1549, %1551 : vector<2x32xf32>
    %1555 = arith.subf %1550, %1552 : vector<2x32xf32>
    %1556 = arith.subf %1546, %1552 : vector<2x32xf32>
    %1557 = tpu.concatenate %1553, %1554, %1555, %1556 in 0 : vector<2x32xf32>, vector<2x32xf32>, vector<2x32xf32>, vector<2x32xf32> -> vector<8x32xf32>
    %1558 = math.exp %1557 : vector<8x32xf32>
    %1559 = vector.extract_strided_slice %1558 {offsets = [0, 0], sizes = [2, 32], strides = [1, 1]} : vector<8x32xf32> to vector<2x32xf32>
    %1560 = vector.extract_strided_slice %1558 {offsets = [2, 0], sizes = [2, 32], strides = [1, 1]} : vector<8x32xf32> to vector<2x32xf32>
    %1561 = vector.extract_strided_slice %1558 {offsets = [4, 0], sizes = [2, 32], strides = [1, 1]} : vector<8x32xf32> to vector<2x32xf32>
    %1562 = vector.extract_strided_slice %1558 {offsets = [6, 0], sizes = [2, 32], strides = [1, 1]} : vector<8x32xf32> to vector<2x32xf32>
    %1563 = arith.mulf %1559, %1540 : vector<2x32xf32>
    %1564 = arith.mulf %1560, %1548 : vector<2x32xf32>
    %1565 = arith.addf %1563, %1564 : vector<2x32xf32>
    %1566 = arith.mulf %1559, %1542 : vector<2x32xf32>
    %1567 = arith.addf %1566, %1560 : vector<2x32xf32>
    %1568 = tpu.reciprocal %1567 {approx = true} : vector<2x32xf32> -> vector<2x32xf32>
    %1569 = arith.mulf %1567, %1568 : vector<2x32xf32>
    %cst_299 = arith.constant 2.000000e+00 : f32
    %1570 = vector.broadcast %cst_299 : f32 to vector<2x32xf32>
    %1571 = arith.subf %1570, %1569 : vector<2x32xf32>
    %1572 = arith.mulf %1568, %1571 : vector<2x32xf32>
    %1573 = arith.mulf %1565, %1572 : vector<2x32xf32>
    %1574 = arith.index_cast %1544 : i32 to index
    %c0_300 = arith.constant 0 : index
    %1575 = vector.load %arg19[%1574, %c0_300] : memref<48x32xf32, #tpu.memory_space<vmem>>, vector<2x32xf32>
    tpu.vector_store %arg19[%1574, %c0_300], %1573 {strides = array<i32>} : memref<48x32xf32, #tpu.memory_space<vmem>>, vector<2x32xf32>,
    %1576 = arith.mulf %1561, %1540 : vector<2x32xf32>
    %1577 = arith.mulf %1562, %1548 : vector<2x32xf32>
    %1578 = arith.addf %1576, %1577 : vector<2x32xf32>
    %1579 = arith.mulf %1561, %1542 : vector<2x32xf32>
    %1580 = arith.addf %1579, %1562 : vector<2x32xf32>
    %c13_i32_301 = arith.constant 13 : i32
    %c2_i32_302 = arith.constant 2 : i32
    %1581 = arith.muli %c13_i32_301, %c2_i32_302 : i32
    %1582 = tpu.assume_multiple %1581, 2 : i32
    %1583 = arith.index_cast %1582 : i32 to index
    %c0_303 = arith.constant 0 : index
    %1584 = vector.load %arg17[%1583, %c0_303] : memref<48x32xf32, #tpu.memory_space<vmem>>, vector<2x32xf32>
    %1585 = arith.index_cast %1582 : i32 to index
    %c0_304 = arith.constant 0 : index
    %1586 = vector.load %arg18[%1585, %c0_304] : memref<48x32xf32, #tpu.memory_space<vmem>>, vector<2x32xf32>
    %1587 = arith.addf %1083, %1584 : vector<2x32xf32>
    %1588 = arith.addf %1079, %1552 : vector<2x32xf32>
    %1589 = arith.maximumf %1552, %1587 : vector<2x32xf32>
    %1590 = arith.maximumf %1588, %1584 : vector<2x32xf32>
    %1591 = arith.subf %1552, %1589 : vector<2x32xf32>
    %1592 = arith.subf %1587, %1589 : vector<2x32xf32>
    %1593 = arith.subf %1588, %1590 : vector<2x32xf32>
    %1594 = arith.subf %1584, %1590 : vector<2x32xf32>
    %1595 = tpu.concatenate %1591, %1592, %1593, %1594 in 0 : vector<2x32xf32>, vector<2x32xf32>, vector<2x32xf32>, vector<2x32xf32> -> vector<8x32xf32>
    %1596 = math.exp %1595 : vector<8x32xf32>
    %1597 = vector.extract_strided_slice %1596 {offsets = [0, 0], sizes = [2, 32], strides = [1, 1]} : vector<8x32xf32> to vector<2x32xf32>
    %1598 = vector.extract_strided_slice %1596 {offsets = [2, 0], sizes = [2, 32], strides = [1, 1]} : vector<8x32xf32> to vector<2x32xf32>
    %1599 = vector.extract_strided_slice %1596 {offsets = [4, 0], sizes = [2, 32], strides = [1, 1]} : vector<8x32xf32> to vector<2x32xf32>
    %1600 = vector.extract_strided_slice %1596 {offsets = [6, 0], sizes = [2, 32], strides = [1, 1]} : vector<8x32xf32> to vector<2x32xf32>
    %1601 = arith.mulf %1597, %1578 : vector<2x32xf32>
    %1602 = arith.mulf %1598, %1586 : vector<2x32xf32>
    %1603 = arith.addf %1601, %1602 : vector<2x32xf32>
    %1604 = arith.mulf %1597, %1580 : vector<2x32xf32>
    %1605 = arith.addf %1604, %1598 : vector<2x32xf32>
    %1606 = tpu.reciprocal %1605 {approx = true} : vector<2x32xf32> -> vector<2x32xf32>
    %1607 = arith.mulf %1605, %1606 : vector<2x32xf32>
    %cst_305 = arith.constant 2.000000e+00 : f32
    %1608 = vector.broadcast %cst_305 : f32 to vector<2x32xf32>
    %1609 = arith.subf %1608, %1607 : vector<2x32xf32>
    %1610 = arith.mulf %1606, %1609 : vector<2x32xf32>
    %1611 = arith.mulf %1603, %1610 : vector<2x32xf32>
    %1612 = arith.index_cast %1582 : i32 to index
    %c0_306 = arith.constant 0 : index
    %1613 = vector.load %arg19[%1612, %c0_306] : memref<48x32xf32, #tpu.memory_space<vmem>>, vector<2x32xf32>
    tpu.vector_store %arg19[%1612, %c0_306], %1611 {strides = array<i32>} : memref<48x32xf32, #tpu.memory_space<vmem>>, vector<2x32xf32>,
    %1614 = arith.mulf %1599, %1578 : vector<2x32xf32>
    %1615 = arith.mulf %1600, %1586 : vector<2x32xf32>
    %1616 = arith.addf %1614, %1615 : vector<2x32xf32>
    %1617 = arith.mulf %1599, %1580 : vector<2x32xf32>
    %1618 = arith.addf %1617, %1600 : vector<2x32xf32>
    %c14_i32_307 = arith.constant 14 : i32
    %c2_i32_308 = arith.constant 2 : i32
    %1619 = arith.muli %c14_i32_307, %c2_i32_308 : i32
    %1620 = tpu.assume_multiple %1619, 2 : i32
    %1621 = arith.index_cast %1620 : i32 to index
    %c0_309 = arith.constant 0 : index
    %1622 = vector.load %arg17[%1621, %c0_309] : memref<48x32xf32, #tpu.memory_space<vmem>>, vector<2x32xf32>
    %1623 = arith.index_cast %1620 : i32 to index
    %c0_310 = arith.constant 0 : index
    %1624 = vector.load %arg18[%1623, %c0_310] : memref<48x32xf32, #tpu.memory_space<vmem>>, vector<2x32xf32>
    %1625 = arith.addf %1083, %1622 : vector<2x32xf32>
    %1626 = arith.addf %1079, %1590 : vector<2x32xf32>
    %1627 = arith.maximumf %1590, %1625 : vector<2x32xf32>
    %1628 = arith.maximumf %1626, %1622 : vector<2x32xf32>
    %1629 = arith.subf %1590, %1627 : vector<2x32xf32>
    %1630 = arith.subf %1625, %1627 : vector<2x32xf32>
    %1631 = arith.subf %1626, %1628 : vector<2x32xf32>
    %1632 = arith.subf %1622, %1628 : vector<2x32xf32>
    %1633 = tpu.concatenate %1629, %1630, %1631, %1632 in 0 : vector<2x32xf32>, vector<2x32xf32>, vector<2x32xf32>, vector<2x32xf32> -> vector<8x32xf32>
    %1634 = math.exp %1633 : vector<8x32xf32>
    %1635 = vector.extract_strided_slice %1634 {offsets = [0, 0], sizes = [2, 32], strides = [1, 1]} : vector<8x32xf32> to vector<2x32xf32>
    %1636 = vector.extract_strided_slice %1634 {offsets = [2, 0], sizes = [2, 32], strides = [1, 1]} : vector<8x32xf32> to vector<2x32xf32>
    %1637 = vector.extract_strided_slice %1634 {offsets = [4, 0], sizes = [2, 32], strides = [1, 1]} : vector<8x32xf32> to vector<2x32xf32>
    %1638 = vector.extract_strided_slice %1634 {offsets = [6, 0], sizes = [2, 32], strides = [1, 1]} : vector<8x32xf32> to vector<2x32xf32>
    %1639 = arith.mulf %1635, %1616 : vector<2x32xf32>
    %1640 = arith.mulf %1636, %1624 : vector<2x32xf32>
    %1641 = arith.addf %1639, %1640 : vector<2x32xf32>
    %1642 = arith.mulf %1635, %1618 : vector<2x32xf32>
    %1643 = arith.addf %1642, %1636 : vector<2x32xf32>
    %1644 = tpu.reciprocal %1643 {approx = true} : vector<2x32xf32> -> vector<2x32xf32>
    %1645 = arith.mulf %1643, %1644 : vector<2x32xf32>
    %cst_311 = arith.constant 2.000000e+00 : f32
    %1646 = vector.broadcast %cst_311 : f32 to vector<2x32xf32>
    %1647 = arith.subf %1646, %1645 : vector<2x32xf32>
    %1648 = arith.mulf %1644, %1647 : vector<2x32xf32>
    %1649 = arith.mulf %1641, %1648 : vector<2x32xf32>
    %1650 = arith.index_cast %1620 : i32 to index
    %c0_312 = arith.constant 0 : index
    %1651 = vector.load %arg19[%1650, %c0_312] : memref<48x32xf32, #tpu.memory_space<vmem>>, vector<2x32xf32>
    tpu.vector_store %arg19[%1650, %c0_312], %1649 {strides = array<i32>} : memref<48x32xf32, #tpu.memory_space<vmem>>, vector<2x32xf32>,
    %1652 = arith.mulf %1637, %1616 : vector<2x32xf32>
    %1653 = arith.mulf %1638, %1624 : vector<2x32xf32>
    %1654 = arith.addf %1652, %1653 : vector<2x32xf32>
    %1655 = arith.mulf %1637, %1618 : vector<2x32xf32>
    %1656 = arith.addf %1655, %1638 : vector<2x32xf32>
    %c15_i32_313 = arith.constant 15 : i32
    %c2_i32_314 = arith.constant 2 : i32
    %1657 = arith.muli %c15_i32_313, %c2_i32_314 : i32
    %1658 = tpu.assume_multiple %1657, 2 : i32
    %1659 = arith.index_cast %1658 : i32 to index
    %c0_315 = arith.constant 0 : index
    %1660 = vector.load %arg17[%1659, %c0_315] : memref<48x32xf32, #tpu.memory_space<vmem>>, vector<2x32xf32>
    %1661 = arith.index_cast %1658 : i32 to index
    %c0_316 = arith.constant 0 : index
    %1662 = vector.load %arg18[%1661, %c0_316] : memref<48x32xf32, #tpu.memory_space<vmem>>, vector<2x32xf32>
    %1663 = arith.addf %1083, %1660 : vector<2x32xf32>
    %1664 = arith.addf %1079, %1628 : vector<2x32xf32>
    %1665 = arith.maximumf %1628, %1663 : vector<2x32xf32>
    %1666 = arith.maximumf %1664, %1660 : vector<2x32xf32>
    %1667 = arith.subf %1628, %1665 : vector<2x32xf32>
    %1668 = arith.subf %1663, %1665 : vector<2x32xf32>
    %1669 = arith.subf %1664, %1666 : vector<2x32xf32>
    %1670 = arith.subf %1660, %1666 : vector<2x32xf32>
    %1671 = tpu.concatenate %1667, %1668, %1669, %1670 in 0 : vector<2x32xf32>, vector<2x32xf32>, vector<2x32xf32>, vector<2x32xf32> -> vector<8x32xf32>
    %1672 = math.exp %1671 : vector<8x32xf32>
    %1673 = vector.extract_strided_slice %1672 {offsets = [0, 0], sizes = [2, 32], strides = [1, 1]} : vector<8x32xf32> to vector<2x32xf32>
    %1674 = vector.extract_strided_slice %1672 {offsets = [2, 0], sizes = [2, 32], strides = [1, 1]} : vector<8x32xf32> to vector<2x32xf32>
    %1675 = vector.extract_strided_slice %1672 {offsets = [4, 0], sizes = [2, 32], strides = [1, 1]} : vector<8x32xf32> to vector<2x32xf32>
    %1676 = vector.extract_strided_slice %1672 {offsets = [6, 0], sizes = [2, 32], strides = [1, 1]} : vector<8x32xf32> to vector<2x32xf32>
    %1677 = arith.mulf %1673, %1654 : vector<2x32xf32>
    %1678 = arith.mulf %1674, %1662 : vector<2x32xf32>
    %1679 = arith.addf %1677, %1678 : vector<2x32xf32>
    %1680 = arith.mulf %1673, %1656 : vector<2x32xf32>
    %1681 = arith.addf %1680, %1674 : vector<2x32xf32>
    %1682 = tpu.reciprocal %1681 {approx = true} : vector<2x32xf32> -> vector<2x32xf32>
    %1683 = arith.mulf %1681, %1682 : vector<2x32xf32>
    %cst_317 = arith.constant 2.000000e+00 : f32
    %1684 = vector.broadcast %cst_317 : f32 to vector<2x32xf32>
    %1685 = arith.subf %1684, %1683 : vector<2x32xf32>
    %1686 = arith.mulf %1682, %1685 : vector<2x32xf32>
    %1687 = arith.mulf %1679, %1686 : vector<2x32xf32>
    %1688 = arith.index_cast %1658 : i32 to index
    %c0_318 = arith.constant 0 : index
    %1689 = vector.load %arg19[%1688, %c0_318] : memref<48x32xf32, #tpu.memory_space<vmem>>, vector<2x32xf32>
    tpu.vector_store %arg19[%1688, %c0_318], %1687 {strides = array<i32>} : memref<48x32xf32, #tpu.memory_space<vmem>>, vector<2x32xf32>,
    %1690 = arith.mulf %1675, %1654 : vector<2x32xf32>
    %1691 = arith.mulf %1676, %1662 : vector<2x32xf32>
    %1692 = arith.addf %1690, %1691 : vector<2x32xf32>
    %1693 = arith.mulf %1675, %1656 : vector<2x32xf32>
    %1694 = arith.addf %1693, %1676 : vector<2x32xf32>
    %c16_i32_319 = arith.constant 16 : i32
    %c2_i32_320 = arith.constant 2 : i32
    %1695 = arith.muli %c16_i32_319, %c2_i32_320 : i32
    %1696 = tpu.assume_multiple %1695, 2 : i32
    %1697 = arith.index_cast %1696 : i32 to index
    %c0_321 = arith.constant 0 : index
    %1698 = vector.load %arg17[%1697, %c0_321] : memref<48x32xf32, #tpu.memory_space<vmem>>, vector<2x32xf32>
    %1699 = arith.index_cast %1696 : i32 to index
    %c0_322 = arith.constant 0 : index
    %1700 = vector.load %arg18[%1699, %c0_322] : memref<48x32xf32, #tpu.memory_space<vmem>>, vector<2x32xf32>
    %1701 = arith.addf %1083, %1698 : vector<2x32xf32>
    %1702 = arith.addf %1079, %1666 : vector<2x32xf32>
    %1703 = arith.maximumf %1666, %1701 : vector<2x32xf32>
    %1704 = arith.maximumf %1702, %1698 : vector<2x32xf32>
    %1705 = arith.subf %1666, %1703 : vector<2x32xf32>
    %1706 = arith.subf %1701, %1703 : vector<2x32xf32>
    %1707 = arith.subf %1702, %1704 : vector<2x32xf32>
    %1708 = arith.subf %1698, %1704 : vector<2x32xf32>
    %1709 = tpu.concatenate %1705, %1706, %1707, %1708 in 0 : vector<2x32xf32>, vector<2x32xf32>, vector<2x32xf32>, vector<2x32xf32> -> vector<8x32xf32>
    %1710 = math.exp %1709 : vector<8x32xf32>
    %1711 = vector.extract_strided_slice %1710 {offsets = [0, 0], sizes = [2, 32], strides = [1, 1]} : vector<8x32xf32> to vector<2x32xf32>
    %1712 = vector.extract_strided_slice %1710 {offsets = [2, 0], sizes = [2, 32], strides = [1, 1]} : vector<8x32xf32> to vector<2x32xf32>
    %1713 = vector.extract_strided_slice %1710 {offsets = [4, 0], sizes = [2, 32], strides = [1, 1]} : vector<8x32xf32> to vector<2x32xf32>
    %1714 = vector.extract_strided_slice %1710 {offsets = [6, 0], sizes = [2, 32], strides = [1, 1]} : vector<8x32xf32> to vector<2x32xf32>
    %1715 = arith.mulf %1711, %1692 : vector<2x32xf32>
    %1716 = arith.mulf %1712, %1700 : vector<2x32xf32>
    %1717 = arith.addf %1715, %1716 : vector<2x32xf32>
    %1718 = arith.mulf %1711, %1694 : vector<2x32xf32>
    %1719 = arith.addf %1718, %1712 : vector<2x32xf32>
    %1720 = tpu.reciprocal %1719 {approx = true} : vector<2x32xf32> -> vector<2x32xf32>
    %1721 = arith.mulf %1719, %1720 : vector<2x32xf32>
    %cst_323 = arith.constant 2.000000e+00 : f32
    %1722 = vector.broadcast %cst_323 : f32 to vector<2x32xf32>
    %1723 = arith.subf %1722, %1721 : vector<2x32xf32>
    %1724 = arith.mulf %1720, %1723 : vector<2x32xf32>
    %1725 = arith.mulf %1717, %1724 : vector<2x32xf32>
    %1726 = arith.index_cast %1696 : i32 to index
    %c0_324 = arith.constant 0 : index
    %1727 = vector.load %arg19[%1726, %c0_324] : memref<48x32xf32, #tpu.memory_space<vmem>>, vector<2x32xf32>
    tpu.vector_store %arg19[%1726, %c0_324], %1725 {strides = array<i32>} : memref<48x32xf32, #tpu.memory_space<vmem>>, vector<2x32xf32>,
    %1728 = arith.mulf %1713, %1692 : vector<2x32xf32>
    %1729 = arith.mulf %1714, %1700 : vector<2x32xf32>
    %1730 = arith.addf %1728, %1729 : vector<2x32xf32>
    %1731 = arith.mulf %1713, %1694 : vector<2x32xf32>
    %1732 = arith.addf %1731, %1714 : vector<2x32xf32>
    %c17_i32_325 = arith.constant 17 : i32
    %c2_i32_326 = arith.constant 2 : i32
    %1733 = arith.muli %c17_i32_325, %c2_i32_326 : i32
    %1734 = tpu.assume_multiple %1733, 2 : i32
    %1735 = arith.index_cast %1734 : i32 to index
    %c0_327 = arith.constant 0 : index
    %1736 = vector.load %arg17[%1735, %c0_327] : memref<48x32xf32, #tpu.memory_space<vmem>>, vector<2x32xf32>
    %1737 = arith.index_cast %1734 : i32 to index
    %c0_328 = arith.constant 0 : index
    %1738 = vector.load %arg18[%1737, %c0_328] : memref<48x32xf32, #tpu.memory_space<vmem>>, vector<2x32xf32>
    %1739 = arith.addf %1083, %1736 : vector<2x32xf32>
    %1740 = arith.addf %1079, %1704 : vector<2x32xf32>
    %1741 = arith.maximumf %1704, %1739 : vector<2x32xf32>
    %1742 = arith.maximumf %1740, %1736 : vector<2x32xf32>
    %1743 = arith.subf %1704, %1741 : vector<2x32xf32>
    %1744 = arith.subf %1739, %1741 : vector<2x32xf32>
    %1745 = arith.subf %1740, %1742 : vector<2x32xf32>
    %1746 = arith.subf %1736, %1742 : vector<2x32xf32>
    %1747 = tpu.concatenate %1743, %1744, %1745, %1746 in 0 : vector<2x32xf32>, vector<2x32xf32>, vector<2x32xf32>, vector<2x32xf32> -> vector<8x32xf32>
    %1748 = math.exp %1747 : vector<8x32xf32>
    %1749 = vector.extract_strided_slice %1748 {offsets = [0, 0], sizes = [2, 32], strides = [1, 1]} : vector<8x32xf32> to vector<2x32xf32>
    %1750 = vector.extract_strided_slice %1748 {offsets = [2, 0], sizes = [2, 32], strides = [1, 1]} : vector<8x32xf32> to vector<2x32xf32>
    %1751 = vector.extract_strided_slice %1748 {offsets = [4, 0], sizes = [2, 32], strides = [1, 1]} : vector<8x32xf32> to vector<2x32xf32>
    %1752 = vector.extract_strided_slice %1748 {offsets = [6, 0], sizes = [2, 32], strides = [1, 1]} : vector<8x32xf32> to vector<2x32xf32>
    %1753 = arith.mulf %1749, %1730 : vector<2x32xf32>
    %1754 = arith.mulf %1750, %1738 : vector<2x32xf32>
    %1755 = arith.addf %1753, %1754 : vector<2x32xf32>
    %1756 = arith.mulf %1749, %1732 : vector<2x32xf32>
    %1757 = arith.addf %1756, %1750 : vector<2x32xf32>
    %1758 = tpu.reciprocal %1757 {approx = true} : vector<2x32xf32> -> vector<2x32xf32>
    %1759 = arith.mulf %1757, %1758 : vector<2x32xf32>
    %cst_329 = arith.constant 2.000000e+00 : f32
    %1760 = vector.broadcast %cst_329 : f32 to vector<2x32xf32>
    %1761 = arith.subf %1760, %1759 : vector<2x32xf32>
    %1762 = arith.mulf %1758, %1761 : vector<2x32xf32>
    %1763 = arith.mulf %1755, %1762 : vector<2x32xf32>
    %1764 = arith.index_cast %1734 : i32 to index
    %c0_330 = arith.constant 0 : index
    %1765 = vector.load %arg19[%1764, %c0_330] : memref<48x32xf32, #tpu.memory_space<vmem>>, vector<2x32xf32>
    tpu.vector_store %arg19[%1764, %c0_330], %1763 {strides = array<i32>} : memref<48x32xf32, #tpu.memory_space<vmem>>, vector<2x32xf32>,
    %1766 = arith.mulf %1751, %1730 : vector<2x32xf32>
    %1767 = arith.mulf %1752, %1738 : vector<2x32xf32>
    %1768 = arith.addf %1766, %1767 : vector<2x32xf32>
    %1769 = arith.mulf %1751, %1732 : vector<2x32xf32>
    %1770 = arith.addf %1769, %1752 : vector<2x32xf32>
    %c18_i32_331 = arith.constant 18 : i32
    %c2_i32_332 = arith.constant 2 : i32
    %1771 = arith.muli %c18_i32_331, %c2_i32_332 : i32
    %1772 = tpu.assume_multiple %1771, 2 : i32
    %1773 = arith.index_cast %1772 : i32 to index
    %c0_333 = arith.constant 0 : index
    %1774 = vector.load %arg17[%1773, %c0_333] : memref<48x32xf32, #tpu.memory_space<vmem>>, vector<2x32xf32>
    %1775 = arith.index_cast %1772 : i32 to index
    %c0_334 = arith.constant 0 : index
    %1776 = vector.load %arg18[%1775, %c0_334] : memref<48x32xf32, #tpu.memory_space<vmem>>, vector<2x32xf32>
    %1777 = arith.addf %1083, %1774 : vector<2x32xf32>
    %1778 = arith.addf %1079, %1742 : vector<2x32xf32>
    %1779 = arith.maximumf %1742, %1777 : vector<2x32xf32>
    %1780 = arith.maximumf %1778, %1774 : vector<2x32xf32>
    %1781 = arith.subf %1742, %1779 : vector<2x32xf32>
    %1782 = arith.subf %1777, %1779 : vector<2x32xf32>
    %1783 = arith.subf %1778, %1780 : vector<2x32xf32>
    %1784 = arith.subf %1774, %1780 : vector<2x32xf32>
    %1785 = tpu.concatenate %1781, %1782, %1783, %1784 in 0 : vector<2x32xf32>, vector<2x32xf32>, vector<2x32xf32>, vector<2x32xf32> -> vector<8x32xf32>
    %1786 = math.exp %1785 : vector<8x32xf32>
    %1787 = vector.extract_strided_slice %1786 {offsets = [0, 0], sizes = [2, 32], strides = [1, 1]} : vector<8x32xf32> to vector<2x32xf32>
    %1788 = vector.extract_strided_slice %1786 {offsets = [2, 0], sizes = [2, 32], strides = [1, 1]} : vector<8x32xf32> to vector<2x32xf32>
    %1789 = vector.extract_strided_slice %1786 {offsets = [4, 0], sizes = [2, 32], strides = [1, 1]} : vector<8x32xf32> to vector<2x32xf32>
    %1790 = vector.extract_strided_slice %1786 {offsets = [6, 0], sizes = [2, 32], strides = [1, 1]} : vector<8x32xf32> to vector<2x32xf32>
    %1791 = arith.mulf %1787, %1768 : vector<2x32xf32>
    %1792 = arith.mulf %1788, %1776 : vector<2x32xf32>
    %1793 = arith.addf %1791, %1792 : vector<2x32xf32>
    %1794 = arith.mulf %1787, %1770 : vector<2x32xf32>
    %1795 = arith.addf %1794, %1788 : vector<2x32xf32>
    %1796 = tpu.reciprocal %1795 {approx = true} : vector<2x32xf32> -> vector<2x32xf32>
    %1797 = arith.mulf %1795, %1796 : vector<2x32xf32>
    %cst_335 = arith.constant 2.000000e+00 : f32
    %1798 = vector.broadcast %cst_335 : f32 to vector<2x32xf32>
    %1799 = arith.subf %1798, %1797 : vector<2x32xf32>
    %1800 = arith.mulf %1796, %1799 : vector<2x32xf32>
    %1801 = arith.mulf %1793, %1800 : vector<2x32xf32>
    %1802 = arith.index_cast %1772 : i32 to index
    %c0_336 = arith.constant 0 : index
    %1803 = vector.load %arg19[%1802, %c0_336] : memref<48x32xf32, #tpu.memory_space<vmem>>, vector<2x32xf32>
    tpu.vector_store %arg19[%1802, %c0_336], %1801 {strides = array<i32>} : memref<48x32xf32, #tpu.memory_space<vmem>>, vector<2x32xf32>,
    %1804 = arith.mulf %1789, %1768 : vector<2x32xf32>
    %1805 = arith.mulf %1790, %1776 : vector<2x32xf32>
    %1806 = arith.addf %1804, %1805 : vector<2x32xf32>
    %1807 = arith.mulf %1789, %1770 : vector<2x32xf32>
    %1808 = arith.addf %1807, %1790 : vector<2x32xf32>
    %c19_i32_337 = arith.constant 19 : i32
    %c2_i32_338 = arith.constant 2 : i32
    %1809 = arith.muli %c19_i32_337, %c2_i32_338 : i32
    %1810 = tpu.assume_multiple %1809, 2 : i32
    %1811 = arith.index_cast %1810 : i32 to index
    %c0_339 = arith.constant 0 : index
    %1812 = vector.load %arg17[%1811, %c0_339] : memref<48x32xf32, #tpu.memory_space<vmem>>, vector<2x32xf32>
    %1813 = arith.index_cast %1810 : i32 to index
    %c0_340 = arith.constant 0 : index
    %1814 = vector.load %arg18[%1813, %c0_340] : memref<48x32xf32, #tpu.memory_space<vmem>>, vector<2x32xf32>
    %1815 = arith.addf %1083, %1812 : vector<2x32xf32>
    %1816 = arith.addf %1079, %1780 : vector<2x32xf32>
    %1817 = arith.maximumf %1780, %1815 : vector<2x32xf32>
    %1818 = arith.maximumf %1816, %1812 : vector<2x32xf32>
    %1819 = arith.subf %1780, %1817 : vector<2x32xf32>
    %1820 = arith.subf %1815, %1817 : vector<2x32xf32>
    %1821 = arith.subf %1816, %1818 : vector<2x32xf32>
    %1822 = arith.subf %1812, %1818 : vector<2x32xf32>
    %1823 = tpu.concatenate %1819, %1820, %1821, %1822 in 0 : vector<2x32xf32>, vector<2x32xf32>, vector<2x32xf32>, vector<2x32xf32> -> vector<8x32xf32>
    %1824 = math.exp %1823 : vector<8x32xf32>
    %1825 = vector.extract_strided_slice %1824 {offsets = [0, 0], sizes = [2, 32], strides = [1, 1]} : vector<8x32xf32> to vector<2x32xf32>
    %1826 = vector.extract_strided_slice %1824 {offsets = [2, 0], sizes = [2, 32], strides = [1, 1]} : vector<8x32xf32> to vector<2x32xf32>
    %1827 = vector.extract_strided_slice %1824 {offsets = [4, 0], sizes = [2, 32], strides = [1, 1]} : vector<8x32xf32> to vector<2x32xf32>
    %1828 = vector.extract_strided_slice %1824 {offsets = [6, 0], sizes = [2, 32], strides = [1, 1]} : vector<8x32xf32> to vector<2x32xf32>
    %1829 = arith.mulf %1825, %1806 : vector<2x32xf32>
    %1830 = arith.mulf %1826, %1814 : vector<2x32xf32>
    %1831 = arith.addf %1829, %1830 : vector<2x32xf32>
    %1832 = arith.mulf %1825, %1808 : vector<2x32xf32>
    %1833 = arith.addf %1832, %1826 : vector<2x32xf32>
    %1834 = tpu.reciprocal %1833 {approx = true} : vector<2x32xf32> -> vector<2x32xf32>
    %1835 = arith.mulf %1833, %1834 : vector<2x32xf32>
    %cst_341 = arith.constant 2.000000e+00 : f32
    %1836 = vector.broadcast %cst_341 : f32 to vector<2x32xf32>
    %1837 = arith.subf %1836, %1835 : vector<2x32xf32>
    %1838 = arith.mulf %1834, %1837 : vector<2x32xf32>
    %1839 = arith.mulf %1831, %1838 : vector<2x32xf32>
    %1840 = arith.index_cast %1810 : i32 to index
    %c0_342 = arith.constant 0 : index
    %1841 = vector.load %arg19[%1840, %c0_342] : memref<48x32xf32, #tpu.memory_space<vmem>>, vector<2x32xf32>
    tpu.vector_store %arg19[%1840, %c0_342], %1839 {strides = array<i32>} : memref<48x32xf32, #tpu.memory_space<vmem>>, vector<2x32xf32>,
    %1842 = arith.mulf %1827, %1806 : vector<2x32xf32>
    %1843 = arith.mulf %1828, %1814 : vector<2x32xf32>
    %1844 = arith.addf %1842, %1843 : vector<2x32xf32>
    %1845 = arith.mulf %1827, %1808 : vector<2x32xf32>
    %1846 = arith.addf %1845, %1828 : vector<2x32xf32>
    %c20_i32_343 = arith.constant 20 : i32
    %c2_i32_344 = arith.constant 2 : i32
    %1847 = arith.muli %c20_i32_343, %c2_i32_344 : i32
    %1848 = tpu.assume_multiple %1847, 2 : i32
    %1849 = arith.index_cast %1848 : i32 to index
    %c0_345 = arith.constant 0 : index
    %1850 = vector.load %arg17[%1849, %c0_345] : memref<48x32xf32, #tpu.memory_space<vmem>>, vector<2x32xf32>
    %1851 = arith.index_cast %1848 : i32 to index
    %c0_346 = arith.constant 0 : index
    %1852 = vector.load %arg18[%1851, %c0_346] : memref<48x32xf32, #tpu.memory_space<vmem>>, vector<2x32xf32>
    %1853 = arith.addf %1083, %1850 : vector<2x32xf32>
    %1854 = arith.addf %1079, %1818 : vector<2x32xf32>
    %1855 = arith.maximumf %1818, %1853 : vector<2x32xf32>
    %1856 = arith.maximumf %1854, %1850 : vector<2x32xf32>
    %1857 = arith.subf %1818, %1855 : vector<2x32xf32>
    %1858 = arith.subf %1853, %1855 : vector<2x32xf32>
    %1859 = arith.subf %1854, %1856 : vector<2x32xf32>
    %1860 = arith.subf %1850, %1856 : vector<2x32xf32>
    %1861 = tpu.concatenate %1857, %1858, %1859, %1860 in 0 : vector<2x32xf32>, vector<2x32xf32>, vector<2x32xf32>, vector<2x32xf32> -> vector<8x32xf32>
    %1862 = math.exp %1861 : vector<8x32xf32>
    %1863 = vector.extract_strided_slice %1862 {offsets = [0, 0], sizes = [2, 32], strides = [1, 1]} : vector<8x32xf32> to vector<2x32xf32>
    %1864 = vector.extract_strided_slice %1862 {offsets = [2, 0], sizes = [2, 32], strides = [1, 1]} : vector<8x32xf32> to vector<2x32xf32>
    %1865 = vector.extract_strided_slice %1862 {offsets = [4, 0], sizes = [2, 32], strides = [1, 1]} : vector<8x32xf32> to vector<2x32xf32>
    %1866 = vector.extract_strided_slice %1862 {offsets = [6, 0], sizes = [2, 32], strides = [1, 1]} : vector<8x32xf32> to vector<2x32xf32>
    %1867 = arith.mulf %1863, %1844 : vector<2x32xf32>
    %1868 = arith.mulf %1864, %1852 : vector<2x32xf32>
    %1869 = arith.addf %1867, %1868 : vector<2x32xf32>
    %1870 = arith.mulf %1863, %1846 : vector<2x32xf32>
    %1871 = arith.addf %1870, %1864 : vector<2x32xf32>
    %1872 = tpu.reciprocal %1871 {approx = true} : vector<2x32xf32> -> vector<2x32xf32>
    %1873 = arith.mulf %1871, %1872 : vector<2x32xf32>
    %cst_347 = arith.constant 2.000000e+00 : f32
    %1874 = vector.broadcast %cst_347 : f32 to vector<2x32xf32>
    %1875 = arith.subf %1874, %1873 : vector<2x32xf32>
    %1876 = arith.mulf %1872, %1875 : vector<2x32xf32>
    %1877 = arith.mulf %1869, %1876 : vector<2x32xf32>
    %1878 = arith.index_cast %1848 : i32 to index
    %c0_348 = arith.constant 0 : index
    %1879 = vector.load %arg19[%1878, %c0_348] : memref<48x32xf32, #tpu.memory_space<vmem>>, vector<2x32xf32>
    tpu.vector_store %arg19[%1878, %c0_348], %1877 {strides = array<i32>} : memref<48x32xf32, #tpu.memory_space<vmem>>, vector<2x32xf32>,
    %1880 = arith.mulf %1865, %1844 : vector<2x32xf32>
    %1881 = arith.mulf %1866, %1852 : vector<2x32xf32>
    %1882 = arith.addf %1880, %1881 : vector<2x32xf32>
    %1883 = arith.mulf %1865, %1846 : vector<2x32xf32>
    %1884 = arith.addf %1883, %1866 : vector<2x32xf32>
    %c21_i32_349 = arith.constant 21 : i32
    %c2_i32_350 = arith.constant 2 : i32
    %1885 = arith.muli %c21_i32_349, %c2_i32_350 : i32
    %1886 = tpu.assume_multiple %1885, 2 : i32
    %1887 = arith.index_cast %1886 : i32 to index
    %c0_351 = arith.constant 0 : index
    %1888 = vector.load %arg17[%1887, %c0_351] : memref<48x32xf32, #tpu.memory_space<vmem>>, vector<2x32xf32>
    %1889 = arith.index_cast %1886 : i32 to index
    %c0_352 = arith.constant 0 : index
    %1890 = vector.load %arg18[%1889, %c0_352] : memref<48x32xf32, #tpu.memory_space<vmem>>, vector<2x32xf32>
    %1891 = arith.addf %1083, %1888 : vector<2x32xf32>
    %1892 = arith.addf %1079, %1856 : vector<2x32xf32>
    %1893 = arith.maximumf %1856, %1891 : vector<2x32xf32>
    %1894 = arith.maximumf %1892, %1888 : vector<2x32xf32>
    %1895 = arith.subf %1856, %1893 : vector<2x32xf32>
    %1896 = arith.subf %1891, %1893 : vector<2x32xf32>
    %1897 = arith.subf %1892, %1894 : vector<2x32xf32>
    %1898 = arith.subf %1888, %1894 : vector<2x32xf32>
    %1899 = tpu.concatenate %1895, %1896, %1897, %1898 in 0 : vector<2x32xf32>, vector<2x32xf32>, vector<2x32xf32>, vector<2x32xf32> -> vector<8x32xf32>
    %1900 = math.exp %1899 : vector<8x32xf32>
    %1901 = vector.extract_strided_slice %1900 {offsets = [0, 0], sizes = [2, 32], strides = [1, 1]} : vector<8x32xf32> to vector<2x32xf32>
    %1902 = vector.extract_strided_slice %1900 {offsets = [2, 0], sizes = [2, 32], strides = [1, 1]} : vector<8x32xf32> to vector<2x32xf32>
    %1903 = vector.extract_strided_slice %1900 {offsets = [4, 0], sizes = [2, 32], strides = [1, 1]} : vector<8x32xf32> to vector<2x32xf32>
    %1904 = vector.extract_strided_slice %1900 {offsets = [6, 0], sizes = [2, 32], strides = [1, 1]} : vector<8x32xf32> to vector<2x32xf32>
    %1905 = arith.mulf %1901, %1882 : vector<2x32xf32>
    %1906 = arith.mulf %1902, %1890 : vector<2x32xf32>
    %1907 = arith.addf %1905, %1906 : vector<2x32xf32>
    %1908 = arith.mulf %1901, %1884 : vector<2x32xf32>
    %1909 = arith.addf %1908, %1902 : vector<2x32xf32>
    %1910 = tpu.reciprocal %1909 {approx = true} : vector<2x32xf32> -> vector<2x32xf32>
    %1911 = arith.mulf %1909, %1910 : vector<2x32xf32>
    %cst_353 = arith.constant 2.000000e+00 : f32
    %1912 = vector.broadcast %cst_353 : f32 to vector<2x32xf32>
    %1913 = arith.subf %1912, %1911 : vector<2x32xf32>
    %1914 = arith.mulf %1910, %1913 : vector<2x32xf32>
    %1915 = arith.mulf %1907, %1914 : vector<2x32xf32>
    %1916 = arith.index_cast %1886 : i32 to index
    %c0_354 = arith.constant 0 : index
    %1917 = vector.load %arg19[%1916, %c0_354] : memref<48x32xf32, #tpu.memory_space<vmem>>, vector<2x32xf32>
    tpu.vector_store %arg19[%1916, %c0_354], %1915 {strides = array<i32>} : memref<48x32xf32, #tpu.memory_space<vmem>>, vector<2x32xf32>,
    %1918 = arith.mulf %1903, %1882 : vector<2x32xf32>
    %1919 = arith.mulf %1904, %1890 : vector<2x32xf32>
    %1920 = arith.addf %1918, %1919 : vector<2x32xf32>
    %1921 = arith.mulf %1903, %1884 : vector<2x32xf32>
    %1922 = arith.addf %1921, %1904 : vector<2x32xf32>
    %c22_i32_355 = arith.constant 22 : i32
    %c2_i32_356 = arith.constant 2 : i32
    %1923 = arith.muli %c22_i32_355, %c2_i32_356 : i32
    %1924 = tpu.assume_multiple %1923, 2 : i32
    %1925 = arith.index_cast %1924 : i32 to index
    %c0_357 = arith.constant 0 : index
    %1926 = vector.load %arg17[%1925, %c0_357] : memref<48x32xf32, #tpu.memory_space<vmem>>, vector<2x32xf32>
    %1927 = arith.index_cast %1924 : i32 to index
    %c0_358 = arith.constant 0 : index
    %1928 = vector.load %arg18[%1927, %c0_358] : memref<48x32xf32, #tpu.memory_space<vmem>>, vector<2x32xf32>
    %1929 = arith.addf %1083, %1926 : vector<2x32xf32>
    %1930 = arith.addf %1079, %1894 : vector<2x32xf32>
    %1931 = arith.maximumf %1894, %1929 : vector<2x32xf32>
    %1932 = arith.maximumf %1930, %1926 : vector<2x32xf32>
    %1933 = arith.subf %1894, %1931 : vector<2x32xf32>
    %1934 = arith.subf %1929, %1931 : vector<2x32xf32>
    %1935 = arith.subf %1930, %1932 : vector<2x32xf32>
    %1936 = arith.subf %1926, %1932 : vector<2x32xf32>
    %1937 = tpu.concatenate %1933, %1934, %1935, %1936 in 0 : vector<2x32xf32>, vector<2x32xf32>, vector<2x32xf32>, vector<2x32xf32> -> vector<8x32xf32>
    %1938 = math.exp %1937 : vector<8x32xf32>
    %1939 = vector.extract_strided_slice %1938 {offsets = [0, 0], sizes = [2, 32], strides = [1, 1]} : vector<8x32xf32> to vector<2x32xf32>
    %1940 = vector.extract_strided_slice %1938 {offsets = [2, 0], sizes = [2, 32], strides = [1, 1]} : vector<8x32xf32> to vector<2x32xf32>
    %1941 = vector.extract_strided_slice %1938 {offsets = [4, 0], sizes = [2, 32], strides = [1, 1]} : vector<8x32xf32> to vector<2x32xf32>
    %1942 = vector.extract_strided_slice %1938 {offsets = [6, 0], sizes = [2, 32], strides = [1, 1]} : vector<8x32xf32> to vector<2x32xf32>
    %1943 = arith.mulf %1939, %1920 : vector<2x32xf32>
    %1944 = arith.mulf %1940, %1928 : vector<2x32xf32>
    %1945 = arith.addf %1943, %1944 : vector<2x32xf32>
    %1946 = arith.mulf %1939, %1922 : vector<2x32xf32>
    %1947 = arith.addf %1946, %1940 : vector<2x32xf32>
    %1948 = tpu.reciprocal %1947 {approx = true} : vector<2x32xf32> -> vector<2x32xf32>
    %1949 = arith.mulf %1947, %1948 : vector<2x32xf32>
    %cst_359 = arith.constant 2.000000e+00 : f32
    %1950 = vector.broadcast %cst_359 : f32 to vector<2x32xf32>
    %1951 = arith.subf %1950, %1949 : vector<2x32xf32>
    %1952 = arith.mulf %1948, %1951 : vector<2x32xf32>
    %1953 = arith.mulf %1945, %1952 : vector<2x32xf32>
    %1954 = arith.index_cast %1924 : i32 to index
    %c0_360 = arith.constant 0 : index
    %1955 = vector.load %arg19[%1954, %c0_360] : memref<48x32xf32, #tpu.memory_space<vmem>>, vector<2x32xf32>
    tpu.vector_store %arg19[%1954, %c0_360], %1953 {strides = array<i32>} : memref<48x32xf32, #tpu.memory_space<vmem>>, vector<2x32xf32>,
    %1956 = arith.mulf %1941, %1920 : vector<2x32xf32>
    %1957 = arith.mulf %1942, %1928 : vector<2x32xf32>
    %1958 = arith.addf %1956, %1957 : vector<2x32xf32>
    %1959 = arith.mulf %1941, %1922 : vector<2x32xf32>
    %1960 = arith.addf %1959, %1942 : vector<2x32xf32>
    %c23_i32_361 = arith.constant 23 : i32
    %c2_i32_362 = arith.constant 2 : i32
    %1961 = arith.muli %c23_i32_361, %c2_i32_362 : i32
    %1962 = tpu.assume_multiple %1961, 2 : i32
    %1963 = arith.index_cast %1962 : i32 to index
    %c0_363 = arith.constant 0 : index
    %1964 = vector.load %arg17[%1963, %c0_363] : memref<48x32xf32, #tpu.memory_space<vmem>>, vector<2x32xf32>
    %1965 = arith.index_cast %1962 : i32 to index
    %c0_364 = arith.constant 0 : index
    %1966 = vector.load %arg18[%1965, %c0_364] : memref<48x32xf32, #tpu.memory_space<vmem>>, vector<2x32xf32>
    %1967 = arith.addf %1083, %1964 : vector<2x32xf32>
    %1968 = arith.addf %1079, %1932 : vector<2x32xf32>
    %1969 = arith.maximumf %1932, %1967 : vector<2x32xf32>
    %1970 = arith.maximumf %1968, %1964 : vector<2x32xf32>
    %1971 = arith.subf %1932, %1969 : vector<2x32xf32>
    %1972 = arith.subf %1967, %1969 : vector<2x32xf32>
    %1973 = arith.subf %1968, %1970 : vector<2x32xf32>
    %1974 = arith.subf %1964, %1970 : vector<2x32xf32>
    %1975 = tpu.concatenate %1971, %1972, %1973, %1974 in 0 : vector<2x32xf32>, vector<2x32xf32>, vector<2x32xf32>, vector<2x32xf32> -> vector<8x32xf32>
    %1976 = math.exp %1975 : vector<8x32xf32>
    %1977 = vector.extract_strided_slice %1976 {offsets = [0, 0], sizes = [2, 32], strides = [1, 1]} : vector<8x32xf32> to vector<2x32xf32>
    %1978 = vector.extract_strided_slice %1976 {offsets = [2, 0], sizes = [2, 32], strides = [1, 1]} : vector<8x32xf32> to vector<2x32xf32>
    %1979 = vector.extract_strided_slice %1976 {offsets = [4, 0], sizes = [2, 32], strides = [1, 1]} : vector<8x32xf32> to vector<2x32xf32>
    %1980 = vector.extract_strided_slice %1976 {offsets = [6, 0], sizes = [2, 32], strides = [1, 1]} : vector<8x32xf32> to vector<2x32xf32>
    %1981 = arith.mulf %1977, %1958 : vector<2x32xf32>
    %1982 = arith.mulf %1978, %1966 : vector<2x32xf32>
    %1983 = arith.addf %1981, %1982 : vector<2x32xf32>
    %1984 = arith.mulf %1977, %1960 : vector<2x32xf32>
    %1985 = arith.addf %1984, %1978 : vector<2x32xf32>
    %1986 = tpu.reciprocal %1985 {approx = true} : vector<2x32xf32> -> vector<2x32xf32>
    %1987 = arith.mulf %1985, %1986 : vector<2x32xf32>
    %cst_365 = arith.constant 2.000000e+00 : f32
    %1988 = vector.broadcast %cst_365 : f32 to vector<2x32xf32>
    %1989 = arith.subf %1988, %1987 : vector<2x32xf32>
    %1990 = arith.mulf %1986, %1989 : vector<2x32xf32>
    %1991 = arith.mulf %1983, %1990 : vector<2x32xf32>
    %1992 = arith.index_cast %1962 : i32 to index
    %c0_366 = arith.constant 0 : index
    %1993 = vector.load %arg19[%1992, %c0_366] : memref<48x32xf32, #tpu.memory_space<vmem>>, vector<2x32xf32>
    tpu.vector_store %arg19[%1992, %c0_366], %1991 {strides = array<i32>} : memref<48x32xf32, #tpu.memory_space<vmem>>, vector<2x32xf32>,
    %1994 = arith.mulf %1979, %1958 : vector<2x32xf32>
    %1995 = arith.mulf %1980, %1966 : vector<2x32xf32>
    %1996 = arith.addf %1994, %1995 : vector<2x32xf32>
    %1997 = arith.mulf %1979, %1960 : vector<2x32xf32>
    %1998 = arith.addf %1997, %1980 : vector<2x32xf32>
    %c24_i32_367 = arith.constant 24 : i32
    %c0_368 = arith.constant 0 : index
    %c0_369 = arith.constant 0 : index
    %1999 = vector.load %arg19[%c0_368, %c0_369] : memref<48x32xf32, #tpu.memory_space<vmem>>, vector<48x32xf32>
    %2000 = arith.mulf %1075, %1999 : vector<48x32xf32>
    %c1_370 = arith.constant 1 : index
    %c0_371 = arith.constant 0 : index
    %c0_372 = arith.constant 0 : index
    %2001 = vector.load %arg9[%c1_370, %c0_371, %c0_372] : memref<2x32x32xf32, #tpu.memory_space<vmem>>, vector<1x32x32xf32>
    %2002 = vector.shape_cast %2001 : vector<1x32x32xf32> to vector<32x32xf32>
    %cst_373 = arith.constant dense<0.000000e+00> : vector<48x32xf32>
    %2003 = tpu.matmul %2000, %2002, %cst_373 {dimension_numbers = #tpu.dot_dimension_numbers<[1], [0], [0], [1], [0, 0, 1, 1], [], []>} : vector<48x32xf32>, vector<32x32xf32>, vector<48x32xf32> -> vector<48x32xf32>
    %2004 = arith.addf %1029, %2003 : vector<48x32xf32>
    %c1_374 = arith.constant 1 : index
    %c0_375 = arith.constant 0 : index
    %c0_376 = arith.constant 0 : index
    %2005 = vector.load %arg3[%c1_374, %c0_375, %c0_376] : memref<2x1x32xf32, #tpu.memory_space<vmem>>, vector<1x1x32xf32>
    %2006 = vector.shape_cast %2005 : vector<1x1x32xf32> to vector<1x32xf32>
    %c1_377 = arith.constant 1 : index
    %c0_378 = arith.constant 0 : index
    %c0_379 = arith.constant 0 : index
    %2007 = vector.load %arg4[%c1_377, %c0_378, %c0_379] : memref<2x1x32xf32, #tpu.memory_space<vmem>>, vector<1x1x32xf32>
    %2008 = vector.shape_cast %2007 : vector<1x1x32xf32> to vector<1x32xf32>
    %cst_380 = arith.constant dense<0.000000e+00> : vector<48xf32>
    %2009 = vector.multi_reduction <add>, %2004, %cst_380 [1] : vector<48x32xf32> to vector<48xf32>
    %2010 = vector.shape_cast %2009 : vector<48xf32> to vector<48x1xf32>
    %cst_381 = arith.constant 3.200000e+01 : f32
    %2011 = vector.broadcast %cst_381 : f32 to vector<48x1xf32>
    %2012 = arith.divf %2010, %2011 : vector<48x1xf32>
    %2013 = vector.broadcast %2012 : vector<48x1xf32> to vector<48x32xf32>
    %2014 = arith.subf %2004, %2013 : vector<48x32xf32>
    %2015 = arith.mulf %2014, %2014 : vector<48x32xf32>
    %cst_382 = arith.constant dense<0.000000e+00> : vector<48xf32>
    %2016 = vector.multi_reduction <add>, %2015, %cst_382 [1] : vector<48x32xf32> to vector<48xf32>
    %2017 = vector.shape_cast %2016 : vector<48xf32> to vector<48x1xf32>
    %cst_383 = arith.constant 3.200000e+01 : f32
    %2018 = vector.broadcast %cst_383 : f32 to vector<48x1xf32>
    %2019 = arith.divf %2017, %2018 : vector<48x1xf32>
    %2020 = vector.broadcast %2012 : vector<48x1xf32> to vector<48x32xf32>
    %2021 = arith.subf %2004, %2020 : vector<48x32xf32>
    %cst_384 = arith.constant 9.99999974E-6 : f32
    %2022 = vector.broadcast %cst_384 : f32 to vector<48x1xf32>
    %2023 = arith.addf %2019, %2022 : vector<48x1xf32>
    %2024 = math.rsqrt %2023 : vector<48x1xf32>
    %2025 = vector.broadcast %2024 : vector<48x1xf32> to vector<48x32xf32>
    %2026 = arith.mulf %2021, %2025 : vector<48x32xf32>
    %2027 = vector.broadcast %2006 : vector<1x32xf32> to vector<48x32xf32>
    %2028 = arith.mulf %2026, %2027 : vector<48x32xf32>
    %2029 = vector.broadcast %2008 : vector<1x32xf32> to vector<48x32xf32>
    %2030 = arith.addf %2028, %2029 : vector<48x32xf32>
    %c2_i32_385 = arith.constant 2 : i32
    %2031 = tpu.dynamic_rotate %2030 by %c2_i32_385 dim 0 : vector<48x32xf32>, i32 -> vector<48x32xf32>
    %cst_386 = arith.constant 0.000000e+00 : f32
    %2032 = vector.broadcast %cst_386 : f32 to vector<48x32xf32>
    %2033 = arith.select %3, %2032, %2031 : vector<48x32xi1>, vector<48x32xf32>
    %c1_387 = arith.constant 1 : index
    %c0_388 = arith.constant 0 : index
    %c0_389 = arith.constant 0 : index
    %2034 = vector.load %arg10[%c1_387, %c0_388, %c0_389] : memref<2x32x160xf32, #tpu.memory_space<vmem>>, vector<1x32x160xf32>
    %2035 = vector.shape_cast %2034 : vector<1x32x160xf32> to vector<32x160xf32>
    %cst_390 = arith.constant dense<0.000000e+00> : vector<48x160xf32>
    %2036 = tpu.matmul %2030, %2035, %cst_390 {dimension_numbers = #tpu.dot_dimension_numbers<[1], [0], [0], [1], [0, 0, 1, 1], [], []>} : vector<48x32xf32>, vector<32x160xf32>, vector<48x160xf32> -> vector<48x160xf32>
    %c1_391 = arith.constant 1 : index
    %c0_392 = arith.constant 0 : index
    %c0_393 = arith.constant 0 : index
    %2037 = vector.load %arg11[%c1_391, %c0_392, %c0_393] : memref<2x32x160xf32, #tpu.memory_space<vmem>>, vector<1x32x160xf32>
    %2038 = vector.shape_cast %2037 : vector<1x32x160xf32> to vector<32x160xf32>
    %cst_394 = arith.constant dense<0.000000e+00> : vector<48x160xf32>
    %2039 = tpu.matmul %2033, %2038, %cst_394 {dimension_numbers = #tpu.dot_dimension_numbers<[1], [0], [0], [1], [0, 0, 1, 1], [], []>} : vector<48x32xf32>, vector<32x160xf32>, vector<48x160xf32> -> vector<48x160xf32>
    %2040 = arith.addf %2036, %2039 : vector<48x160xf32>
    %2041 = vector.extract_strided_slice %2040 {offsets = [0, 0], sizes = [48, 128], strides = [1, 1]} : vector<48x160xf32> to vector<48x128xf32>
    %cst_395 = arith.constant 0.000000e+00 : f32
    %2042 = vector.broadcast %cst_395 : f32 to vector<48x128xf32>
    %2043 = arith.maximumf %2041, %2042 : vector<48x128xf32>
    %2044 = arith.mulf %2043, %2043 : vector<48x128xf32>
    %2045 = vector.extract_strided_slice %2040 {offsets = [0, 128], sizes = [48, 32], strides = [1, 1]} : vector<48x160xf32> to vector<48x32xf32>
    %2046 = arith.negf %2045 : vector<48x32xf32>
    %2047 = math.exp %2046 : vector<48x32xf32>
    %cst_396 = arith.constant 1.000000e+00 : f32
    %2048 = vector.broadcast %cst_396 : f32 to vector<48x32xf32>
    %2049 = arith.addf %2048, %2047 : vector<48x32xf32>
    %2050 = arith.divf %2048, %2049 : vector<48x32xf32>
    %c1_397 = arith.constant 1 : index
    %c0_398 = arith.constant 0 : index
    %c0_399 = arith.constant 0 : index
    %2051 = vector.load %arg12[%c1_397, %c0_398, %c0_399] : memref<2x128x32xf32, #tpu.memory_space<vmem>>, vector<1x128x32xf32>
    %2052 = vector.shape_cast %2051 : vector<1x128x32xf32> to vector<128x32xf32>
    %cst_400 = arith.constant dense<0.000000e+00> : vector<48x32xf32>
    %2053 = tpu.matmul %2044, %2052, %cst_400 {dimension_numbers = #tpu.dot_dimension_numbers<[1], [0], [0], [1], [0, 0, 1, 1], [], []>} : vector<48x128xf32>, vector<128x32xf32>, vector<48x32xf32> -> vector<48x32xf32>
    %2054 = arith.mulf %2050, %2053 : vector<48x32xf32>
    %2055 = arith.addf %2004, %2054 : vector<48x32xf32>
    %2056 = vector.extract_strided_slice %2055 {offsets = [2, 0], sizes = [2, 32], strides = [1, 1]} : vector<48x32xf32> to vector<2x32xf32>
    %2057 = vector.extract_strided_slice %2055 {offsets = [8, 0], sizes = [2, 32], strides = [1, 1]} : vector<48x32xf32> to vector<2x32xf32>
    %2058 = vector.extract_strided_slice %2055 {offsets = [14, 0], sizes = [2, 32], strides = [1, 1]} : vector<48x32xf32> to vector<2x32xf32>
    %2059 = vector.extract_strided_slice %2055 {offsets = [20, 0], sizes = [2, 32], strides = [1, 1]} : vector<48x32xf32> to vector<2x32xf32>
    %2060 = vector.extract_strided_slice %2055 {offsets = [26, 0], sizes = [2, 32], strides = [1, 1]} : vector<48x32xf32> to vector<2x32xf32>
    %2061 = vector.extract_strided_slice %2055 {offsets = [32, 0], sizes = [2, 32], strides = [1, 1]} : vector<48x32xf32> to vector<2x32xf32>
    %2062 = vector.extract_strided_slice %2055 {offsets = [38, 0], sizes = [2, 32], strides = [1, 1]} : vector<48x32xf32> to vector<2x32xf32>
    %2063 = vector.extract_strided_slice %2055 {offsets = [44, 0], sizes = [2, 32], strides = [1, 1]} : vector<48x32xf32> to vector<2x32xf32>
    %2064 = tpu.concatenate %2056, %2057, %2058, %2059, %2060, %2061, %2062, %2063 in 0 : vector<2x32xf32>, vector<2x32xf32>, vector<2x32xf32>, vector<2x32xf32>, vector<2x32xf32>, vector<2x32xf32>, vector<2x32xf32>, vector<2x32xf32> -> vector<16x32xf32>
    %c0_401 = arith.constant 0 : index
    %c0_402 = arith.constant 0 : index
    %2065 = vector.load %arg13[%c0_401, %c0_402] : memref<1x32xf32, #tpu.memory_space<vmem>>, vector<1x32xf32>
    %c0_403 = arith.constant 0 : index
    %c0_404 = arith.constant 0 : index
    %2066 = vector.load %arg14[%c0_403, %c0_404] : memref<1x32xf32, #tpu.memory_space<vmem>>, vector<1x32xf32>
    %cst_405 = arith.constant dense<0.000000e+00> : vector<16xf32>
    %2067 = vector.multi_reduction <add>, %2064, %cst_405 [1] : vector<16x32xf32> to vector<16xf32>
    %2068 = vector.shape_cast %2067 : vector<16xf32> to vector<16x1xf32>
    %cst_406 = arith.constant 3.200000e+01 : f32
    %2069 = vector.broadcast %cst_406 : f32 to vector<16x1xf32>
    %2070 = arith.divf %2068, %2069 : vector<16x1xf32>
    %2071 = vector.broadcast %2070 : vector<16x1xf32> to vector<16x32xf32>
    %2072 = arith.subf %2064, %2071 : vector<16x32xf32>
    %2073 = arith.mulf %2072, %2072 : vector<16x32xf32>
    %cst_407 = arith.constant dense<0.000000e+00> : vector<16xf32>
    %2074 = vector.multi_reduction <add>, %2073, %cst_407 [1] : vector<16x32xf32> to vector<16xf32>
    %2075 = vector.shape_cast %2074 : vector<16xf32> to vector<16x1xf32>
    %cst_408 = arith.constant 3.200000e+01 : f32
    %2076 = vector.broadcast %cst_408 : f32 to vector<16x1xf32>
    %2077 = arith.divf %2075, %2076 : vector<16x1xf32>
    %2078 = vector.broadcast %2070 : vector<16x1xf32> to vector<16x32xf32>
    %2079 = arith.subf %2064, %2078 : vector<16x32xf32>
    %cst_409 = arith.constant 9.99999974E-6 : f32
    %2080 = vector.broadcast %cst_409 : f32 to vector<16x1xf32>
    %2081 = arith.addf %2077, %2080 : vector<16x1xf32>
    %2082 = math.rsqrt %2081 : vector<16x1xf32>
    %2083 = vector.broadcast %2082 : vector<16x1xf32> to vector<16x32xf32>
    %2084 = arith.mulf %2079, %2083 : vector<16x32xf32>
    %2085 = vector.broadcast %2065 : vector<1x32xf32> to vector<16x32xf32>
    %2086 = arith.mulf %2084, %2085 : vector<16x32xf32>
    %2087 = vector.broadcast %2066 : vector<1x32xf32> to vector<16x32xf32>
    %2088 = arith.addf %2086, %2087 : vector<16x32xf32>
    %c0_410 = arith.constant 0 : index
    %c0_411 = arith.constant 0 : index
    %2089 = vector.load %arg15[%c0_410, %c0_411] : memref<32x128xf32, #tpu.memory_space<vmem>>, vector<32x128xf32>
    %cst_412 = arith.constant dense<0.000000e+00> : vector<16x128xf32>
    %2090 = tpu.matmul %2088, %2089, %cst_412 {dimension_numbers = #tpu.dot_dimension_numbers<[1], [0], [0], [1], [0, 0, 1, 1], [], []>} : vector<16x32xf32>, vector<32x128xf32>, vector<16x128xf32> -> vector<16x128xf32>
    %c0_413 = arith.constant 0 : index
    %c0_414 = arith.constant 0 : index
    %2091 = vector.load %arg16[%c0_413, %c0_414] : memref<16x128xf32, #tpu.memory_space<vmem>>, vector<16x128xf32>
    tpu.vector_store %arg16[%c0_413, %c0_414], %2090 {strides = array<i32>} : memref<16x128xf32, #tpu.memory_space<vmem>>, vector<16x128xf32>,
    return
  }
}

</mosaic_0001>

<llo_original>
// kernel: decision_rwkv_forward.1
$region0: #{decision_rwkv_forward.1}
  #allocation0 [shape = 'u32[]', space=smem, size = 0x4, offset = 0x4, fixed_abs, tag = 'smem constant byte address 0x4 - core index']
  #allocation1 [shape = 'u32[144,128]{1,0:T(1,128)}', space=vmem, size = 0x12000, scoped, tag = 'internal scratch']
  #allocation2 [shape = 'f32[48,32]{1,0:T(8,128)}', space=vmem, size = 0x6000, scoped, tag = 'scratch operand']
  #allocation3 [shape = 'f32[48,32]{1,0:T(8,128)}', space=vmem, size = 0x6000, scoped, tag = 'scratch operand']
  #allocation4 [shape = 'f32[48,32]{1,0:T(8,128)}', space=vmem, size = 0x6000, scoped, tag = 'scratch operand']
  %s0 = inlined_call_operand.vmem [shape: f32[48,32], index: 0, kind: input, shape index: {}]
  %s1 = inlined_call_operand.vmem [shape: f32[2,1,32], index: 1, kind: input, shape index: {}]
  %s2 = inlined_call_operand.vmem [shape: f32[2,1,32], index: 2, kind: input, shape index: {}]
  %s3 = inlined_call_operand.vmem [shape: f32[2,1,32], index: 3, kind: input, shape index: {}]
  %s4 = inlined_call_operand.vmem [shape: f32[2,1,32], index: 4, kind: input, shape index: {}]
  %s5 = inlined_call_operand.vmem [shape: f32[2,1,32], index: 5, kind: input, shape index: {}]
  %s6 = inlined_call_operand.vmem [shape: f32[2,1,32], index: 6, kind: input, shape index: {}]
  %s7 = inlined_call_operand.vmem [shape: f32[2,32,96], index: 7, kind: input, shape index: {}]
  %s8 = inlined_call_operand.vmem [shape: f32[2,32,96], index: 8, kind: input, shape index: {}]
  %s9 = inlined_call_operand.vmem [shape: f32[2,32,32], index: 9, kind: input, shape index: {}]
  %s10 = inlined_call_operand.vmem [shape: f32[2,32,160], index: 10, kind: input, shape index: {}]
  %s11 = inlined_call_operand.vmem [shape: f32[2,32,160], index: 11, kind: input, shape index: {}]
  %s12 = inlined_call_operand.vmem [shape: f32[2,128,32], index: 12, kind: input, shape index: {}]
  %s13 = inlined_call_operand.vmem [shape: f32[1,32], index: 13, kind: input, shape index: {}]
  %s14 = inlined_call_operand.vmem [shape: f32[1,32], index: 14, kind: input, shape index: {}]
  %s15 = inlined_call_operand.vmem [shape: f32[32,128], index: 15, kind: input, shape index: {}]
  %s16 = inlined_call_operand.vmem [shape: f32[16,128], index: 16, kind: output, shape index: {}]
  %s17 = sld [smem:[#allocation0]]
  $region74: #{decision_rwkv_forward.1} parent=0
    _
  %s19 = ssub.s32 1, %s17
  %s20 = scalar_select 0, %s19, %s17
  // Predicated region
  $region2: #{decision_rwkv_forward.1} parent=0 // pred_check
    _
  $region3: #{decision_rwkv_forward.1} parent=0 // pred_check_branch
    %22 = sbr.rel (0) target = $region5
  $region4: #{decision_rwkv_forward.1} parent=0 // pred_region
    _
  $region5: #{decision_rwkv_forward.1} parent=0 // pred_fallthru
    _
  // Predicated region
  $region6: #{decision_rwkv_forward.1} parent=0 // pred_check
    _
  $region7: #{decision_rwkv_forward.1} parent=0 // pred_check_branch
    %24 = sbr.rel (0) target = $region9
  $region8: #{decision_rwkv_forward.1} parent=0 // pred_region
    _
  $region9: #{decision_rwkv_forward.1} parent=0 // pred_fallthru
    _
  // Predicated region
  $region10: #{decision_rwkv_forward.1} parent=0 // pred_check
    _
  $region11: #{decision_rwkv_forward.1} parent=0 // pred_check_branch
    %26 = sbr.rel (0) target = $region13
  $region12: #{decision_rwkv_forward.1} parent=0 // pred_region
    _
  $region13: #{decision_rwkv_forward.1} parent=0 // pred_fallthru
    _
  // Predicated region
  $region14: #{decision_rwkv_forward.1} parent=0 // pred_check
    _
  $region15: #{decision_rwkv_forward.1} parent=0 // pred_check_branch
    %28 = sbr.rel (0) target = $region17
  $region16: #{decision_rwkv_forward.1} parent=0 // pred_region
    _
  $region17: #{decision_rwkv_forward.1} parent=0 // pred_fallthru
    _
  // Predicated region
  $region18: #{decision_rwkv_forward.1} parent=0 // pred_check
    _
  $region19: #{decision_rwkv_forward.1} parent=0 // pred_check_branch
    %30 = sbr.rel (0) target = $region21
  $region20: #{decision_rwkv_forward.1} parent=0 // pred_region
    _
  $region21: #{decision_rwkv_forward.1} parent=0 // pred_fallthru
    _
  // Predicated region
  $region22: #{decision_rwkv_forward.1} parent=0 // pred_check
    _
  $region23: #{decision_rwkv_forward.1} parent=0 // pred_check_branch
    %32 = sbr.rel (0) target = $region25
  $region24: #{decision_rwkv_forward.1} parent=0 // pred_region
    _
  $region25: #{decision_rwkv_forward.1} parent=0 // pred_fallthru
    _
  // Predicated region
  $region26: #{decision_rwkv_forward.1} parent=0 // pred_check
    _
  $region27: #{decision_rwkv_forward.1} parent=0 // pred_check_branch
    %34 = sbr.rel (0) target = $region29
  $region28: #{decision_rwkv_forward.1} parent=0 // pred_region
    _
  $region29: #{decision_rwkv_forward.1} parent=0 // pred_fallthru
    _
  // Predicated region
  $region30: #{decision_rwkv_forward.1} parent=0 // pred_check
    _
  $region31: #{decision_rwkv_forward.1} parent=0 // pred_check_branch
    %36 = sbr.rel (0) target = $region33
  $region32: #{decision_rwkv_forward.1} parent=0 // pred_region
    _
  $region33: #{decision_rwkv_forward.1} parent=0 // pred_fallthru
    _
  // Predicated region
  $region34: #{decision_rwkv_forward.1} parent=0 // pred_check
    _
  $region35: #{decision_rwkv_forward.1} parent=0 // pred_check_branch
    %38 = sbr.rel (0) target = $region37
  $region36: #{decision_rwkv_forward.1} parent=0 // pred_region
    _
  $region37: #{decision_rwkv_forward.1} parent=0 // pred_fallthru
    _
  // Predicated region
  $region38: #{decision_rwkv_forward.1} parent=0 // pred_check
    _
  $region39: #{decision_rwkv_forward.1} parent=0 // pred_check_branch
    %40 = sbr.rel (0) target = $region41
  $region40: #{decision_rwkv_forward.1} parent=0 // pred_region
    _
  $region41: #{decision_rwkv_forward.1} parent=0 // pred_fallthru
    _
  // Predicated region
  $region42: #{decision_rwkv_forward.1} parent=0 // pred_check
    _
  $region43: #{decision_rwkv_forward.1} parent=0 // pred_check_branch
    %42 = sbr.rel (0) target = $region45
  $region44: #{decision_rwkv_forward.1} parent=0 // pred_region
    _
  $region45: #{decision_rwkv_forward.1} parent=0 // pred_fallthru
    _
  // Predicated region
  $region46: #{decision_rwkv_forward.1} parent=0 // pred_check
    _
  $region47: #{decision_rwkv_forward.1} parent=0 // pred_check_branch
    %44 = sbr.rel (0) target = $region49
  $region48: #{decision_rwkv_forward.1} parent=0 // pred_region
    _
  $region49: #{decision_rwkv_forward.1} parent=0 // pred_fallthru
    _
  // Predicated region
  $region50: #{decision_rwkv_forward.1} parent=0 // pred_check
    _
  $region51: #{decision_rwkv_forward.1} parent=0 // pred_check_branch
    %46 = sbr.rel (0) target = $region53
  $region52: #{decision_rwkv_forward.1} parent=0 // pred_region
    _
  $region53: #{decision_rwkv_forward.1} parent=0 // pred_fallthru
    _
  // Predicated region
  $region54: #{decision_rwkv_forward.1} parent=0 // pred_check
    _
  $region55: #{decision_rwkv_forward.1} parent=0 // pred_check_branch
    %48 = sbr.rel (0) target = $region57
  $region56: #{decision_rwkv_forward.1} parent=0 // pred_region
    _
  $region57: #{decision_rwkv_forward.1} parent=0 // pred_fallthru
    _
  // Predicated region
  $region58: #{decision_rwkv_forward.1} parent=0 // pred_check
    _
  $region59: #{decision_rwkv_forward.1} parent=0 // pred_check_branch
    %50 = sbr.rel (0) target = $region61
  $region60: #{decision_rwkv_forward.1} parent=0 // pred_region
    _
  $region61: #{decision_rwkv_forward.1} parent=0 // pred_fallthru
    _
  // Predicated region
  $region62: #{decision_rwkv_forward.1} parent=0 // pred_check
    _
  $region63: #{decision_rwkv_forward.1} parent=0 // pred_check_branch
    %52 = sbr.rel (0) target = $region65
  $region64: #{decision_rwkv_forward.1} parent=0 // pred_region
    _
  $region65: #{decision_rwkv_forward.1} parent=0 // pred_fallthru
    _
  %v53 = vld [vmem:[%s0] sm:$0xff]
  %v54 = vld [vmem:[%s0 + $0x8] sm:$0xff]
  %v55 = vld [vmem:[%s0 + $0x10] sm:$0xff]
  %v56 = vld [vmem:[%s0 + $0x18] sm:$0xff]
  %v57 = vld [vmem:[%s0 + $0x20] sm:$0xff]
  %v58 = vld [vmem:[%s0 + $0x28] sm:$0xff]
  %v59 = vlaneseq
  %v60 = vshrl.u32 %v59, 7
  %v61 = vadd.s32 %v60, 8
  %v62 = vadd.s32 %v60, 16
  %v63 = vadd.s32 %v60, 24
  %v64 = vadd.s32 %v60, 32
  %v65 = vadd.s32 %v60, 40
  %vm66 = vcmp.lt.s32.totalorder %v60, 2
  %vm67 = vcmp.lt.s32.totalorder %v61, 2
  %vm68 = vcmp.lt.s32.totalorder %v62, 2
  %vm69 = vcmp.lt.s32.totalorder %v63, 2
  %vm70 = vcmp.lt.s32.totalorder %v64, 2
  %vm71 = vcmp.lt.s32.totalorder %v65, 2
  %v72 = vld [vmem:[%s1] sm:$0x1]
  %v73 = vld [vmem:[%s2] sm:$0x1]
  %vm74 = vcmask 261120
  %v75 = vsel %vm74, %v53, 0.0
  %76 = vadd.xlane.f32.xlu0 %v75
  %v77 = vpop.xlane.xlu0 %76
  %v78 = vsel %vm74, %v54, 0.0
  %79 = vadd.xlane.f32.xlu0 %v78
  %v80 = vpop.xlane.xlu0 %79
  %v81 = vsel %vm74, %v55, 0.0
  %82 = vadd.xlane.f32.xlu0 %v81
  %v83 = vpop.xlane.xlu0 %82
  %v84 = vsel %vm74, %v56, 0.0
  %85 = vadd.xlane.f32.xlu0 %v84
  %v86 = vpop.xlane.xlu0 %85
  %v87 = vsel %vm74, %v57, 0.0
  %88 = vadd.xlane.f32.xlu0 %v87
  %v89 = vpop.xlane.xlu0 %88
  %v90 = vsel %vm74, %v58, 0.0
  %91 = vadd.xlane.f32.xlu0 %v90
  %v92 = vpop.xlane.xlu0 %91
  %v93 = vrcp.pop 32.0
  %v94 = vmul.f32 %v77, %v93
  %v95 = vmul.f32 %v80, %v93
  %v96 = vmul.f32 %v83, %v93
  %v97 = vmul.f32 %v86, %v93
  %v98 = vmul.f32 %v89, %v93
  %v99 = vmul.f32 %v92, %v93
  %v100 = vsub.f32 %v53, %v94
  %v101 = vsub.f32 %v54, %v95
  %v102 = vsub.f32 %v55, %v96
  %v103 = vsub.f32 %v56, %v97
  %v104 = vsub.f32 %v57, %v98
  %v105 = vsub.f32 %v58, %v99
  %v106 = vmul.f32 %v100, %v100
  %v107 = vmul.f32 %v101, %v101
  %v108 = vmul.f32 %v102, %v102
  %v109 = vmul.f32 %v103, %v103
  %v110 = vmul.f32 %v104, %v104
  %v111 = vmul.f32 %v105, %v105
  %v112 = vsel %vm74, %v106, 0.0
  %113 = vadd.xlane.f32.xlu0 %v112
  %v114 = vpop.xlane.xlu0 %113
  %v115 = vsel %vm74, %v107, 0.0
  %116 = vadd.xlane.f32.xlu0 %v115
  %v117 = vpop.xlane.xlu0 %116
  %v118 = vsel %vm74, %v108, 0.0
  %119 = vadd.xlane.f32.xlu0 %v118
  %v120 = vpop.xlane.xlu0 %119
  %v121 = vsel %vm74, %v109, 0.0
  %122 = vadd.xlane.f32.xlu0 %v121
  %v123 = vpop.xlane.xlu0 %122
  %v124 = vsel %vm74, %v110, 0.0
  %125 = vadd.xlane.f32.xlu0 %v124
  %v126 = vpop.xlane.xlu0 %125
  %v127 = vsel %vm74, %v111, 0.0
  %128 = vadd.xlane.f32.xlu0 %v127
  %v129 = vpop.xlane.xlu0 %128
  %v130 = vmul.f32 %v114, %v93
  %v131 = vmul.f32 %v117, %v93
  %v132 = vmul.f32 %v120, %v93
  %v133 = vmul.f32 %v123, %v93
  %v134 = vmul.f32 %v126, %v93
  %v135 = vmul.f32 %v129, %v93
  %v136 = vadd.f32 %v130, 1e-05
  %v137 = vadd.f32 %v131, 1e-05
  %v138 = vadd.f32 %v132, 1e-05
  %v139 = vadd.f32 %v133, 1e-05
  %v140 = vadd.f32 %v134, 1e-05
  %v141 = vadd.f32 %v135, 1e-05
  %v142 = vrsqrt.pop %v136
  %v143 = vrsqrt.pop %v137
  %v144 = vrsqrt.pop %v138
  %v145 = vrsqrt.pop %v139
  %v146 = vrsqrt.pop %v140
  %v147 = vrsqrt.pop %v141
  %v148 = vmul.f32 %v100, %v142
  %v149 = vmul.f32 %v101, %v143
  %v150 = vmul.f32 %v102, %v144
  %v151 = vmul.f32 %v103, %v145
  %v152 = vmul.f32 %v104, %v146
  %v153 = vmul.f32 %v105, %v147
  %v155 = vlaneseq
  %v156 = vshrl.u32 %v155, 7
  %v157 = vsub.s32 0, %v156
  %v158 = vrot.slane %v72, %v157
  %v160 = vmul.f32 %v148, %v158
  %v161 = vmul.f32 %v149, %v158
  %v162 = vmul.f32 %v150, %v158
  %v163 = vmul.f32 %v151, %v158
  %v164 = vmul.f32 %v152, %v158
  %v165 = vmul.f32 %v153, %v158
  %v167 = vlaneseq
  %v168 = vshrl.u32 %v167, 7
  %v169 = vsub.s32 0, %v168
  %v170 = vrot.slane %v73, %v169
  %v172 = vadd.f32 %v160, %v170
  %v173 = vadd.f32 %v161, %v170
  %v174 = vadd.f32 %v162, %v170
  %v175 = vadd.f32 %v163, %v170
  %v176 = vadd.f32 %v164, %v170
  %v177 = vadd.f32 %v165, %v170
  %v178 = vrot.slane %v172, 6
  %v179 = vrot.slane %v173, 6
  %v180 = vrot.slane %v174, 6
  %v181 = vrot.slane %v175, 6
  %v182 = vrot.slane %v176, 6
  %v183 = vrot.slane %v177, 6
  %v184 = vsel %vm66, %v182, %v183
  %v185 = vsel %vm66, %v181, %v182
  %v186 = vsel %vm66, %v180, %v181
  %v187 = vsel %vm66, %v179, %v180
  %v188 = vsel %vm66, %v178, %v179
  %v189 = vsel %vm66, %v183, %v178
  %v190 = vsel %vm66, 0.0, %v189
  %v191 = vsel %vm67, 0.0, %v188
  %v192 = vsel %vm68, 0.0, %v187
  %v193 = vsel %vm69, 0.0, %v186
  %v194 = vsel %vm70, 0.0, %v185
  %v195 = vsel %vm71, 0.0, %v184
  %v196 = vld [vmem:[%s7] sm:$0xff]
  %v197 = vld [vmem:[%s7 + $0x8] sm:$0xff]
  %v198 = vld [vmem:[%s7 + $0x10] sm:$0xff]
  %v199 = vld [vmem:[%s7 + $0x18] sm:$0xff]
  %v200 = vld [vmem:[%s8] sm:$0xff]
  %v201 = vld [vmem:[%s8 + $0x8] sm:$0xff]
  %v202 = vld [vmem:[%s8 + $0x10] sm:$0xff]
  %v203 = vld [vmem:[%s8 + $0x18] sm:$0xff]
  %v205 = vsel %vm74, %v190, 0
  %v208 = vsel %vm74, %v191, 0
  %v211 = vsel %vm74, %v192, 0
  %v214 = vsel %vm74, %v193, 0
  %v217 = vsel %vm74, %v194, 0
  %v220 = vsel %vm74, %v195, 0
  %222 = vmatprep.subr.mxu0 0.0
  %223 = vmatpush1.msra.mxu0 %v200
  %224 = vmatprep.subr.mxu0 0.0
  %225 = vmatpush1.msra.mxu0 %v201
  %226 = vmatprep.subr.mxu0 0.0
  %227 = vmatpush1.msra.mxu0 %v202
  %228 = vmatprep.subr.mxu0 0.0
  %229 = vmatpush1.msra.mxu0 %v203
  %230 = vmatprep.subr.mxu0 0.0
  %231 = vmatpush1.msra.mxu0 0.0
  %232 = vmatprep.subr.mxu0 0.0
  %233 = vmatpush1.msra.mxu0 0.0
  %234 = vmatprep.subr.mxu0 0.0
  %235 = vmatpush1.msra.mxu0 0.0
  %236 = vmatprep.subr.mxu0 0.0
  %237 = vmatpush1.msra.mxu0 0.0
  %238 = vmatprep.subr.mxu0 0.0
  %239 = vmatpush1.msra.mxu0 0.0
  %240 = vmatprep.subr.mxu0 0.0
  %241 = vmatpush1.msra.mxu0 0.0
  %242 = vmatprep.subr.mxu0 0.0
  %243 = vmatpush1.msra.mxu0 0.0
  %244 = vmatprep.subr.mxu0 0.0
  %245 = vmatpush1.msra.mxu0 0.0
  %246 = vmatprep.subr.mxu0 0.0
  %247 = vmatpush1.msra.mxu0 0.0
  %248 = vmatprep.subr.mxu0 0.0
  %249 = vmatpush1.msra.mxu0 0.0
  %250 = vmatprep.subr.mxu0 0.0
  %251 = vmatpush1.msra.mxu0 0.0
  %252 = vmatprep.subr.mxu0 0.0
  %253 = vmatpush1.msra.mxu0 0.0
  %254 = vmatprep.subr.mxu0 0.0
  %255 = vmatpush1.msra.mxu0 0.0
  %256 = vmatprep.subr.mxu0 0.0
  %257 = vmatpush1.msra.mxu0 0.0
  %258 = vmatprep.subr.mxu0 0.0
  %259 = vmatpush1.msra.mxu0 0.0
  %260 = vmatprep.subr.mxu0 0.0
  %261 = vmatpush1.msra.mxu0 0.0
  %262 = vmatprep.subr.mxu0 0.0
  %263 = vmatpush1.msra.mxu0 0.0
  %264 = vmatprep.subr.mxu0 0.0
  %265 = vmatpush1.msra.mxu0 0.0
  %266 = vmatprep.subr.mxu0 0.0
  %267 = vmatpush1.msra.mxu0 0.0
  %268 = vmatprep.subr.mxu0 0.0
  %269 = vmatpush1.msra.mxu0 0.0
  %270 = vmatprep.subr.mxu0 0.0
  %271 = vmatpush1.msra.mxu0 0.0
  %272 = vmatprep.subr.mxu0 0.0
  %273 = vmatpush1.msra.mxu0 0.0
  %274 = vmatprep.subr.mxu0 0.0
  %275 = vmatpush1.msra.mxu0 0.0
  %276 = vmatprep.subr.mxu0 0.0
  %277 = vmatpush1.msra.mxu0 0.0
  %278 = vmatprep.subr.mxu0 0.0
  %279 = vmatpush1.msra.mxu0 0.0
  %280 = vmatprep.subr.mxu0 0.0
  %281 = vmatpush1.msra.mxu0 0.0
  %282 = vmatprep.subr.mxu0 0.0
  %283 = vmatpush1.msra.mxu0 0.0
  %284 = vmatprep.subr.mxu0 0.0
  %285 = vmatpush1.msra.mxu0 0.0
  %286 = vmatprep.mubr.f32.mxu0 0.0
  %287 = vmatmul.mubr.f32.gmra.mrb[0].mxu0 %v205
  %v288 = vpop.f32.mrb[0].mxu0
  %v289 = vadd.f32 0.0, %v288
  %v290 = vpop.f32.mrb[0].mxu0
  %291 = vmatprep.mubr.f32.mxu0 0.0
  %292 = vmatmul.mubr.f32.gmra.mrb[0].mxu0 %v208
  %v293 = vpop.f32.mrb[0].mxu0
  %v294 = vadd.f32 0.0, %v293
  %v295 = vpop.f32.mrb[0].mxu0
  %296 = vmatprep.mubr.f32.mxu0 0.0
  %297 = vmatmul.mubr.f32.gmra.mrb[0].mxu0 %v211
  %v298 = vpop.f32.mrb[0].mxu0
  %v299 = vadd.f32 0.0, %v298
  %v300 = vpop.f32.mrb[0].mxu0
  %301 = vmatprep.mubr.f32.mxu0 0.0
  %302 = vmatmul.mubr.f32.gmra.mrb[0].mxu0 %v214
  %v303 = vpop.f32.mrb[0].mxu0
  %v304 = vadd.f32 0.0, %v303
  %v305 = vpop.f32.mrb[0].mxu0
  %306 = vmatprep.mubr.f32.mxu0 0.0
  %307 = vmatmul.mubr.f32.gmra.mrb[0].mxu0 %v217
  %v308 = vpop.f32.mrb[0].mxu0
  %v309 = vadd.f32 0.0, %v308
  %v310 = vpop.f32.mrb[0].mxu0
  %311 = vmatprep.mubr.f32.mxu0 0.0
  %312 = vmatmul.mubr.f32.gmra.mrb[0].mxu0 %v220
  %v313 = vpop.f32.mrb[0].mxu0
  %v314 = vadd.f32 0.0, %v313
  %v315 = vpop.f32.mrb[0].mxu0
  %316 = vdwg.mxu0
  %v318 = vsel %vm74, %v172, 0
  %v321 = vsel %vm74, %v173, 0
  %v324 = vsel %vm74, %v174, 0
  %v327 = vsel %vm74, %v175, 0
  %v330 = vsel %vm74, %v176, 0
  %v333 = vsel %vm74, %v177, 0
  %335 = vmatprep.subr.mxu0 0.0
  %336 = vmatpush1.msra.mxu0 %v196
  %337 = vmatprep.subr.mxu0 0.0
  %338 = vmatpush1.msra.mxu0 %v197
  %339 = vmatprep.subr.mxu0 0.0
  %340 = vmatpush1.msra.mxu0 %v198
  %341 = vmatprep.subr.mxu0 0.0
  %342 = vmatpush1.msra.mxu0 %v199
  %343 = vmatprep.subr.mxu0 0.0
  %344 = vmatpush1.msra.mxu0 0.0
  %345 = vmatprep.subr.mxu0 0.0
  %346 = vmatpush1.msra.mxu0 0.0
  %347 = vmatprep.subr.mxu0 0.0
  %348 = vmatpush1.msra.mxu0 0.0
  %349 = vmatprep.subr.mxu0 0.0
  %350 = vmatpush1.msra.mxu0 0.0
  %351 = vmatprep.subr.mxu0 0.0
  %352 = vmatpush1.msra.mxu0 0.0
  %353 = vmatprep.subr.mxu0 0.0
  %354 = vmatpush1.msra.mxu0 0.0
  %355 = vmatprep.subr.mxu0 0.0
  %356 = vmatpush1.msra.mxu0 0.0
  %357 = vmatprep.subr.mxu0 0.0
  %358 = vmatpush1.msra.mxu0 0.0
  %359 = vmatprep.subr.mxu0 0.0
  %360 = vmatpush1.msra.mxu0 0.0
  %361 = vmatprep.subr.mxu0 0.0
  %362 = vmatpush1.msra.mxu0 0.0
  %363 = vmatprep.subr.mxu0 0.0
  %364 = vmatpush1.msra.mxu0 0.0
  %365 = vmatprep.subr.mxu0 0.0
  %366 = vmatpush1.msra.mxu0 0.0
  %367 = vmatprep.subr.mxu0 0.0
  %368 = vmatpush1.msra.mxu0 0.0
  %369 = vmatprep.subr.mxu0 0.0
  %370 = vmatpush1.msra.mxu0 0.0
  %371 = vmatprep.subr.mxu0 0.0
  %372 = vmatpush1.msra.mxu0 0.0
  %373 = vmatprep.subr.mxu0 0.0
  %374 = vmatpush1.msra.mxu0 0.0
  %375 = vmatprep.subr.mxu0 0.0
  %376 = vmatpush1.msra.mxu0 0.0
  %377 = vmatprep.subr.mxu0 0.0
  %378 = vmatpush1.msra.mxu0 0.0
  %379 = vmatprep.subr.mxu0 0.0
  %380 = vmatpush1.msra.mxu0 0.0
  %381 = vmatprep.subr.mxu0 0.0
  %382 = vmatpush1.msra.mxu0 0.0
  %383 = vmatprep.subr.mxu0 0.0
  %384 = vmatpush1.msra.mxu0 0.0
  %385 = vmatprep.subr.mxu0 0.0
  %386 = vmatpush1.msra.mxu0 0.0
  %387 = vmatprep.subr.mxu0 0.0
  %388 = vmatpush1.msra.mxu0 0.0
  %389 = vmatprep.subr.mxu0 0.0
  %390 = vmatpush1.msra.mxu0 0.0
  %391 = vmatprep.subr.mxu0 0.0
  %392 = vmatpush1.msra.mxu0 0.0
  %393 = vmatprep.subr.mxu0 0.0
  %394 = vmatpush1.msra.mxu0 0.0
  %395 = vmatprep.subr.mxu0 0.0
  %396 = vmatpush1.msra.mxu0 0.0
  %397 = vmatprep.subr.mxu0 0.0
  %398 = vmatpush1.msra.mxu0 0.0
  %399 = vmatprep.mubr.f32.mxu0 0.0
  %400 = vmatmul.mubr.f32.gmra.mrb[0].mxu0 %v318
  %v401 = vpop.f32.mrb[0].mxu0
  %v402 = vadd.f32 %v289, %v401
  %v403 = vpop.f32.mrb[0].mxu0
  %404 = vmatprep.mubr.f32.mxu0 0.0
  %405 = vmatmul.mubr.f32.gmra.mrb[0].mxu0 %v321
  %v406 = vpop.f32.mrb[0].mxu0
  %v407 = vadd.f32 %v294, %v406
  %v408 = vpop.f32.mrb[0].mxu0
  %409 = vmatprep.mubr.f32.mxu0 0.0
  %410 = vmatmul.mubr.f32.gmra.mrb[0].mxu0 %v324
  %v411 = vpop.f32.mrb[0].mxu0
  %v412 = vadd.f32 %v299, %v411
  %v413 = vpop.f32.mrb[0].mxu0
  %414 = vmatprep.mubr.f32.mxu0 0.0
  %415 = vmatmul.mubr.f32.gmra.mrb[0].mxu0 %v327
  %v416 = vpop.f32.mrb[0].mxu0
  %v417 = vadd.f32 %v304, %v416
  %v418 = vpop.f32.mrb[0].mxu0
  %419 = vmatprep.mubr.f32.mxu0 0.0
  %420 = vmatmul.mubr.f32.gmra.mrb[0].mxu0 %v330
  %v421 = vpop.f32.mrb[0].mxu0
  %v422 = vadd.f32 %v309, %v421
  %v423 = vpop.f32.mrb[0].mxu0
  %424 = vmatprep.mubr.f32.mxu0 0.0
  %425 = vmatmul.mubr.f32.gmra.mrb[0].mxu0 %v333
  %v426 = vpop.f32.mrb[0].mxu0
  %v427 = vadd.f32 %v314, %v426
  %v428 = vpop.f32.mrb[0].mxu0
  %429 = vdwg.mxu0
  %430 = vst.msk [vmem:[#allocation2] sm:$0xff] %vm74, %v402
  %431 = vst.msk [vmem:[#allocation2 + $0x8] sm:$0xff] %vm74, %v407
  %432 = vst.msk [vmem:[#allocation2 + $0x10] sm:$0xff] %vm74, %v412
  %433 = vst.msk [vmem:[#allocation2 + $0x18] sm:$0xff] %vm74, %v417
  %434 = vst.msk [vmem:[#allocation2 + $0x20] sm:$0xff] %vm74, %v422
  %435 = vst.msk [vmem:[#allocation2 + $0x28] sm:$0xff] %vm74, %v427
  %442 = vrot.lane.b32.xlu0 %v402, 96
  %v443 = vpop.permute.xlu0 %442
  %444 = vrot.lane.b32.xlu0 %v407, 96
  %v445 = vpop.permute.xlu0 %444
  %446 = vrot.lane.b32.xlu0 %v412, 96
  %v447 = vpop.permute.xlu0 %446
  %448 = vrot.lane.b32.xlu0 %v417, 96
  %v449 = vpop.permute.xlu0 %448
  %450 = vrot.lane.b32.xlu0 %v422, 96
  %v451 = vpop.permute.xlu0 %450
  %452 = vrot.lane.b32.xlu0 %v427, 96
  %v453 = vpop.permute.xlu0 %452
  %460 = vst.msk [vmem:[#allocation3] sm:$0xff] %vm74, %v443
  %461 = vst.msk [vmem:[#allocation3 + $0x8] sm:$0xff] %vm74, %v445
  %462 = vst.msk [vmem:[#allocation3 + $0x10] sm:$0xff] %vm74, %v447
  %463 = vst.msk [vmem:[#allocation3 + $0x18] sm:$0xff] %vm74, %v449
  %464 = vst.msk [vmem:[#allocation3 + $0x20] sm:$0xff] %vm74, %v451
  %465 = vst.msk [vmem:[#allocation3 + $0x28] sm:$0xff] %vm74, %v453
  %v466 = vxor.u32 %v402, 2147483648
  %v467 = vxor.u32 %v407, 2147483648
  %v468 = vxor.u32 %v412, 2147483648
  %v469 = vxor.u32 %v417, 2147483648
  %v470 = vxor.u32 %v422, 2147483648
  %v471 = vxor.u32 %v427, 2147483648
  %v472 = vmul.f32 %v466, 1.442695
  %v473 = vpow.pop %v472
  %v474 = vmul.f32 %v467, 1.442695
  %v475 = vpow.pop %v474
  %v476 = vmul.f32 %v468, 1.442695
  %v477 = vpow.pop %v476
  %v478 = vmul.f32 %v469, 1.442695
  %v479 = vpow.pop %v478
  %v480 = vmul.f32 %v470, 1.442695
  %v481 = vpow.pop %v480
  %v482 = vmul.f32 %v471, 1.442695
  %v483 = vpow.pop %v482
  %v484 = vadd.f32 %v473, 1.0
  %v485 = vadd.f32 %v475, 1.0
  %v486 = vadd.f32 %v477, 1.0
  %v487 = vadd.f32 %v479, 1.0
  %v488 = vadd.f32 %v481, 1.0
  %v489 = vadd.f32 %v483, 1.0
  %v490 = vrcp.pop %v484
  %v491 = vmul.f32 1.0, %v490
  %v492 = vrcp.pop %v485
  %v493 = vmul.f32 1.0, %v492
  %v494 = vrcp.pop %v486
  %v495 = vmul.f32 1.0, %v494
  %v496 = vrcp.pop %v487
  %v497 = vmul.f32 1.0, %v496
  %v498 = vrcp.pop %v488
  %v499 = vmul.f32 1.0, %v498
  %v500 = vrcp.pop %v489
  %v501 = vmul.f32 1.0, %v500
  %v502 = vld [vmem:[%s5] sm:$0x1]
  %v504 = vlaneseq
  %v505 = vshrl.u32 %v504, 7
  %v506 = vsub.s32 0, %v505
  %v507 = vrot.slane %v502, %v506
  %v509 = vld [vmem:[%s6] sm:$0x1]
  %v511 = vlaneseq
  %v512 = vshrl.u32 %v511, 7
  %v513 = vsub.s32 0, %v512
  %v514 = vrot.slane %v509, %v513
  %v516 = vld [vmem:[#allocation2] sm:$0x3]
  %v517 = vld [vmem:[#allocation3] sm:$0x3]
  %v518 = vadd.f32 %v514, %v516
  %v519 = vadd.f32 %v507, -1e+38
  %v520 = vmax.f32 %v518, -1e+38
  %v521 = vmax.f32 %v519, %v516
  %v522 = vsub.f32 -1e+38, %v520
  %v523 = vsub.f32 %v518, %v520
  %v524 = vsub.f32 %v519, %v521
  %v525 = vsub.f32 %v516, %v521
  %v527 = vrot.slane %v523, 6
  %v530 = vrot.slane %v524, 4
  %v533 = vrot.slane %v525, 2
  %vm535 = vcmask 1041408
  %v536 = vsel %vm535, %v522, %v527
  %vm537 = vcmask 1043456
  %v538 = vsel %vm537, %v536, %v530
  %vm539 = vcmask 1045504
  %v540 = vsel %vm539, %v538, %v533
  %v541 = vmul.f32 %v540, 1.442695
  %v542 = vpow.pop %v541
  %v543 = vmul.f32 %v542, 0.0
  %v545 = vrot.slane %v517, 6
  %v547 = vmul.f32 %v542, %v545
  %v549 = vrot.slane %v547, 2
  %v551 = vadd.f32 %v543, %v549
  %v553 = vrot.slane %v542, 2
  %v555 = vadd.f32 %v543, %v553
  %v556 = vrcp.pop %v555
  %v557 = vmul.f32 %v555, %v556
  %v558 = vsub.f32 2.0, %v557
  %v559 = vmul.f32 %v556, %v558
  %v560 = vmul.f32 %v551, %v559
  %vm561 = vcmask 254976
  %562 = vst.msk [vmem:[#allocation4] sm:$0x3] %vm561, %v560
  %v563 = vrot.slane %v517, 2
  %v565 = vmul.f32 %v542, %v563
  %v567 = vrot.slane %v565, 2
  %v569 = vadd.f32 %v543, %v567
  %s570 = scalar_lea.vmem [#allocation2], 2
  %v571 = vld [vmem:[%s570] sm:$0x3]
  %s572 = scalar_lea.vmem [#allocation3], 2
  %v573 = vld [vmem:[%s572] sm:$0x3]
  %v574 = vadd.f32 %v514, %v571
  %v575 = vadd.f32 %v507, %v521
  %v576 = vmax.f32 %v521, %v574
  %v577 = vmax.f32 %v575, %v571
  %v578 = vsub.f32 %v521, %v576
  %v579 = vsub.f32 %v574, %v576
  %v580 = vsub.f32 %v575, %v577
  %v581 = vsub.f32 %v571, %v577
  %v583 = vrot.slane %v579, 6
  %v586 = vrot.slane %v580, 4
  %v589 = vrot.slane %v581, 2
  %v591 = vsel %vm535, %v578, %v583
  %v592 = vsel %vm537, %v591, %v586
  %v593 = vsel %vm539, %v592, %v589
  %v594 = vmul.f32 %v593, 1.442695
  %v595 = vpow.pop %v594
  %v597 = vrot.slane %v569, 4
  %v599 = vmul.f32 %v595, %v597
  %v601 = vrot.slane %v573, 6
  %v603 = vmul.f32 %v595, %v601
  %v605 = vrot.slane %v603, 2
  %v607 = vadd.f32 %v599, %v605
  %v609 = vrot.slane %v555, 4
  %v611 = vmul.f32 %v595, %v609
  %v613 = vrot.slane %v595, 2
  %v615 = vadd.f32 %v611, %v613
  %v616 = vrcp.pop %v615
  %v617 = vmul.f32 %v615, %v616
  %v618 = vsub.f32 2.0, %v617
  %v619 = vmul.f32 %v616, %v618
  %v620 = vmul.f32 %v607, %v619
  %s621 = scalar_lea.vmem [#allocation4], 2
  %622 = vst.msk [vmem:[%s621] sm:$0x3] %vm561, %v620
  %v623 = vmul.f32 %v595, %v569
  %v624 = vrot.slane %v573, 2
  %v626 = vmul.f32 %v595, %v624
  %v628 = vrot.slane %v626, 2
  %v630 = vadd.f32 %v623, %v628
  %v631 = vmul.f32 %v595, %v555
  %v632 = vadd.f32 %v631, %v613
  %s633 = scalar_lea.vmem [#allocation2], 4
  %v634 = vld [vmem:[%s633] sm:$0x3]
  %s635 = scalar_lea.vmem [#allocation3], 4
  %v636 = vld [vmem:[%s635] sm:$0x3]
  %v637 = vadd.f32 %v514, %v634
  %v638 = vadd.f32 %v507, %v577
  %v639 = vmax.f32 %v577, %v637
  %v640 = vmax.f32 %v638, %v634
  %v641 = vsub.f32 %v577, %v639
  %v642 = vsub.f32 %v637, %v639
  %v643 = vsub.f32 %v638, %v640
  %v644 = vsub.f32 %v634, %v640
  %v646 = vrot.slane %v642, 6
  %v649 = vrot.slane %v643, 4
  %v652 = vrot.slane %v644, 2
  %v654 = vsel %vm535, %v641, %v646
  %v655 = vsel %vm537, %v654, %v649
  %v656 = vsel %vm539, %v655, %v652
  %v657 = vmul.f32 %v656, 1.442695
  %v658 = vpow.pop %v657
  %v660 = vrot.slane %v630, 4
  %v662 = vmul.f32 %v658, %v660
  %v664 = vrot.slane %v636, 6
  %v666 = vmul.f32 %v658, %v664
  %v668 = vrot.slane %v666, 2
  %v670 = vadd.f32 %v662, %v668
  %v672 = vrot.slane %v632, 4
  %v674 = vmul.f32 %v658, %v672
  %v676 = vrot.slane %v658, 2
  %v678 = vadd.f32 %v674, %v676
  %v679 = vrcp.pop %v678
  %v680 = vmul.f32 %v678, %v679
  %v681 = vsub.f32 2.0, %v680
  %v682 = vmul.f32 %v679, %v681
  %v683 = vmul.f32 %v670, %v682
  %s684 = scalar_lea.vmem [#allocation4], 4
  %685 = vst.msk [vmem:[%s684] sm:$0x3] %vm561, %v683
  %v686 = vmul.f32 %v658, %v630
  %v687 = vrot.slane %v636, 2
  %v689 = vmul.f32 %v658, %v687
  %v691 = vrot.slane %v689, 2
  %v693 = vadd.f32 %v686, %v691
  %v694 = vmul.f32 %v658, %v632
  %v695 = vadd.f32 %v694, %v676
  %s696 = scalar_lea.vmem [#allocation2], 6
  %v697 = vld [vmem:[%s696] sm:$0x3]
  %s698 = scalar_lea.vmem [#allocation3], 6
  %v699 = vld [vmem:[%s698] sm:$0x3]
  %v700 = vadd.f32 %v514, %v697
  %v701 = vadd.f32 %v507, %v640
  %v702 = vmax.f32 %v640, %v700
  %v703 = vmax.f32 %v701, %v697
  %v704 = vsub.f32 %v640, %v702
  %v705 = vsub.f32 %v700, %v702
  %v706 = vsub.f32 %v701, %v703
  %v707 = vsub.f32 %v697, %v703
  %v709 = vrot.slane %v705, 6
  %v712 = vrot.slane %v706, 4
  %v715 = vrot.slane %v707, 2
  %v717 = vsel %vm535, %v704, %v709
  %v718 = vsel %vm537, %v717, %v712
  %v719 = vsel %vm539, %v718, %v715
  %v720 = vmul.f32 %v719, 1.442695
  %v721 = vpow.pop %v720
  %v723 = vrot.slane %v693, 4
  %v725 = vmul.f32 %v721, %v723
  %v727 = vrot.slane %v699, 6
  %v729 = vmul.f32 %v721, %v727
  %v731 = vrot.slane %v729, 2
  %v733 = vadd.f32 %v725, %v731
  %v735 = vrot.slane %v695, 4
  %v737 = vmul.f32 %v721, %v735
  %v739 = vrot.slane %v721, 2
  %v741 = vadd.f32 %v737, %v739
  %v742 = vrcp.pop %v741
  %v743 = vmul.f32 %v741, %v742
  %v744 = vsub.f32 2.0, %v743
  %v745 = vmul.f32 %v742, %v744
  %v746 = vmul.f32 %v733, %v745
  %s747 = scalar_lea.vmem [#allocation4], 6
  %748 = vst.msk [vmem:[%s747] sm:$0x3] %vm561, %v746
  %v749 = vmul.f32 %v721, %v693
  %v750 = vrot.slane %v699, 2
  %v752 = vmul.f32 %v721, %v750
  %v754 = vrot.slane %v752, 2
  %v756 = vadd.f32 %v749, %v754
  %v757 = vmul.f32 %v721, %v695
  %v758 = vadd.f32 %v757, %v739
  %s759 = scalar_lea.vmem [#allocation2], 8
  %v760 = vld [vmem:[%s759] sm:$0x3]
  %s761 = scalar_lea.vmem [#allocation3], 8
  %v762 = vld [vmem:[%s761] sm:$0x3]
  %v763 = vadd.f32 %v514, %v760
  %v764 = vadd.f32 %v507, %v703
  %v765 = vmax.f32 %v703, %v763
  %v766 = vmax.f32 %v764, %v760
  %v767 = vsub.f32 %v703, %v765
  %v768 = vsub.f32 %v763, %v765
  %v769 = vsub.f32 %v764, %v766
  %v770 = vsub.f32 %v760, %v766
  %v772 = vrot.slane %v768, 6
  %v775 = vrot.slane %v769, 4
  %v778 = vrot.slane %v770, 2
  %v780 = vsel %vm535, %v767, %v772
  %v781 = vsel %vm537, %v780, %v775
  %v782 = vsel %vm539, %v781, %v778
  %v783 = vmul.f32 %v782, 1.442695
  %v784 = vpow.pop %v783
  %v786 = vrot.slane %v756, 4
  %v788 = vmul.f32 %v784, %v786
  %v790 = vrot.slane %v762, 6
  %v792 = vmul.f32 %v784, %v790
  %v794 = vrot.slane %v792, 2
  %v796 = vadd.f32 %v788, %v794
  %v798 = vrot.slane %v758, 4
  %v800 = vmul.f32 %v784, %v798
  %v802 = vrot.slane %v784, 2
  %v804 = vadd.f32 %v800, %v802
  %v805 = vrcp.pop %v804
  %v806 = vmul.f32 %v804, %v805
  %v807 = vsub.f32 2.0, %v806
  %v808 = vmul.f32 %v805, %v807
  %v809 = vmul.f32 %v796, %v808
  %s810 = scalar_lea.vmem [#allocation4], 8
  %811 = vst.msk [vmem:[%s810] sm:$0x3] %vm561, %v809
  %v812 = vmul.f32 %v784, %v756
  %v813 = vrot.slane %v762, 2
  %v815 = vmul.f32 %v784, %v813
  %v817 = vrot.slane %v815, 2
  %v819 = vadd.f32 %v812, %v817
  %v820 = vmul.f32 %v784, %v758
  %v821 = vadd.f32 %v820, %v802
  %s822 = scalar_lea.vmem [#allocation2], 10
  %v823 = vld [vmem:[%s822] sm:$0x3]
  %s824 = scalar_lea.vmem [#allocation3], 10
  %v825 = vld [vmem:[%s824] sm:$0x3]
  %v826 = vadd.f32 %v514, %v823
  %v827 = vadd.f32 %v507, %v766
  %v828 = vmax.f32 %v766, %v826
  %v829 = vmax.f32 %v827, %v823
  %v830 = vsub.f32 %v766, %v828
  %v831 = vsub.f32 %v826, %v828
  %v832 = vsub.f32 %v827, %v829
  %v833 = vsub.f32 %v823, %v829
  %v835 = vrot.slane %v831, 6
  %v838 = vrot.slane %v832, 4
  %v841 = vrot.slane %v833, 2
  %v843 = vsel %vm535, %v830, %v835
  %v844 = vsel %vm537, %v843, %v838
  %v845 = vsel %vm539, %v844, %v841
  %v846 = vmul.f32 %v845, 1.442695
  %v847 = vpow.pop %v846
  %v849 = vrot.slane %v819, 4
  %v851 = vmul.f32 %v847, %v849
  %v853 = vrot.slane %v825, 6
  %v855 = vmul.f32 %v847, %v853
  %v857 = vrot.slane %v855, 2
  %v859 = vadd.f32 %v851, %v857
  %v861 = vrot.slane %v821, 4
  %v863 = vmul.f32 %v847, %v861
  %v865 = vrot.slane %v847, 2
  %v867 = vadd.f32 %v863, %v865
  %v868 = vrcp.pop %v867
  %v869 = vmul.f32 %v867, %v868
  %v870 = vsub.f32 2.0, %v869
  %v871 = vmul.f32 %v868, %v870
  %v872 = vmul.f32 %v859, %v871
  %s873 = scalar_lea.vmem [#allocation4], 10
  %874 = vst.msk [vmem:[%s873] sm:$0x3] %vm561, %v872
  %v875 = vmul.f32 %v847, %v819
  %v876 = vrot.slane %v825, 2
  %v878 = vmul.f32 %v847, %v876
  %v880 = vrot.slane %v878, 2
  %v882 = vadd.f32 %v875, %v880
  %v883 = vmul.f32 %v847, %v821
  %v884 = vadd.f32 %v883, %v865
  %s885 = scalar_lea.vmem [#allocation2], 12
  %v886 = vld [vmem:[%s885] sm:$0x3]
  %s887 = scalar_lea.vmem [#allocation3], 12
  %v888 = vld [vmem:[%s887] sm:$0x3]
  %v889 = vadd.f32 %v514, %v886
  %v890 = vadd.f32 %v507, %v829
  %v891 = vmax.f32 %v829, %v889
  %v892 = vmax.f32 %v890, %v886
  %v893 = vsub.f32 %v829, %v891
  %v894 = vsub.f32 %v889, %v891
  %v895 = vsub.f32 %v890, %v892
  %v896 = vsub.f32 %v886, %v892
  %v898 = vrot.slane %v894, 6
  %v901 = vrot.slane %v895, 4
  %v904 = vrot.slane %v896, 2
  %v906 = vsel %vm535, %v893, %v898
  %v907 = vsel %vm537, %v906, %v901
  %v908 = vsel %vm539, %v907, %v904
  %v909 = vmul.f32 %v908, 1.442695
  %v910 = vpow.pop %v909
  %v912 = vrot.slane %v882, 4
  %v914 = vmul.f32 %v910, %v912
  %v916 = vrot.slane %v888, 6
  %v918 = vmul.f32 %v910, %v916
  %v920 = vrot.slane %v918, 2
  %v922 = vadd.f32 %v914, %v920
  %v924 = vrot.slane %v884, 4
  %v926 = vmul.f32 %v910, %v924
  %v928 = vrot.slane %v910, 2
  %v930 = vadd.f32 %v926, %v928
  %v931 = vrcp.pop %v930
  %v932 = vmul.f32 %v930, %v931
  %v933 = vsub.f32 2.0, %v932
  %v934 = vmul.f32 %v931, %v933
  %v935 = vmul.f32 %v922, %v934
  %s936 = scalar_lea.vmem [#allocation4], 12
  %937 = vst.msk [vmem:[%s936] sm:$0x3] %vm561, %v935
  %v938 = vmul.f32 %v910, %v882
  %v939 = vrot.slane %v888, 2
  %v941 = vmul.f32 %v910, %v939
  %v943 = vrot.slane %v941, 2
  %v945 = vadd.f32 %v938, %v943
  %v946 = vmul.f32 %v910, %v884
  %v947 = vadd.f32 %v946, %v928
  %s948 = scalar_lea.vmem [#allocation2], 14
  %v949 = vld [vmem:[%s948] sm:$0x3]
  %s950 = scalar_lea.vmem [#allocation3], 14
  %v951 = vld [vmem:[%s950] sm:$0x3]
  %v952 = vadd.f32 %v514, %v949
  %v953 = vadd.f32 %v507, %v892
  %v954 = vmax.f32 %v892, %v952
  %v955 = vmax.f32 %v953, %v949
  %v956 = vsub.f32 %v892, %v954
  %v957 = vsub.f32 %v952, %v954
  %v958 = vsub.f32 %v953, %v955
  %v959 = vsub.f32 %v949, %v955
  %v961 = vrot.slane %v957, 6
  %v964 = vrot.slane %v958, 4
  %v967 = vrot.slane %v959, 2
  %v969 = vsel %vm535, %v956, %v961
  %v970 = vsel %vm537, %v969, %v964
  %v971 = vsel %vm539, %v970, %v967
  %v972 = vmul.f32 %v971, 1.442695
  %v973 = vpow.pop %v972
  %v975 = vrot.slane %v945, 4
  %v977 = vmul.f32 %v973, %v975
  %v979 = vrot.slane %v951, 6
  %v981 = vmul.f32 %v973, %v979
  %v983 = vrot.slane %v981, 2
  %v985 = vadd.f32 %v977, %v983
  %v987 = vrot.slane %v947, 4
  %v989 = vmul.f32 %v973, %v987
  %v991 = vrot.slane %v973, 2
  %v993 = vadd.f32 %v989, %v991
  %v994 = vrcp.pop %v993
  %v995 = vmul.f32 %v993, %v994
  %v996 = vsub.f32 2.0, %v995
  %v997 = vmul.f32 %v994, %v996
  %v998 = vmul.f32 %v985, %v997
  %s999 = scalar_lea.vmem [#allocation4], 14
  %1000 = vst.msk [vmem:[%s999] sm:$0x3] %vm561, %v998
  %v1001 = vmul.f32 %v973, %v945
  %v1002 = vrot.slane %v951, 2
  %v1004 = vmul.f32 %v973, %v1002
  %v1006 = vrot.slane %v1004, 2
  %v1008 = vadd.f32 %v1001, %v1006
  %v1009 = vmul.f32 %v973, %v947
  %v1010 = vadd.f32 %v1009, %v991
  %s1011 = scalar_lea.vmem [#allocation2], 16
  %v1012 = vld [vmem:[%s1011] sm:$0x3]
  %s1013 = scalar_lea.vmem [#allocation3], 16
  %v1014 = vld [vmem:[%s1013] sm:$0x3]
  %v1015 = vadd.f32 %v514, %v1012
  %v1016 = vadd.f32 %v507, %v955
  %v1017 = vmax.f32 %v955, %v1015
  %v1018 = vmax.f32 %v1016, %v1012
  %v1019 = vsub.f32 %v955, %v1017
  %v1020 = vsub.f32 %v1015, %v1017
  %v1021 = vsub.f32 %v1016, %v1018
  %v1022 = vsub.f32 %v1012, %v1018
  %v1024 = vrot.slane %v1020, 6
  %v1027 = vrot.slane %v1021, 4
  %v1030 = vrot.slane %v1022, 2
  %v1032 = vsel %vm535, %v1019, %v1024
  %v1033 = vsel %vm537, %v1032, %v1027
  %v1034 = vsel %vm539, %v1033, %v1030
  %v1035 = vmul.f32 %v1034, 1.442695
  %v1036 = vpow.pop %v1035
  %v1038 = vrot.slane %v1008, 4
  %v1040 = vmul.f32 %v1036, %v1038
  %v1042 = vrot.slane %v1014, 6
  %v1044 = vmul.f32 %v1036, %v1042
  %v1046 = vrot.slane %v1044, 2
  %v1048 = vadd.f32 %v1040, %v1046
  %v1050 = vrot.slane %v1010, 4
  %v1052 = vmul.f32 %v1036, %v1050
  %v1054 = vrot.slane %v1036, 2
  %v1056 = vadd.f32 %v1052, %v1054
  %v1057 = vrcp.pop %v1056
  %v1058 = vmul.f32 %v1056, %v1057
  %v1059 = vsub.f32 2.0, %v1058
  %v1060 = vmul.f32 %v1057, %v1059
  %v1061 = vmul.f32 %v1048, %v1060
  %s1062 = scalar_lea.vmem [#allocation4], 16
  %1063 = vst.msk [vmem:[%s1062] sm:$0x3] %vm561, %v1061
  %v1064 = vmul.f32 %v1036, %v1008
  %v1065 = vrot.slane %v1014, 2
  %v1067 = vmul.f32 %v1036, %v1065
  %v1069 = vrot.slane %v1067, 2
  %v1071 = vadd.f32 %v1064, %v1069
  %v1072 = vmul.f32 %v1036, %v1010
  %v1073 = vadd.f32 %v1072, %v1054
  %s1074 = scalar_lea.vmem [#allocation2], 18
  %v1075 = vld [vmem:[%s1074] sm:$0x3]
  %s1076 = scalar_lea.vmem [#allocation3], 18
  %v1077 = vld [vmem:[%s1076] sm:$0x3]
  %v1078 = vadd.f32 %v514, %v1075
  %v1079 = vadd.f32 %v507, %v1018
  %v1080 = vmax.f32 %v1018, %v1078
  %v1081 = vmax.f32 %v1079, %v1075
  %v1082 = vsub.f32 %v1018, %v1080
  %v1083 = vsub.f32 %v1078, %v1080
  %v1084 = vsub.f32 %v1079, %v1081
  %v1085 = vsub.f32 %v1075, %v1081
  %v1087 = vrot.slane %v1083, 6
  %v1090 = vrot.slane %v1084, 4
  %v1093 = vrot.slane %v1085, 2
  %v1095 = vsel %vm535, %v1082, %v1087
  %v1096 = vsel %vm537, %v1095, %v1090
  %v1097 = vsel %vm539, %v1096, %v1093
  %v1098 = vmul.f32 %v1097, 1.442695
  %v1099 = vpow.pop %v1098
  %v1101 = vrot.slane %v1071, 4
  %v1103 = vmul.f32 %v1099, %v1101
  %v1105 = vrot.slane %v1077, 6
  %v1107 = vmul.f32 %v1099, %v1105
  %v1109 = vrot.slane %v1107, 2
  %v1111 = vadd.f32 %v1103, %v1109
  %v1113 = vrot.slane %v1073, 4
  %v1115 = vmul.f32 %v1099, %v1113
  %v1117 = vrot.slane %v1099, 2
  %v1119 = vadd.f32 %v1115, %v1117
  %v1120 = vrcp.pop %v1119
  %v1121 = vmul.f32 %v1119, %v1120
  %v1122 = vsub.f32 2.0, %v1121
  %v1123 = vmul.f32 %v1120, %v1122
  %v1124 = vmul.f32 %v1111, %v1123
  %s1125 = scalar_lea.vmem [#allocation4], 18
  %1126 = vst.msk [vmem:[%s1125] sm:$0x3] %vm561, %v1124
  %v1127 = vmul.f32 %v1099, %v1071
  %v1128 = vrot.slane %v1077, 2
  %v1130 = vmul.f32 %v1099, %v1128
  %v1132 = vrot.slane %v1130, 2
  %v1134 = vadd.f32 %v1127, %v1132
  %v1135 = vmul.f32 %v1099, %v1073
  %v1136 = vadd.f32 %v1135, %v1117
  %s1137 = scalar_lea.vmem [#allocation2], 20
  %v1138 = vld [vmem:[%s1137] sm:$0x3]
  %s1139 = scalar_lea.vmem [#allocation3], 20
  %v1140 = vld [vmem:[%s1139] sm:$0x3]
  %v1141 = vadd.f32 %v514, %v1138
  %v1142 = vadd.f32 %v507, %v1081
  %v1143 = vmax.f32 %v1081, %v1141
  %v1144 = vmax.f32 %v1142, %v1138
  %v1145 = vsub.f32 %v1081, %v1143
  %v1146 = vsub.f32 %v1141, %v1143
  %v1147 = vsub.f32 %v1142, %v1144
  %v1148 = vsub.f32 %v1138, %v1144
  %v1150 = vrot.slane %v1146, 6
  %v1153 = vrot.slane %v1147, 4
  %v1156 = vrot.slane %v1148, 2
  %v1158 = vsel %vm535, %v1145, %v1150
  %v1159 = vsel %vm537, %v1158, %v1153
  %v1160 = vsel %vm539, %v1159, %v1156
  %v1161 = vmul.f32 %v1160, 1.442695
  %v1162 = vpow.pop %v1161
  %v1164 = vrot.slane %v1134, 4
  %v1166 = vmul.f32 %v1162, %v1164
  %v1168 = vrot.slane %v1140, 6
  %v1170 = vmul.f32 %v1162, %v1168
  %v1172 = vrot.slane %v1170, 2
  %v1174 = vadd.f32 %v1166, %v1172
  %v1176 = vrot.slane %v1136, 4
  %v1178 = vmul.f32 %v1162, %v1176
  %v1180 = vrot.slane %v1162, 2
  %v1182 = vadd.f32 %v1178, %v1180
  %v1183 = vrcp.pop %v1182
  %v1184 = vmul.f32 %v1182, %v1183
  %v1185 = vsub.f32 2.0, %v1184
  %v1186 = vmul.f32 %v1183, %v1185
  %v1187 = vmul.f32 %v1174, %v1186
  %s1188 = scalar_lea.vmem [#allocation4], 20
  %1189 = vst.msk [vmem:[%s1188] sm:$0x3] %vm561, %v1187
  %v1190 = vmul.f32 %v1162, %v1134
  %v1191 = vrot.slane %v1140, 2
  %v1193 = vmul.f32 %v1162, %v1191
  %v1195 = vrot.slane %v1193, 2
  %v1197 = vadd.f32 %v1190, %v1195
  %v1198 = vmul.f32 %v1162, %v1136
  %v1199 = vadd.f32 %v1198, %v1180
  %s1200 = scalar_lea.vmem [#allocation2], 22
  %v1201 = vld [vmem:[%s1200] sm:$0x3]
  %s1202 = scalar_lea.vmem [#allocation3], 22
  %v1203 = vld [vmem:[%s1202] sm:$0x3]
  %v1204 = vadd.f32 %v514, %v1201
  %v1205 = vadd.f32 %v507, %v1144
  %v1206 = vmax.f32 %v1144, %v1204
  %v1207 = vmax.f32 %v1205, %v1201
  %v1208 = vsub.f32 %v1144, %v1206
  %v1209 = vsub.f32 %v1204, %v1206
  %v1210 = vsub.f32 %v1205, %v1207
  %v1211 = vsub.f32 %v1201, %v1207
  %v1213 = vrot.slane %v1209, 6
  %v1216 = vrot.slane %v1210, 4
  %v1219 = vrot.slane %v1211, 2
  %v1221 = vsel %vm535, %v1208, %v1213
  %v1222 = vsel %vm537, %v1221, %v1216
  %v1223 = vsel %vm539, %v1222, %v1219
  %v1224 = vmul.f32 %v1223, 1.442695
  %v1225 = vpow.pop %v1224
  %v1227 = vrot.slane %v1197, 4
  %v1229 = vmul.f32 %v1225, %v1227
  %v1231 = vrot.slane %v1203, 6
  %v1233 = vmul.f32 %v1225, %v1231
  %v1235 = vrot.slane %v1233, 2
  %v1237 = vadd.f32 %v1229, %v1235
  %v1239 = vrot.slane %v1199, 4
  %v1241 = vmul.f32 %v1225, %v1239
  %v1243 = vrot.slane %v1225, 2
  %v1245 = vadd.f32 %v1241, %v1243
  %v1246 = vrcp.pop %v1245
  %v1247 = vmul.f32 %v1245, %v1246
  %v1248 = vsub.f32 2.0, %v1247
  %v1249 = vmul.f32 %v1246, %v1248
  %v1250 = vmul.f32 %v1237, %v1249
  %s1251 = scalar_lea.vmem [#allocation4], 22
  %1252 = vst.msk [vmem:[%s1251] sm:$0x3] %vm561, %v1250
  %v1253 = vmul.f32 %v1225, %v1197
  %v1254 = vrot.slane %v1203, 2
  %v1256 = vmul.f32 %v1225, %v1254
  %v1258 = vrot.slane %v1256, 2
  %v1260 = vadd.f32 %v1253, %v1258
  %v1261 = vmul.f32 %v1225, %v1199
  %v1262 = vadd.f32 %v1261, %v1243
  %s1263 = scalar_lea.vmem [#allocation2], 24
  %v1264 = vld [vmem:[%s1263] sm:$0x3]
  %s1265 = scalar_lea.vmem [#allocation3], 24
  %v1266 = vld [vmem:[%s1265] sm:$0x3]
  %v1267 = vadd.f32 %v514, %v1264
  %v1268 = vadd.f32 %v507, %v1207
  %v1269 = vmax.f32 %v1207, %v1267
  %v1270 = vmax.f32 %v1268, %v1264
  %v1271 = vsub.f32 %v1207, %v1269
  %v1272 = vsub.f32 %v1267, %v1269
  %v1273 = vsub.f32 %v1268, %v1270
  %v1274 = vsub.f32 %v1264, %v1270
  %v1276 = vrot.slane %v1272, 6
  %v1279 = vrot.slane %v1273, 4
  %v1282 = vrot.slane %v1274, 2
  %v1284 = vsel %vm535, %v1271, %v1276
  %v1285 = vsel %vm537, %v1284, %v1279
  %v1286 = vsel %vm539, %v1285, %v1282
  %v1287 = vmul.f32 %v1286, 1.442695
  %v1288 = vpow.pop %v1287
  %v1290 = vrot.slane %v1260, 4
  %v1292 = vmul.f32 %v1288, %v1290
  %v1294 = vrot.slane %v1266, 6
  %v1296 = vmul.f32 %v1288, %v1294
  %v1298 = vrot.slane %v1296, 2
  %v1300 = vadd.f32 %v1292, %v1298
  %v1302 = vrot.slane %v1262, 4
  %v1304 = vmul.f32 %v1288, %v1302
  %v1306 = vrot.slane %v1288, 2
  %v1308 = vadd.f32 %v1304, %v1306
  %v1309 = vrcp.pop %v1308
  %v1310 = vmul.f32 %v1308, %v1309
  %v1311 = vsub.f32 2.0, %v1310
  %v1312 = vmul.f32 %v1309, %v1311
  %v1313 = vmul.f32 %v1300, %v1312
  %s1314 = scalar_lea.vmem [#allocation4], 24
  %1315 = vst.msk [vmem:[%s1314] sm:$0x3] %vm561, %v1313
  %v1316 = vmul.f32 %v1288, %v1260
  %v1317 = vrot.slane %v1266, 2
  %v1319 = vmul.f32 %v1288, %v1317
  %v1321 = vrot.slane %v1319, 2
  %v1323 = vadd.f32 %v1316, %v1321
  %v1324 = vmul.f32 %v1288, %v1262
  %v1325 = vadd.f32 %v1324, %v1306
  %s1326 = scalar_lea.vmem [#allocation2], 26
  %v1327 = vld [vmem:[%s1326] sm:$0x3]
  %s1328 = scalar_lea.vmem [#allocation3], 26
  %v1329 = vld [vmem:[%s1328] sm:$0x3]
  %v1330 = vadd.f32 %v514, %v1327
  %v1331 = vadd.f32 %v507, %v1270
  %v1332 = vmax.f32 %v1270, %v1330
  %v1333 = vmax.f32 %v1331, %v1327
  %v1334 = vsub.f32 %v1270, %v1332
  %v1335 = vsub.f32 %v1330, %v1332
  %v1336 = vsub.f32 %v1331, %v1333
  %v1337 = vsub.f32 %v1327, %v1333
  %v1339 = vrot.slane %v1335, 6
  %v1342 = vrot.slane %v1336, 4
  %v1345 = vrot.slane %v1337, 2
  %v1347 = vsel %vm535, %v1334, %v1339
  %v1348 = vsel %vm537, %v1347, %v1342
  %v1349 = vsel %vm539, %v1348, %v1345
  %v1350 = vmul.f32 %v1349, 1.442695
  %v1351 = vpow.pop %v1350
  %v1353 = vrot.slane %v1323, 4
  %v1355 = vmul.f32 %v1351, %v1353
  %v1357 = vrot.slane %v1329, 6
  %v1359 = vmul.f32 %v1351, %v1357
  %v1361 = vrot.slane %v1359, 2
  %v1363 = vadd.f32 %v1355, %v1361
  %v1365 = vrot.slane %v1325, 4
  %v1367 = vmul.f32 %v1351, %v1365
  %v1369 = vrot.slane %v1351, 2
  %v1371 = vadd.f32 %v1367, %v1369
  %v1372 = vrcp.pop %v1371
  %v1373 = vmul.f32 %v1371, %v1372
  %v1374 = vsub.f32 2.0, %v1373
  %v1375 = vmul.f32 %v1372, %v1374
  %v1376 = vmul.f32 %v1363, %v1375
  %s1377 = scalar_lea.vmem [#allocation4], 26
  %1378 = vst.msk [vmem:[%s1377] sm:$0x3] %vm561, %v1376
  %v1379 = vmul.f32 %v1351, %v1323
  %v1380 = vrot.slane %v1329, 2
  %v1382 = vmul.f32 %v1351, %v1380
  %v1384 = vrot.slane %v1382, 2
  %v1386 = vadd.f32 %v1379, %v1384
  %v1387 = vmul.f32 %v1351, %v1325
  %v1388 = vadd.f32 %v1387, %v1369
  %s1389 = scalar_lea.vmem [#allocation2], 28
  %v1390 = vld [vmem:[%s1389] sm:$0x3]
  %s1391 = scalar_lea.vmem [#allocation3], 28
  %v1392 = vld [vmem:[%s1391] sm:$0x3]
  %v1393 = vadd.f32 %v514, %v1390
  %v1394 = vadd.f32 %v507, %v1333
  %v1395 = vmax.f32 %v1333, %v1393
  %v1396 = vmax.f32 %v1394, %v1390
  %v1397 = vsub.f32 %v1333, %v1395
  %v1398 = vsub.f32 %v1393, %v1395
  %v1399 = vsub.f32 %v1394, %v1396
  %v1400 = vsub.f32 %v1390, %v1396
  %v1402 = vrot.slane %v1398, 6
  %v1405 = vrot.slane %v1399, 4
  %v1408 = vrot.slane %v1400, 2
  %v1410 = vsel %vm535, %v1397, %v1402
  %v1411 = vsel %vm537, %v1410, %v1405
  %v1412 = vsel %vm539, %v1411, %v1408
  %v1413 = vmul.f32 %v1412, 1.442695
  %v1414 = vpow.pop %v1413
  %v1416 = vrot.slane %v1386, 4
  %v1418 = vmul.f32 %v1414, %v1416
  %v1420 = vrot.slane %v1392, 6
  %v1422 = vmul.f32 %v1414, %v1420
  %v1424 = vrot.slane %v1422, 2
  %v1426 = vadd.f32 %v1418, %v1424
  %v1428 = vrot.slane %v1388, 4
  %v1430 = vmul.f32 %v1414, %v1428
  %v1432 = vrot.slane %v1414, 2
  %v1434 = vadd.f32 %v1430, %v1432
  %v1435 = vrcp.pop %v1434
  %v1436 = vmul.f32 %v1434, %v1435
  %v1437 = vsub.f32 2.0, %v1436
  %v1438 = vmul.f32 %v1435, %v1437
  %v1439 = vmul.f32 %v1426, %v1438
  %s1440 = scalar_lea.vmem [#allocation4], 28
  %1441 = vst.msk [vmem:[%s1440] sm:$0x3] %vm561, %v1439
  %v1442 = vmul.f32 %v1414, %v1386
  %v1443 = vrot.slane %v1392, 2
  %v1445 = vmul.f32 %v1414, %v1443
  %v1447 = vrot.slane %v1445, 2
  %v1449 = vadd.f32 %v1442, %v1447
  %v1450 = vmul.f32 %v1414, %v1388
  %v1451 = vadd.f32 %v1450, %v1432
  %s1452 = scalar_lea.vmem [#allocation2], 30
  %v1453 = vld [vmem:[%s1452] sm:$0x3]
  %s1454 = scalar_lea.vmem [#allocation3], 30
  %v1455 = vld [vmem:[%s1454] sm:$0x3]
  %v1456 = vadd.f32 %v514, %v1453
  %v1457 = vadd.f32 %v507, %v1396
  %v1458 = vmax.f32 %v1396, %v1456
  %v1459 = vmax.f32 %v1457, %v1453
  %v1460 = vsub.f32 %v1396, %v1458
  %v1461 = vsub.f32 %v1456, %v1458
  %v1462 = vsub.f32 %v1457, %v1459
  %v1463 = vsub.f32 %v1453, %v1459
  %v1465 = vrot.slane %v1461, 6
  %v1468 = vrot.slane %v1462, 4
  %v1471 = vrot.slane %v1463, 2
  %v1473 = vsel %vm535, %v1460, %v1465
  %v1474 = vsel %vm537, %v1473, %v1468
  %v1475 = vsel %vm539, %v1474, %v1471
  %v1476 = vmul.f32 %v1475, 1.442695
  %v1477 = vpow.pop %v1476
  %v1479 = vrot.slane %v1449, 4
  %v1481 = vmul.f32 %v1477, %v1479
  %v1483 = vrot.slane %v1455, 6
  %v1485 = vmul.f32 %v1477, %v1483
  %v1487 = vrot.slane %v1485, 2
  %v1489 = vadd.f32 %v1481, %v1487
  %v1491 = vrot.slane %v1451, 4
  %v1493 = vmul.f32 %v1477, %v1491
  %v1495 = vrot.slane %v1477, 2
  %v1497 = vadd.f32 %v1493, %v1495
  %v1498 = vrcp.pop %v1497
  %v1499 = vmul.f32 %v1497, %v1498
  %v1500 = vsub.f32 2.0, %v1499
  %v1501 = vmul.f32 %v1498, %v1500
  %v1502 = vmul.f32 %v1489, %v1501
  %s1503 = scalar_lea.vmem [#allocation4], 30
  %1504 = vst.msk [vmem:[%s1503] sm:$0x3] %vm561, %v1502
  %v1505 = vmul.f32 %v1477, %v1449
  %v1506 = vrot.slane %v1455, 2
  %v1508 = vmul.f32 %v1477, %v1506
  %v1510 = vrot.slane %v1508, 2
  %v1512 = vadd.f32 %v1505, %v1510
  %v1513 = vmul.f32 %v1477, %v1451
  %v1514 = vadd.f32 %v1513, %v1495
  %s1515 = scalar_lea.vmem [#allocation2], 32
  %v1516 = vld [vmem:[%s1515] sm:$0x3]
  %s1517 = scalar_lea.vmem [#allocation3], 32
  %v1518 = vld [vmem:[%s1517] sm:$0x3]
  %v1519 = vadd.f32 %v514, %v1516
  %v1520 = vadd.f32 %v507, %v1459
  %v1521 = vmax.f32 %v1459, %v1519
  %v1522 = vmax.f32 %v1520, %v1516
  %v1523 = vsub.f32 %v1459, %v1521
  %v1524 = vsub.f32 %v1519, %v1521
  %v1525 = vsub.f32 %v1520, %v1522
  %v1526 = vsub.f32 %v1516, %v1522
  %v1528 = vrot.slane %v1524, 6
  %v1531 = vrot.slane %v1525, 4
  %v1534 = vrot.slane %v1526, 2
  %v1536 = vsel %vm535, %v1523, %v1528
  %v1537 = vsel %vm537, %v1536, %v1531
  %v1538 = vsel %vm539, %v1537, %v1534
  %v1539 = vmul.f32 %v1538, 1.442695
  %v1540 = vpow.pop %v1539
  %v1542 = vrot.slane %v1512, 4
  %v1544 = vmul.f32 %v1540, %v1542
  %v1546 = vrot.slane %v1518, 6
  %v1548 = vmul.f32 %v1540, %v1546
  %v1550 = vrot.slane %v1548, 2
  %v1552 = vadd.f32 %v1544, %v1550
  %v1554 = vrot.slane %v1514, 4
  %v1556 = vmul.f32 %v1540, %v1554
  %v1558 = vrot.slane %v1540, 2
  %v1560 = vadd.f32 %v1556, %v1558
  %v1561 = vrcp.pop %v1560
  %v1562 = vmul.f32 %v1560, %v1561
  %v1563 = vsub.f32 2.0, %v1562
  %v1564 = vmul.f32 %v1561, %v1563
  %v1565 = vmul.f32 %v1552, %v1564
  %s1566 = scalar_lea.vmem [#allocation4], 32
  %1567 = vst.msk [vmem:[%s1566] sm:$0x3] %vm561, %v1565
  %v1568 = vmul.f32 %v1540, %v1512
  %v1569 = vrot.slane %v1518, 2
  %v1571 = vmul.f32 %v1540, %v1569
  %v1573 = vrot.slane %v1571, 2
  %v1575 = vadd.f32 %v1568, %v1573
  %v1576 = vmul.f32 %v1540, %v1514
  %v1577 = vadd.f32 %v1576, %v1558
  %s1578 = scalar_lea.vmem [#allocation2], 34
  %v1579 = vld [vmem:[%s1578] sm:$0x3]
  %s1580 = scalar_lea.vmem [#allocation3], 34
  %v1581 = vld [vmem:[%s1580] sm:$0x3]
  %v1582 = vadd.f32 %v514, %v1579
  %v1583 = vadd.f32 %v507, %v1522
  %v1584 = vmax.f32 %v1522, %v1582
  %v1585 = vmax.f32 %v1583, %v1579
  %v1586 = vsub.f32 %v1522, %v1584
  %v1587 = vsub.f32 %v1582, %v1584
  %v1588 = vsub.f32 %v1583, %v1585
  %v1589 = vsub.f32 %v1579, %v1585
  %v1591 = vrot.slane %v1587, 6
  %v1594 = vrot.slane %v1588, 4
  %v1597 = vrot.slane %v1589, 2
  %v1599 = vsel %vm535, %v1586, %v1591
  %v1600 = vsel %vm537, %v1599, %v1594
  %v1601 = vsel %vm539, %v1600, %v1597
  %v1602 = vmul.f32 %v1601, 1.442695
  %v1603 = vpow.pop %v1602
  %v1605 = vrot.slane %v1575, 4
  %v1607 = vmul.f32 %v1603, %v1605
  %v1609 = vrot.slane %v1581, 6
  %v1611 = vmul.f32 %v1603, %v1609
  %v1613 = vrot.slane %v1611, 2
  %v1615 = vadd.f32 %v1607, %v1613
  %v1617 = vrot.slane %v1577, 4
  %v1619 = vmul.f32 %v1603, %v1617
  %v1621 = vrot.slane %v1603, 2
  %v1623 = vadd.f32 %v1619, %v1621
  %v1624 = vrcp.pop %v1623
  %v1625 = vmul.f32 %v1623, %v1624
  %v1626 = vsub.f32 2.0, %v1625
  %v1627 = vmul.f32 %v1624, %v1626
  %v1628 = vmul.f32 %v1615, %v1627
  %s1629 = scalar_lea.vmem [#allocation4], 34
  %1630 = vst.msk [vmem:[%s1629] sm:$0x3] %vm561, %v1628
  %v1631 = vmul.f32 %v1603, %v1575
  %v1632 = vrot.slane %v1581, 2
  %v1634 = vmul.f32 %v1603, %v1632
  %v1636 = vrot.slane %v1634, 2
  %v1638 = vadd.f32 %v1631, %v1636
  %v1639 = vmul.f32 %v1603, %v1577
  %v1640 = vadd.f32 %v1639, %v1621
  %s1641 = scalar_lea.vmem [#allocation2], 36
  %v1642 = vld [vmem:[%s1641] sm:$0x3]
  %s1643 = scalar_lea.vmem [#allocation3], 36
  %v1644 = vld [vmem:[%s1643] sm:$0x3]
  %v1645 = vadd.f32 %v514, %v1642
  %v1646 = vadd.f32 %v507, %v1585
  %v1647 = vmax.f32 %v1585, %v1645
  %v1648 = vmax.f32 %v1646, %v1642
  %v1649 = vsub.f32 %v1585, %v1647
  %v1650 = vsub.f32 %v1645, %v1647
  %v1651 = vsub.f32 %v1646, %v1648
  %v1652 = vsub.f32 %v1642, %v1648
  %v1654 = vrot.slane %v1650, 6
  %v1657 = vrot.slane %v1651, 4
  %v1660 = vrot.slane %v1652, 2
  %v1662 = vsel %vm535, %v1649, %v1654
  %v1663 = vsel %vm537, %v1662, %v1657
  %v1664 = vsel %vm539, %v1663, %v1660
  %v1665 = vmul.f32 %v1664, 1.442695
  %v1666 = vpow.pop %v1665
  %v1668 = vrot.slane %v1638, 4
  %v1670 = vmul.f32 %v1666, %v1668
  %v1672 = vrot.slane %v1644, 6
  %v1674 = vmul.f32 %v1666, %v1672
  %v1676 = vrot.slane %v1674, 2
  %v1678 = vadd.f32 %v1670, %v1676
  %v1680 = vrot.slane %v1640, 4
  %v1682 = vmul.f32 %v1666, %v1680
  %v1684 = vrot.slane %v1666, 2
  %v1686 = vadd.f32 %v1682, %v1684
  %v1687 = vrcp.pop %v1686
  %v1688 = vmul.f32 %v1686, %v1687
  %v1689 = vsub.f32 2.0, %v1688
  %v1690 = vmul.f32 %v1687, %v1689
  %v1691 = vmul.f32 %v1678, %v1690
  %s1692 = scalar_lea.vmem [#allocation4], 36
  %1693 = vst.msk [vmem:[%s1692] sm:$0x3] %vm561, %v1691
  %v1694 = vmul.f32 %v1666, %v1638
  %v1695 = vrot.slane %v1644, 2
  %v1697 = vmul.f32 %v1666, %v1695
  %v1699 = vrot.slane %v1697, 2
  %v1701 = vadd.f32 %v1694, %v1699
  %v1702 = vmul.f32 %v1666, %v1640
  %v1703 = vadd.f32 %v1702, %v1684
  %s1704 = scalar_lea.vmem [#allocation2], 38
  %v1705 = vld [vmem:[%s1704] sm:$0x3]
  %s1706 = scalar_lea.vmem [#allocation3], 38
  %v1707 = vld [vmem:[%s1706] sm:$0x3]
  %v1708 = vadd.f32 %v514, %v1705
  %v1709 = vadd.f32 %v507, %v1648
  %v1710 = vmax.f32 %v1648, %v1708
  %v1711 = vmax.f32 %v1709, %v1705
  %v1712 = vsub.f32 %v1648, %v1710
  %v1713 = vsub.f32 %v1708, %v1710
  %v1714 = vsub.f32 %v1709, %v1711
  %v1715 = vsub.f32 %v1705, %v1711
  %v1717 = vrot.slane %v1713, 6
  %v1720 = vrot.slane %v1714, 4
  %v1723 = vrot.slane %v1715, 2
  %v1725 = vsel %vm535, %v1712, %v1717
  %v1726 = vsel %vm537, %v1725, %v1720
  %v1727 = vsel %vm539, %v1726, %v1723
  %v1728 = vmul.f32 %v1727, 1.442695
  %v1729 = vpow.pop %v1728
  %v1731 = vrot.slane %v1701, 4
  %v1733 = vmul.f32 %v1729, %v1731
  %v1735 = vrot.slane %v1707, 6
  %v1737 = vmul.f32 %v1729, %v1735
  %v1739 = vrot.slane %v1737, 2
  %v1741 = vadd.f32 %v1733, %v1739
  %v1743 = vrot.slane %v1703, 4
  %v1745 = vmul.f32 %v1729, %v1743
  %v1747 = vrot.slane %v1729, 2
  %v1749 = vadd.f32 %v1745, %v1747
  %v1750 = vrcp.pop %v1749
  %v1751 = vmul.f32 %v1749, %v1750
  %v1752 = vsub.f32 2.0, %v1751
  %v1753 = vmul.f32 %v1750, %v1752
  %v1754 = vmul.f32 %v1741, %v1753
  %s1755 = scalar_lea.vmem [#allocation4], 38
  %1756 = vst.msk [vmem:[%s1755] sm:$0x3] %vm561, %v1754
  %v1757 = vmul.f32 %v1729, %v1701
  %v1758 = vrot.slane %v1707, 2
  %v1760 = vmul.f32 %v1729, %v1758
  %v1762 = vrot.slane %v1760, 2
  %v1764 = vadd.f32 %v1757, %v1762
  %v1765 = vmul.f32 %v1729, %v1703
  %v1766 = vadd.f32 %v1765, %v1747
  %s1767 = scalar_lea.vmem [#allocation2], 40
  %v1768 = vld [vmem:[%s1767] sm:$0x3]
  %s1769 = scalar_lea.vmem [#allocation3], 40
  %v1770 = vld [vmem:[%s1769] sm:$0x3]
  %v1771 = vadd.f32 %v514, %v1768
  %v1772 = vadd.f32 %v507, %v1711
  %v1773 = vmax.f32 %v1711, %v1771
  %v1774 = vmax.f32 %v1772, %v1768
  %v1775 = vsub.f32 %v1711, %v1773
  %v1776 = vsub.f32 %v1771, %v1773
  %v1777 = vsub.f32 %v1772, %v1774
  %v1778 = vsub.f32 %v1768, %v1774
  %v1780 = vrot.slane %v1776, 6
  %v1783 = vrot.slane %v1777, 4
  %v1786 = vrot.slane %v1778, 2
  %v1788 = vsel %vm535, %v1775, %v1780
  %v1789 = vsel %vm537, %v1788, %v1783
  %v1790 = vsel %vm539, %v1789, %v1786
  %v1791 = vmul.f32 %v1790, 1.442695
  %v1792 = vpow.pop %v1791
  %v1794 = vrot.slane %v1764, 4
  %v1796 = vmul.f32 %v1792, %v1794
  %v1798 = vrot.slane %v1770, 6
  %v1800 = vmul.f32 %v1792, %v1798
  %v1802 = vrot.slane %v1800, 2
  %v1804 = vadd.f32 %v1796, %v1802
  %v1806 = vrot.slane %v1766, 4
  %v1808 = vmul.f32 %v1792, %v1806
  %v1810 = vrot.slane %v1792, 2
  %v1812 = vadd.f32 %v1808, %v1810
  %v1813 = vrcp.pop %v1812
  %v1814 = vmul.f32 %v1812, %v1813
  %v1815 = vsub.f32 2.0, %v1814
  %v1816 = vmul.f32 %v1813, %v1815
  %v1817 = vmul.f32 %v1804, %v1816
  %s1818 = scalar_lea.vmem [#allocation4], 40
  %1819 = vst.msk [vmem:[%s1818] sm:$0x3] %vm561, %v1817
  %v1820 = vmul.f32 %v1792, %v1764
  %v1821 = vrot.slane %v1770, 2
  %v1823 = vmul.f32 %v1792, %v1821
  %v1825 = vrot.slane %v1823, 2
  %v1827 = vadd.f32 %v1820, %v1825
  %v1828 = vmul.f32 %v1792, %v1766
  %v1829 = vadd.f32 %v1828, %v1810
  %s1830 = scalar_lea.vmem [#allocation2], 42
  %v1831 = vld [vmem:[%s1830] sm:$0x3]
  %s1832 = scalar_lea.vmem [#allocation3], 42
  %v1833 = vld [vmem:[%s1832] sm:$0x3]
  %v1834 = vadd.f32 %v514, %v1831
  %v1835 = vadd.f32 %v507, %v1774
  %v1836 = vmax.f32 %v1774, %v1834
  %v1837 = vmax.f32 %v1835, %v1831
  %v1838 = vsub.f32 %v1774, %v1836
  %v1839 = vsub.f32 %v1834, %v1836
  %v1840 = vsub.f32 %v1835, %v1837
  %v1841 = vsub.f32 %v1831, %v1837
  %v1843 = vrot.slane %v1839, 6
  %v1846 = vrot.slane %v1840, 4
  %v1849 = vrot.slane %v1841, 2
  %v1851 = vsel %vm535, %v1838, %v1843
  %v1852 = vsel %vm537, %v1851, %v1846
  %v1853 = vsel %vm539, %v1852, %v1849
  %v1854 = vmul.f32 %v1853, 1.442695
  %v1855 = vpow.pop %v1854
  %v1857 = vrot.slane %v1827, 4
  %v1859 = vmul.f32 %v1855, %v1857
  %v1861 = vrot.slane %v1833, 6
  %v1863 = vmul.f32 %v1855, %v1861
  %v1865 = vrot.slane %v1863, 2
  %v1867 = vadd.f32 %v1859, %v1865
  %v1869 = vrot.slane %v1829, 4
  %v1871 = vmul.f32 %v1855, %v1869
  %v1873 = vrot.slane %v1855, 2
  %v1875 = vadd.f32 %v1871, %v1873
  %v1876 = vrcp.pop %v1875
  %v1877 = vmul.f32 %v1875, %v1876
  %v1878 = vsub.f32 2.0, %v1877
  %v1879 = vmul.f32 %v1876, %v1878
  %v1880 = vmul.f32 %v1867, %v1879
  %s1881 = scalar_lea.vmem [#allocation4], 42
  %1882 = vst.msk [vmem:[%s1881] sm:$0x3] %vm561, %v1880
  %v1883 = vmul.f32 %v1855, %v1827
  %v1884 = vrot.slane %v1833, 2
  %v1886 = vmul.f32 %v1855, %v1884
  %v1888 = vrot.slane %v1886, 2
  %v1890 = vadd.f32 %v1883, %v1888
  %v1891 = vmul.f32 %v1855, %v1829
  %v1892 = vadd.f32 %v1891, %v1873
  %s1893 = scalar_lea.vmem [#allocation2], 44
  %v1894 = vld [vmem:[%s1893] sm:$0x3]
  %s1895 = scalar_lea.vmem [#allocation3], 44
  %v1896 = vld [vmem:[%s1895] sm:$0x3]
  %v1897 = vadd.f32 %v514, %v1894
  %v1898 = vadd.f32 %v507, %v1837
  %v1899 = vmax.f32 %v1837, %v1897
  %v1900 = vmax.f32 %v1898, %v1894
  %v1901 = vsub.f32 %v1837, %v1899
  %v1902 = vsub.f32 %v1897, %v1899
  %v1903 = vsub.f32 %v1898, %v1900
  %v1904 = vsub.f32 %v1894, %v1900
  %v1906 = vrot.slane %v1902, 6
  %v1909 = vrot.slane %v1903, 4
  %v1912 = vrot.slane %v1904, 2
  %v1914 = vsel %vm535, %v1901, %v1906
  %v1915 = vsel %vm537, %v1914, %v1909
  %v1916 = vsel %vm539, %v1915, %v1912
  %v1917 = vmul.f32 %v1916, 1.442695
  %v1918 = vpow.pop %v1917
  %v1920 = vrot.slane %v1890, 4
  %v1922 = vmul.f32 %v1918, %v1920
  %v1924 = vrot.slane %v1896, 6
  %v1926 = vmul.f32 %v1918, %v1924
  %v1928 = vrot.slane %v1926, 2
  %v1930 = vadd.f32 %v1922, %v1928
  %v1932 = vrot.slane %v1892, 4
  %v1934 = vmul.f32 %v1918, %v1932
  %v1936 = vrot.slane %v1918, 2
  %v1938 = vadd.f32 %v1934, %v1936
  %v1939 = vrcp.pop %v1938
  %v1940 = vmul.f32 %v1938, %v1939
  %v1941 = vsub.f32 2.0, %v1940
  %v1942 = vmul.f32 %v1939, %v1941
  %v1943 = vmul.f32 %v1930, %v1942
  %s1944 = scalar_lea.vmem [#allocation4], 44
  %1945 = vst.msk [vmem:[%s1944] sm:$0x3] %vm561, %v1943
  %v1946 = vmul.f32 %v1918, %v1890
  %v1947 = vrot.slane %v1896, 2
  %v1949 = vmul.f32 %v1918, %v1947
  %v1951 = vrot.slane %v1949, 2
  %v1953 = vadd.f32 %v1946, %v1951
  %v1954 = vmul.f32 %v1918, %v1892
  %v1955 = vadd.f32 %v1954, %v1936
  %s1956 = scalar_lea.vmem [#allocation2], 46
  %v1957 = vld [vmem:[%s1956] sm:$0x3]
  %s1958 = scalar_lea.vmem [#allocation3], 46
  %v1959 = vld [vmem:[%s1958] sm:$0x3]
  %v1960 = vadd.f32 %v514, %v1957
  %v1961 = vadd.f32 %v507, %v1900
  %v1962 = vmax.f32 %v1900, %v1960
  %v1963 = vmax.f32 %v1961, %v1957
  %v1964 = vsub.f32 %v1900, %v1962
  %v1965 = vsub.f32 %v1960, %v1962
  %v1966 = vsub.f32 %v1961, %v1963
  %v1967 = vsub.f32 %v1957, %v1963
  %v1969 = vrot.slane %v1965, 6
  %v1972 = vrot.slane %v1966, 4
  %v1975 = vrot.slane %v1967, 2
  %v1977 = vsel %vm535, %v1964, %v1969
  %v1978 = vsel %vm537, %v1977, %v1972
  %v1979 = vsel %vm539, %v1978, %v1975
  %v1980 = vmul.f32 %v1979, 1.442695
  %v1981 = vpow.pop %v1980
  %v1983 = vrot.slane %v1953, 4
  %v1985 = vmul.f32 %v1981, %v1983
  %v1987 = vrot.slane %v1959, 6
  %v1989 = vmul.f32 %v1981, %v1987
  %v1991 = vrot.slane %v1989, 2
  %v1993 = vadd.f32 %v1985, %v1991
  %v1995 = vrot.slane %v1955, 4
  %v1997 = vmul.f32 %v1981, %v1995
  %v1999 = vrot.slane %v1981, 2
  %v2001 = vadd.f32 %v1997, %v1999
  %v2002 = vrcp.pop %v2001
  %v2003 = vmul.f32 %v2001, %v2002
  %v2004 = vsub.f32 2.0, %v2003
  %v2005 = vmul.f32 %v2002, %v2004
  %v2006 = vmul.f32 %v1993, %v2005
  %s2007 = scalar_lea.vmem [#allocation4], 46
  %2008 = vst.msk [vmem:[%s2007] sm:$0x3] %vm561, %v2006
  %v2009 = vld [vmem:[#allocation4] sm:$0xff]
  %v2010 = vld [vmem:[#allocation4 + $0x8] sm:$0xff]
  %v2011 = vld [vmem:[#allocation4 + $0x10] sm:$0xff]
  %v2012 = vld [vmem:[#allocation4 + $0x18] sm:$0xff]
  %v2013 = vld [vmem:[#allocation4 + $0x20] sm:$0xff]
  %v2014 = vld [vmem:[#allocation4 + $0x28] sm:$0xff]
  %2021 = vrot.lane.b32.xlu0 %v2009, 64
  %v2022 = vpop.permute.xlu0 %2021
  %2023 = vrot.lane.b32.xlu0 %v2010, 64
  %v2024 = vpop.permute.xlu0 %2023
  %2025 = vrot.lane.b32.xlu0 %v2011, 64
  %v2026 = vpop.permute.xlu0 %2025
  %2027 = vrot.lane.b32.xlu0 %v2012, 64
  %v2028 = vpop.permute.xlu0 %2027
  %2029 = vrot.lane.b32.xlu0 %v2013, 64
  %v2030 = vpop.permute.xlu0 %2029
  %2031 = vrot.lane.b32.xlu0 %v2014, 64
  %v2032 = vpop.permute.xlu0 %2031
  %v2039 = vmul.f32 %v491, %v2022
  %v2040 = vmul.f32 %v493, %v2024
  %v2041 = vmul.f32 %v495, %v2026
  %v2042 = vmul.f32 %v497, %v2028
  %v2043 = vmul.f32 %v499, %v2030
  %v2044 = vmul.f32 %v501, %v2032
  %v2045 = vld [vmem:[%s9] sm:$0xff]
  %v2046 = vld [vmem:[%s9 + $0x8] sm:$0xff]
  %v2047 = vld [vmem:[%s9 + $0x10] sm:$0xff]
  %v2048 = vld [vmem:[%s9 + $0x18] sm:$0xff]
  %2055 = vrot.lane.b32.xlu0 %v2039, 64
  %v2056 = vpop.permute.xlu0 %2055
  %2057 = vrot.lane.b32.xlu0 %v2040, 64
  %v2058 = vpop.permute.xlu0 %2057
  %2059 = vrot.lane.b32.xlu0 %v2041, 64
  %v2060 = vpop.permute.xlu0 %2059
  %2061 = vrot.lane.b32.xlu0 %v2042, 64
  %v2062 = vpop.permute.xlu0 %2061
  %2063 = vrot.lane.b32.xlu0 %v2043, 64
  %v2064 = vpop.permute.xlu0 %2063
  %2065 = vrot.lane.b32.xlu0 %v2044, 64
  %v2066 = vpop.permute.xlu0 %2065
  %v2067 = vsel %vm74, %v2056, 0
  %v2069 = vsel %vm74, %v2058, 0
  %v2071 = vsel %vm74, %v2060, 0
  %v2073 = vsel %vm74, %v2062, 0
  %v2075 = vsel %vm74, %v2064, 0
  %v2077 = vsel %vm74, %v2066, 0
  %2079 = vmatprep.subr.mxu0 0.0
  %2080 = vmatpush1.msra.mxu0 %v2045
  %2081 = vmatprep.subr.mxu0 0.0
  %2082 = vmatpush1.msra.mxu0 %v2046
  %2083 = vmatprep.subr.mxu0 0.0
  %2084 = vmatpush1.msra.mxu0 %v2047
  %2085 = vmatprep.subr.mxu0 0.0
  %2086 = vmatpush1.msra.mxu0 %v2048
  %2087 = vmatprep.subr.mxu0 0.0
  %2088 = vmatpush1.msra.mxu0 0.0
  %2089 = vmatprep.subr.mxu0 0.0
  %2090 = vmatpush1.msra.mxu0 0.0
  %2091 = vmatprep.subr.mxu0 0.0
  %2092 = vmatpush1.msra.mxu0 0.0
  %2093 = vmatprep.subr.mxu0 0.0
  %2094 = vmatpush1.msra.mxu0 0.0
  %2095 = vmatprep.subr.mxu0 0.0
  %2096 = vmatpush1.msra.mxu0 0.0
  %2097 = vmatprep.subr.mxu0 0.0
  %2098 = vmatpush1.msra.mxu0 0.0
  %2099 = vmatprep.subr.mxu0 0.0
  %2100 = vmatpush1.msra.mxu0 0.0
  %2101 = vmatprep.subr.mxu0 0.0
  %2102 = vmatpush1.msra.mxu0 0.0
  %2103 = vmatprep.subr.mxu0 0.0
  %2104 = vmatpush1.msra.mxu0 0.0
  %2105 = vmatprep.subr.mxu0 0.0
  %2106 = vmatpush1.msra.mxu0 0.0
  %2107 = vmatprep.subr.mxu0 0.0
  %2108 = vmatpush1.msra.mxu0 0.0
  %2109 = vmatprep.subr.mxu0 0.0
  %2110 = vmatpush1.msra.mxu0 0.0
  %2111 = vmatprep.subr.mxu0 0.0
  %2112 = vmatpush1.msra.mxu0 0.0
  %2113 = vmatprep.subr.mxu0 0.0
  %2114 = vmatpush1.msra.mxu0 0.0
  %2115 = vmatprep.subr.mxu0 0.0
  %2116 = vmatpush1.msra.mxu0 0.0
  %2117 = vmatprep.subr.mxu0 0.0
  %2118 = vmatpush1.msra.mxu0 0.0
  %2119 = vmatprep.subr.mxu0 0.0
  %2120 = vmatpush1.msra.mxu0 0.0
  %2121 = vmatprep.subr.mxu0 0.0
  %2122 = vmatpush1.msra.mxu0 0.0
  %2123 = vmatprep.subr.mxu0 0.0
  %2124 = vmatpush1.msra.mxu0 0.0
  %2125 = vmatprep.subr.mxu0 0.0
  %2126 = vmatpush1.msra.mxu0 0.0
  %2127 = vmatprep.subr.mxu0 0.0
  %2128 = vmatpush1.msra.mxu0 0.0
  %2129 = vmatprep.subr.mxu0 0.0
  %2130 = vmatpush1.msra.mxu0 0.0
  %2131 = vmatprep.subr.mxu0 0.0
  %2132 = vmatpush1.msra.mxu0 0.0
  %2133 = vmatprep.subr.mxu0 0.0
  %2134 = vmatpush1.msra.mxu0 0.0
  %2135 = vmatprep.subr.mxu0 0.0
  %2136 = vmatpush1.msra.mxu0 0.0
  %2137 = vmatprep.subr.mxu0 0.0
  %2138 = vmatpush1.msra.mxu0 0.0
  %2139 = vmatprep.subr.mxu0 0.0
  %2140 = vmatpush1.msra.mxu0 0.0
  %2141 = vmatprep.subr.mxu0 0.0
  %2142 = vmatpush1.msra.mxu0 0.0
  %2143 = vmatprep.mubr.f32.mxu0 0.0
  %2144 = vmatmul.mubr.f32.gmra.mrb[0].mxu0 %v2067
  %v2145 = vpop.f32.mrb[0].mxu0
  %v2146 = vadd.f32 0.0, %v2145
  %v2147 = vpop.f32.mrb[0].mxu0
  %2148 = vmatprep.mubr.f32.mxu0 0.0
  %2149 = vmatmul.mubr.f32.gmra.mrb[0].mxu0 %v2069
  %v2150 = vpop.f32.mrb[0].mxu0
  %v2151 = vadd.f32 0.0, %v2150
  %v2152 = vpop.f32.mrb[0].mxu0
  %2153 = vmatprep.mubr.f32.mxu0 0.0
  %2154 = vmatmul.mubr.f32.gmra.mrb[0].mxu0 %v2071
  %v2155 = vpop.f32.mrb[0].mxu0
  %v2156 = vadd.f32 0.0, %v2155
  %v2157 = vpop.f32.mrb[0].mxu0
  %2158 = vmatprep.mubr.f32.mxu0 0.0
  %2159 = vmatmul.mubr.f32.gmra.mrb[0].mxu0 %v2073
  %v2160 = vpop.f32.mrb[0].mxu0
  %v2161 = vadd.f32 0.0, %v2160
  %v2162 = vpop.f32.mrb[0].mxu0
  %2163 = vmatprep.mubr.f32.mxu0 0.0
  %2164 = vmatmul.mubr.f32.gmra.mrb[0].mxu0 %v2075
  %v2165 = vpop.f32.mrb[0].mxu0
  %v2166 = vadd.f32 0.0, %v2165
  %v2167 = vpop.f32.mrb[0].mxu0
  %2168 = vmatprep.mubr.f32.mxu0 0.0
  %2169 = vmatmul.mubr.f32.gmra.mrb[0].mxu0 %v2077
  %v2170 = vpop.f32.mrb[0].mxu0
  %v2171 = vadd.f32 0.0, %v2170
  %v2172 = vpop.f32.mrb[0].mxu0
  %2173 = vdwg.mxu0
  %v2174 = vadd.f32 %v53, %v2146
  %v2175 = vadd.f32 %v54, %v2151
  %v2176 = vadd.f32 %v55, %v2156
  %v2177 = vadd.f32 %v56, %v2161
  %v2178 = vadd.f32 %v57, %v2166
  %v2179 = vadd.f32 %v58, %v2171
  %v2180 = vld [vmem:[%s3] sm:$0x1]
  %v2181 = vld [vmem:[%s4] sm:$0x1]
  %v2182 = vsel %vm74, %v2174, 0.0
  %2183 = vadd.xlane.f32.xlu0 %v2182
  %v2184 = vpop.xlane.xlu0 %2183
  %v2185 = vsel %vm74, %v2175, 0.0
  %2186 = vadd.xlane.f32.xlu0 %v2185
  %v2187 = vpop.xlane.xlu0 %2186
  %v2188 = vsel %vm74, %v2176, 0.0
  %2189 = vadd.xlane.f32.xlu0 %v2188
  %v2190 = vpop.xlane.xlu0 %2189
  %v2191 = vsel %vm74, %v2177, 0.0
  %2192 = vadd.xlane.f32.xlu0 %v2191
  %v2193 = vpop.xlane.xlu0 %2192
  %v2194 = vsel %vm74, %v2178, 0.0
  %2195 = vadd.xlane.f32.xlu0 %v2194
  %v2196 = vpop.xlane.xlu0 %2195
  %v2197 = vsel %vm74, %v2179, 0.0
  %2198 = vadd.xlane.f32.xlu0 %v2197
  %v2199 = vpop.xlane.xlu0 %2198
  %v2200 = vmul.f32 %v2184, %v93
  %v2201 = vmul.f32 %v2187, %v93
  %v2202 = vmul.f32 %v2190, %v93
  %v2203 = vmul.f32 %v2193, %v93
  %v2204 = vmul.f32 %v2196, %v93
  %v2205 = vmul.f32 %v2199, %v93
  %v2206 = vsub.f32 %v2174, %v2200
  %v2207 = vsub.f32 %v2175, %v2201
  %v2208 = vsub.f32 %v2176, %v2202
  %v2209 = vsub.f32 %v2177, %v2203
  %v2210 = vsub.f32 %v2178, %v2204
  %v2211 = vsub.f32 %v2179, %v2205
  %v2212 = vmul.f32 %v2206, %v2206
  %v2213 = vmul.f32 %v2207, %v2207
  %v2214 = vmul.f32 %v2208, %v2208
  %v2215 = vmul.f32 %v2209, %v2209
  %v2216 = vmul.f32 %v2210, %v2210
  %v2217 = vmul.f32 %v2211, %v2211
  %v2218 = vsel %vm74, %v2212, 0.0
  %2219 = vadd.xlane.f32.xlu0 %v2218
  %v2220 = vpop.xlane.xlu0 %2219
  %v2221 = vsel %vm74, %v2213, 0.0
  %2222 = vadd.xlane.f32.xlu0 %v2221
  %v2223 = vpop.xlane.xlu0 %2222
  %v2224 = vsel %vm74, %v2214, 0.0
  %2225 = vadd.xlane.f32.xlu0 %v2224
  %v2226 = vpop.xlane.xlu0 %2225
  %v2227 = vsel %vm74, %v2215, 0.0
  %2228 = vadd.xlane.f32.xlu0 %v2227
  %v2229 = vpop.xlane.xlu0 %2228
  %v2230 = vsel %vm74, %v2216, 0.0
  %2231 = vadd.xlane.f32.xlu0 %v2230
  %v2232 = vpop.xlane.xlu0 %2231
  %v2233 = vsel %vm74, %v2217, 0.0
  %2234 = vadd.xlane.f32.xlu0 %v2233
  %v2235 = vpop.xlane.xlu0 %2234
  %v2236 = vmul.f32 %v2220, %v93
  %v2237 = vmul.f32 %v2223, %v93
  %v2238 = vmul.f32 %v2226, %v93
  %v2239 = vmul.f32 %v2229, %v93
  %v2240 = vmul.f32 %v2232, %v93
  %v2241 = vmul.f32 %v2235, %v93
  %v2242 = vadd.f32 %v2236, 1e-05
  %v2243 = vadd.f32 %v2237, 1e-05
  %v2244 = vadd.f32 %v2238, 1e-05
  %v2245 = vadd.f32 %v2239, 1e-05
  %v2246 = vadd.f32 %v2240, 1e-05
  %v2247 = vadd.f32 %v2241, 1e-05
  %v2248 = vrsqrt.pop %v2242
  %v2249 = vrsqrt.pop %v2243
  %v2250 = vrsqrt.pop %v2244
  %v2251 = vrsqrt.pop %v2245
  %v2252 = vrsqrt.pop %v2246
  %v2253 = vrsqrt.pop %v2247
  %v2254 = vmul.f32 %v2206, %v2248
  %v2255 = vmul.f32 %v2207, %v2249
  %v2256 = vmul.f32 %v2208, %v2250
  %v2257 = vmul.f32 %v2209, %v2251
  %v2258 = vmul.f32 %v2210, %v2252
  %v2259 = vmul.f32 %v2211, %v2253
  %v2261 = vlaneseq
  %v2262 = vshrl.u32 %v2261, 7
  %v2263 = vsub.s32 0, %v2262
  %v2264 = vrot.slane %v2180, %v2263
  %v2266 = vmul.f32 %v2254, %v2264
  %v2267 = vmul.f32 %v2255, %v2264
  %v2268 = vmul.f32 %v2256, %v2264
  %v2269 = vmul.f32 %v2257, %v2264
  %v2270 = vmul.f32 %v2258, %v2264
  %v2271 = vmul.f32 %v2259, %v2264
  %v2273 = vlaneseq
  %v2274 = vshrl.u32 %v2273, 7
  %v2275 = vsub.s32 0, %v2274
  %v2276 = vrot.slane %v2181, %v2275
  %v2278 = vadd.f32 %v2266, %v2276
  %v2279 = vadd.f32 %v2267, %v2276
  %v2280 = vadd.f32 %v2268, %v2276
  %v2281 = vadd.f32 %v2269, %v2276
  %v2282 = vadd.f32 %v2270, %v2276
  %v2283 = vadd.f32 %v2271, %v2276
  %v2284 = vrot.slane %v2278, 6
  %v2285 = vrot.slane %v2279, 6
  %v2286 = vrot.slane %v2280, 6
  %v2287 = vrot.slane %v2281, 6
  %v2288 = vrot.slane %v2282, 6
  %v2289 = vrot.slane %v2283, 6
  %v2290 = vsel %vm66, %v2288, %v2289
  %v2291 = vsel %vm66, %v2287, %v2288
  %v2292 = vsel %vm66, %v2286, %v2287
  %v2293 = vsel %vm66, %v2285, %v2286
  %v2294 = vsel %vm66, %v2284, %v2285
  %v2295 = vsel %vm66, %v2289, %v2284
  %v2296 = vsel %vm66, 0.0, %v2295
  %v2297 = vsel %vm67, 0.0, %v2294
  %v2298 = vsel %vm68, 0.0, %v2293
  %v2299 = vsel %vm69, 0.0, %v2292
  %v2300 = vsel %vm70, 0.0, %v2291
  %v2301 = vsel %vm71, 0.0, %v2290
  %v2302 = vld [vmem:[%s10] sm:$0xff]
  %v2303 = vld [vmem:[%s10 + $0x8] sm:$0xff]
  %v2304 = vld [vmem:[%s10 + $0x10] sm:$0xff]
  %v2305 = vld [vmem:[%s10 + $0x18] sm:$0xff]
  %v2306 = vld [vmem:[%s10 + $0x20] sm:$0xff]
  %v2307 = vld [vmem:[%s10 + $0x28] sm:$0xff]
  %v2308 = vld [vmem:[%s10 + $0x30] sm:$0xff]
  %v2309 = vld [vmem:[%s10 + $0x38] sm:$0xff]
  %v2310 = vld [vmem:[%s11] sm:$0xff]
  %v2311 = vld [vmem:[%s11 + $0x8] sm:$0xff]
  %v2312 = vld [vmem:[%s11 + $0x10] sm:$0xff]
  %v2313 = vld [vmem:[%s11 + $0x18] sm:$0xff]
  %v2314 = vld [vmem:[%s11 + $0x20] sm:$0xff]
  %v2315 = vld [vmem:[%s11 + $0x28] sm:$0xff]
  %v2316 = vld [vmem:[%s11 + $0x30] sm:$0xff]
  %v2317 = vld [vmem:[%s11 + $0x38] sm:$0xff]
  %v2319 = vsel %vm74, %v2296, 0
  %v2322 = vsel %vm74, %v2297, 0
  %v2325 = vsel %vm74, %v2298, 0
  %v2328 = vsel %vm74, %v2299, 0
  %v2331 = vsel %vm74, %v2300, 0
  %v2334 = vsel %vm74, %v2301, 0
  %2336 = vmatprep.subr.mxu0 %v2311
  %2337 = vmatpush1.msra.mxu0 %v2310
  %2338 = vmatprep.subr.mxu0 %v2313
  %2339 = vmatpush1.msra.mxu0 %v2312
  %2340 = vmatprep.subr.mxu0 %v2315
  %2341 = vmatpush1.msra.mxu0 %v2314
  %2342 = vmatprep.subr.mxu0 %v2317
  %2343 = vmatpush1.msra.mxu0 %v2316
  %2344 = vmatprep.subr.mxu0 0.0
  %2345 = vmatpush1.msra.mxu0 0.0
  %2346 = vmatprep.subr.mxu0 0.0
  %2347 = vmatpush1.msra.mxu0 0.0
  %2348 = vmatprep.subr.mxu0 0.0
  %2349 = vmatpush1.msra.mxu0 0.0
  %2350 = vmatprep.subr.mxu0 0.0
  %2351 = vmatpush1.msra.mxu0 0.0
  %2352 = vmatprep.subr.mxu0 0.0
  %2353 = vmatpush1.msra.mxu0 0.0
  %2354 = vmatprep.subr.mxu0 0.0
  %2355 = vmatpush1.msra.mxu0 0.0
  %2356 = vmatprep.subr.mxu0 0.0
  %2357 = vmatpush1.msra.mxu0 0.0
  %2358 = vmatprep.subr.mxu0 0.0
  %2359 = vmatpush1.msra.mxu0 0.0
  %2360 = vmatprep.subr.mxu0 0.0
  %2361 = vmatpush1.msra.mxu0 0.0
  %2362 = vmatprep.subr.mxu0 0.0
  %2363 = vmatpush1.msra.mxu0 0.0
  %2364 = vmatprep.subr.mxu0 0.0
  %2365 = vmatpush1.msra.mxu0 0.0
  %2366 = vmatprep.subr.mxu0 0.0
  %2367 = vmatpush1.msra.mxu0 0.0
  %2368 = vmatprep.subr.mxu0 0.0
  %2369 = vmatpush1.msra.mxu0 0.0
  %2370 = vmatprep.subr.mxu0 0.0
  %2371 = vmatpush1.msra.mxu0 0.0
  %2372 = vmatprep.subr.mxu0 0.0
  %2373 = vmatpush1.msra.mxu0 0.0
  %2374 = vmatprep.subr.mxu0 0.0
  %2375 = vmatpush1.msra.mxu0 0.0
  %2376 = vmatprep.subr.mxu0 0.0
  %2377 = vmatpush1.msra.mxu0 0.0
  %2378 = vmatprep.subr.mxu0 0.0
  %2379 = vmatpush1.msra.mxu0 0.0
  %2380 = vmatprep.subr.mxu0 0.0
  %2381 = vmatpush1.msra.mxu0 0.0
  %2382 = vmatprep.subr.mxu0 0.0
  %2383 = vmatpush1.msra.mxu0 0.0
  %2384 = vmatprep.subr.mxu0 0.0
  %2385 = vmatpush1.msra.mxu0 0.0
  %2386 = vmatprep.subr.mxu0 0.0
  %2387 = vmatpush1.msra.mxu0 0.0
  %2388 = vmatprep.subr.mxu0 0.0
  %2389 = vmatpush1.msra.mxu0 0.0
  %2390 = vmatprep.subr.mxu0 0.0
  %2391 = vmatpush1.msra.mxu0 0.0
  %2392 = vmatprep.subr.mxu0 0.0
  %2393 = vmatpush1.msra.mxu0 0.0
  %2394 = vmatprep.subr.mxu0 0.0
  %2395 = vmatpush1.msra.mxu0 0.0
  %2396 = vmatprep.subr.mxu0 0.0
  %2397 = vmatpush1.msra.mxu0 0.0
  %2398 = vmatprep.subr.mxu0 0.0
  %2399 = vmatpush1.msra.mxu0 0.0
  %2400 = vmatprep.mubr.f32.mxu0 0.0
  %2401 = vmatmul.mubr.f32.gmra.mrb[0].mxu0 %v2319
  %v2402 = vpop.f32.mrb[0].mxu0
  %v2403 = vadd.f32 0.0, %v2402
  %v2404 = vpop.f32.mrb[0].mxu0
  %v2405 = vadd.f32 0.0, %v2404
  %2406 = vmatprep.mubr.f32.mxu0 0.0
  %2407 = vmatmul.mubr.f32.gmra.mrb[0].mxu0 %v2322
  %v2408 = vpop.f32.mrb[0].mxu0
  %v2409 = vadd.f32 0.0, %v2408
  %v2410 = vpop.f32.mrb[0].mxu0
  %v2411 = vadd.f32 0.0, %v2410
  %2412 = vmatprep.mubr.f32.mxu0 0.0
  %2413 = vmatmul.mubr.f32.gmra.mrb[0].mxu0 %v2325
  %v2414 = vpop.f32.mrb[0].mxu0
  %v2415 = vadd.f32 0.0, %v2414
  %v2416 = vpop.f32.mrb[0].mxu0
  %v2417 = vadd.f32 0.0, %v2416
  %2418 = vmatprep.mubr.f32.mxu0 0.0
  %2419 = vmatmul.mubr.f32.gmra.mrb[0].mxu0 %v2328
  %v2420 = vpop.f32.mrb[0].mxu0
  %v2421 = vadd.f32 0.0, %v2420
  %v2422 = vpop.f32.mrb[0].mxu0
  %v2423 = vadd.f32 0.0, %v2422
  %2424 = vmatprep.mubr.f32.mxu0 0.0
  %2425 = vmatmul.mubr.f32.gmra.mrb[0].mxu0 %v2331
  %v2426 = vpop.f32.mrb[0].mxu0
  %v2427 = vadd.f32 0.0, %v2426
  %v2428 = vpop.f32.mrb[0].mxu0
  %v2429 = vadd.f32 0.0, %v2428
  %2430 = vmatprep.mubr.f32.mxu0 0.0
  %2431 = vmatmul.mubr.f32.gmra.mrb[0].mxu0 %v2334
  %v2432 = vpop.f32.mrb[0].mxu0
  %v2433 = vadd.f32 0.0, %v2432
  %v2434 = vpop.f32.mrb[0].mxu0
  %v2435 = vadd.f32 0.0, %v2434
  %2436 = vdwg.mxu0
  %v2438 = vsel %vm74, %v2278, 0
  %v2441 = vsel %vm74, %v2279, 0
  %v2444 = vsel %vm74, %v2280, 0
  %v2447 = vsel %vm74, %v2281, 0
  %v2450 = vsel %vm74, %v2282, 0
  %v2453 = vsel %vm74, %v2283, 0
  %2455 = vmatprep.subr.mxu0 %v2303
  %2456 = vmatpush1.msra.mxu0 %v2302
  %2457 = vmatprep.subr.mxu0 %v2305
  %2458 = vmatpush1.msra.mxu0 %v2304
  %2459 = vmatprep.subr.mxu0 %v2307
  %2460 = vmatpush1.msra.mxu0 %v2306
  %2461 = vmatprep.subr.mxu0 %v2309
  %2462 = vmatpush1.msra.mxu0 %v2308
  %2463 = vmatprep.subr.mxu0 0.0
  %2464 = vmatpush1.msra.mxu0 0.0
  %2465 = vmatprep.subr.mxu0 0.0
  %2466 = vmatpush1.msra.mxu0 0.0
  %2467 = vmatprep.subr.mxu0 0.0
  %2468 = vmatpush1.msra.mxu0 0.0
  %2469 = vmatprep.subr.mxu0 0.0
  %2470 = vmatpush1.msra.mxu0 0.0
  %2471 = vmatprep.subr.mxu0 0.0
  %2472 = vmatpush1.msra.mxu0 0.0
  %2473 = vmatprep.subr.mxu0 0.0
  %2474 = vmatpush1.msra.mxu0 0.0
  %2475 = vmatprep.subr.mxu0 0.0
  %2476 = vmatpush1.msra.mxu0 0.0
  %2477 = vmatprep.subr.mxu0 0.0
  %2478 = vmatpush1.msra.mxu0 0.0
  %2479 = vmatprep.subr.mxu0 0.0
  %2480 = vmatpush1.msra.mxu0 0.0
  %2481 = vmatprep.subr.mxu0 0.0
  %2482 = vmatpush1.msra.mxu0 0.0
  %2483 = vmatprep.subr.mxu0 0.0
  %2484 = vmatpush1.msra.mxu0 0.0
  %2485 = vmatprep.subr.mxu0 0.0
  %2486 = vmatpush1.msra.mxu0 0.0
  %2487 = vmatprep.subr.mxu0 0.0
  %2488 = vmatpush1.msra.mxu0 0.0
  %2489 = vmatprep.subr.mxu0 0.0
  %2490 = vmatpush1.msra.mxu0 0.0
  %2491 = vmatprep.subr.mxu0 0.0
  %2492 = vmatpush1.msra.mxu0 0.0
  %2493 = vmatprep.subr.mxu0 0.0
  %2494 = vmatpush1.msra.mxu0 0.0
  %2495 = vmatprep.subr.mxu0 0.0
  %2496 = vmatpush1.msra.mxu0 0.0
  %2497 = vmatprep.subr.mxu0 0.0
  %2498 = vmatpush1.msra.mxu0 0.0
  %2499 = vmatprep.subr.mxu0 0.0
  %2500 = vmatpush1.msra.mxu0 0.0
  %2501 = vmatprep.subr.mxu0 0.0
  %2502 = vmatpush1.msra.mxu0 0.0
  %2503 = vmatprep.subr.mxu0 0.0
  %2504 = vmatpush1.msra.mxu0 0.0
  %2505 = vmatprep.subr.mxu0 0.0
  %2506 = vmatpush1.msra.mxu0 0.0
  %2507 = vmatprep.subr.mxu0 0.0
  %2508 = vmatpush1.msra.mxu0 0.0
  %2509 = vmatprep.subr.mxu0 0.0
  %2510 = vmatpush1.msra.mxu0 0.0
  %2511 = vmatprep.subr.mxu0 0.0
  %2512 = vmatpush1.msra.mxu0 0.0
  %2513 = vmatprep.subr.mxu0 0.0
  %2514 = vmatpush1.msra.mxu0 0.0
  %2515 = vmatprep.subr.mxu0 0.0
  %2516 = vmatpush1.msra.mxu0 0.0
  %2517 = vmatprep.subr.mxu0 0.0
  %2518 = vmatpush1.msra.mxu0 0.0
  %2519 = vmatprep.mubr.f32.mxu0 0.0
  %2520 = vmatmul.mubr.f32.gmra.mrb[0].mxu0 %v2438
  %v2521 = vpop.f32.mrb[0].mxu0
  %v2522 = vadd.f32 %v2403, %v2521
  %v2523 = vpop.f32.mrb[0].mxu0
  %v2524 = vadd.f32 %v2405, %v2523
  %2525 = vmatprep.mubr.f32.mxu0 0.0
  %2526 = vmatmul.mubr.f32.gmra.mrb[0].mxu0 %v2441
  %v2527 = vpop.f32.mrb[0].mxu0
  %v2528 = vadd.f32 %v2409, %v2527
  %v2529 = vpop.f32.mrb[0].mxu0
  %v2530 = vadd.f32 %v2411, %v2529
  %2531 = vmatprep.mubr.f32.mxu0 0.0
  %2532 = vmatmul.mubr.f32.gmra.mrb[0].mxu0 %v2444
  %v2533 = vpop.f32.mrb[0].mxu0
  %v2534 = vadd.f32 %v2415, %v2533
  %v2535 = vpop.f32.mrb[0].mxu0
  %v2536 = vadd.f32 %v2417, %v2535
  %2537 = vmatprep.mubr.f32.mxu0 0.0
  %2538 = vmatmul.mubr.f32.gmra.mrb[0].mxu0 %v2447
  %v2539 = vpop.f32.mrb[0].mxu0
  %v2540 = vadd.f32 %v2421, %v2539
  %v2541 = vpop.f32.mrb[0].mxu0
  %v2542 = vadd.f32 %v2423, %v2541
  %2543 = vmatprep.mubr.f32.mxu0 0.0
  %2544 = vmatmul.mubr.f32.gmra.mrb[0].mxu0 %v2450
  %v2545 = vpop.f32.mrb[0].mxu0
  %v2546 = vadd.f32 %v2427, %v2545
  %v2547 = vpop.f32.mrb[0].mxu0
  %v2548 = vadd.f32 %v2429, %v2547
  %2549 = vmatprep.mubr.f32.mxu0 0.0
  %2550 = vmatmul.mubr.f32.gmra.mrb[0].mxu0 %v2453
  %v2551 = vpop.f32.mrb[0].mxu0
  %v2552 = vadd.f32 %v2433, %v2551
  %v2553 = vpop.f32.mrb[0].mxu0
  %v2554 = vadd.f32 %v2435, %v2553
  %2555 = vdwg.mxu0
  %v2556 = vmax.f32 %v2522, 0.0
  %v2557 = vmax.f32 %v2528, 0.0
  %v2558 = vmax.f32 %v2534, 0.0
  %v2559 = vmax.f32 %v2540, 0.0
  %v2560 = vmax.f32 %v2546, 0.0
  %v2561 = vmax.f32 %v2552, 0.0
  %v2562 = vmul.f32 %v2556, %v2556
  %v2563 = vmul.f32 %v2557, %v2557
  %v2564 = vmul.f32 %v2558, %v2558
  %v2565 = vmul.f32 %v2559, %v2559
  %v2566 = vmul.f32 %v2560, %v2560
  %v2567 = vmul.f32 %v2561, %v2561
  %v2568 = vxor.u32 %v2524, 2147483648
  %v2569 = vxor.u32 %v2530, 2147483648
  %v2570 = vxor.u32 %v2536, 2147483648
  %v2571 = vxor.u32 %v2542, 2147483648
  %v2572 = vxor.u32 %v2548, 2147483648
  %v2573 = vxor.u32 %v2554, 2147483648
  %v2574 = vmul.f32 %v2568, 1.442695
  %v2575 = vpow.pop %v2574
  %v2576 = vmul.f32 %v2569, 1.442695
  %v2577 = vpow.pop %v2576
  %v2578 = vmul.f32 %v2570, 1.442695
  %v2579 = vpow.pop %v2578
  %v2580 = vmul.f32 %v2571, 1.442695
  %v2581 = vpow.pop %v2580
  %v2582 = vmul.f32 %v2572, 1.442695
  %v2583 = vpow.pop %v2582
  %v2584 = vmul.f32 %v2573, 1.442695
  %v2585 = vpow.pop %v2584
  %v2586 = vadd.f32 %v2575, 1.0
  %v2587 = vadd.f32 %v2577, 1.0
  %v2588 = vadd.f32 %v2579, 1.0
  %v2589 = vadd.f32 %v2581, 1.0
  %v2590 = vadd.f32 %v2583, 1.0
  %v2591 = vadd.f32 %v2585, 1.0
  %v2592 = vrcp.pop %v2586
  %v2593 = vmul.f32 1.0, %v2592
  %v2594 = vrcp.pop %v2587
  %v2595 = vmul.f32 1.0, %v2594
  %v2596 = vrcp.pop %v2588
  %v2597 = vmul.f32 1.0, %v2596
  %v2598 = vrcp.pop %v2589
  %v2599 = vmul.f32 1.0, %v2598
  %v2600 = vrcp.pop %v2590
  %v2601 = vmul.f32 1.0, %v2600
  %v2602 = vrcp.pop %v2591
  %v2603 = vmul.f32 1.0, %v2602
  %v2604 = vld [vmem:[%s12] sm:$0xff]
  %v2605 = vld [vmem:[%s12 + $0x8] sm:$0xff]
  %v2606 = vld [vmem:[%s12 + $0x10] sm:$0xff]
  %v2607 = vld [vmem:[%s12 + $0x18] sm:$0xff]
  %v2608 = vld [vmem:[%s12 + $0x20] sm:$0xff]
  %v2609 = vld [vmem:[%s12 + $0x28] sm:$0xff]
  %v2610 = vld [vmem:[%s12 + $0x30] sm:$0xff]
  %v2611 = vld [vmem:[%s12 + $0x38] sm:$0xff]
  %v2612 = vld [vmem:[%s12 + $0x40] sm:$0xff]
  %v2613 = vld [vmem:[%s12 + $0x48] sm:$0xff]
  %v2614 = vld [vmem:[%s12 + $0x50] sm:$0xff]
  %v2615 = vld [vmem:[%s12 + $0x58] sm:$0xff]
  %v2616 = vld [vmem:[%s12 + $0x60] sm:$0xff]
  %v2617 = vld [vmem:[%s12 + $0x68] sm:$0xff]
  %v2618 = vld [vmem:[%s12 + $0x70] sm:$0xff]
  %v2619 = vld [vmem:[%s12 + $0x78] sm:$0xff]
  %2620 = vmatprep.subr.mxu0 0.0
  %2621 = vmatpush1.msra.mxu0 %v2604
  %2622 = vmatprep.subr.mxu0 0.0
  %2623 = vmatpush1.msra.mxu0 %v2605
  %2624 = vmatprep.subr.mxu0 0.0
  %2625 = vmatpush1.msra.mxu0 %v2606
  %2626 = vmatprep.subr.mxu0 0.0
  %2627 = vmatpush1.msra.mxu0 %v2607
  %2628 = vmatprep.subr.mxu0 0.0
  %2629 = vmatpush1.msra.mxu0 %v2608
  %2630 = vmatprep.subr.mxu0 0.0
  %2631 = vmatpush1.msra.mxu0 %v2609
  %2632 = vmatprep.subr.mxu0 0.0
  %2633 = vmatpush1.msra.mxu0 %v2610
  %2634 = vmatprep.subr.mxu0 0.0
  %2635 = vmatpush1.msra.mxu0 %v2611
  %2636 = vmatprep.subr.mxu0 0.0
  %2637 = vmatpush1.msra.mxu0 %v2612
  %2638 = vmatprep.subr.mxu0 0.0
  %2639 = vmatpush1.msra.mxu0 %v2613
  %2640 = vmatprep.subr.mxu0 0.0
  %2641 = vmatpush1.msra.mxu0 %v2614
  %2642 = vmatprep.subr.mxu0 0.0
  %2643 = vmatpush1.msra.mxu0 %v2615
  %2644 = vmatprep.subr.mxu0 0.0
  %2645 = vmatpush1.msra.mxu0 %v2616
  %2646 = vmatprep.subr.mxu0 0.0
  %2647 = vmatpush1.msra.mxu0 %v2617
  %2648 = vmatprep.subr.mxu0 0.0
  %2649 = vmatpush1.msra.mxu0 %v2618
  %2650 = vmatprep.subr.mxu0 0.0
  %2651 = vmatpush1.msra.mxu0 %v2619
  %2652 = vmatprep.subr.mxu0 0.0
  %2653 = vmatpush1.msra.mxu0 0.0
  %2654 = vmatprep.subr.mxu0 0.0
  %2655 = vmatpush1.msra.mxu0 0.0
  %2656 = vmatprep.subr.mxu0 0.0
  %2657 = vmatpush1.msra.mxu0 0.0
  %2658 = vmatprep.subr.mxu0 0.0
  %2659 = vmatpush1.msra.mxu0 0.0
  %2660 = vmatprep.subr.mxu0 0.0
  %2661 = vmatpush1.msra.mxu0 0.0
  %2662 = vmatprep.subr.mxu0 0.0
  %2663 = vmatpush1.msra.mxu0 0.0
  %2664 = vmatprep.subr.mxu0 0.0
  %2665 = vmatpush1.msra.mxu0 0.0
  %2666 = vmatprep.subr.mxu0 0.0
  %2667 = vmatpush1.msra.mxu0 0.0
  %2668 = vmatprep.subr.mxu0 0.0
  %2669 = vmatpush1.msra.mxu0 0.0
  %2670 = vmatprep.subr.mxu0 0.0
  %2671 = vmatpush1.msra.mxu0 0.0
  %2672 = vmatprep.subr.mxu0 0.0
  %2673 = vmatpush1.msra.mxu0 0.0
  %2674 = vmatprep.subr.mxu0 0.0
  %2675 = vmatpush1.msra.mxu0 0.0
  %2676 = vmatprep.subr.mxu0 0.0
  %2677 = vmatpush1.msra.mxu0 0.0
  %2678 = vmatprep.subr.mxu0 0.0
  %2679 = vmatpush1.msra.mxu0 0.0
  %2680 = vmatprep.subr.mxu0 0.0
  %2681 = vmatpush1.msra.mxu0 0.0
  %2682 = vmatprep.subr.mxu0 0.0
  %2683 = vmatpush1.msra.mxu0 0.0
  %2684 = vmatprep.mubr.f32.mxu0 0.0
  %2685 = vmatmul.mubr.f32.gmra.mrb[0].mxu0 %v2562
  %v2686 = vpop.f32.mrb[0].mxu0
  %v2687 = vadd.f32 0.0, %v2686
  %v2688 = vpop.f32.mrb[0].mxu0
  %2689 = vmatprep.mubr.f32.mxu0 0.0
  %2690 = vmatmul.mubr.f32.gmra.mrb[0].mxu0 %v2563
  %v2691 = vpop.f32.mrb[0].mxu0
  %v2692 = vadd.f32 0.0, %v2691
  %v2693 = vpop.f32.mrb[0].mxu0
  %2694 = vmatprep.mubr.f32.mxu0 0.0
  %2695 = vmatmul.mubr.f32.gmra.mrb[0].mxu0 %v2564
  %v2696 = vpop.f32.mrb[0].mxu0
  %v2697 = vadd.f32 0.0, %v2696
  %v2698 = vpop.f32.mrb[0].mxu0
  %2699 = vmatprep.mubr.f32.mxu0 0.0
  %2700 = vmatmul.mubr.f32.gmra.mrb[0].mxu0 %v2565
  %v2701 = vpop.f32.mrb[0].mxu0
  %v2702 = vadd.f32 0.0, %v2701
  %v2703 = vpop.f32.mrb[0].mxu0
  %2704 = vmatprep.mubr.f32.mxu0 0.0
  %2705 = vmatmul.mubr.f32.gmra.mrb[0].mxu0 %v2566
  %v2706 = vpop.f32.mrb[0].mxu0
  %v2707 = vadd.f32 0.0, %v2706
  %v2708 = vpop.f32.mrb[0].mxu0
  %2709 = vmatprep.mubr.f32.mxu0 0.0
  %2710 = vmatmul.mubr.f32.gmra.mrb[0].mxu0 %v2567
  %v2711 = vpop.f32.mrb[0].mxu0
  %v2712 = vadd.f32 0.0, %v2711
  %v2713 = vpop.f32.mrb[0].mxu0
  %2714 = vdwg.mxu0
  %v2715 = vmul.f32 %v2593, %v2687
  %v2716 = vmul.f32 %v2595, %v2692
  %v2717 = vmul.f32 %v2597, %v2697
  %v2718 = vmul.f32 %v2599, %v2702
  %v2719 = vmul.f32 %v2601, %v2707
  %v2720 = vmul.f32 %v2603, %v2712
  %v2721 = vadd.f32 %v2174, %v2715
  %v2722 = vadd.f32 %v2175, %v2716
  %v2723 = vadd.f32 %v2176, %v2717
  %v2724 = vadd.f32 %v2177, %v2718
  %v2725 = vadd.f32 %v2178, %v2719
  %v2726 = vadd.f32 %v2179, %v2720
  %s2727 = scalar_lea.vmem %s1, 1
  %v2728 = vld [vmem:[%s2727] sm:$0x1]
  %s2729 = scalar_lea.vmem %s2, 1
  %v2730 = vld [vmem:[%s2729] sm:$0x1]
  %v2731 = vsel %vm74, %v2721, 0.0
  %2732 = vadd.xlane.f32.xlu0 %v2731
  %v2733 = vpop.xlane.xlu0 %2732
  %v2734 = vsel %vm74, %v2722, 0.0
  %2735 = vadd.xlane.f32.xlu0 %v2734
  %v2736 = vpop.xlane.xlu0 %2735
  %v2737 = vsel %vm74, %v2723, 0.0
  %2738 = vadd.xlane.f32.xlu0 %v2737
  %v2739 = vpop.xlane.xlu0 %2738
  %v2740 = vsel %vm74, %v2724, 0.0
  %2741 = vadd.xlane.f32.xlu0 %v2740
  %v2742 = vpop.xlane.xlu0 %2741
  %v2743 = vsel %vm74, %v2725, 0.0
  %2744 = vadd.xlane.f32.xlu0 %v2743
  %v2745 = vpop.xlane.xlu0 %2744
  %v2746 = vsel %vm74, %v2726, 0.0
  %2747 = vadd.xlane.f32.xlu0 %v2746
  %v2748 = vpop.xlane.xlu0 %2747
  %v2749 = vmul.f32 %v2733, %v93
  %v2750 = vmul.f32 %v2736, %v93
  %v2751 = vmul.f32 %v2739, %v93
  %v2752 = vmul.f32 %v2742, %v93
  %v2753 = vmul.f32 %v2745, %v93
  %v2754 = vmul.f32 %v2748, %v93
  %v2755 = vsub.f32 %v2721, %v2749
  %v2756 = vsub.f32 %v2722, %v2750
  %v2757 = vsub.f32 %v2723, %v2751
  %v2758 = vsub.f32 %v2724, %v2752
  %v2759 = vsub.f32 %v2725, %v2753
  %v2760 = vsub.f32 %v2726, %v2754
  %v2761 = vmul.f32 %v2755, %v2755
  %v2762 = vmul.f32 %v2756, %v2756
  %v2763 = vmul.f32 %v2757, %v2757
  %v2764 = vmul.f32 %v2758, %v2758
  %v2765 = vmul.f32 %v2759, %v2759
  %v2766 = vmul.f32 %v2760, %v2760
  %v2767 = vsel %vm74, %v2761, 0.0
  %2768 = vadd.xlane.f32.xlu0 %v2767
  %v2769 = vpop.xlane.xlu0 %2768
  %v2770 = vsel %vm74, %v2762, 0.0
  %2771 = vadd.xlane.f32.xlu0 %v2770
  %v2772 = vpop.xlane.xlu0 %2771
  %v2773 = vsel %vm74, %v2763, 0.0
  %2774 = vadd.xlane.f32.xlu0 %v2773
  %v2775 = vpop.xlane.xlu0 %2774
  %v2776 = vsel %vm74, %v2764, 0.0
  %2777 = vadd.xlane.f32.xlu0 %v2776
  %v2778 = vpop.xlane.xlu0 %2777
  %v2779 = vsel %vm74, %v2765, 0.0
  %2780 = vadd.xlane.f32.xlu0 %v2779
  %v2781 = vpop.xlane.xlu0 %2780
  %v2782 = vsel %vm74, %v2766, 0.0
  %2783 = vadd.xlane.f32.xlu0 %v2782
  %v2784 = vpop.xlane.xlu0 %2783
  %v2785 = vmul.f32 %v2769, %v93
  %v2786 = vmul.f32 %v2772, %v93
  %v2787 = vmul.f32 %v2775, %v93
  %v2788 = vmul.f32 %v2778, %v93
  %v2789 = vmul.f32 %v2781, %v93
  %v2790 = vmul.f32 %v2784, %v93
  %v2791 = vadd.f32 %v2785, 1e-05
  %v2792 = vadd.f32 %v2786, 1e-05
  %v2793 = vadd.f32 %v2787, 1e-05
  %v2794 = vadd.f32 %v2788, 1e-05
  %v2795 = vadd.f32 %v2789, 1e-05
  %v2796 = vadd.f32 %v2790, 1e-05
  %v2797 = vrsqrt.pop %v2791
  %v2798 = vrsqrt.pop %v2792
  %v2799 = vrsqrt.pop %v2793
  %v2800 = vrsqrt.pop %v2794
  %v2801 = vrsqrt.pop %v2795
  %v2802 = vrsqrt.pop %v2796
  %v2803 = vmul.f32 %v2755, %v2797
  %v2804 = vmul.f32 %v2756, %v2798
  %v2805 = vmul.f32 %v2757, %v2799
  %v2806 = vmul.f32 %v2758, %v2800
  %v2807 = vmul.f32 %v2759, %v2801
  %v2808 = vmul.f32 %v2760, %v2802
  %v2810 = vlaneseq
  %v2811 = vshrl.u32 %v2810, 7
  %v2812 = vsub.s32 0, %v2811
  %v2813 = vrot.slane %v2728, %v2812
  %v2815 = vmul.f32 %v2803, %v2813
  %v2816 = vmul.f32 %v2804, %v2813
  %v2817 = vmul.f32 %v2805, %v2813
  %v2818 = vmul.f32 %v2806, %v2813
  %v2819 = vmul.f32 %v2807, %v2813
  %v2820 = vmul.f32 %v2808, %v2813
  %v2822 = vlaneseq
  %v2823 = vshrl.u32 %v2822, 7
  %v2824 = vsub.s32 0, %v2823
  %v2825 = vrot.slane %v2730, %v2824
  %v2827 = vadd.f32 %v2815, %v2825
  %v2828 = vadd.f32 %v2816, %v2825
  %v2829 = vadd.f32 %v2817, %v2825
  %v2830 = vadd.f32 %v2818, %v2825
  %v2831 = vadd.f32 %v2819, %v2825
  %v2832 = vadd.f32 %v2820, %v2825
  %v2833 = vrot.slane %v2827, 6
  %v2834 = vrot.slane %v2828, 6
  %v2835 = vrot.slane %v2829, 6
  %v2836 = vrot.slane %v2830, 6
  %v2837 = vrot.slane %v2831, 6
  %v2838 = vrot.slane %v2832, 6
  %v2839 = vsel %vm66, %v2837, %v2838
  %v2840 = vsel %vm66, %v2836, %v2837
  %v2841 = vsel %vm66, %v2835, %v2836
  %v2842 = vsel %vm66, %v2834, %v2835
  %v2843 = vsel %vm66, %v2833, %v2834
  %v2844 = vsel %vm66, %v2838, %v2833
  %v2845 = vsel %vm66, 0.0, %v2844
  %v2846 = vsel %vm67, 0.0, %v2843
  %v2847 = vsel %vm68, 0.0, %v2842
  %v2848 = vsel %vm69, 0.0, %v2841
  %v2849 = vsel %vm70, 0.0, %v2840
  %v2850 = vsel %vm71, 0.0, %v2839
  %s2851 = scalar_lea.vmem %s7, 32
  %v2852 = vld [vmem:[%s2851] sm:$0xff]
  %v2853 = vld [vmem:[%s2851 + $0x8] sm:$0xff]
  %v2854 = vld [vmem:[%s2851 + $0x10] sm:$0xff]
  %v2855 = vld [vmem:[%s2851 + $0x18] sm:$0xff]
  %s2856 = scalar_lea.vmem %s8, 32
  %v2857 = vld [vmem:[%s2856] sm:$0xff]
  %v2858 = vld [vmem:[%s2856 + $0x8] sm:$0xff]
  %v2859 = vld [vmem:[%s2856 + $0x10] sm:$0xff]
  %v2860 = vld [vmem:[%s2856 + $0x18] sm:$0xff]
  %v2862 = vsel %vm74, %v2845, 0
  %v2865 = vsel %vm74, %v2846, 0
  %v2868 = vsel %vm74, %v2847, 0
  %v2871 = vsel %vm74, %v2848, 0
  %v2874 = vsel %vm74, %v2849, 0
  %v2877 = vsel %vm74, %v2850, 0
  %2879 = vmatprep.subr.mxu0 0.0
  %2880 = vmatpush1.msra.mxu0 %v2857
  %2881 = vmatprep.subr.mxu0 0.0
  %2882 = vmatpush1.msra.mxu0 %v2858
  %2883 = vmatprep.subr.mxu0 0.0
  %2884 = vmatpush1.msra.mxu0 %v2859
  %2885 = vmatprep.subr.mxu0 0.0
  %2886 = vmatpush1.msra.mxu0 %v2860
  %2887 = vmatprep.subr.mxu0 0.0
  %2888 = vmatpush1.msra.mxu0 0.0
  %2889 = vmatprep.subr.mxu0 0.0
  %2890 = vmatpush1.msra.mxu0 0.0
  %2891 = vmatprep.subr.mxu0 0.0
  %2892 = vmatpush1.msra.mxu0 0.0
  %2893 = vmatprep.subr.mxu0 0.0
  %2894 = vmatpush1.msra.mxu0 0.0
  %2895 = vmatprep.subr.mxu0 0.0
  %2896 = vmatpush1.msra.mxu0 0.0
  %2897 = vmatprep.subr.mxu0 0.0
  %2898 = vmatpush1.msra.mxu0 0.0
  %2899 = vmatprep.subr.mxu0 0.0
  %2900 = vmatpush1.msra.mxu0 0.0
  %2901 = vmatprep.subr.mxu0 0.0
  %2902 = vmatpush1.msra.mxu0 0.0
  %2903 = vmatprep.subr.mxu0 0.0
  %2904 = vmatpush1.msra.mxu0 0.0
  %2905 = vmatprep.subr.mxu0 0.0
  %2906 = vmatpush1.msra.mxu0 0.0
  %2907 = vmatprep.subr.mxu0 0.0
  %2908 = vmatpush1.msra.mxu0 0.0
  %2909 = vmatprep.subr.mxu0 0.0
  %2910 = vmatpush1.msra.mxu0 0.0
  %2911 = vmatprep.subr.mxu0 0.0
  %2912 = vmatpush1.msra.mxu0 0.0
  %2913 = vmatprep.subr.mxu0 0.0
  %2914 = vmatpush1.msra.mxu0 0.0
  %2915 = vmatprep.subr.mxu0 0.0
  %2916 = vmatpush1.msra.mxu0 0.0
  %2917 = vmatprep.subr.mxu0 0.0
  %2918 = vmatpush1.msra.mxu0 0.0
  %2919 = vmatprep.subr.mxu0 0.0
  %2920 = vmatpush1.msra.mxu0 0.0
  %2921 = vmatprep.subr.mxu0 0.0
  %2922 = vmatpush1.msra.mxu0 0.0
  %2923 = vmatprep.subr.mxu0 0.0
  %2924 = vmatpush1.msra.mxu0 0.0
  %2925 = vmatprep.subr.mxu0 0.0
  %2926 = vmatpush1.msra.mxu0 0.0
  %2927 = vmatprep.subr.mxu0 0.0
  %2928 = vmatpush1.msra.mxu0 0.0
  %2929 = vmatprep.subr.mxu0 0.0
  %2930 = vmatpush1.msra.mxu0 0.0
  %2931 = vmatprep.subr.mxu0 0.0
  %2932 = vmatpush1.msra.mxu0 0.0
  %2933 = vmatprep.subr.mxu0 0.0
  %2934 = vmatpush1.msra.mxu0 0.0
  %2935 = vmatprep.subr.mxu0 0.0
  %2936 = vmatpush1.msra.mxu0 0.0
  %2937 = vmatprep.subr.mxu0 0.0
  %2938 = vmatpush1.msra.mxu0 0.0
  %2939 = vmatprep.subr.mxu0 0.0
  %2940 = vmatpush1.msra.mxu0 0.0
  %2941 = vmatprep.subr.mxu0 0.0
  %2942 = vmatpush1.msra.mxu0 0.0
  %2943 = vmatprep.mubr.f32.mxu0 0.0
  %2944 = vmatmul.mubr.f32.gmra.mrb[0].mxu0 %v2862
  %v2945 = vpop.f32.mrb[0].mxu0
  %v2946 = vadd.f32 0.0, %v2945
  %v2947 = vpop.f32.mrb[0].mxu0
  %2948 = vmatprep.mubr.f32.mxu0 0.0
  %2949 = vmatmul.mubr.f32.gmra.mrb[0].mxu0 %v2865
  %v2950 = vpop.f32.mrb[0].mxu0
  %v2951 = vadd.f32 0.0, %v2950
  %v2952 = vpop.f32.mrb[0].mxu0
  %2953 = vmatprep.mubr.f32.mxu0 0.0
  %2954 = vmatmul.mubr.f32.gmra.mrb[0].mxu0 %v2868
  %v2955 = vpop.f32.mrb[0].mxu0
  %v2956 = vadd.f32 0.0, %v2955
  %v2957 = vpop.f32.mrb[0].mxu0
  %2958 = vmatprep.mubr.f32.mxu0 0.0
  %2959 = vmatmul.mubr.f32.gmra.mrb[0].mxu0 %v2871
  %v2960 = vpop.f32.mrb[0].mxu0
  %v2961 = vadd.f32 0.0, %v2960
  %v2962 = vpop.f32.mrb[0].mxu0
  %2963 = vmatprep.mubr.f32.mxu0 0.0
  %2964 = vmatmul.mubr.f32.gmra.mrb[0].mxu0 %v2874
  %v2965 = vpop.f32.mrb[0].mxu0
  %v2966 = vadd.f32 0.0, %v2965
  %v2967 = vpop.f32.mrb[0].mxu0
  %2968 = vmatprep.mubr.f32.mxu0 0.0
  %2969 = vmatmul.mubr.f32.gmra.mrb[0].mxu0 %v2877
  %v2970 = vpop.f32.mrb[0].mxu0
  %v2971 = vadd.f32 0.0, %v2970
  %v2972 = vpop.f32.mrb[0].mxu0
  %2973 = vdwg.mxu0
  %v2975 = vsel %vm74, %v2827, 0
  %v2978 = vsel %vm74, %v2828, 0
  %v2981 = vsel %vm74, %v2829, 0
  %v2984 = vsel %vm74, %v2830, 0
  %v2987 = vsel %vm74, %v2831, 0
  %v2990 = vsel %vm74, %v2832, 0
  %2992 = vmatprep.subr.mxu0 0.0
  %2993 = vmatpush1.msra.mxu0 %v2852
  %2994 = vmatprep.subr.mxu0 0.0
  %2995 = vmatpush1.msra.mxu0 %v2853
  %2996 = vmatprep.subr.mxu0 0.0
  %2997 = vmatpush1.msra.mxu0 %v2854
  %2998 = vmatprep.subr.mxu0 0.0
  %2999 = vmatpush1.msra.mxu0 %v2855
  %3000 = vmatprep.subr.mxu0 0.0
  %3001 = vmatpush1.msra.mxu0 0.0
  %3002 = vmatprep.subr.mxu0 0.0
  %3003 = vmatpush1.msra.mxu0 0.0
  %3004 = vmatprep.subr.mxu0 0.0
  %3005 = vmatpush1.msra.mxu0 0.0
  %3006 = vmatprep.subr.mxu0 0.0
  %3007 = vmatpush1.msra.mxu0 0.0
  %3008 = vmatprep.subr.mxu0 0.0
  %3009 = vmatpush1.msra.mxu0 0.0
  %3010 = vmatprep.subr.mxu0 0.0
  %3011 = vmatpush1.msra.mxu0 0.0
  %3012 = vmatprep.subr.mxu0 0.0
  %3013 = vmatpush1.msra.mxu0 0.0
  %3014 = vmatprep.subr.mxu0 0.0
  %3015 = vmatpush1.msra.mxu0 0.0
  %3016 = vmatprep.subr.mxu0 0.0
  %3017 = vmatpush1.msra.mxu0 0.0
  %3018 = vmatprep.subr.mxu0 0.0
  %3019 = vmatpush1.msra.mxu0 0.0
  %3020 = vmatprep.subr.mxu0 0.0
  %3021 = vmatpush1.msra.mxu0 0.0
  %3022 = vmatprep.subr.mxu0 0.0
  %3023 = vmatpush1.msra.mxu0 0.0
  %3024 = vmatprep.subr.mxu0 0.0
  %3025 = vmatpush1.msra.mxu0 0.0
  %3026 = vmatprep.subr.mxu0 0.0
  %3027 = vmatpush1.msra.mxu0 0.0
  %3028 = vmatprep.subr.mxu0 0.0
  %3029 = vmatpush1.msra.mxu0 0.0
  %3030 = vmatprep.subr.mxu0 0.0
  %3031 = vmatpush1.msra.mxu0 0.0
  %3032 = vmatprep.subr.mxu0 0.0
  %3033 = vmatpush1.msra.mxu0 0.0
  %3034 = vmatprep.subr.mxu0 0.0
  %3035 = vmatpush1.msra.mxu0 0.0
  %3036 = vmatprep.subr.mxu0 0.0
  %3037 = vmatpush1.msra.mxu0 0.0
  %3038 = vmatprep.subr.mxu0 0.0
  %3039 = vmatpush1.msra.mxu0 0.0
  %3040 = vmatprep.subr.mxu0 0.0
  %3041 = vmatpush1.msra.mxu0 0.0
  %3042 = vmatprep.subr.mxu0 0.0
  %3043 = vmatpush1.msra.mxu0 0.0
  %3044 = vmatprep.subr.mxu0 0.0
  %3045 = vmatpush1.msra.mxu0 0.0
  %3046 = vmatprep.subr.mxu0 0.0
  %3047 = vmatpush1.msra.mxu0 0.0
  %3048 = vmatprep.subr.mxu0 0.0
  %3049 = vmatpush1.msra.mxu0 0.0
  %3050 = vmatprep.subr.mxu0 0.0
  %3051 = vmatpush1.msra.mxu0 0.0
  %3052 = vmatprep.subr.mxu0 0.0
  %3053 = vmatpush1.msra.mxu0 0.0
  %3054 = vmatprep.subr.mxu0 0.0
  %3055 = vmatpush1.msra.mxu0 0.0
  %3056 = vmatprep.mubr.f32.mxu0 0.0
  %3057 = vmatmul.mubr.f32.gmra.mrb[0].mxu0 %v2975
  %v3058 = vpop.f32.mrb[0].mxu0
  %v3059 = vadd.f32 %v2946, %v3058
  %v3060 = vpop.f32.mrb[0].mxu0
  %3061 = vmatprep.mubr.f32.mxu0 0.0
  %3062 = vmatmul.mubr.f32.gmra.mrb[0].mxu0 %v2978
  %v3063 = vpop.f32.mrb[0].mxu0
  %v3064 = vadd.f32 %v2951, %v3063
  %v3065 = vpop.f32.mrb[0].mxu0
  %3066 = vmatprep.mubr.f32.mxu0 0.0
  %3067 = vmatmul.mubr.f32.gmra.mrb[0].mxu0 %v2981
  %v3068 = vpop.f32.mrb[0].mxu0
  %v3069 = vadd.f32 %v2956, %v3068
  %v3070 = vpop.f32.mrb[0].mxu0
  %3071 = vmatprep.mubr.f32.mxu0 0.0
  %3072 = vmatmul.mubr.f32.gmra.mrb[0].mxu0 %v2984
  %v3073 = vpop.f32.mrb[0].mxu0
  %v3074 = vadd.f32 %v2961, %v3073
  %v3075 = vpop.f32.mrb[0].mxu0
  %3076 = vmatprep.mubr.f32.mxu0 0.0
  %3077 = vmatmul.mubr.f32.gmra.mrb[0].mxu0 %v2987
  %v3078 = vpop.f32.mrb[0].mxu0
  %v3079 = vadd.f32 %v2966, %v3078
  %v3080 = vpop.f32.mrb[0].mxu0
  %3081 = vmatprep.mubr.f32.mxu0 0.0
  %3082 = vmatmul.mubr.f32.gmra.mrb[0].mxu0 %v2990
  %v3083 = vpop.f32.mrb[0].mxu0
  %v3084 = vadd.f32 %v2971, %v3083
  %v3085 = vpop.f32.mrb[0].mxu0
  %3086 = vdwg.mxu0
  %3087 = vst.msk [vmem:[#allocation2] sm:$0xff] %vm74, %v3059
  %3088 = vst.msk [vmem:[#allocation2 + $0x8] sm:$0xff] %vm74, %v3064
  %3089 = vst.msk [vmem:[#allocation2 + $0x10] sm:$0xff] %vm74, %v3069
  %3090 = vst.msk [vmem:[#allocation2 + $0x18] sm:$0xff] %vm74, %v3074
  %3091 = vst.msk [vmem:[#allocation2 + $0x20] sm:$0xff] %vm74, %v3079
  %3092 = vst.msk [vmem:[#allocation2 + $0x28] sm:$0xff] %vm74, %v3084
  %3099 = vrot.lane.b32.xlu0 %v3059, 96
  %v3100 = vpop.permute.xlu0 %3099
  %3101 = vrot.lane.b32.xlu0 %v3064, 96
  %v3102 = vpop.permute.xlu0 %3101
  %3103 = vrot.lane.b32.xlu0 %v3069, 96
  %v3104 = vpop.permute.xlu0 %3103
  %3105 = vrot.lane.b32.xlu0 %v3074, 96
  %v3106 = vpop.permute.xlu0 %3105
  %3107 = vrot.lane.b32.xlu0 %v3079, 96
  %v3108 = vpop.permute.xlu0 %3107
  %3109 = vrot.lane.b32.xlu0 %v3084, 96
  %v3110 = vpop.permute.xlu0 %3109
  %3117 = vst.msk [vmem:[#allocation3] sm:$0xff] %vm74, %v3100
  %3118 = vst.msk [vmem:[#allocation3 + $0x8] sm:$0xff] %vm74, %v3102
  %3119 = vst.msk [vmem:[#allocation3 + $0x10] sm:$0xff] %vm74, %v3104
  %3120 = vst.msk [vmem:[#allocation3 + $0x18] sm:$0xff] %vm74, %v3106
  %3121 = vst.msk [vmem:[#allocation3 + $0x20] sm:$0xff] %vm74, %v3108
  %3122 = vst.msk [vmem:[#allocation3 + $0x28] sm:$0xff] %vm74, %v3110
  %v3123 = vxor.u32 %v3059, 2147483648
  %v3124 = vxor.u32 %v3064, 2147483648
  %v3125 = vxor.u32 %v3069, 2147483648
  %v3126 = vxor.u32 %v3074, 2147483648
  %v3127 = vxor.u32 %v3079, 2147483648
  %v3128 = vxor.u32 %v3084, 2147483648
  %v3129 = vmul.f32 %v3123, 1.442695
  %v3130 = vpow.pop %v3129
  %v3131 = vmul.f32 %v3124, 1.442695
  %v3132 = vpow.pop %v3131
  %v3133 = vmul.f32 %v3125, 1.442695
  %v3134 = vpow.pop %v3133
  %v3135 = vmul.f32 %v3126, 1.442695
  %v3136 = vpow.pop %v3135
  %v3137 = vmul.f32 %v3127, 1.442695
  %v3138 = vpow.pop %v3137
  %v3139 = vmul.f32 %v3128, 1.442695
  %v3140 = vpow.pop %v3139
  %v3141 = vadd.f32 %v3130, 1.0
  %v3142 = vadd.f32 %v3132, 1.0
  %v3143 = vadd.f32 %v3134, 1.0
  %v3144 = vadd.f32 %v3136, 1.0
  %v3145 = vadd.f32 %v3138, 1.0
  %v3146 = vadd.f32 %v3140, 1.0
  %v3147 = vrcp.pop %v3141
  %v3148 = vmul.f32 1.0, %v3147
  %v3149 = vrcp.pop %v3142
  %v3150 = vmul.f32 1.0, %v3149
  %v3151 = vrcp.pop %v3143
  %v3152 = vmul.f32 1.0, %v3151
  %v3153 = vrcp.pop %v3144
  %v3154 = vmul.f32 1.0, %v3153
  %v3155 = vrcp.pop %v3145
  %v3156 = vmul.f32 1.0, %v3155
  %v3157 = vrcp.pop %v3146
  %v3158 = vmul.f32 1.0, %v3157
  %s3159 = scalar_lea.vmem %s5, 1
  %v3160 = vld [vmem:[%s3159] sm:$0x1]
  %v3162 = vlaneseq
  %v3163 = vshrl.u32 %v3162, 7
  %v3164 = vsub.s32 0, %v3163
  %v3165 = vrot.slane %v3160, %v3164
  %s3167 = scalar_lea.vmem %s6, 1
  %v3168 = vld [vmem:[%s3167] sm:$0x1]
  %v3170 = vlaneseq
  %v3171 = vshrl.u32 %v3170, 7
  %v3172 = vsub.s32 0, %v3171
  %v3173 = vrot.slane %v3168, %v3172
  %v3175 = vld [vmem:[#allocation2] sm:$0x3]
  %v3176 = vld [vmem:[#allocation3] sm:$0x3]
  %v3177 = vadd.f32 %v3173, %v3175
  %v3178 = vadd.f32 %v3165, -1e+38
  %v3179 = vmax.f32 %v3177, -1e+38
  %v3180 = vmax.f32 %v3178, %v3175
  %v3181 = vsub.f32 -1e+38, %v3179
  %v3182 = vsub.f32 %v3177, %v3179
  %v3183 = vsub.f32 %v3178, %v3180
  %v3184 = vsub.f32 %v3175, %v3180
  %v3186 = vrot.slane %v3182, 6
  %v3189 = vrot.slane %v3183, 4
  %v3192 = vrot.slane %v3184, 2
  %v3194 = vsel %vm535, %v3181, %v3186
  %v3195 = vsel %vm537, %v3194, %v3189
  %v3196 = vsel %vm539, %v3195, %v3192
  %v3197 = vmul.f32 %v3196, 1.442695
  %v3198 = vpow.pop %v3197
  %v3199 = vmul.f32 %v3198, 0.0
  %v3201 = vrot.slane %v3176, 6
  %v3203 = vmul.f32 %v3198, %v3201
  %v3205 = vrot.slane %v3203, 2
  %v3207 = vadd.f32 %v3199, %v3205
  %v3209 = vrot.slane %v3198, 2
  %v3211 = vadd.f32 %v3199, %v3209
  %v3212 = vrcp.pop %v3211
  %v3213 = vmul.f32 %v3211, %v3212
  %v3214 = vsub.f32 2.0, %v3213
  %v3215 = vmul.f32 %v3212, %v3214
  %v3216 = vmul.f32 %v3207, %v3215
  %3217 = vst.msk [vmem:[#allocation4] sm:$0x3] %vm561, %v3216
  %v3218 = vrot.slane %v3176, 2
  %v3220 = vmul.f32 %v3198, %v3218
  %v3222 = vrot.slane %v3220, 2
  %v3224 = vadd.f32 %v3199, %v3222
  %v3225 = vld [vmem:[%s570] sm:$0x3]
  %v3226 = vld [vmem:[%s572] sm:$0x3]
  %v3227 = vadd.f32 %v3173, %v3225
  %v3228 = vadd.f32 %v3165, %v3180
  %v3229 = vmax.f32 %v3180, %v3227
  %v3230 = vmax.f32 %v3228, %v3225
  %v3231 = vsub.f32 %v3180, %v3229
  %v3232 = vsub.f32 %v3227, %v3229
  %v3233 = vsub.f32 %v3228, %v3230
  %v3234 = vsub.f32 %v3225, %v3230
  %v3236 = vrot.slane %v3232, 6
  %v3239 = vrot.slane %v3233, 4
  %v3242 = vrot.slane %v3234, 2
  %v3244 = vsel %vm535, %v3231, %v3236
  %v3245 = vsel %vm537, %v3244, %v3239
  %v3246 = vsel %vm539, %v3245, %v3242
  %v3247 = vmul.f32 %v3246, 1.442695
  %v3248 = vpow.pop %v3247
  %v3250 = vrot.slane %v3224, 4
  %v3252 = vmul.f32 %v3248, %v3250
  %v3254 = vrot.slane %v3226, 6
  %v3256 = vmul.f32 %v3248, %v3254
  %v3258 = vrot.slane %v3256, 2
  %v3260 = vadd.f32 %v3252, %v3258
  %v3262 = vrot.slane %v3211, 4
  %v3264 = vmul.f32 %v3248, %v3262
  %v3266 = vrot.slane %v3248, 2
  %v3268 = vadd.f32 %v3264, %v3266
  %v3269 = vrcp.pop %v3268
  %v3270 = vmul.f32 %v3268, %v3269
  %v3271 = vsub.f32 2.0, %v3270
  %v3272 = vmul.f32 %v3269, %v3271
  %v3273 = vmul.f32 %v3260, %v3272
  %3274 = vst.msk [vmem:[%s621] sm:$0x3] %vm561, %v3273
  %v3275 = vmul.f32 %v3248, %v3224
  %v3276 = vrot.slane %v3226, 2
  %v3278 = vmul.f32 %v3248, %v3276
  %v3280 = vrot.slane %v3278, 2
  %v3282 = vadd.f32 %v3275, %v3280
  %v3283 = vmul.f32 %v3248, %v3211
  %v3284 = vadd.f32 %v3283, %v3266
  %v3285 = vld [vmem:[%s633] sm:$0x3]
  %v3286 = vld [vmem:[%s635] sm:$0x3]
  %v3287 = vadd.f32 %v3173, %v3285
  %v3288 = vadd.f32 %v3165, %v3230
  %v3289 = vmax.f32 %v3230, %v3287
  %v3290 = vmax.f32 %v3288, %v3285
  %v3291 = vsub.f32 %v3230, %v3289
  %v3292 = vsub.f32 %v3287, %v3289
  %v3293 = vsub.f32 %v3288, %v3290
  %v3294 = vsub.f32 %v3285, %v3290
  %v3296 = vrot.slane %v3292, 6
  %v3299 = vrot.slane %v3293, 4
  %v3302 = vrot.slane %v3294, 2
  %v3304 = vsel %vm535, %v3291, %v3296
  %v3305 = vsel %vm537, %v3304, %v3299
  %v3306 = vsel %vm539, %v3305, %v3302
  %v3307 = vmul.f32 %v3306, 1.442695
  %v3308 = vpow.pop %v3307
  %v3310 = vrot.slane %v3282, 4
  %v3312 = vmul.f32 %v3308, %v3310
  %v3314 = vrot.slane %v3286, 6
  %v3316 = vmul.f32 %v3308, %v3314
  %v3318 = vrot.slane %v3316, 2
  %v3320 = vadd.f32 %v3312, %v3318
  %v3322 = vrot.slane %v3284, 4
  %v3324 = vmul.f32 %v3308, %v3322
  %v3326 = vrot.slane %v3308, 2
  %v3328 = vadd.f32 %v3324, %v3326
  %v3329 = vrcp.pop %v3328
  %v3330 = vmul.f32 %v3328, %v3329
  %v3331 = vsub.f32 2.0, %v3330
  %v3332 = vmul.f32 %v3329, %v3331
  %v3333 = vmul.f32 %v3320, %v3332
  %3334 = vst.msk [vmem:[%s684] sm:$0x3] %vm561, %v3333
  %v3335 = vmul.f32 %v3308, %v3282
  %v3336 = vrot.slane %v3286, 2
  %v3338 = vmul.f32 %v3308, %v3336
  %v3340 = vrot.slane %v3338, 2
  %v3342 = vadd.f32 %v3335, %v3340
  %v3343 = vmul.f32 %v3308, %v3284
  %v3344 = vadd.f32 %v3343, %v3326
  %v3345 = vld [vmem:[%s696] sm:$0x3]
  %v3346 = vld [vmem:[%s698] sm:$0x3]
  %v3347 = vadd.f32 %v3173, %v3345
  %v3348 = vadd.f32 %v3165, %v3290
  %v3349 = vmax.f32 %v3290, %v3347
  %v3350 = vmax.f32 %v3348, %v3345
  %v3351 = vsub.f32 %v3290, %v3349
  %v3352 = vsub.f32 %v3347, %v3349
  %v3353 = vsub.f32 %v3348, %v3350
  %v3354 = vsub.f32 %v3345, %v3350
  %v3356 = vrot.slane %v3352, 6
  %v3359 = vrot.slane %v3353, 4
  %v3362 = vrot.slane %v3354, 2
  %v3364 = vsel %vm535, %v3351, %v3356
  %v3365 = vsel %vm537, %v3364, %v3359
  %v3366 = vsel %vm539, %v3365, %v3362
  %v3367 = vmul.f32 %v3366, 1.442695
  %v3368 = vpow.pop %v3367
  %v3370 = vrot.slane %v3342, 4
  %v3372 = vmul.f32 %v3368, %v3370
  %v3374 = vrot.slane %v3346, 6
  %v3376 = vmul.f32 %v3368, %v3374
  %v3378 = vrot.slane %v3376, 2
  %v3380 = vadd.f32 %v3372, %v3378
  %v3382 = vrot.slane %v3344, 4
  %v3384 = vmul.f32 %v3368, %v3382
  %v3386 = vrot.slane %v3368, 2
  %v3388 = vadd.f32 %v3384, %v3386
  %v3389 = vrcp.pop %v3388
  %v3390 = vmul.f32 %v3388, %v3389
  %v3391 = vsub.f32 2.0, %v3390
  %v3392 = vmul.f32 %v3389, %v3391
  %v3393 = vmul.f32 %v3380, %v3392
  %3394 = vst.msk [vmem:[%s747] sm:$0x3] %vm561, %v3393
  %v3395 = vmul.f32 %v3368, %v3342
  %v3396 = vrot.slane %v3346, 2
  %v3398 = vmul.f32 %v3368, %v3396
  %v3400 = vrot.slane %v3398, 2
  %v3402 = vadd.f32 %v3395, %v3400
  %v3403 = vmul.f32 %v3368, %v3344
  %v3404 = vadd.f32 %v3403, %v3386
  %v3405 = vld [vmem:[%s759] sm:$0x3]
  %v3406 = vld [vmem:[%s761] sm:$0x3]
  %v3407 = vadd.f32 %v3173, %v3405
  %v3408 = vadd.f32 %v3165, %v3350
  %v3409 = vmax.f32 %v3350, %v3407
  %v3410 = vmax.f32 %v3408, %v3405
  %v3411 = vsub.f32 %v3350, %v3409
  %v3412 = vsub.f32 %v3407, %v3409
  %v3413 = vsub.f32 %v3408, %v3410
  %v3414 = vsub.f32 %v3405, %v3410
  %v3416 = vrot.slane %v3412, 6
  %v3419 = vrot.slane %v3413, 4
  %v3422 = vrot.slane %v3414, 2
  %v3424 = vsel %vm535, %v3411, %v3416
  %v3425 = vsel %vm537, %v3424, %v3419
  %v3426 = vsel %vm539, %v3425, %v3422
  %v3427 = vmul.f32 %v3426, 1.442695
  %v3428 = vpow.pop %v3427
  %v3430 = vrot.slane %v3402, 4
  %v3432 = vmul.f32 %v3428, %v3430
  %v3434 = vrot.slane %v3406, 6
  %v3436 = vmul.f32 %v3428, %v3434
  %v3438 = vrot.slane %v3436, 2
  %v3440 = vadd.f32 %v3432, %v3438
  %v3442 = vrot.slane %v3404, 4
  %v3444 = vmul.f32 %v3428, %v3442
  %v3446 = vrot.slane %v3428, 2
  %v3448 = vadd.f32 %v3444, %v3446
  %v3449 = vrcp.pop %v3448
  %v3450 = vmul.f32 %v3448, %v3449
  %v3451 = vsub.f32 2.0, %v3450
  %v3452 = vmul.f32 %v3449, %v3451
  %v3453 = vmul.f32 %v3440, %v3452
  %3454 = vst.msk [vmem:[%s810] sm:$0x3] %vm561, %v3453
  %v3455 = vmul.f32 %v3428, %v3402
  %v3456 = vrot.slane %v3406, 2
  %v3458 = vmul.f32 %v3428, %v3456
  %v3460 = vrot.slane %v3458, 2
  %v3462 = vadd.f32 %v3455, %v3460
  %v3463 = vmul.f32 %v3428, %v3404
  %v3464 = vadd.f32 %v3463, %v3446
  %v3465 = vld [vmem:[%s822] sm:$0x3]
  %v3466 = vld [vmem:[%s824] sm:$0x3]
  %v3467 = vadd.f32 %v3173, %v3465
  %v3468 = vadd.f32 %v3165, %v3410
  %v3469 = vmax.f32 %v3410, %v3467
  %v3470 = vmax.f32 %v3468, %v3465
  %v3471 = vsub.f32 %v3410, %v3469
  %v3472 = vsub.f32 %v3467, %v3469
  %v3473 = vsub.f32 %v3468, %v3470
  %v3474 = vsub.f32 %v3465, %v3470
  %v3476 = vrot.slane %v3472, 6
  %v3479 = vrot.slane %v3473, 4
  %v3482 = vrot.slane %v3474, 2
  %v3484 = vsel %vm535, %v3471, %v3476
  %v3485 = vsel %vm537, %v3484, %v3479
  %v3486 = vsel %vm539, %v3485, %v3482
  %v3487 = vmul.f32 %v3486, 1.442695
  %v3488 = vpow.pop %v3487
  %v3490 = vrot.slane %v3462, 4
  %v3492 = vmul.f32 %v3488, %v3490
  %v3494 = vrot.slane %v3466, 6
  %v3496 = vmul.f32 %v3488, %v3494
  %v3498 = vrot.slane %v3496, 2
  %v3500 = vadd.f32 %v3492, %v3498
  %v3502 = vrot.slane %v3464, 4
  %v3504 = vmul.f32 %v3488, %v3502
  %v3506 = vrot.slane %v3488, 2
  %v3508 = vadd.f32 %v3504, %v3506
  %v3509 = vrcp.pop %v3508
  %v3510 = vmul.f32 %v3508, %v3509
  %v3511 = vsub.f32 2.0, %v3510
  %v3512 = vmul.f32 %v3509, %v3511
  %v3513 = vmul.f32 %v3500, %v3512
  %3514 = vst.msk [vmem:[%s873] sm:$0x3] %vm561, %v3513
  %v3515 = vmul.f32 %v3488, %v3462
  %v3516 = vrot.slane %v3466, 2
  %v3518 = vmul.f32 %v3488, %v3516
  %v3520 = vrot.slane %v3518, 2
  %v3522 = vadd.f32 %v3515, %v3520
  %v3523 = vmul.f32 %v3488, %v3464
  %v3524 = vadd.f32 %v3523, %v3506
  %v3525 = vld [vmem:[%s885] sm:$0x3]
  %v3526 = vld [vmem:[%s887] sm:$0x3]
  %v3527 = vadd.f32 %v3173, %v3525
  %v3528 = vadd.f32 %v3165, %v3470
  %v3529 = vmax.f32 %v3470, %v3527
  %v3530 = vmax.f32 %v3528, %v3525
  %v3531 = vsub.f32 %v3470, %v3529
  %v3532 = vsub.f32 %v3527, %v3529
  %v3533 = vsub.f32 %v3528, %v3530
  %v3534 = vsub.f32 %v3525, %v3530
  %v3536 = vrot.slane %v3532, 6
  %v3539 = vrot.slane %v3533, 4
  %v3542 = vrot.slane %v3534, 2
  %v3544 = vsel %vm535, %v3531, %v3536
  %v3545 = vsel %vm537, %v3544, %v3539
  %v3546 = vsel %vm539, %v3545, %v3542
  %v3547 = vmul.f32 %v3546, 1.442695
  %v3548 = vpow.pop %v3547
  %v3550 = vrot.slane %v3522, 4
  %v3552 = vmul.f32 %v3548, %v3550
  %v3554 = vrot.slane %v3526, 6
  %v3556 = vmul.f32 %v3548, %v3554
  %v3558 = vrot.slane %v3556, 2
  %v3560 = vadd.f32 %v3552, %v3558
  %v3562 = vrot.slane %v3524, 4
  %v3564 = vmul.f32 %v3548, %v3562
  %v3566 = vrot.slane %v3548, 2
  %v3568 = vadd.f32 %v3564, %v3566
  %v3569 = vrcp.pop %v3568
  %v3570 = vmul.f32 %v3568, %v3569
  %v3571 = vsub.f32 2.0, %v3570
  %v3572 = vmul.f32 %v3569, %v3571
  %v3573 = vmul.f32 %v3560, %v3572
  %3574 = vst.msk [vmem:[%s936] sm:$0x3] %vm561, %v3573
  %v3575 = vmul.f32 %v3548, %v3522
  %v3576 = vrot.slane %v3526, 2
  %v3578 = vmul.f32 %v3548, %v3576
  %v3580 = vrot.slane %v3578, 2
  %v3582 = vadd.f32 %v3575, %v3580
  %v3583 = vmul.f32 %v3548, %v3524
  %v3584 = vadd.f32 %v3583, %v3566
  %v3585 = vld [vmem:[%s948] sm:$0x3]
  %v3586 = vld [vmem:[%s950] sm:$0x3]
  %v3587 = vadd.f32 %v3173, %v3585
  %v3588 = vadd.f32 %v3165, %v3530
  %v3589 = vmax.f32 %v3530, %v3587
  %v3590 = vmax.f32 %v3588, %v3585
  %v3591 = vsub.f32 %v3530, %v3589
  %v3592 = vsub.f32 %v3587, %v3589
  %v3593 = vsub.f32 %v3588, %v3590
  %v3594 = vsub.f32 %v3585, %v3590
  %v3596 = vrot.slane %v3592, 6
  %v3599 = vrot.slane %v3593, 4
  %v3602 = vrot.slane %v3594, 2
  %v3604 = vsel %vm535, %v3591, %v3596
  %v3605 = vsel %vm537, %v3604, %v3599
  %v3606 = vsel %vm539, %v3605, %v3602
  %v3607 = vmul.f32 %v3606, 1.442695
  %v3608 = vpow.pop %v3607
  %v3610 = vrot.slane %v3582, 4
  %v3612 = vmul.f32 %v3608, %v3610
  %v3614 = vrot.slane %v3586, 6
  %v3616 = vmul.f32 %v3608, %v3614
  %v3618 = vrot.slane %v3616, 2
  %v3620 = vadd.f32 %v3612, %v3618
  %v3622 = vrot.slane %v3584, 4
  %v3624 = vmul.f32 %v3608, %v3622
  %v3626 = vrot.slane %v3608, 2
  %v3628 = vadd.f32 %v3624, %v3626
  %v3629 = vrcp.pop %v3628
  %v3630 = vmul.f32 %v3628, %v3629
  %v3631 = vsub.f32 2.0, %v3630
  %v3632 = vmul.f32 %v3629, %v3631
  %v3633 = vmul.f32 %v3620, %v3632
  %3634 = vst.msk [vmem:[%s999] sm:$0x3] %vm561, %v3633
  %v3635 = vmul.f32 %v3608, %v3582
  %v3636 = vrot.slane %v3586, 2
  %v3638 = vmul.f32 %v3608, %v3636
  %v3640 = vrot.slane %v3638, 2
  %v3642 = vadd.f32 %v3635, %v3640
  %v3643 = vmul.f32 %v3608, %v3584
  %v3644 = vadd.f32 %v3643, %v3626
  %v3645 = vld [vmem:[%s1011] sm:$0x3]
  %v3646 = vld [vmem:[%s1013] sm:$0x3]
  %v3647 = vadd.f32 %v3173, %v3645
  %v3648 = vadd.f32 %v3165, %v3590
  %v3649 = vmax.f32 %v3590, %v3647
  %v3650 = vmax.f32 %v3648, %v3645
  %v3651 = vsub.f32 %v3590, %v3649
  %v3652 = vsub.f32 %v3647, %v3649
  %v3653 = vsub.f32 %v3648, %v3650
  %v3654 = vsub.f32 %v3645, %v3650
  %v3656 = vrot.slane %v3652, 6
  %v3659 = vrot.slane %v3653, 4
  %v3662 = vrot.slane %v3654, 2
  %v3664 = vsel %vm535, %v3651, %v3656
  %v3665 = vsel %vm537, %v3664, %v3659
  %v3666 = vsel %vm539, %v3665, %v3662
  %v3667 = vmul.f32 %v3666, 1.442695
  %v3668 = vpow.pop %v3667
  %v3670 = vrot.slane %v3642, 4
  %v3672 = vmul.f32 %v3668, %v3670
  %v3674 = vrot.slane %v3646, 6
  %v3676 = vmul.f32 %v3668, %v3674
  %v3678 = vrot.slane %v3676, 2
  %v3680 = vadd.f32 %v3672, %v3678
  %v3682 = vrot.slane %v3644, 4
  %v3684 = vmul.f32 %v3668, %v3682
  %v3686 = vrot.slane %v3668, 2
  %v3688 = vadd.f32 %v3684, %v3686
  %v3689 = vrcp.pop %v3688
  %v3690 = vmul.f32 %v3688, %v3689
  %v3691 = vsub.f32 2.0, %v3690
  %v3692 = vmul.f32 %v3689, %v3691
  %v3693 = vmul.f32 %v3680, %v3692
  %3694 = vst.msk [vmem:[%s1062] sm:$0x3] %vm561, %v3693
  %v3695 = vmul.f32 %v3668, %v3642
  %v3696 = vrot.slane %v3646, 2
  %v3698 = vmul.f32 %v3668, %v3696
  %v3700 = vrot.slane %v3698, 2
  %v3702 = vadd.f32 %v3695, %v3700
  %v3703 = vmul.f32 %v3668, %v3644
  %v3704 = vadd.f32 %v3703, %v3686
  %v3705 = vld [vmem:[%s1074] sm:$0x3]
  %v3706 = vld [vmem:[%s1076] sm:$0x3]
  %v3707 = vadd.f32 %v3173, %v3705
  %v3708 = vadd.f32 %v3165, %v3650
  %v3709 = vmax.f32 %v3650, %v3707
  %v3710 = vmax.f32 %v3708, %v3705
  %v3711 = vsub.f32 %v3650, %v3709
  %v3712 = vsub.f32 %v3707, %v3709
  %v3713 = vsub.f32 %v3708, %v3710
  %v3714 = vsub.f32 %v3705, %v3710
  %v3716 = vrot.slane %v3712, 6
  %v3719 = vrot.slane %v3713, 4
  %v3722 = vrot.slane %v3714, 2
  %v3724 = vsel %vm535, %v3711, %v3716
  %v3725 = vsel %vm537, %v3724, %v3719
  %v3726 = vsel %vm539, %v3725, %v3722
  %v3727 = vmul.f32 %v3726, 1.442695
  %v3728 = vpow.pop %v3727
  %v3730 = vrot.slane %v3702, 4
  %v3732 = vmul.f32 %v3728, %v3730
  %v3734 = vrot.slane %v3706, 6
  %v3736 = vmul.f32 %v3728, %v3734
  %v3738 = vrot.slane %v3736, 2
  %v3740 = vadd.f32 %v3732, %v3738
  %v3742 = vrot.slane %v3704, 4
  %v3744 = vmul.f32 %v3728, %v3742
  %v3746 = vrot.slane %v3728, 2
  %v3748 = vadd.f32 %v3744, %v3746
  %v3749 = vrcp.pop %v3748
  %v3750 = vmul.f32 %v3748, %v3749
  %v3751 = vsub.f32 2.0, %v3750
  %v3752 = vmul.f32 %v3749, %v3751
  %v3753 = vmul.f32 %v3740, %v3752
  %3754 = vst.msk [vmem:[%s1125] sm:$0x3] %vm561, %v3753
  %v3755 = vmul.f32 %v3728, %v3702
  %v3756 = vrot.slane %v3706, 2
  %v3758 = vmul.f32 %v3728, %v3756
  %v3760 = vrot.slane %v3758, 2
  %v3762 = vadd.f32 %v3755, %v3760
  %v3763 = vmul.f32 %v3728, %v3704
  %v3764 = vadd.f32 %v3763, %v3746
  %v3765 = vld [vmem:[%s1137] sm:$0x3]
  %v3766 = vld [vmem:[%s1139] sm:$0x3]
  %v3767 = vadd.f32 %v3173, %v3765
  %v3768 = vadd.f32 %v3165, %v3710
  %v3769 = vmax.f32 %v3710, %v3767
  %v3770 = vmax.f32 %v3768, %v3765
  %v3771 = vsub.f32 %v3710, %v3769
  %v3772 = vsub.f32 %v3767, %v3769
  %v3773 = vsub.f32 %v3768, %v3770
  %v3774 = vsub.f32 %v3765, %v3770
  %v3776 = vrot.slane %v3772, 6
  %v3779 = vrot.slane %v3773, 4
  %v3782 = vrot.slane %v3774, 2
  %v3784 = vsel %vm535, %v3771, %v3776
  %v3785 = vsel %vm537, %v3784, %v3779
  %v3786 = vsel %vm539, %v3785, %v3782
  %v3787 = vmul.f32 %v3786, 1.442695
  %v3788 = vpow.pop %v3787
  %v3790 = vrot.slane %v3762, 4
  %v3792 = vmul.f32 %v3788, %v3790
  %v3794 = vrot.slane %v3766, 6
  %v3796 = vmul.f32 %v3788, %v3794
  %v3798 = vrot.slane %v3796, 2
  %v3800 = vadd.f32 %v3792, %v3798
  %v3802 = vrot.slane %v3764, 4
  %v3804 = vmul.f32 %v3788, %v3802
  %v3806 = vrot.slane %v3788, 2
  %v3808 = vadd.f32 %v3804, %v3806
  %v3809 = vrcp.pop %v3808
  %v3810 = vmul.f32 %v3808, %v3809
  %v3811 = vsub.f32 2.0, %v3810
  %v3812 = vmul.f32 %v3809, %v3811
  %v3813 = vmul.f32 %v3800, %v3812
  %3814 = vst.msk [vmem:[%s1188] sm:$0x3] %vm561, %v3813
  %v3815 = vmul.f32 %v3788, %v3762
  %v3816 = vrot.slane %v3766, 2
  %v3818 = vmul.f32 %v3788, %v3816
  %v3820 = vrot.slane %v3818, 2
  %v3822 = vadd.f32 %v3815, %v3820
  %v3823 = vmul.f32 %v3788, %v3764
  %v3824 = vadd.f32 %v3823, %v3806
  %v3825 = vld [vmem:[%s1200] sm:$0x3]
  %v3826 = vld [vmem:[%s1202] sm:$0x3]
  %v3827 = vadd.f32 %v3173, %v3825
  %v3828 = vadd.f32 %v3165, %v3770
  %v3829 = vmax.f32 %v3770, %v3827
  %v3830 = vmax.f32 %v3828, %v3825
  %v3831 = vsub.f32 %v3770, %v3829
  %v3832 = vsub.f32 %v3827, %v3829
  %v3833 = vsub.f32 %v3828, %v3830
  %v3834 = vsub.f32 %v3825, %v3830
  %v3836 = vrot.slane %v3832, 6
  %v3839 = vrot.slane %v3833, 4
  %v3842 = vrot.slane %v3834, 2
  %v3844 = vsel %vm535, %v3831, %v3836
  %v3845 = vsel %vm537, %v3844, %v3839
  %v3846 = vsel %vm539, %v3845, %v3842
  %v3847 = vmul.f32 %v3846, 1.442695
  %v3848 = vpow.pop %v3847
  %v3850 = vrot.slane %v3822, 4
  %v3852 = vmul.f32 %v3848, %v3850
  %v3854 = vrot.slane %v3826, 6
  %v3856 = vmul.f32 %v3848, %v3854
  %v3858 = vrot.slane %v3856, 2
  %v3860 = vadd.f32 %v3852, %v3858
  %v3862 = vrot.slane %v3824, 4
  %v3864 = vmul.f32 %v3848, %v3862
  %v3866 = vrot.slane %v3848, 2
  %v3868 = vadd.f32 %v3864, %v3866
  %v3869 = vrcp.pop %v3868
  %v3870 = vmul.f32 %v3868, %v3869
  %v3871 = vsub.f32 2.0, %v3870
  %v3872 = vmul.f32 %v3869, %v3871
  %v3873 = vmul.f32 %v3860, %v3872
  %3874 = vst.msk [vmem:[%s1251] sm:$0x3] %vm561, %v3873
  %v3875 = vmul.f32 %v3848, %v3822
  %v3876 = vrot.slane %v3826, 2
  %v3878 = vmul.f32 %v3848, %v3876
  %v3880 = vrot.slane %v3878, 2
  %v3882 = vadd.f32 %v3875, %v3880
  %v3883 = vmul.f32 %v3848, %v3824
  %v3884 = vadd.f32 %v3883, %v3866
  %v3885 = vld [vmem:[%s1263] sm:$0x3]
  %v3886 = vld [vmem:[%s1265] sm:$0x3]
  %v3887 = vadd.f32 %v3173, %v3885
  %v3888 = vadd.f32 %v3165, %v3830
  %v3889 = vmax.f32 %v3830, %v3887
  %v3890 = vmax.f32 %v3888, %v3885
  %v3891 = vsub.f32 %v3830, %v3889
  %v3892 = vsub.f32 %v3887, %v3889
  %v3893 = vsub.f32 %v3888, %v3890
  %v3894 = vsub.f32 %v3885, %v3890
  %v3896 = vrot.slane %v3892, 6
  %v3899 = vrot.slane %v3893, 4
  %v3902 = vrot.slane %v3894, 2
  %v3904 = vsel %vm535, %v3891, %v3896
  %v3905 = vsel %vm537, %v3904, %v3899
  %v3906 = vsel %vm539, %v3905, %v3902
  %v3907 = vmul.f32 %v3906, 1.442695
  %v3908 = vpow.pop %v3907
  %v3910 = vrot.slane %v3882, 4
  %v3912 = vmul.f32 %v3908, %v3910
  %v3914 = vrot.slane %v3886, 6
  %v3916 = vmul.f32 %v3908, %v3914
  %v3918 = vrot.slane %v3916, 2
  %v3920 = vadd.f32 %v3912, %v3918
  %v3922 = vrot.slane %v3884, 4
  %v3924 = vmul.f32 %v3908, %v3922
  %v3926 = vrot.slane %v3908, 2
  %v3928 = vadd.f32 %v3924, %v3926
  %v3929 = vrcp.pop %v3928
  %v3930 = vmul.f32 %v3928, %v3929
  %v3931 = vsub.f32 2.0, %v3930
  %v3932 = vmul.f32 %v3929, %v3931
  %v3933 = vmul.f32 %v3920, %v3932
  %3934 = vst.msk [vmem:[%s1314] sm:$0x3] %vm561, %v3933
  %v3935 = vmul.f32 %v3908, %v3882
  %v3936 = vrot.slane %v3886, 2
  %v3938 = vmul.f32 %v3908, %v3936
  %v3940 = vrot.slane %v3938, 2
  %v3942 = vadd.f32 %v3935, %v3940
  %v3943 = vmul.f32 %v3908, %v3884
  %v3944 = vadd.f32 %v3943, %v3926
  %v3945 = vld [vmem:[%s1326] sm:$0x3]
  %v3946 = vld [vmem:[%s1328] sm:$0x3]
  %v3947 = vadd.f32 %v3173, %v3945
  %v3948 = vadd.f32 %v3165, %v3890
  %v3949 = vmax.f32 %v3890, %v3947
  %v3950 = vmax.f32 %v3948, %v3945
  %v3951 = vsub.f32 %v3890, %v3949
  %v3952 = vsub.f32 %v3947, %v3949
  %v3953 = vsub.f32 %v3948, %v3950
  %v3954 = vsub.f32 %v3945, %v3950
  %v3956 = vrot.slane %v3952, 6
  %v3959 = vrot.slane %v3953, 4
  %v3962 = vrot.slane %v3954, 2
  %v3964 = vsel %vm535, %v3951, %v3956
  %v3965 = vsel %vm537, %v3964, %v3959
  %v3966 = vsel %vm539, %v3965, %v3962
  %v3967 = vmul.f32 %v3966, 1.442695
  %v3968 = vpow.pop %v3967
  %v3970 = vrot.slane %v3942, 4
  %v3972 = vmul.f32 %v3968, %v3970
  %v3974 = vrot.slane %v3946, 6
  %v3976 = vmul.f32 %v3968, %v3974
  %v3978 = vrot.slane %v3976, 2
  %v3980 = vadd.f32 %v3972, %v3978
  %v3982 = vrot.slane %v3944, 4
  %v3984 = vmul.f32 %v3968, %v3982
  %v3986 = vrot.slane %v3968, 2
  %v3988 = vadd.f32 %v3984, %v3986
  %v3989 = vrcp.pop %v3988
  %v3990 = vmul.f32 %v3988, %v3989
  %v3991 = vsub.f32 2.0, %v3990
  %v3992 = vmul.f32 %v3989, %v3991
  %v3993 = vmul.f32 %v3980, %v3992
  %3994 = vst.msk [vmem:[%s1377] sm:$0x3] %vm561, %v3993
  %v3995 = vmul.f32 %v3968, %v3942
  %v3996 = vrot.slane %v3946, 2
  %v3998 = vmul.f32 %v3968, %v3996
  %v4000 = vrot.slane %v3998, 2
  %v4002 = vadd.f32 %v3995, %v4000
  %v4003 = vmul.f32 %v3968, %v3944
  %v4004 = vadd.f32 %v4003, %v3986
  %v4005 = vld [vmem:[%s1389] sm:$0x3]
  %v4006 = vld [vmem:[%s1391] sm:$0x3]
  %v4007 = vadd.f32 %v3173, %v4005
  %v4008 = vadd.f32 %v3165, %v3950
  %v4009 = vmax.f32 %v3950, %v4007
  %v4010 = vmax.f32 %v4008, %v4005
  %v4011 = vsub.f32 %v3950, %v4009
  %v4012 = vsub.f32 %v4007, %v4009
  %v4013 = vsub.f32 %v4008, %v4010
  %v4014 = vsub.f32 %v4005, %v4010
  %v4016 = vrot.slane %v4012, 6
  %v4019 = vrot.slane %v4013, 4
  %v4022 = vrot.slane %v4014, 2
  %v4024 = vsel %vm535, %v4011, %v4016
  %v4025 = vsel %vm537, %v4024, %v4019
  %v4026 = vsel %vm539, %v4025, %v4022
  %v4027 = vmul.f32 %v4026, 1.442695
  %v4028 = vpow.pop %v4027
  %v4030 = vrot.slane %v4002, 4
  %v4032 = vmul.f32 %v4028, %v4030
  %v4034 = vrot.slane %v4006, 6
  %v4036 = vmul.f32 %v4028, %v4034
  %v4038 = vrot.slane %v4036, 2
  %v4040 = vadd.f32 %v4032, %v4038
  %v4042 = vrot.slane %v4004, 4
  %v4044 = vmul.f32 %v4028, %v4042
  %v4046 = vrot.slane %v4028, 2
  %v4048 = vadd.f32 %v4044, %v4046
  %v4049 = vrcp.pop %v4048
  %v4050 = vmul.f32 %v4048, %v4049
  %v4051 = vsub.f32 2.0, %v4050
  %v4052 = vmul.f32 %v4049, %v4051
  %v4053 = vmul.f32 %v4040, %v4052
  %4054 = vst.msk [vmem:[%s1440] sm:$0x3] %vm561, %v4053
  %v4055 = vmul.f32 %v4028, %v4002
  %v4056 = vrot.slane %v4006, 2
  %v4058 = vmul.f32 %v4028, %v4056
  %v4060 = vrot.slane %v4058, 2
  %v4062 = vadd.f32 %v4055, %v4060
  %v4063 = vmul.f32 %v4028, %v4004
  %v4064 = vadd.f32 %v4063, %v4046
  %v4065 = vld [vmem:[%s1452] sm:$0x3]
  %v4066 = vld [vmem:[%s1454] sm:$0x3]
  %v4067 = vadd.f32 %v3173, %v4065
  %v4068 = vadd.f32 %v3165, %v4010
  %v4069 = vmax.f32 %v4010, %v4067
  %v4070 = vmax.f32 %v4068, %v4065
  %v4071 = vsub.f32 %v4010, %v4069
  %v4072 = vsub.f32 %v4067, %v4069
  %v4073 = vsub.f32 %v4068, %v4070
  %v4074 = vsub.f32 %v4065, %v4070
  %v4076 = vrot.slane %v4072, 6
  %v4079 = vrot.slane %v4073, 4
  %v4082 = vrot.slane %v4074, 2
  %v4084 = vsel %vm535, %v4071, %v4076
  %v4085 = vsel %vm537, %v4084, %v4079
  %v4086 = vsel %vm539, %v4085, %v4082
  %v4087 = vmul.f32 %v4086, 1.442695
  %v4088 = vpow.pop %v4087
  %v4090 = vrot.slane %v4062, 4
  %v4092 = vmul.f32 %v4088, %v4090
  %v4094 = vrot.slane %v4066, 6
  %v4096 = vmul.f32 %v4088, %v4094
  %v4098 = vrot.slane %v4096, 2
  %v4100 = vadd.f32 %v4092, %v4098
  %v4102 = vrot.slane %v4064, 4
  %v4104 = vmul.f32 %v4088, %v4102
  %v4106 = vrot.slane %v4088, 2
  %v4108 = vadd.f32 %v4104, %v4106
  %v4109 = vrcp.pop %v4108
  %v4110 = vmul.f32 %v4108, %v4109
  %v4111 = vsub.f32 2.0, %v4110
  %v4112 = vmul.f32 %v4109, %v4111
  %v4113 = vmul.f32 %v4100, %v4112
  %4114 = vst.msk [vmem:[%s1503] sm:$0x3] %vm561, %v4113
  %v4115 = vmul.f32 %v4088, %v4062
  %v4116 = vrot.slane %v4066, 2
  %v4118 = vmul.f32 %v4088, %v4116
  %v4120 = vrot.slane %v4118, 2
  %v4122 = vadd.f32 %v4115, %v4120
  %v4123 = vmul.f32 %v4088, %v4064
  %v4124 = vadd.f32 %v4123, %v4106
  %v4125 = vld [vmem:[%s1515] sm:$0x3]
  %v4126 = vld [vmem:[%s1517] sm:$0x3]
  %v4127 = vadd.f32 %v3173, %v4125
  %v4128 = vadd.f32 %v3165, %v4070
  %v4129 = vmax.f32 %v4070, %v4127
  %v4130 = vmax.f32 %v4128, %v4125
  %v4131 = vsub.f32 %v4070, %v4129
  %v4132 = vsub.f32 %v4127, %v4129
  %v4133 = vsub.f32 %v4128, %v4130
  %v4134 = vsub.f32 %v4125, %v4130
  %v4136 = vrot.slane %v4132, 6
  %v4139 = vrot.slane %v4133, 4
  %v4142 = vrot.slane %v4134, 2
  %v4144 = vsel %vm535, %v4131, %v4136
  %v4145 = vsel %vm537, %v4144, %v4139
  %v4146 = vsel %vm539, %v4145, %v4142
  %v4147 = vmul.f32 %v4146, 1.442695
  %v4148 = vpow.pop %v4147
  %v4150 = vrot.slane %v4122, 4
  %v4152 = vmul.f32 %v4148, %v4150
  %v4154 = vrot.slane %v4126, 6
  %v4156 = vmul.f32 %v4148, %v4154
  %v4158 = vrot.slane %v4156, 2
  %v4160 = vadd.f32 %v4152, %v4158
  %v4162 = vrot.slane %v4124, 4
  %v4164 = vmul.f32 %v4148, %v4162
  %v4166 = vrot.slane %v4148, 2
  %v4168 = vadd.f32 %v4164, %v4166
  %v4169 = vrcp.pop %v4168
  %v4170 = vmul.f32 %v4168, %v4169
  %v4171 = vsub.f32 2.0, %v4170
  %v4172 = vmul.f32 %v4169, %v4171
  %v4173 = vmul.f32 %v4160, %v4172
  %4174 = vst.msk [vmem:[%s1566] sm:$0x3] %vm561, %v4173
  %v4175 = vmul.f32 %v4148, %v4122
  %v4176 = vrot.slane %v4126, 2
  %v4178 = vmul.f32 %v4148, %v4176
  %v4180 = vrot.slane %v4178, 2
  %v4182 = vadd.f32 %v4175, %v4180
  %v4183 = vmul.f32 %v4148, %v4124
  %v4184 = vadd.f32 %v4183, %v4166
  %v4185 = vld [vmem:[%s1578] sm:$0x3]
  %v4186 = vld [vmem:[%s1580] sm:$0x3]
  %v4187 = vadd.f32 %v3173, %v4185
  %v4188 = vadd.f32 %v3165, %v4130
  %v4189 = vmax.f32 %v4130, %v4187
  %v4190 = vmax.f32 %v4188, %v4185
  %v4191 = vsub.f32 %v4130, %v4189
  %v4192 = vsub.f32 %v4187, %v4189
  %v4193 = vsub.f32 %v4188, %v4190
  %v4194 = vsub.f32 %v4185, %v4190
  %v4196 = vrot.slane %v4192, 6
  %v4199 = vrot.slane %v4193, 4
  %v4202 = vrot.slane %v4194, 2
  %v4204 = vsel %vm535, %v4191, %v4196
  %v4205 = vsel %vm537, %v4204, %v4199
  %v4206 = vsel %vm539, %v4205, %v4202
  %v4207 = vmul.f32 %v4206, 1.442695
  %v4208 = vpow.pop %v4207
  %v4210 = vrot.slane %v4182, 4
  %v4212 = vmul.f32 %v4208, %v4210
  %v4214 = vrot.slane %v4186, 6
  %v4216 = vmul.f32 %v4208, %v4214
  %v4218 = vrot.slane %v4216, 2
  %v4220 = vadd.f32 %v4212, %v4218
  %v4222 = vrot.slane %v4184, 4
  %v4224 = vmul.f32 %v4208, %v4222
  %v4226 = vrot.slane %v4208, 2
  %v4228 = vadd.f32 %v4224, %v4226
  %v4229 = vrcp.pop %v4228
  %v4230 = vmul.f32 %v4228, %v4229
  %v4231 = vsub.f32 2.0, %v4230
  %v4232 = vmul.f32 %v4229, %v4231
  %v4233 = vmul.f32 %v4220, %v4232
  %4234 = vst.msk [vmem:[%s1629] sm:$0x3] %vm561, %v4233
  %v4235 = vmul.f32 %v4208, %v4182
  %v4236 = vrot.slane %v4186, 2
  %v4238 = vmul.f32 %v4208, %v4236
  %v4240 = vrot.slane %v4238, 2
  %v4242 = vadd.f32 %v4235, %v4240
  %v4243 = vmul.f32 %v4208, %v4184
  %v4244 = vadd.f32 %v4243, %v4226
  %v4245 = vld [vmem:[%s1641] sm:$0x3]
  %v4246 = vld [vmem:[%s1643] sm:$0x3]
  %v4247 = vadd.f32 %v3173, %v4245
  %v4248 = vadd.f32 %v3165, %v4190
  %v4249 = vmax.f32 %v4190, %v4247
  %v4250 = vmax.f32 %v4248, %v4245
  %v4251 = vsub.f32 %v4190, %v4249
  %v4252 = vsub.f32 %v4247, %v4249
  %v4253 = vsub.f32 %v4248, %v4250
  %v4254 = vsub.f32 %v4245, %v4250
  %v4256 = vrot.slane %v4252, 6
  %v4259 = vrot.slane %v4253, 4
  %v4262 = vrot.slane %v4254, 2
  %v4264 = vsel %vm535, %v4251, %v4256
  %v4265 = vsel %vm537, %v4264, %v4259
  %v4266 = vsel %vm539, %v4265, %v4262
  %v4267 = vmul.f32 %v4266, 1.442695
  %v4268 = vpow.pop %v4267
  %v4270 = vrot.slane %v4242, 4
  %v4272 = vmul.f32 %v4268, %v4270
  %v4274 = vrot.slane %v4246, 6
  %v4276 = vmul.f32 %v4268, %v4274
  %v4278 = vrot.slane %v4276, 2
  %v4280 = vadd.f32 %v4272, %v4278
  %v4282 = vrot.slane %v4244, 4
  %v4284 = vmul.f32 %v4268, %v4282
  %v4286 = vrot.slane %v4268, 2
  %v4288 = vadd.f32 %v4284, %v4286
  %v4289 = vrcp.pop %v4288
  %v4290 = vmul.f32 %v4288, %v4289
  %v4291 = vsub.f32 2.0, %v4290
  %v4292 = vmul.f32 %v4289, %v4291
  %v4293 = vmul.f32 %v4280, %v4292
  %4294 = vst.msk [vmem:[%s1692] sm:$0x3] %vm561, %v4293
  %v4295 = vmul.f32 %v4268, %v4242
  %v4296 = vrot.slane %v4246, 2
  %v4298 = vmul.f32 %v4268, %v4296
  %v4300 = vrot.slane %v4298, 2
  %v4302 = vadd.f32 %v4295, %v4300
  %v4303 = vmul.f32 %v4268, %v4244
  %v4304 = vadd.f32 %v4303, %v4286
  %v4305 = vld [vmem:[%s1704] sm:$0x3]
  %v4306 = vld [vmem:[%s1706] sm:$0x3]
  %v4307 = vadd.f32 %v3173, %v4305
  %v4308 = vadd.f32 %v3165, %v4250
  %v4309 = vmax.f32 %v4250, %v4307
  %v4310 = vmax.f32 %v4308, %v4305
  %v4311 = vsub.f32 %v4250, %v4309
  %v4312 = vsub.f32 %v4307, %v4309
  %v4313 = vsub.f32 %v4308, %v4310
  %v4314 = vsub.f32 %v4305, %v4310
  %v4316 = vrot.slane %v4312, 6
  %v4319 = vrot.slane %v4313, 4
  %v4322 = vrot.slane %v4314, 2
  %v4324 = vsel %vm535, %v4311, %v4316
  %v4325 = vsel %vm537, %v4324, %v4319
  %v4326 = vsel %vm539, %v4325, %v4322
  %v4327 = vmul.f32 %v4326, 1.442695
  %v4328 = vpow.pop %v4327
  %v4330 = vrot.slane %v4302, 4
  %v4332 = vmul.f32 %v4328, %v4330
  %v4334 = vrot.slane %v4306, 6
  %v4336 = vmul.f32 %v4328, %v4334
  %v4338 = vrot.slane %v4336, 2
  %v4340 = vadd.f32 %v4332, %v4338
  %v4342 = vrot.slane %v4304, 4
  %v4344 = vmul.f32 %v4328, %v4342
  %v4346 = vrot.slane %v4328, 2
  %v4348 = vadd.f32 %v4344, %v4346
  %v4349 = vrcp.pop %v4348
  %v4350 = vmul.f32 %v4348, %v4349
  %v4351 = vsub.f32 2.0, %v4350
  %v4352 = vmul.f32 %v4349, %v4351
  %v4353 = vmul.f32 %v4340, %v4352
  %4354 = vst.msk [vmem:[%s1755] sm:$0x3] %vm561, %v4353
  %v4355 = vmul.f32 %v4328, %v4302
  %v4356 = vrot.slane %v4306, 2
  %v4358 = vmul.f32 %v4328, %v4356
  %v4360 = vrot.slane %v4358, 2
  %v4362 = vadd.f32 %v4355, %v4360
  %v4363 = vmul.f32 %v4328, %v4304
  %v4364 = vadd.f32 %v4363, %v4346
  %v4365 = vld [vmem:[%s1767] sm:$0x3]
  %v4366 = vld [vmem:[%s1769] sm:$0x3]
  %v4367 = vadd.f32 %v3173, %v4365
  %v4368 = vadd.f32 %v3165, %v4310
  %v4369 = vmax.f32 %v4310, %v4367
  %v4370 = vmax.f32 %v4368, %v4365
  %v4371 = vsub.f32 %v4310, %v4369
  %v4372 = vsub.f32 %v4367, %v4369
  %v4373 = vsub.f32 %v4368, %v4370
  %v4374 = vsub.f32 %v4365, %v4370
  %v4376 = vrot.slane %v4372, 6
  %v4379 = vrot.slane %v4373, 4
  %v4382 = vrot.slane %v4374, 2
  %v4384 = vsel %vm535, %v4371, %v4376
  %v4385 = vsel %vm537, %v4384, %v4379
  %v4386 = vsel %vm539, %v4385, %v4382
  %v4387 = vmul.f32 %v4386, 1.442695
  %v4388 = vpow.pop %v4387
  %v4390 = vrot.slane %v4362, 4
  %v4392 = vmul.f32 %v4388, %v4390
  %v4394 = vrot.slane %v4366, 6
  %v4396 = vmul.f32 %v4388, %v4394
  %v4398 = vrot.slane %v4396, 2
  %v4400 = vadd.f32 %v4392, %v4398
  %v4402 = vrot.slane %v4364, 4
  %v4404 = vmul.f32 %v4388, %v4402
  %v4406 = vrot.slane %v4388, 2
  %v4408 = vadd.f32 %v4404, %v4406
  %v4409 = vrcp.pop %v4408
  %v4410 = vmul.f32 %v4408, %v4409
  %v4411 = vsub.f32 2.0, %v4410
  %v4412 = vmul.f32 %v4409, %v4411
  %v4413 = vmul.f32 %v4400, %v4412
  %4414 = vst.msk [vmem:[%s1818] sm:$0x3] %vm561, %v4413
  %v4415 = vmul.f32 %v4388, %v4362
  %v4416 = vrot.slane %v4366, 2
  %v4418 = vmul.f32 %v4388, %v4416
  %v4420 = vrot.slane %v4418, 2
  %v4422 = vadd.f32 %v4415, %v4420
  %v4423 = vmul.f32 %v4388, %v4364
  %v4424 = vadd.f32 %v4423, %v4406
  %v4425 = vld [vmem:[%s1830] sm:$0x3]
  %v4426 = vld [vmem:[%s1832] sm:$0x3]
  %v4427 = vadd.f32 %v3173, %v4425
  %v4428 = vadd.f32 %v3165, %v4370
  %v4429 = vmax.f32 %v4370, %v4427
  %v4430 = vmax.f32 %v4428, %v4425
  %v4431 = vsub.f32 %v4370, %v4429
  %v4432 = vsub.f32 %v4427, %v4429
  %v4433 = vsub.f32 %v4428, %v4430
  %v4434 = vsub.f32 %v4425, %v4430
  %v4436 = vrot.slane %v4432, 6
  %v4439 = vrot.slane %v4433, 4
  %v4442 = vrot.slane %v4434, 2
  %v4444 = vsel %vm535, %v4431, %v4436
  %v4445 = vsel %vm537, %v4444, %v4439
  %v4446 = vsel %vm539, %v4445, %v4442
  %v4447 = vmul.f32 %v4446, 1.442695
  %v4448 = vpow.pop %v4447
  %v4450 = vrot.slane %v4422, 4
  %v4452 = vmul.f32 %v4448, %v4450
  %v4454 = vrot.slane %v4426, 6
  %v4456 = vmul.f32 %v4448, %v4454
  %v4458 = vrot.slane %v4456, 2
  %v4460 = vadd.f32 %v4452, %v4458
  %v4462 = vrot.slane %v4424, 4
  %v4464 = vmul.f32 %v4448, %v4462
  %v4466 = vrot.slane %v4448, 2
  %v4468 = vadd.f32 %v4464, %v4466
  %v4469 = vrcp.pop %v4468
  %v4470 = vmul.f32 %v4468, %v4469
  %v4471 = vsub.f32 2.0, %v4470
  %v4472 = vmul.f32 %v4469, %v4471
  %v4473 = vmul.f32 %v4460, %v4472
  %4474 = vst.msk [vmem:[%s1881] sm:$0x3] %vm561, %v4473
  %v4475 = vmul.f32 %v4448, %v4422
  %v4476 = vrot.slane %v4426, 2
  %v4478 = vmul.f32 %v4448, %v4476
  %v4480 = vrot.slane %v4478, 2
  %v4482 = vadd.f32 %v4475, %v4480
  %v4483 = vmul.f32 %v4448, %v4424
  %v4484 = vadd.f32 %v4483, %v4466
  %v4485 = vld [vmem:[%s1893] sm:$0x3]
  %v4486 = vld [vmem:[%s1895] sm:$0x3]
  %v4487 = vadd.f32 %v3173, %v4485
  %v4488 = vadd.f32 %v3165, %v4430
  %v4489 = vmax.f32 %v4430, %v4487
  %v4490 = vmax.f32 %v4488, %v4485
  %v4491 = vsub.f32 %v4430, %v4489
  %v4492 = vsub.f32 %v4487, %v4489
  %v4493 = vsub.f32 %v4488, %v4490
  %v4494 = vsub.f32 %v4485, %v4490
  %v4496 = vrot.slane %v4492, 6
  %v4499 = vrot.slane %v4493, 4
  %v4502 = vrot.slane %v4494, 2
  %v4504 = vsel %vm535, %v4491, %v4496
  %v4505 = vsel %vm537, %v4504, %v4499
  %v4506 = vsel %vm539, %v4505, %v4502
  %v4507 = vmul.f32 %v4506, 1.442695
  %v4508 = vpow.pop %v4507
  %v4510 = vrot.slane %v4482, 4
  %v4512 = vmul.f32 %v4508, %v4510
  %v4514 = vrot.slane %v4486, 6
  %v4516 = vmul.f32 %v4508, %v4514
  %v4518 = vrot.slane %v4516, 2
  %v4520 = vadd.f32 %v4512, %v4518
  %v4522 = vrot.slane %v4484, 4
  %v4524 = vmul.f32 %v4508, %v4522
  %v4526 = vrot.slane %v4508, 2
  %v4528 = vadd.f32 %v4524, %v4526
  %v4529 = vrcp.pop %v4528
  %v4530 = vmul.f32 %v4528, %v4529
  %v4531 = vsub.f32 2.0, %v4530
  %v4532 = vmul.f32 %v4529, %v4531
  %v4533 = vmul.f32 %v4520, %v4532
  %4534 = vst.msk [vmem:[%s1944] sm:$0x3] %vm561, %v4533
  %v4535 = vmul.f32 %v4508, %v4482
  %v4536 = vrot.slane %v4486, 2
  %v4538 = vmul.f32 %v4508, %v4536
  %v4540 = vrot.slane %v4538, 2
  %v4542 = vadd.f32 %v4535, %v4540
  %v4543 = vmul.f32 %v4508, %v4484
  %v4544 = vadd.f32 %v4543, %v4526
  %v4545 = vld [vmem:[%s1956] sm:$0x3]
  %v4546 = vld [vmem:[%s1958] sm:$0x3]
  %v4547 = vadd.f32 %v3173, %v4545
  %v4548 = vadd.f32 %v3165, %v4490
  %v4549 = vmax.f32 %v4490, %v4547
  %v4550 = vmax.f32 %v4548, %v4545
  %v4551 = vsub.f32 %v4490, %v4549
  %v4552 = vsub.f32 %v4547, %v4549
  %v4553 = vsub.f32 %v4548, %v4550
  %v4554 = vsub.f32 %v4545, %v4550
  %v4556 = vrot.slane %v4552, 6
  %v4559 = vrot.slane %v4553, 4
  %v4562 = vrot.slane %v4554, 2
  %v4564 = vsel %vm535, %v4551, %v4556
  %v4565 = vsel %vm537, %v4564, %v4559
  %v4566 = vsel %vm539, %v4565, %v4562
  %v4567 = vmul.f32 %v4566, 1.442695
  %v4568 = vpow.pop %v4567
  %v4570 = vrot.slane %v4542, 4
  %v4572 = vmul.f32 %v4568, %v4570
  %v4574 = vrot.slane %v4546, 6
  %v4576 = vmul.f32 %v4568, %v4574
  %v4578 = vrot.slane %v4576, 2
  %v4580 = vadd.f32 %v4572, %v4578
  %v4582 = vrot.slane %v4544, 4
  %v4584 = vmul.f32 %v4568, %v4582
  %v4586 = vrot.slane %v4568, 2
  %v4588 = vadd.f32 %v4584, %v4586
  %v4589 = vrcp.pop %v4588
  %v4590 = vmul.f32 %v4588, %v4589
  %v4591 = vsub.f32 2.0, %v4590
  %v4592 = vmul.f32 %v4589, %v4591
  %v4593 = vmul.f32 %v4580, %v4592
  %4594 = vst.msk [vmem:[%s2007] sm:$0x3] %vm561, %v4593
  %v4595 = vld [vmem:[#allocation4] sm:$0xff]
  %v4596 = vld [vmem:[#allocation4 + $0x8] sm:$0xff]
  %v4597 = vld [vmem:[#allocation4 + $0x10] sm:$0xff]
  %v4598 = vld [vmem:[#allocation4 + $0x18] sm:$0xff]
  %v4599 = vld [vmem:[#allocation4 + $0x20] sm:$0xff]
  %v4600 = vld [vmem:[#allocation4 + $0x28] sm:$0xff]
  %4607 = vrot.lane.b32.xlu0 %v4595, 64
  %v4608 = vpop.permute.xlu0 %4607
  %4609 = vrot.lane.b32.xlu0 %v4596, 64
  %v4610 = vpop.permute.xlu0 %4609
  %4611 = vrot.lane.b32.xlu0 %v4597, 64
  %v4612 = vpop.permute.xlu0 %4611
  %4613 = vrot.lane.b32.xlu0 %v4598, 64
  %v4614 = vpop.permute.xlu0 %4613
  %4615 = vrot.lane.b32.xlu0 %v4599, 64
  %v4616 = vpop.permute.xlu0 %4615
  %4617 = vrot.lane.b32.xlu0 %v4600, 64
  %v4618 = vpop.permute.xlu0 %4617
  %v4625 = vmul.f32 %v3148, %v4608
  %v4626 = vmul.f32 %v3150, %v4610
  %v4627 = vmul.f32 %v3152, %v4612
  %v4628 = vmul.f32 %v3154, %v4614
  %v4629 = vmul.f32 %v3156, %v4616
  %v4630 = vmul.f32 %v3158, %v4618
  %s4631 = scalar_lea.vmem %s9, 32
  %v4632 = vld [vmem:[%s4631] sm:$0xff]
  %v4633 = vld [vmem:[%s4631 + $0x8] sm:$0xff]
  %v4634 = vld [vmem:[%s4631 + $0x10] sm:$0xff]
  %v4635 = vld [vmem:[%s4631 + $0x18] sm:$0xff]
  %4642 = vrot.lane.b32.xlu0 %v4625, 64
  %v4643 = vpop.permute.xlu0 %4642
  %4644 = vrot.lane.b32.xlu0 %v4626, 64
  %v4645 = vpop.permute.xlu0 %4644
  %4646 = vrot.lane.b32.xlu0 %v4627, 64
  %v4647 = vpop.permute.xlu0 %4646
  %4648 = vrot.lane.b32.xlu0 %v4628, 64
  %v4649 = vpop.permute.xlu0 %4648
  %4650 = vrot.lane.b32.xlu0 %v4629, 64
  %v4651 = vpop.permute.xlu0 %4650
  %4652 = vrot.lane.b32.xlu0 %v4630, 64
  %v4653 = vpop.permute.xlu0 %4652
  %v4654 = vsel %vm74, %v4643, 0
  %v4656 = vsel %vm74, %v4645, 0
  %v4658 = vsel %vm74, %v4647, 0
  %v4660 = vsel %vm74, %v4649, 0
  %v4662 = vsel %vm74, %v4651, 0
  %v4664 = vsel %vm74, %v4653, 0
  %4666 = vmatprep.subr.mxu0 0.0
  %4667 = vmatpush1.msra.mxu0 %v4632
  %4668 = vmatprep.subr.mxu0 0.0
  %4669 = vmatpush1.msra.mxu0 %v4633
  %4670 = vmatprep.subr.mxu0 0.0
  %4671 = vmatpush1.msra.mxu0 %v4634
  %4672 = vmatprep.subr.mxu0 0.0
  %4673 = vmatpush1.msra.mxu0 %v4635
  %4674 = vmatprep.subr.mxu0 0.0
  %4675 = vmatpush1.msra.mxu0 0.0
  %4676 = vmatprep.subr.mxu0 0.0
  %4677 = vmatpush1.msra.mxu0 0.0
  %4678 = vmatprep.subr.mxu0 0.0
  %4679 = vmatpush1.msra.mxu0 0.0
  %4680 = vmatprep.subr.mxu0 0.0
  %4681 = vmatpush1.msra.mxu0 0.0
  %4682 = vmatprep.subr.mxu0 0.0
  %4683 = vmatpush1.msra.mxu0 0.0
  %4684 = vmatprep.subr.mxu0 0.0
  %4685 = vmatpush1.msra.mxu0 0.0
  %4686 = vmatprep.subr.mxu0 0.0
  %4687 = vmatpush1.msra.mxu0 0.0
  %4688 = vmatprep.subr.mxu0 0.0
  %4689 = vmatpush1.msra.mxu0 0.0
  %4690 = vmatprep.subr.mxu0 0.0
  %4691 = vmatpush1.msra.mxu0 0.0
  %4692 = vmatprep.subr.mxu0 0.0
  %4693 = vmatpush1.msra.mxu0 0.0
  %4694 = vmatprep.subr.mxu0 0.0
  %4695 = vmatpush1.msra.mxu0 0.0
  %4696 = vmatprep.subr.mxu0 0.0
  %4697 = vmatpush1.msra.mxu0 0.0
  %4698 = vmatprep.subr.mxu0 0.0
  %4699 = vmatpush1.msra.mxu0 0.0
  %4700 = vmatprep.subr.mxu0 0.0
  %4701 = vmatpush1.msra.mxu0 0.0
  %4702 = vmatprep.subr.mxu0 0.0
  %4703 = vmatpush1.msra.mxu0 0.0
  %4704 = vmatprep.subr.mxu0 0.0
  %4705 = vmatpush1.msra.mxu0 0.0
  %4706 = vmatprep.subr.mxu0 0.0
  %4707 = vmatpush1.msra.mxu0 0.0
  %4708 = vmatprep.subr.mxu0 0.0
  %4709 = vmatpush1.msra.mxu0 0.0
  %4710 = vmatprep.subr.mxu0 0.0
  %4711 = vmatpush1.msra.mxu0 0.0
  %4712 = vmatprep.subr.mxu0 0.0
  %4713 = vmatpush1.msra.mxu0 0.0
  %4714 = vmatprep.subr.mxu0 0.0
  %4715 = vmatpush1.msra.mxu0 0.0
  %4716 = vmatprep.subr.mxu0 0.0
  %4717 = vmatpush1.msra.mxu0 0.0
  %4718 = vmatprep.subr.mxu0 0.0
  %4719 = vmatpush1.msra.mxu0 0.0
  %4720 = vmatprep.subr.mxu0 0.0
  %4721 = vmatpush1.msra.mxu0 0.0
  %4722 = vmatprep.subr.mxu0 0.0
  %4723 = vmatpush1.msra.mxu0 0.0
  %4724 = vmatprep.subr.mxu0 0.0
  %4725 = vmatpush1.msra.mxu0 0.0
  %4726 = vmatprep.subr.mxu0 0.0
  %4727 = vmatpush1.msra.mxu0 0.0
  %4728 = vmatprep.subr.mxu0 0.0
  %4729 = vmatpush1.msra.mxu0 0.0
  %4730 = vmatprep.mubr.f32.mxu0 0.0
  %4731 = vmatmul.mubr.f32.gmra.mrb[0].mxu0 %v4654
  %v4732 = vpop.f32.mrb[0].mxu0
  %v4733 = vadd.f32 0.0, %v4732
  %v4734 = vpop.f32.mrb[0].mxu0
  %4735 = vmatprep.mubr.f32.mxu0 0.0
  %4736 = vmatmul.mubr.f32.gmra.mrb[0].mxu0 %v4656
  %v4737 = vpop.f32.mrb[0].mxu0
  %v4738 = vadd.f32 0.0, %v4737
  %v4739 = vpop.f32.mrb[0].mxu0
  %4740 = vmatprep.mubr.f32.mxu0 0.0
  %4741 = vmatmul.mubr.f32.gmra.mrb[0].mxu0 %v4658
  %v4742 = vpop.f32.mrb[0].mxu0
  %v4743 = vadd.f32 0.0, %v4742
  %v4744 = vpop.f32.mrb[0].mxu0
  %4745 = vmatprep.mubr.f32.mxu0 0.0
  %4746 = vmatmul.mubr.f32.gmra.mrb[0].mxu0 %v4660
  %v4747 = vpop.f32.mrb[0].mxu0
  %v4748 = vadd.f32 0.0, %v4747
  %v4749 = vpop.f32.mrb[0].mxu0
  %4750 = vmatprep.mubr.f32.mxu0 0.0
  %4751 = vmatmul.mubr.f32.gmra.mrb[0].mxu0 %v4662
  %v4752 = vpop.f32.mrb[0].mxu0
  %v4753 = vadd.f32 0.0, %v4752
  %v4754 = vpop.f32.mrb[0].mxu0
  %4755 = vmatprep.mubr.f32.mxu0 0.0
  %4756 = vmatmul.mubr.f32.gmra.mrb[0].mxu0 %v4664
  %v4757 = vpop.f32.mrb[0].mxu0
  %v4758 = vadd.f32 0.0, %v4757
  %v4759 = vpop.f32.mrb[0].mxu0
  %4760 = vdwg.mxu0
  %v4761 = vadd.f32 %v2721, %v4733
  %v4762 = vadd.f32 %v2722, %v4738
  %v4763 = vadd.f32 %v2723, %v4743
  %v4764 = vadd.f32 %v2724, %v4748
  %v4765 = vadd.f32 %v2725, %v4753
  %v4766 = vadd.f32 %v2726, %v4758
  %s4767 = scalar_lea.vmem %s3, 1
  %v4768 = vld [vmem:[%s4767] sm:$0x1]
  %s4769 = scalar_lea.vmem %s4, 1
  %v4770 = vld [vmem:[%s4769] sm:$0x1]
  %v4771 = vsel %vm74, %v4761, 0.0
  %4772 = vadd.xlane.f32.xlu0 %v4771
  %v4773 = vpop.xlane.xlu0 %4772
  %v4774 = vsel %vm74, %v4762, 0.0
  %4775 = vadd.xlane.f32.xlu0 %v4774
  %v4776 = vpop.xlane.xlu0 %4775
  %v4777 = vsel %vm74, %v4763, 0.0
  %4778 = vadd.xlane.f32.xlu0 %v4777
  %v4779 = vpop.xlane.xlu0 %4778
  %v4780 = vsel %vm74, %v4764, 0.0
  %4781 = vadd.xlane.f32.xlu0 %v4780
  %v4782 = vpop.xlane.xlu0 %4781
  %v4783 = vsel %vm74, %v4765, 0.0
  %4784 = vadd.xlane.f32.xlu0 %v4783
  %v4785 = vpop.xlane.xlu0 %4784
  %v4786 = vsel %vm74, %v4766, 0.0
  %4787 = vadd.xlane.f32.xlu0 %v4786
  %v4788 = vpop.xlane.xlu0 %4787
  %v4789 = vmul.f32 %v4773, %v93
  %v4790 = vmul.f32 %v4776, %v93
  %v4791 = vmul.f32 %v4779, %v93
  %v4792 = vmul.f32 %v4782, %v93
  %v4793 = vmul.f32 %v4785, %v93
  %v4794 = vmul.f32 %v4788, %v93
  %v4795 = vsub.f32 %v4761, %v4789
  %v4796 = vsub.f32 %v4762, %v4790
  %v4797 = vsub.f32 %v4763, %v4791
  %v4798 = vsub.f32 %v4764, %v4792
  %v4799 = vsub.f32 %v4765, %v4793
  %v4800 = vsub.f32 %v4766, %v4794
  %v4801 = vmul.f32 %v4795, %v4795
  %v4802 = vmul.f32 %v4796, %v4796
  %v4803 = vmul.f32 %v4797, %v4797
  %v4804 = vmul.f32 %v4798, %v4798
  %v4805 = vmul.f32 %v4799, %v4799
  %v4806 = vmul.f32 %v4800, %v4800
  %v4807 = vsel %vm74, %v4801, 0.0
  %4808 = vadd.xlane.f32.xlu0 %v4807
  %v4809 = vpop.xlane.xlu0 %4808
  %v4810 = vsel %vm74, %v4802, 0.0
  %4811 = vadd.xlane.f32.xlu0 %v4810
  %v4812 = vpop.xlane.xlu0 %4811
  %v4813 = vsel %vm74, %v4803, 0.0
  %4814 = vadd.xlane.f32.xlu0 %v4813
  %v4815 = vpop.xlane.xlu0 %4814
  %v4816 = vsel %vm74, %v4804, 0.0
  %4817 = vadd.xlane.f32.xlu0 %v4816
  %v4818 = vpop.xlane.xlu0 %4817
  %v4819 = vsel %vm74, %v4805, 0.0
  %4820 = vadd.xlane.f32.xlu0 %v4819
  %v4821 = vpop.xlane.xlu0 %4820
  %v4822 = vsel %vm74, %v4806, 0.0
  %4823 = vadd.xlane.f32.xlu0 %v4822
  %v4824 = vpop.xlane.xlu0 %4823
  %v4825 = vmul.f32 %v4809, %v93
  %v4826 = vmul.f32 %v4812, %v93
  %v4827 = vmul.f32 %v4815, %v93
  %v4828 = vmul.f32 %v4818, %v93
  %v4829 = vmul.f32 %v4821, %v93
  %v4830 = vmul.f32 %v4824, %v93
  %v4831 = vadd.f32 %v4825, 1e-05
  %v4832 = vadd.f32 %v4826, 1e-05
  %v4833 = vadd.f32 %v4827, 1e-05
  %v4834 = vadd.f32 %v4828, 1e-05
  %v4835 = vadd.f32 %v4829, 1e-05
  %v4836 = vadd.f32 %v4830, 1e-05
  %v4837 = vrsqrt.pop %v4831
  %v4838 = vrsqrt.pop %v4832
  %v4839 = vrsqrt.pop %v4833
  %v4840 = vrsqrt.pop %v4834
  %v4841 = vrsqrt.pop %v4835
  %v4842 = vrsqrt.pop %v4836
  %v4843 = vmul.f32 %v4795, %v4837
  %v4844 = vmul.f32 %v4796, %v4838
  %v4845 = vmul.f32 %v4797, %v4839
  %v4846 = vmul.f32 %v4798, %v4840
  %v4847 = vmul.f32 %v4799, %v4841
  %v4848 = vmul.f32 %v4800, %v4842
  %v4850 = vlaneseq
  %v4851 = vshrl.u32 %v4850, 7
  %v4852 = vsub.s32 0, %v4851
  %v4853 = vrot.slane %v4768, %v4852
  %v4855 = vmul.f32 %v4843, %v4853
  %v4856 = vmul.f32 %v4844, %v4853
  %v4857 = vmul.f32 %v4845, %v4853
  %v4858 = vmul.f32 %v4846, %v4853
  %v4859 = vmul.f32 %v4847, %v4853
  %v4860 = vmul.f32 %v4848, %v4853
  %v4862 = vlaneseq
  %v4863 = vshrl.u32 %v4862, 7
  %v4864 = vsub.s32 0, %v4863
  %v4865 = vrot.slane %v4770, %v4864
  %v4867 = vadd.f32 %v4855, %v4865
  %v4868 = vadd.f32 %v4856, %v4865
  %v4869 = vadd.f32 %v4857, %v4865
  %v4870 = vadd.f32 %v4858, %v4865
  %v4871 = vadd.f32 %v4859, %v4865
  %v4872 = vadd.f32 %v4860, %v4865
  %v4873 = vrot.slane %v4867, 6
  %v4874 = vrot.slane %v4868, 6
  %v4875 = vrot.slane %v4869, 6
  %v4876 = vrot.slane %v4870, 6
  %v4877 = vrot.slane %v4871, 6
  %v4878 = vrot.slane %v4872, 6
  %v4879 = vsel %vm66, %v4877, %v4878
  %v4880 = vsel %vm66, %v4876, %v4877
  %v4881 = vsel %vm66, %v4875, %v4876
  %v4882 = vsel %vm66, %v4874, %v4875
  %v4883 = vsel %vm66, %v4873, %v4874
  %v4884 = vsel %vm66, %v4878, %v4873
  %v4885 = vsel %vm66, 0.0, %v4884
  %v4886 = vsel %vm67, 0.0, %v4883
  %v4887 = vsel %vm68, 0.0, %v4882
  %v4888 = vsel %vm69, 0.0, %v4881
  %v4889 = vsel %vm70, 0.0, %v4880
  %v4890 = vsel %vm71, 0.0, %v4879
  %s4891 = scalar_lea.vmem %s10, 64
  %v4892 = vld [vmem:[%s4891] sm:$0xff]
  %v4893 = vld [vmem:[%s4891 + $0x8] sm:$0xff]
  %v4894 = vld [vmem:[%s4891 + $0x10] sm:$0xff]
  %v4895 = vld [vmem:[%s4891 + $0x18] sm:$0xff]
  %v4896 = vld [vmem:[%s4891 + $0x20] sm:$0xff]
  %v4897 = vld [vmem:[%s4891 + $0x28] sm:$0xff]
  %v4898 = vld [vmem:[%s4891 + $0x30] sm:$0xff]
  %v4899 = vld [vmem:[%s4891 + $0x38] sm:$0xff]
  %s4900 = scalar_lea.vmem %s11, 64
  %v4901 = vld [vmem:[%s4900] sm:$0xff]
  %v4902 = vld [vmem:[%s4900 + $0x8] sm:$0xff]
  %v4903 = vld [vmem:[%s4900 + $0x10] sm:$0xff]
  %v4904 = vld [vmem:[%s4900 + $0x18] sm:$0xff]
  %v4905 = vld [vmem:[%s4900 + $0x20] sm:$0xff]
  %v4906 = vld [vmem:[%s4900 + $0x28] sm:$0xff]
  %v4907 = vld [vmem:[%s4900 + $0x30] sm:$0xff]
  %v4908 = vld [vmem:[%s4900 + $0x38] sm:$0xff]
  %v4910 = vsel %vm74, %v4885, 0
  %v4913 = vsel %vm74, %v4886, 0
  %v4916 = vsel %vm74, %v4887, 0
  %v4919 = vsel %vm74, %v4888, 0
  %v4922 = vsel %vm74, %v4889, 0
  %v4925 = vsel %vm74, %v4890, 0
  %4927 = vmatprep.subr.mxu0 %v4902
  %4928 = vmatpush1.msra.mxu0 %v4901
  %4929 = vmatprep.subr.mxu0 %v4904
  %4930 = vmatpush1.msra.mxu0 %v4903
  %4931 = vmatprep.subr.mxu0 %v4906
  %4932 = vmatpush1.msra.mxu0 %v4905
  %4933 = vmatprep.subr.mxu0 %v4908
  %4934 = vmatpush1.msra.mxu0 %v4907
  %4935 = vmatprep.subr.mxu0 0.0
  %4936 = vmatpush1.msra.mxu0 0.0
  %4937 = vmatprep.subr.mxu0 0.0
  %4938 = vmatpush1.msra.mxu0 0.0
  %4939 = vmatprep.subr.mxu0 0.0
  %4940 = vmatpush1.msra.mxu0 0.0
  %4941 = vmatprep.subr.mxu0 0.0
  %4942 = vmatpush1.msra.mxu0 0.0
  %4943 = vmatprep.subr.mxu0 0.0
  %4944 = vmatpush1.msra.mxu0 0.0
  %4945 = vmatprep.subr.mxu0 0.0
  %4946 = vmatpush1.msra.mxu0 0.0
  %4947 = vmatprep.subr.mxu0 0.0
  %4948 = vmatpush1.msra.mxu0 0.0
  %4949 = vmatprep.subr.mxu0 0.0
  %4950 = vmatpush1.msra.mxu0 0.0
  %4951 = vmatprep.subr.mxu0 0.0
  %4952 = vmatpush1.msra.mxu0 0.0
  %4953 = vmatprep.subr.mxu0 0.0
  %4954 = vmatpush1.msra.mxu0 0.0
  %4955 = vmatprep.subr.mxu0 0.0
  %4956 = vmatpush1.msra.mxu0 0.0
  %4957 = vmatprep.subr.mxu0 0.0
  %4958 = vmatpush1.msra.mxu0 0.0
  %4959 = vmatprep.subr.mxu0 0.0
  %4960 = vmatpush1.msra.mxu0 0.0
  %4961 = vmatprep.subr.mxu0 0.0
  %4962 = vmatpush1.msra.mxu0 0.0
  %4963 = vmatprep.subr.mxu0 0.0
  %4964 = vmatpush1.msra.mxu0 0.0
  %4965 = vmatprep.subr.mxu0 0.0
  %4966 = vmatpush1.msra.mxu0 0.0
  %4967 = vmatprep.subr.mxu0 0.0
  %4968 = vmatpush1.msra.mxu0 0.0
  %4969 = vmatprep.subr.mxu0 0.0
  %4970 = vmatpush1.msra.mxu0 0.0
  %4971 = vmatprep.subr.mxu0 0.0
  %4972 = vmatpush1.msra.mxu0 0.0
  %4973 = vmatprep.subr.mxu0 0.0
  %4974 = vmatpush1.msra.mxu0 0.0
  %4975 = vmatprep.subr.mxu0 0.0
  %4976 = vmatpush1.msra.mxu0 0.0
  %4977 = vmatprep.subr.mxu0 0.0
  %4978 = vmatpush1.msra.mxu0 0.0
  %4979 = vmatprep.subr.mxu0 0.0
  %4980 = vmatpush1.msra.mxu0 0.0
  %4981 = vmatprep.subr.mxu0 0.0
  %4982 = vmatpush1.msra.mxu0 0.0
  %4983 = vmatprep.subr.mxu0 0.0
  %4984 = vmatpush1.msra.mxu0 0.0
  %4985 = vmatprep.subr.mxu0 0.0
  %4986 = vmatpush1.msra.mxu0 0.0
  %4987 = vmatprep.subr.mxu0 0.0
  %4988 = vmatpush1.msra.mxu0 0.0
  %4989 = vmatprep.subr.mxu0 0.0
  %4990 = vmatpush1.msra.mxu0 0.0
  %4991 = vmatprep.mubr.f32.mxu0 0.0
  %4992 = vmatmul.mubr.f32.gmra.mrb[0].mxu0 %v4910
  %v4993 = vpop.f32.mrb[0].mxu0
  %v4994 = vadd.f32 0.0, %v4993
  %v4995 = vpop.f32.mrb[0].mxu0
  %v4996 = vadd.f32 0.0, %v4995
  %4997 = vmatprep.mubr.f32.mxu0 0.0
  %4998 = vmatmul.mubr.f32.gmra.mrb[0].mxu0 %v4913
  %v4999 = vpop.f32.mrb[0].mxu0
  %v5000 = vadd.f32 0.0, %v4999
  %v5001 = vpop.f32.mrb[0].mxu0
  %v5002 = vadd.f32 0.0, %v5001
  %5003 = vmatprep.mubr.f32.mxu0 0.0
  %5004 = vmatmul.mubr.f32.gmra.mrb[0].mxu0 %v4916
  %v5005 = vpop.f32.mrb[0].mxu0
  %v5006 = vadd.f32 0.0, %v5005
  %v5007 = vpop.f32.mrb[0].mxu0
  %v5008 = vadd.f32 0.0, %v5007
  %5009 = vmatprep.mubr.f32.mxu0 0.0
  %5010 = vmatmul.mubr.f32.gmra.mrb[0].mxu0 %v4919
  %v5011 = vpop.f32.mrb[0].mxu0
  %v5012 = vadd.f32 0.0, %v5011
  %v5013 = vpop.f32.mrb[0].mxu0
  %v5014 = vadd.f32 0.0, %v5013
  %5015 = vmatprep.mubr.f32.mxu0 0.0
  %5016 = vmatmul.mubr.f32.gmra.mrb[0].mxu0 %v4922
  %v5017 = vpop.f32.mrb[0].mxu0
  %v5018 = vadd.f32 0.0, %v5017
  %v5019 = vpop.f32.mrb[0].mxu0
  %v5020 = vadd.f32 0.0, %v5019
  %5021 = vmatprep.mubr.f32.mxu0 0.0
  %5022 = vmatmul.mubr.f32.gmra.mrb[0].mxu0 %v4925
  %v5023 = vpop.f32.mrb[0].mxu0
  %v5024 = vadd.f32 0.0, %v5023
  %v5025 = vpop.f32.mrb[0].mxu0
  %v5026 = vadd.f32 0.0, %v5025
  %5027 = vdwg.mxu0
  %v5029 = vsel %vm74, %v4867, 0
  %v5032 = vsel %vm74, %v4868, 0
  %v5035 = vsel %vm74, %v4869, 0
  %v5038 = vsel %vm74, %v4870, 0
  %v5041 = vsel %vm74, %v4871, 0
  %v5044 = vsel %vm74, %v4872, 0
  %5046 = vmatprep.subr.mxu0 %v4893
  %5047 = vmatpush1.msra.mxu0 %v4892
  %5048 = vmatprep.subr.mxu0 %v4895
  %5049 = vmatpush1.msra.mxu0 %v4894
  %5050 = vmatprep.subr.mxu0 %v4897
  %5051 = vmatpush1.msra.mxu0 %v4896
  %5052 = vmatprep.subr.mxu0 %v4899
  %5053 = vmatpush1.msra.mxu0 %v4898
  %5054 = vmatprep.subr.mxu0 0.0
  %5055 = vmatpush1.msra.mxu0 0.0
  %5056 = vmatprep.subr.mxu0 0.0
  %5057 = vmatpush1.msra.mxu0 0.0
  %5058 = vmatprep.subr.mxu0 0.0
  %5059 = vmatpush1.msra.mxu0 0.0
  %5060 = vmatprep.subr.mxu0 0.0
  %5061 = vmatpush1.msra.mxu0 0.0
  %5062 = vmatprep.subr.mxu0 0.0
  %5063 = vmatpush1.msra.mxu0 0.0
  %5064 = vmatprep.subr.mxu0 0.0
  %5065 = vmatpush1.msra.mxu0 0.0
  %5066 = vmatprep.subr.mxu0 0.0
  %5067 = vmatpush1.msra.mxu0 0.0
  %5068 = vmatprep.subr.mxu0 0.0
  %5069 = vmatpush1.msra.mxu0 0.0
  %5070 = vmatprep.subr.mxu0 0.0
  %5071 = vmatpush1.msra.mxu0 0.0
  %5072 = vmatprep.subr.mxu0 0.0
  %5073 = vmatpush1.msra.mxu0 0.0
  %5074 = vmatprep.subr.mxu0 0.0
  %5075 = vmatpush1.msra.mxu0 0.0
  %5076 = vmatprep.subr.mxu0 0.0
  %5077 = vmatpush1.msra.mxu0 0.0
  %5078 = vmatprep.subr.mxu0 0.0
  %5079 = vmatpush1.msra.mxu0 0.0
  %5080 = vmatprep.subr.mxu0 0.0
  %5081 = vmatpush1.msra.mxu0 0.0
  %5082 = vmatprep.subr.mxu0 0.0
  %5083 = vmatpush1.msra.mxu0 0.0
  %5084 = vmatprep.subr.mxu0 0.0
  %5085 = vmatpush1.msra.mxu0 0.0
  %5086 = vmatprep.subr.mxu0 0.0
  %5087 = vmatpush1.msra.mxu0 0.0
  %5088 = vmatprep.subr.mxu0 0.0
  %5089 = vmatpush1.msra.mxu0 0.0
  %5090 = vmatprep.subr.mxu0 0.0
  %5091 = vmatpush1.msra.mxu0 0.0
  %5092 = vmatprep.subr.mxu0 0.0
  %5093 = vmatpush1.msra.mxu0 0.0
  %5094 = vmatprep.subr.mxu0 0.0
  %5095 = vmatpush1.msra.mxu0 0.0
  %5096 = vmatprep.subr.mxu0 0.0
  %5097 = vmatpush1.msra.mxu0 0.0
  %5098 = vmatprep.subr.mxu0 0.0
  %5099 = vmatpush1.msra.mxu0 0.0
  %5100 = vmatprep.subr.mxu0 0.0
  %5101 = vmatpush1.msra.mxu0 0.0
  %5102 = vmatprep.subr.mxu0 0.0
  %5103 = vmatpush1.msra.mxu0 0.0
  %5104 = vmatprep.subr.mxu0 0.0
  %5105 = vmatpush1.msra.mxu0 0.0
  %5106 = vmatprep.subr.mxu0 0.0
  %5107 = vmatpush1.msra.mxu0 0.0
  %5108 = vmatprep.subr.mxu0 0.0
  %5109 = vmatpush1.msra.mxu0 0.0
  %5110 = vmatprep.mubr.f32.mxu0 0.0
  %5111 = vmatmul.mubr.f32.gmra.mrb[0].mxu0 %v5029
  %v5112 = vpop.f32.mrb[0].mxu0
  %v5113 = vadd.f32 %v4994, %v5112
  %v5114 = vpop.f32.mrb[0].mxu0
  %v5115 = vadd.f32 %v4996, %v5114
  %5116 = vmatprep.mubr.f32.mxu0 0.0
  %5117 = vmatmul.mubr.f32.gmra.mrb[0].mxu0 %v5032
  %v5118 = vpop.f32.mrb[0].mxu0
  %v5119 = vadd.f32 %v5000, %v5118
  %v5120 = vpop.f32.mrb[0].mxu0
  %v5121 = vadd.f32 %v5002, %v5120
  %5122 = vmatprep.mubr.f32.mxu0 0.0
  %5123 = vmatmul.mubr.f32.gmra.mrb[0].mxu0 %v5035
  %v5124 = vpop.f32.mrb[0].mxu0
  %v5125 = vadd.f32 %v5006, %v5124
  %v5126 = vpop.f32.mrb[0].mxu0
  %v5127 = vadd.f32 %v5008, %v5126
  %5128 = vmatprep.mubr.f32.mxu0 0.0
  %5129 = vmatmul.mubr.f32.gmra.mrb[0].mxu0 %v5038
  %v5130 = vpop.f32.mrb[0].mxu0
  %v5131 = vadd.f32 %v5012, %v5130
  %v5132 = vpop.f32.mrb[0].mxu0
  %v5133 = vadd.f32 %v5014, %v5132
  %5134 = vmatprep.mubr.f32.mxu0 0.0
  %5135 = vmatmul.mubr.f32.gmra.mrb[0].mxu0 %v5041
  %v5136 = vpop.f32.mrb[0].mxu0
  %v5137 = vadd.f32 %v5018, %v5136
  %v5138 = vpop.f32.mrb[0].mxu0
  %v5139 = vadd.f32 %v5020, %v5138
  %5140 = vmatprep.mubr.f32.mxu0 0.0
  %5141 = vmatmul.mubr.f32.gmra.mrb[0].mxu0 %v5044
  %v5142 = vpop.f32.mrb[0].mxu0
  %v5143 = vadd.f32 %v5024, %v5142
  %v5144 = vpop.f32.mrb[0].mxu0
  %v5145 = vadd.f32 %v5026, %v5144
  %5146 = vdwg.mxu0
  %v5147 = vmax.f32 %v5113, 0.0
  %v5148 = vmax.f32 %v5119, 0.0
  %v5149 = vmax.f32 %v5125, 0.0
  %v5150 = vmax.f32 %v5131, 0.0
  %v5151 = vmax.f32 %v5137, 0.0
  %v5152 = vmax.f32 %v5143, 0.0
  %v5153 = vmul.f32 %v5147, %v5147
  %v5154 = vmul.f32 %v5148, %v5148
  %v5155 = vmul.f32 %v5149, %v5149
  %v5156 = vmul.f32 %v5150, %v5150
  %v5157 = vmul.f32 %v5151, %v5151
  %v5158 = vmul.f32 %v5152, %v5152
  %v5159 = vxor.u32 %v5115, 2147483648
  %v5160 = vxor.u32 %v5121, 2147483648
  %v5161 = vxor.u32 %v5127, 2147483648
  %v5162 = vxor.u32 %v5133, 2147483648
  %v5163 = vxor.u32 %v5139, 2147483648
  %v5164 = vxor.u32 %v5145, 2147483648
  %v5165 = vmul.f32 %v5159, 1.442695
  %v5166 = vpow.pop %v5165
  %v5167 = vmul.f32 %v5160, 1.442695
  %v5168 = vpow.pop %v5167
  %v5169 = vmul.f32 %v5161, 1.442695
  %v5170 = vpow.pop %v5169
  %v5171 = vmul.f32 %v5162, 1.442695
  %v5172 = vpow.pop %v5171
  %v5173 = vmul.f32 %v5163, 1.442695
  %v5174 = vpow.pop %v5173
  %v5175 = vmul.f32 %v5164, 1.442695
  %v5176 = vpow.pop %v5175
  %v5177 = vadd.f32 %v5166, 1.0
  %v5178 = vadd.f32 %v5168, 1.0
  %v5179 = vadd.f32 %v5170, 1.0
  %v5180 = vadd.f32 %v5172, 1.0
  %v5181 = vadd.f32 %v5174, 1.0
  %v5182 = vadd.f32 %v5176, 1.0
  %v5183 = vrcp.pop %v5177
  %v5184 = vmul.f32 1.0, %v5183
  %v5185 = vrcp.pop %v5178
  %v5186 = vmul.f32 1.0, %v5185
  %v5187 = vrcp.pop %v5179
  %v5188 = vmul.f32 1.0, %v5187
  %v5189 = vrcp.pop %v5180
  %v5190 = vmul.f32 1.0, %v5189
  %v5191 = vrcp.pop %v5181
  %v5192 = vmul.f32 1.0, %v5191
  %v5193 = vrcp.pop %v5182
  %v5194 = vmul.f32 1.0, %v5193
  %s5195 = scalar_lea.vmem %s12, 128
  %v5196 = vld [vmem:[%s5195] sm:$0xff]
  %v5197 = vld [vmem:[%s5195 + $0x8] sm:$0xff]
  %v5198 = vld [vmem:[%s5195 + $0x10] sm:$0xff]
  %v5199 = vld [vmem:[%s5195 + $0x18] sm:$0xff]
  %v5200 = vld [vmem:[%s5195 + $0x20] sm:$0xff]
  %v5201 = vld [vmem:[%s5195 + $0x28] sm:$0xff]
  %v5202 = vld [vmem:[%s5195 + $0x30] sm:$0xff]
  %v5203 = vld [vmem:[%s5195 + $0x38] sm:$0xff]
  %v5204 = vld [vmem:[%s5195 + $0x40] sm:$0xff]
  %v5205 = vld [vmem:[%s5195 + $0x48] sm:$0xff]
  %v5206 = vld [vmem:[%s5195 + $0x50] sm:$0xff]
  %v5207 = vld [vmem:[%s5195 + $0x58] sm:$0xff]
  %v5208 = vld [vmem:[%s5195 + $0x60] sm:$0xff]
  %v5209 = vld [vmem:[%s5195 + $0x68] sm:$0xff]
  %v5210 = vld [vmem:[%s5195 + $0x70] sm:$0xff]
  %v5211 = vld [vmem:[%s5195 + $0x78] sm:$0xff]
  %5212 = vmatprep.subr.mxu0 0.0
  %5213 = vmatpush1.msra.mxu0 %v5196
  %5214 = vmatprep.subr.mxu0 0.0
  %5215 = vmatpush1.msra.mxu0 %v5197
  %5216 = vmatprep.subr.mxu0 0.0
  %5217 = vmatpush1.msra.mxu0 %v5198
  %5218 = vmatprep.subr.mxu0 0.0
  %5219 = vmatpush1.msra.mxu0 %v5199
  %5220 = vmatprep.subr.mxu0 0.0
  %5221 = vmatpush1.msra.mxu0 %v5200
  %5222 = vmatprep.subr.mxu0 0.0
  %5223 = vmatpush1.msra.mxu0 %v5201
  %5224 = vmatprep.subr.mxu0 0.0
  %5225 = vmatpush1.msra.mxu0 %v5202
  %5226 = vmatprep.subr.mxu0 0.0
  %5227 = vmatpush1.msra.mxu0 %v5203
  %5228 = vmatprep.subr.mxu0 0.0
  %5229 = vmatpush1.msra.mxu0 %v5204
  %5230 = vmatprep.subr.mxu0 0.0
  %5231 = vmatpush1.msra.mxu0 %v5205
  %5232 = vmatprep.subr.mxu0 0.0
  %5233 = vmatpush1.msra.mxu0 %v5206
  %5234 = vmatprep.subr.mxu0 0.0
  %5235 = vmatpush1.msra.mxu0 %v5207
  %5236 = vmatprep.subr.mxu0 0.0
  %5237 = vmatpush1.msra.mxu0 %v5208
  %5238 = vmatprep.subr.mxu0 0.0
  %5239 = vmatpush1.msra.mxu0 %v5209
  %5240 = vmatprep.subr.mxu0 0.0
  %5241 = vmatpush1.msra.mxu0 %v5210
  %5242 = vmatprep.subr.mxu0 0.0
  %5243 = vmatpush1.msra.mxu0 %v5211
  %5244 = vmatprep.subr.mxu0 0.0
  %5245 = vmatpush1.msra.mxu0 0.0
  %5246 = vmatprep.subr.mxu0 0.0
  %5247 = vmatpush1.msra.mxu0 0.0
  %5248 = vmatprep.subr.mxu0 0.0
  %5249 = vmatpush1.msra.mxu0 0.0
  %5250 = vmatprep.subr.mxu0 0.0
  %5251 = vmatpush1.msra.mxu0 0.0
  %5252 = vmatprep.subr.mxu0 0.0
  %5253 = vmatpush1.msra.mxu0 0.0
  %5254 = vmatprep.subr.mxu0 0.0
  %5255 = vmatpush1.msra.mxu0 0.0
  %5256 = vmatprep.subr.mxu0 0.0
  %5257 = vmatpush1.msra.mxu0 0.0
  %5258 = vmatprep.subr.mxu0 0.0
  %5259 = vmatpush1.msra.mxu0 0.0
  %5260 = vmatprep.subr.mxu0 0.0
  %5261 = vmatpush1.msra.mxu0 0.0
  %5262 = vmatprep.subr.mxu0 0.0
  %5263 = vmatpush1.msra.mxu0 0.0
  %5264 = vmatprep.subr.mxu0 0.0
  %5265 = vmatpush1.msra.mxu0 0.0
  %5266 = vmatprep.subr.mxu0 0.0
  %5267 = vmatpush1.msra.mxu0 0.0
  %5268 = vmatprep.subr.mxu0 0.0
  %5269 = vmatpush1.msra.mxu0 0.0
  %5270 = vmatprep.subr.mxu0 0.0
  %5271 = vmatpush1.msra.mxu0 0.0
  %5272 = vmatprep.subr.mxu0 0.0
  %5273 = vmatpush1.msra.mxu0 0.0
  %5274 = vmatprep.subr.mxu0 0.0
  %5275 = vmatpush1.msra.mxu0 0.0
  %5276 = vmatprep.mubr.f32.mxu0 0.0
  %5277 = vmatmul.mubr.f32.gmra.mrb[0].mxu0 %v5153
  %v5278 = vpop.f32.mrb[0].mxu0
  %v5279 = vadd.f32 0.0, %v5278
  %v5280 = vpop.f32.mrb[0].mxu0
  %5281 = vmatprep.mubr.f32.mxu0 0.0
  %5282 = vmatmul.mubr.f32.gmra.mrb[0].mxu0 %v5154
  %v5283 = vpop.f32.mrb[0].mxu0
  %v5284 = vadd.f32 0.0, %v5283
  %v5285 = vpop.f32.mrb[0].mxu0
  %5286 = vmatprep.mubr.f32.mxu0 0.0
  %5287 = vmatmul.mubr.f32.gmra.mrb[0].mxu0 %v5155
  %v5288 = vpop.f32.mrb[0].mxu0
  %v5289 = vadd.f32 0.0, %v5288
  %v5290 = vpop.f32.mrb[0].mxu0
  %5291 = vmatprep.mubr.f32.mxu0 0.0
  %5292 = vmatmul.mubr.f32.gmra.mrb[0].mxu0 %v5156
  %v5293 = vpop.f32.mrb[0].mxu0
  %v5294 = vadd.f32 0.0, %v5293
  %v5295 = vpop.f32.mrb[0].mxu0
  %5296 = vmatprep.mubr.f32.mxu0 0.0
  %5297 = vmatmul.mubr.f32.gmra.mrb[0].mxu0 %v5157
  %v5298 = vpop.f32.mrb[0].mxu0
  %v5299 = vadd.f32 0.0, %v5298
  %v5300 = vpop.f32.mrb[0].mxu0
  %5301 = vmatprep.mubr.f32.mxu0 0.0
  %5302 = vmatmul.mubr.f32.gmra.mrb[0].mxu0 %v5158
  %v5303 = vpop.f32.mrb[0].mxu0
  %v5304 = vadd.f32 0.0, %v5303
  %v5305 = vpop.f32.mrb[0].mxu0
  %5306 = vdwg.mxu0
  %v5307 = vmul.f32 %v5184, %v5279
  %v5308 = vmul.f32 %v5186, %v5284
  %v5309 = vmul.f32 %v5188, %v5289
  %v5310 = vmul.f32 %v5190, %v5294
  %v5311 = vmul.f32 %v5192, %v5299
  %v5312 = vmul.f32 %v5194, %v5304
  %v5313 = vadd.f32 %v4761, %v5307
  %v5314 = vadd.f32 %v4762, %v5308
  %v5315 = vadd.f32 %v4763, %v5309
  %v5316 = vadd.f32 %v4764, %v5310
  %v5317 = vadd.f32 %v4765, %v5311
  %v5318 = vadd.f32 %v4766, %v5312
  %v5320 = vrot.slane %v5313, 2
  %v5323 = vrot.slane %v5314, 6
  %v5325 = vrot.slane %v5314, 2
  %v5328 = vrot.slane %v5315, 6
  %v5331 = vrot.slane %v5316, 2
  %v5334 = vrot.slane %v5317, 6
  %v5336 = vrot.slane %v5317, 2
  %v5339 = vrot.slane %v5318, 6
  %v5341 = vsel %vm535, %v5320, %v5323
  %v5342 = vsel %vm537, %v5341, %v5325
  %v5343 = vsel %vm539, %v5342, %v5328
  %v5344 = vsel %vm535, %v5331, %v5334
  %v5345 = vsel %vm537, %v5344, %v5336
  %v5346 = vsel %vm539, %v5345, %v5339
  %v5347 = vld [vmem:[%s13] sm:$0x1]
  %v5348 = vld [vmem:[%s14] sm:$0x1]
  %v5349 = vsel %vm74, %v5343, 0.0
  %5350 = vadd.xlane.f32.xlu0 %v5349
  %v5351 = vpop.xlane.xlu0 %5350
  %v5352 = vsel %vm74, %v5346, 0.0
  %5353 = vadd.xlane.f32.xlu0 %v5352
  %v5354 = vpop.xlane.xlu0 %5353
  %v5355 = vmul.f32 %v5351, %v93
  %v5356 = vmul.f32 %v5354, %v93
  %v5357 = vsub.f32 %v5343, %v5355
  %v5358 = vsub.f32 %v5346, %v5356
  %v5359 = vmul.f32 %v5357, %v5357
  %v5360 = vmul.f32 %v5358, %v5358
  %v5361 = vsel %vm74, %v5359, 0.0
  %5362 = vadd.xlane.f32.xlu0 %v5361
  %v5363 = vpop.xlane.xlu0 %5362
  %v5364 = vsel %vm74, %v5360, 0.0
  %5365 = vadd.xlane.f32.xlu0 %v5364
  %v5366 = vpop.xlane.xlu0 %5365
  %v5367 = vmul.f32 %v5363, %v93
  %v5368 = vmul.f32 %v5366, %v93
  %v5369 = vadd.f32 %v5367, 1e-05
  %v5370 = vadd.f32 %v5368, 1e-05
  %v5371 = vrsqrt.pop %v5369
  %v5372 = vrsqrt.pop %v5370
  %v5373 = vmul.f32 %v5357, %v5371
  %v5374 = vmul.f32 %v5358, %v5372
  %v5376 = vlaneseq
  %v5377 = vshrl.u32 %v5376, 7
  %v5378 = vsub.s32 0, %v5377
  %v5379 = vrot.slane %v5347, %v5378
  %v5381 = vmul.f32 %v5373, %v5379
  %v5382 = vmul.f32 %v5374, %v5379
  %v5384 = vlaneseq
  %v5385 = vshrl.u32 %v5384, 7
  %v5386 = vsub.s32 0, %v5385
  %v5387 = vrot.slane %v5348, %v5386
  %v5389 = vadd.f32 %v5381, %v5387
  %v5390 = vadd.f32 %v5382, %v5387
  %v5391 = vld [vmem:[%s15] sm:$0xff]
  %v5392 = vld [vmem:[%s15 + $0x8] sm:$0xff]
  %v5393 = vld [vmem:[%s15 + $0x10] sm:$0xff]
  %v5394 = vld [vmem:[%s15 + $0x18] sm:$0xff]
  %v5396 = vsel %vm74, %v5389, 0
  %v5399 = vsel %vm74, %v5390, 0
  %5401 = vmatprep.subr.mxu0 0.0
  %5402 = vmatpush1.msra.mxu0 %v5391
  %5403 = vmatprep.subr.mxu0 0.0
  %5404 = vmatpush1.msra.mxu0 %v5392
  %5405 = vmatprep.subr.mxu0 0.0
  %5406 = vmatpush1.msra.mxu0 %v5393
  %5407 = vmatprep.subr.mxu0 0.0
  %5408 = vmatpush1.msra.mxu0 %v5394
  %5409 = vmatprep.subr.mxu0 0.0
  %5410 = vmatpush1.msra.mxu0 0.0
  %5411 = vmatprep.subr.mxu0 0.0
  %5412 = vmatpush1.msra.mxu0 0.0
  %5413 = vmatprep.subr.mxu0 0.0
  %5414 = vmatpush1.msra.mxu0 0.0
  %5415 = vmatprep.subr.mxu0 0.0
  %5416 = vmatpush1.msra.mxu0 0.0
  %5417 = vmatprep.subr.mxu0 0.0
  %5418 = vmatpush1.msra.mxu0 0.0
  %5419 = vmatprep.subr.mxu0 0.0
  %5420 = vmatpush1.msra.mxu0 0.0
  %5421 = vmatprep.subr.mxu0 0.0
  %5422 = vmatpush1.msra.mxu0 0.0
  %5423 = vmatprep.subr.mxu0 0.0
  %5424 = vmatpush1.msra.mxu0 0.0
  %5425 = vmatprep.subr.mxu0 0.0
  %5426 = vmatpush1.msra.mxu0 0.0
  %5427 = vmatprep.subr.mxu0 0.0
  %5428 = vmatpush1.msra.mxu0 0.0
  %5429 = vmatprep.subr.mxu0 0.0
  %5430 = vmatpush1.msra.mxu0 0.0
  %5431 = vmatprep.subr.mxu0 0.0
  %5432 = vmatpush1.msra.mxu0 0.0
  %5433 = vmatprep.subr.mxu0 0.0
  %5434 = vmatpush1.msra.mxu0 0.0
  %5435 = vmatprep.subr.mxu0 0.0
  %5436 = vmatpush1.msra.mxu0 0.0
  %5437 = vmatprep.subr.mxu0 0.0
  %5438 = vmatpush1.msra.mxu0 0.0
  %5439 = vmatprep.subr.mxu0 0.0
  %5440 = vmatpush1.msra.mxu0 0.0
  %5441 = vmatprep.subr.mxu0 0.0
  %5442 = vmatpush1.msra.mxu0 0.0
  %5443 = vmatprep.subr.mxu0 0.0
  %5444 = vmatpush1.msra.mxu0 0.0
  %5445 = vmatprep.subr.mxu0 0.0
  %5446 = vmatpush1.msra.mxu0 0.0
  %5447 = vmatprep.subr.mxu0 0.0
  %5448 = vmatpush1.msra.mxu0 0.0
  %5449 = vmatprep.subr.mxu0 0.0
  %5450 = vmatpush1.msra.mxu0 0.0
  %5451 = vmatprep.subr.mxu0 0.0
  %5452 = vmatpush1.msra.mxu0 0.0
  %5453 = vmatprep.subr.mxu0 0.0
  %5454 = vmatpush1.msra.mxu0 0.0
  %5455 = vmatprep.subr.mxu0 0.0
  %5456 = vmatpush1.msra.mxu0 0.0
  %5457 = vmatprep.subr.mxu0 0.0
  %5458 = vmatpush1.msra.mxu0 0.0
  %5459 = vmatprep.subr.mxu0 0.0
  %5460 = vmatpush1.msra.mxu0 0.0
  %5461 = vmatprep.subr.mxu0 0.0
  %5462 = vmatpush1.msra.mxu0 0.0
  %5463 = vmatprep.subr.mxu0 0.0
  %5464 = vmatpush1.msra.mxu0 0.0
  %5465 = vmatprep.mubr.f32.mxu0 0.0
  %5466 = vmatmul.mubr.f32.gmra.mrb[0].mxu0 %v5396
  %v5467 = vpop.f32.mrb[0].mxu0
  %v5468 = vadd.f32 0.0, %v5467
  %v5469 = vpop.f32.mrb[0].mxu0
  %5470 = vmatprep.mubr.f32.mxu0 0.0
  %5471 = vmatmul.mubr.f32.gmra.mrb[0].mxu0 %v5399
  %v5472 = vpop.f32.mrb[0].mxu0
  %v5473 = vadd.f32 0.0, %v5472
  %v5474 = vpop.f32.mrb[0].mxu0
  %5475 = vdwg.mxu0
  %5476 = vst [vmem:[%s16] sm:$0xff] %v5468
  %5477 = vst [vmem:[%s16 + $0x8] sm:$0xff] %v5473
  // Predicated region
  $region66: #{decision_rwkv_forward.1} parent=0 // pred_check
    _
  $region67: #{decision_rwkv_forward.1} parent=0 // pred_check_branch
    %5479 = sbr.rel (0) target = $region69
  $region68: #{decision_rwkv_forward.1} parent=0 // pred_region
    _
  $region69: #{decision_rwkv_forward.1} parent=0 // pred_fallthru
    _
  // Predicated region
  $region70: #{decision_rwkv_forward.1} parent=0 // pred_check
    _
  $region71: #{decision_rwkv_forward.1} parent=0 // pred_check_branch
    %5481 = sbr.rel (0) target = $region73
  $region72: #{decision_rwkv_forward.1} parent=0 // pred_region
    _
  $region73: #{decision_rwkv_forward.1} parent=0 // pred_fallthru
    _

</llo_original>
